<compile_context>
chip_gen: v6e
topology: v6e:2x2x1
jax: 0.10.0
libtpu: 0.0.40
codegen_flags: <defaults>
</compile_context>

<pallas_src>
import jax
import jax.numpy as jnp
from jax.experimental import pallas as pl
from jax.experimental.pallas import tpu as pltpu


def _round_up(x, m):
    return (x + m - 1) // m * m


def _basic_block_kernel(x_ref, w1_ref, s1_ref, b1_ref, w2_ref, s2_ref, b2_ref,
                        o_ref, h1_ref):
    # x_ref  : (1, H+4, Wpad, Cp) bf16  image padded by 2 rows top/bottom and
    #          zero columns at [W, Wpad); resident across the H-tile axis.
    # w*_ref : (3, 3*Cp, Cp)      bf16  per-dy weight slabs (dx packed along K)
    # s*/b*  : (1, Cp)            f32   folded BN scale / bias
    # o_ref  : (1, TH, W, Cp)     bf16  output row-tile
    # h1_ref : (TH+2, Wpad, Cp)   bf16  conv1 activation (1-row halo each side)
    _, hp4, wpad, cp = x_ref.shape
    _, th, w_img, _ = o_ref.shape
    h_img = hp4 - 4
    th2 = th + 2

    h_idx = pl.program_id(1)
    r0 = pl.multiple_of(h_idx * th, th)            # first output row of tile

    def conv3x3(region, w_ref, rows):
        """3x3 / stride-1 / pad-1 conv over `rows` spatial rows.

        region: ((rows+2)*wpad, cp) bf16, row-major over (row, col); every
        spatial row has zeros in columns >= w_img (these zeros realize the
        left/right halo after the +-1 shifts below).
        Returns (rows*wpad, cp) f32.
        """
        n = region.shape[0]
        # Build the two shifted copies once per conv (not per tap).  Done in
        # f32 via slice+concat — a guaranteed lowering path; the shifted halo
        # values come from the zero columns / the explicit zero row.
        r32 = region.astype(jnp.float32)
        zrow = jnp.zeros((1, cp), jnp.float32)
        left = jnp.concatenate([zrow, r32[:n - 1]], axis=0).astype(region.dtype)
        right = jnp.concatenate([r32[1:], zrow], axis=0).astype(region.dtype)
        # K-fused im2col patch: dx taps packed along lanes -> K = 3*cp.
        patch = jnp.concatenate([left, region, right], axis=-1)
        acc = jnp.zeros((rows * wpad, cp), jnp.float32)
        for dy in range(3):
            s = dy * wpad                          # multiple of 8 -> aligned
            acc += jnp.dot(patch[s:s + rows * wpad], w_ref[dy],
                           preferred_element_type=jnp.float32)
        return acc

    # ---- conv1 -> BN1 -> ReLU over TH+2 rows (1-row halo, recomputed) ----
    reg1 = x_ref[0, pl.ds(r0, th2 + 2), :, :].reshape((th2 + 2) * wpad, cp)
    acc1 = conv3x3(reg1, w1_ref, th2)
    h1 = jnp.maximum(acc1 * s1_ref[0] + b1_ref[0], 0.0).reshape(th2, wpad, cp)
    # Keep columns >= W zero so the shift trick stays exact for conv2.
    col = jax.lax.broadcasted_iota(jnp.int32, (th2, wpad, cp), 1)
    h1_ref[...] = jnp.where(col < w_img, h1, 0.0).astype(h1_ref.dtype)

    # Rows of h1 that are the conv padding ring must be zero; this only
    # happens at the very top / bottom of the image.
    @pl.when(h_idx == 0)
    def _():
        h1_ref[0] = jnp.zeros((wpad, cp), h1_ref.dtype)

    @pl.when(h_idx == pl.num_programs(1) - 1)
    def _():
        h1_ref[th + 1] = jnp.zeros((wpad, cp), h1_ref.dtype)

    # ---- conv2 -> BN2 -> +residual -> ReLU over the TH output rows ----
    reg2 = h1_ref[...].reshape(th2 * wpad, cp)
    acc2 = conv3x3(reg2, w2_ref, th)
    res = x_ref[0, pl.ds(r0 + 2, th), :, :].astype(jnp.float32)
    out = acc2 * s2_ref[0] + b2_ref[0] + res.reshape(th * wpad, cp)
    out = jnp.maximum(out, 0.0).reshape(th, wpad, cp)
    o_ref[0] = out[:, :w_img, :].astype(o_ref.dtype)


def basic_block_pallas(x_nchw, w1, s1, b1, w2, s2, b2):
    """Fused BasicBlock forward.

    x_nchw : (N, C, H, W) float32 (PyTorch layout)
    w1, w2 : (3, 3, Cin, Cout) HWIO conv weights
    s*, b* : (C,) folded (inference-mode) BatchNorm scale / bias
    """
    N, C, H, W = x_nchw.shape
    Cout = w1.shape[-1]
    assert C == Cout, "downsample=None requires inplanes == planes (stride 1)"

    Cp = max(128, _round_up(C, 128))          # lane-dense channels
    pc = Cp - C
    Wpad = _round_up(W + 2, 8)                # sublane-aligned row length

    # H-tile: largest divisor of H with (TH+2)*Wpad <= 512 matmul rows
    # (MXU M sweet spot, bounded accumulator live range, >=2 tiles for 2 TCs
    # at realistic image sizes).
    divs = [d for d in range(1, H + 1) if H % d == 0]
    cands = [d for d in divs if (d + 2) * Wpad <= 512] or [1]
    TH = max(cands)
    nH = H // TH

    # ---- wrapper-side layout prep (one fused XLA pass each) ----
    # NCHW -> NHWC, bf16, pad: 2 halo rows top/bottom, zero cols [W, Wpad),
    # channel pad to Cp.
    x_k = jnp.pad(jnp.transpose(x_nchw, (0, 2, 3, 1)).astype(jnp.bfloat16),
                  ((0, 0), (2, 2), (0, Wpad - W), (0, pc)))

    def prep_w(w):  # (3,3,C,C) -> (3, 3*Cp, Cp) bf16 per-dy slabs (dx along K)
        wq = jnp.pad(w.astype(jnp.bfloat16),
                     ((0, 0), (0, 0), (0, pc), (0, pc)))
        return wq.reshape(3, 3 * Cp, Cp)

    def prep_v(v):  # (C,) -> (1, Cp) f32
        return jnp.pad(v.reshape(-1).astype(jnp.float32), (0, pc)).reshape(1, Cp)

    w1_k, w2_k = prep_w(w1), prep_w(w2)
    s1_k, b1_k, s2_k, b2_k = prep_v(s1), prep_v(b1), prep_v(s2), prep_v(b2)

    # ---- VMEM budget (blocks + scratch + transient conv temporaries) ----
    Wout8 = _round_up(W, 8)
    block_bytes = (
        2 * (H + 4) * Wpad * Cp * 2           # x block (bf16, double-buffered)
        + 2 * TH * Wout8 * Cp * 2             # out block (bf16, double-buffered)
        + 2 * 2 * 3 * (3 * Cp) * Cp * 2       # w1 + w2 blocks (bf16, dbl-buf)
        + 2 * 4 * 8 * Cp * 4                  # BN scale / bias blocks
        + (TH + 2) * Wpad * Cp * 2)           # h1 scratch (bf16)
    transient_bytes = (TH + 4) * Wpad * Cp * 24   # f32 region/acc + bf16 patch
    need = block_bytes + transient_bytes
    try:
        cap = int(getattr(pltpu.get_tpu_info(), "vmem_capacity_bytes", 0)) \
              or (64 << 20)
    except Exception:  # pragma: no cover - defensive (older/newer jax)
        cap = 64 << 20
    vmem_limit = int(min(max(2 * need, 32 << 20), int(0.9 * cap)))

    # Advisory cost estimate (MXU flops of the 6 K-fused matmuls per tile).
    flops = 2 * 3 * (3 * Cp) * Cp * Wpad * ((TH + 2) + TH) * N * nH
    bytes_accessed = (int(x_k.size) * 2 + N * H * W * Cp * 2
                      + 2 * 3 * 3 * Cp * Cp * 2 + 4 * Cp * 4)
    cost = pl.CostEstimate(flops=flops, transcendentals=0,
                           bytes_accessed=bytes_accessed)

    out_nhwc = pl.pallas_call(
        _basic_block_kernel,
        out_shape=jax.ShapeDtypeStruct((N, H, W, Cp), jnp.bfloat16),
        grid_spec=pltpu.PrefetchScalarGridSpec(
            num_scalar_prefetch=0,
            grid=(N, nH),
            in_specs=[
                pl.BlockSpec((1, H + 4, Wpad, Cp), lambda n, h: (n, 0, 0, 0)),
                pl.BlockSpec((3, 3 * Cp, Cp), lambda n, h: (0, 0, 0)),
                pl.BlockSpec((1, Cp), lambda n, h: (0, 0)),
                pl.BlockSpec((1, Cp), lambda n, h: (0, 0)),
                pl.BlockSpec((3, 3 * Cp, Cp), lambda n, h: (0, 0, 0)),
                pl.BlockSpec((1, Cp), lambda n, h: (0, 0)),
                pl.BlockSpec((1, Cp), lambda n, h: (0, 0)),
            ],
            out_specs=pl.BlockSpec((1, TH, W, Cp), lambda n, h: (n, h, 0, 0)),
            scratch_shapes=[
                pltpu.VMEM((TH + 2, Wpad, Cp), jnp.bfloat16),   # conv1 act
            ],
        ),
        compiler_params=pltpu.CompilerParams(
            dimension_semantics=("parallel", "parallel"),
            vmem_limit_bytes=vmem_limit),
        cost_estimate=cost,
    )(x_k, w1_k, s1_k, b1_k, w2_k, s2_k, b2_k)

    # Drop channel padding, back to NCHW f32 (interface dtype).
    return jnp.transpose(out_nhwc[..., :C].astype(jnp.float32), (0, 3, 1, 2))


def _reference_basic_block(x, w1, s1, b1, w2, s2, b2):
    """Pure-JAX reference (NCHW in/out, HWIO weights) mirroring the module."""
    def conv(inp, w_hwio):
        w_oihw = jnp.transpose(w_hwio, (3, 2, 0, 1))
        return jax.lax.conv_general_dilated(
            inp, w_oihw, window_strides=(1, 1), padding=((1, 1), (1, 1)),
            dimension_numbers=("NCHW", "OIHW", "NCHW"))
    h = conv(x, w1) * s1[None, :, None, None] + b1[None, :, None, None]
    h = jnp.maximum(h, 0.0)
    o = conv(h, w2) * s2[None, :, None, None] + b2[None, :, None, None]
    return jnp.maximum(o + x, 0.0)


if __name__ == "__main__":
    key = jax.random.PRNGKey(0)
    N, C, H, W = 2, 8, 16, 16           # inplanes == planes == 8, stride 1
    eps = 1e-5

    k = jax.random.split(key, 9)
    x = jax.random.normal(k[0], (N, C, H, W), dtype=jnp.float32)
    w1 = jax.random.normal(k[1], (3, 3, C, C), dtype=jnp.float32) * 0.1   # HWIO
    w2 = jax.random.normal(k[2], (3, 3, C, C), dtype=jnp.float32) * 0.1
    gamma1 = 1.0 + 0.1 * jax.random.normal(k[3], (C,), dtype=jnp.float32)
    beta1 = 0.1 * jax.random.normal(k[4], (C,), dtype=jnp.float32)
    mean1 = 0.1 * jax.random.normal(k[5], (C,), dtype=jnp.float32)
    var1 = jnp.abs(1.0 + 0.1 * jax.random.normal(k[6], (C,), dtype=jnp.float32))
    gamma2 = 1.0 + 0.1 * jax.random.normal(k[7], (C,), dtype=jnp.float32)
    beta2 = 0.1 * jax.random.normal(k[8], (C,), dtype=jnp.float32)
    mean2 = jnp.zeros((C,), jnp.float32)
    var2 = jnp.ones((C,), jnp.float32)

    # Fold inference-mode BN into scale / bias.
    s1 = gamma1 / jnp.sqrt(var1 + eps)
    b1 = beta1 - mean1 * s1
    s2 = gamma2 / jnp.sqrt(var2 + eps)
    b2 = beta2 - mean2 * s2

    out = basic_block_pallas(x, w1, s1, b1, w2, s2, b2)
    out = jax.block_until_ready(out)

    # Reference on the same bf16-rounded inputs the kernel's MXU consumes
    # (the kernel accumulates / applies BN, ReLU and the residual in f32 and
    # only the final store is bf16).
    q = lambda a: a.astype(jnp.bfloat16).astype(jnp.float32)
    ref = _reference_basic_block(q(x), q(w1), s1, b1, q(w2), s2, b2)

    assert out.shape == (N, C, H, W)
    max_err = float(jnp.max(jnp.abs(out - ref)))
    assert jnp.allclose(out, ref, atol=5e-2, rtol=5e-2), f"mismatch: {max_err}"

    print("KERNEL_OK")
</pallas_src>

<mosaic_0001>
module attributes {stable_mosaic.version = 11 : i64} {
  func.func @_basic_block_kernel(%arg0: i32, %arg1: i32, %arg2: memref<1x20x24x128xbf16, #tpu.memory_space<vmem>>, %arg3: memref<3x384x128xbf16, #tpu.memory_space<vmem>>, %arg4: memref<1x128xf32, #tpu.memory_space<vmem>>, %arg5: memref<1x128xf32, #tpu.memory_space<vmem>>, %arg6: memref<3x384x128xbf16, #tpu.memory_space<vmem>>, %arg7: memref<1x128xf32, #tpu.memory_space<vmem>>, %arg8: memref<1x128xf32, #tpu.memory_space<vmem>>, %arg9: memref<1x16x16x128xbf16, #tpu.memory_space<vmem>>, %arg10: memref<18x24x128xbf16, #tpu.memory_space<vmem>>) attributes {dimension_semantics = [#tpu.dimension_semantics<parallel>, #tpu.dimension_semantics<parallel>], iteration_bounds = array<i64: 2, 1>, scalar_prefetch = 0 : i64, scratch_operands = 1 : i64, tpu.core_type = #tpu.core_type<tc>, window_params = [{transform_indices = @transform_0, window_bounds = array<i64: 1, 20, 24, 128>}, {pipeline_mode = #tpu.pipeline_mode<synchronous>, transform_indices = @transform_1, window_bounds = array<i64: 3, 384, 128>}, {pipeline_mode = #tpu.pipeline_mode<synchronous>, transform_indices = @transform_2, window_bounds = array<i64: 1, 128>}, {pipeline_mode = #tpu.pipeline_mode<synchronous>, transform_indices = @transform_3, window_bounds = array<i64: 1, 128>}, {pipeline_mode = #tpu.pipeline_mode<synchronous>, transform_indices = @transform_4, window_bounds = array<i64: 3, 384, 128>}, {pipeline_mode = #tpu.pipeline_mode<synchronous>, transform_indices = @transform_5, window_bounds = array<i64: 1, 128>}, {pipeline_mode = #tpu.pipeline_mode<synchronous>, transform_indices = @transform_6, window_bounds = array<i64: 1, 128>}, {transform_indices = @transform_7, window_bounds = array<i64: 1, 16, 16, 128>}]} {
    %c16_i32 = arith.constant 16 : i32
    %0 = arith.muli %arg1, %c16_i32 : i32
    %1 = tpu.assume_multiple %0, 16 : i32
    %c0 = arith.constant 0 : index
    %2 = arith.index_cast %1 : i32 to index
    %c0_0 = arith.constant 0 : index
    %c0_1 = arith.constant 0 : index
    %3 = vector.load %arg2[%c0, %2, %c0_0, %c0_1] : memref<1x20x24x128xbf16, #tpu.memory_space<vmem>>, vector<1x20x24x128xbf16>
    %4 = vector.shape_cast %3 : vector<1x20x24x128xbf16> to vector<20x24x128xbf16>
    %5 = vector.shape_cast %4 : vector<20x24x128xbf16> to vector<480x128xbf16>
    %6 = arith.extf %5 : vector<480x128xbf16> to vector<480x128xf32>
    %cst = arith.constant 0.000000e+00 : f32
    %7 = vector.broadcast %cst : f32 to vector<1x128xf32>
    %8 = vector.extract_strided_slice %6 {offsets = [0, 0], sizes = [479, 128], strides = [1, 1]} : vector<480x128xf32> to vector<479x128xf32>
    %9 = tpu.concatenate %7, %8 in 0 : vector<1x128xf32>, vector<479x128xf32> -> vector<480x128xf32>
    %10 = arith.truncf %9 : vector<480x128xf32> to vector<480x128xbf16>
    %11 = vector.extract_strided_slice %6 {offsets = [1, 0], sizes = [479, 128], strides = [1, 1]} : vector<480x128xf32> to vector<479x128xf32>
    %12 = tpu.concatenate %11, %7 in 0 : vector<479x128xf32>, vector<1x128xf32> -> vector<480x128xf32>
    %13 = arith.truncf %12 : vector<480x128xf32> to vector<480x128xbf16>
    %14 = tpu.concatenate %10, %5, %13 in 1 : vector<480x128xbf16>, vector<480x128xbf16>, vector<480x128xbf16> -> vector<480x384xbf16>
    %cst_2 = arith.constant 0.000000e+00 : f32
    %15 = vector.broadcast %cst_2 : f32 to vector<432x128xf32>
    %16 = vector.extract_strided_slice %14 {offsets = [0, 0], sizes = [432, 384], strides = [1, 1]} : vector<480x384xbf16> to vector<432x384xbf16>
    %c0_3 = arith.constant 0 : index
    %c0_4 = arith.constant 0 : index
    %c0_5 = arith.constant 0 : index
    %17 = vector.load %arg3[%c0_3, %c0_4, %c0_5] : memref<3x384x128xbf16, #tpu.memory_space<vmem>>, vector<1x384x128xbf16>
    %18 = vector.shape_cast %17 : vector<1x384x128xbf16> to vector<384x128xbf16>
    %cst_6 = arith.constant dense<0.000000e+00> : vector<432x128xf32>
    %19 = tpu.matmul %16, %18, %cst_6 {dimension_numbers = #tpu.dot_dimension_numbers<[1], [0], [0], [1], [0, 0, 1, 1], [], []>} : vector<432x384xbf16>, vector<384x128xbf16>, vector<432x128xf32> -> vector<432x128xf32>
    %20 = arith.addf %15, %19 : vector<432x128xf32>
    %21 = vector.extract_strided_slice %14 {offsets = [24, 0], sizes = [432, 384], strides = [1, 1]} : vector<480x384xbf16> to vector<432x384xbf16>
    %c1 = arith.constant 1 : index
    %c0_7 = arith.constant 0 : index
    %c0_8 = arith.constant 0 : index
    %22 = vector.load %arg3[%c1, %c0_7, %c0_8] : memref<3x384x128xbf16, #tpu.memory_space<vmem>>, vector<1x384x128xbf16>
    %23 = vector.shape_cast %22 : vector<1x384x128xbf16> to vector<384x128xbf16>
    %cst_9 = arith.constant dense<0.000000e+00> : vector<432x128xf32>
    %24 = tpu.matmul %21, %23, %cst_9 {dimension_numbers = #tpu.dot_dimension_numbers<[1], [0], [0], [1], [0, 0, 1, 1], [], []>} : vector<432x384xbf16>, vector<384x128xbf16>, vector<432x128xf32> -> vector<432x128xf32>
    %25 = arith.addf %20, %24 : vector<432x128xf32>
    %26 = vector.extract_strided_slice %14 {offsets = [48, 0], sizes = [432, 384], strides = [1, 1]} : vector<480x384xbf16> to vector<432x384xbf16>
    %c2 = arith.constant 2 : index
    %c0_10 = arith.constant 0 : index
    %c0_11 = arith.constant 0 : index
    %27 = vector.load %arg3[%c2, %c0_10, %c0_11] : memref<3x384x128xbf16, #tpu.memory_space<vmem>>, vector<1x384x128xbf16>
    %28 = vector.shape_cast %27 : vector<1x384x128xbf16> to vector<384x128xbf16>
    %cst_12 = arith.constant dense<0.000000e+00> : vector<432x128xf32>
    %29 = tpu.matmul %26, %28, %cst_12 {dimension_numbers = #tpu.dot_dimension_numbers<[1], [0], [0], [1], [0, 0, 1, 1], [], []>} : vector<432x384xbf16>, vector<384x128xbf16>, vector<432x128xf32> -> vector<432x128xf32>
    %30 = arith.addf %25, %29 : vector<432x128xf32>
    %c0_13 = arith.constant 0 : index
    %c0_14 = arith.constant 0 : index
    %31 = vector.load %arg4[%c0_13, %c0_14] : memref<1x128xf32, #tpu.memory_space<vmem>>, vector<1x128xf32>
    %32 = vector.shape_cast %31 : vector<1x128xf32> to vector<128xf32>
    %33 = vector.shape_cast %32 : vector<128xf32> to vector<1x128xf32>
    %34 = vector.broadcast %33 : vector<1x128xf32> to vector<432x128xf32>
    %35 = arith.mulf %30, %34 : vector<432x128xf32>
    %c0_15 = arith.constant 0 : index
    %c0_16 = arith.constant 0 : index
    %36 = vector.load %arg5[%c0_15, %c0_16] : memref<1x128xf32, #tpu.memory_space<vmem>>, vector<1x128xf32>
    %37 = vector.shape_cast %36 : vector<1x128xf32> to vector<128xf32>
    %38 = vector.shape_cast %37 : vector<128xf32> to vector<1x128xf32>
    %39 = vector.broadcast %38 : vector<1x128xf32> to vector<432x128xf32>
    %40 = arith.addf %35, %39 : vector<432x128xf32>
    %cst_17 = arith.constant 0.000000e+00 : f32
    %41 = vector.broadcast %cst_17 : f32 to vector<432x128xf32>
    %42 = arith.maximumf %40, %41 : vector<432x128xf32>
    %43 = vector.shape_cast %42 : vector<432x128xf32> to vector<18x24x128xf32>
    %44 = tpu.iota {dimensions = array<i32: 1>} : vector<18x24x128xi32>
    %c16_i32_18 = arith.constant 16 : i32
    %45 = vector.broadcast %c16_i32_18 : i32 to vector<18x24x128xi32>
    %46 = arith.cmpi slt, %44, %45 : vector<18x24x128xi32>
    %cst_19 = arith.constant 0.000000e+00 : f32
    %47 = vector.broadcast %cst_19 : f32 to vector<18x24x128xf32>
    %48 = arith.select %46, %43, %47 : vector<18x24x128xi1>, vector<18x24x128xf32>
    %49 = arith.truncf %48 : vector<18x24x128xf32> to vector<18x24x128xbf16>
    %c0_20 = arith.constant 0 : index
    %c0_21 = arith.constant 0 : index
    %c0_22 = arith.constant 0 : index
    %50 = vector.load %arg10[%c0_20, %c0_21, %c0_22] : memref<18x24x128xbf16, #tpu.memory_space<vmem>>, vector<18x24x128xbf16>
    tpu.vector_store %arg10[%c0_20, %c0_21, %c0_22], %49 {strides = array<i32>} : memref<18x24x128xbf16, #tpu.memory_space<vmem>>, vector<18x24x128xbf16>,
    %c0_i32 = arith.constant 0 : i32
    %51 = arith.cmpi eq, %arg1, %c0_i32 : i32
    %52 = arith.extui %51 : i1 to i32
    %c0_i32_23 = arith.constant 0 : i32
    %53 = arith.cmpi ne, %52, %c0_i32_23 : i32
    scf.if %53 {
      %cst_55 = arith.constant 0.000000e+00 : bf16
      %109 = vector.broadcast %cst_55 : bf16 to vector<24x128xbf16>
      %c0_56 = arith.constant 0 : index
      %c0_57 = arith.constant 0 : index
      %c0_58 = arith.constant 0 : index
      %110 = vector.load %arg10[%c0_56, %c0_57, %c0_58] : memref<18x24x128xbf16, #tpu.memory_space<vmem>>, vector<1x24x128xbf16>
      %111 = vector.shape_cast %110 : vector<1x24x128xbf16> to vector<24x128xbf16>
      %112 = vector.shape_cast %109 : vector<24x128xbf16> to vector<1x24x128xbf16>
      tpu.vector_store %arg10[%c0_56, %c0_57, %c0_58], %112 {strides = array<i32>} : memref<18x24x128xbf16, #tpu.memory_space<vmem>>, vector<1x24x128xbf16>,
    } else {
    }
    %c0_i32_24 = arith.constant 0 : i32
    %54 = arith.cmpi eq, %arg1, %c0_i32_24 : i32
    %55 = arith.extui %54 : i1 to i32
    %c0_i32_25 = arith.constant 0 : i32
    %56 = arith.cmpi ne, %55, %c0_i32_25 : i32
    scf.if %56 {
      %cst_55 = arith.constant 0.000000e+00 : bf16
      %109 = vector.broadcast %cst_55 : bf16 to vector<24x128xbf16>
      %c17 = arith.constant 17 : index
      %c0_56 = arith.constant 0 : index
      %c0_57 = arith.constant 0 : index
      %110 = vector.load %arg10[%c17, %c0_56, %c0_57] : memref<18x24x128xbf16, #tpu.memory_space<vmem>>, vector<1x24x128xbf16>
      %111 = vector.shape_cast %110 : vector<1x24x128xbf16> to vector<24x128xbf16>
      %112 = vector.shape_cast %109 : vector<24x128xbf16> to vector<1x24x128xbf16>
      tpu.vector_store %arg10[%c17, %c0_56, %c0_57], %112 {strides = array<i32>} : memref<18x24x128xbf16, #tpu.memory_space<vmem>>, vector<1x24x128xbf16>,
    } else {
    }
    %c0_26 = arith.constant 0 : index
    %c0_27 = arith.constant 0 : index
    %c0_28 = arith.constant 0 : index
    %57 = vector.load %arg10[%c0_26, %c0_27, %c0_28] : memref<18x24x128xbf16, #tpu.memory_space<vmem>>, vector<18x24x128xbf16>
    %58 = vector.shape_cast %57 : vector<18x24x128xbf16> to vector<432x128xbf16>
    %59 = arith.extf %58 : vector<432x128xbf16> to vector<432x128xf32>
    %cst_29 = arith.constant 0.000000e+00 : f32
    %60 = vector.broadcast %cst_29 : f32 to vector<1x128xf32>
    %61 = vector.extract_strided_slice %59 {offsets = [0, 0], sizes = [431, 128], strides = [1, 1]} : vector<432x128xf32> to vector<431x128xf32>
    %62 = tpu.concatenate %60, %61 in 0 : vector<1x128xf32>, vector<431x128xf32> -> vector<432x128xf32>
    %63 = arith.truncf %62 : vector<432x128xf32> to vector<432x128xbf16>
    %64 = vector.extract_strided_slice %59 {offsets = [1, 0], sizes = [431, 128], strides = [1, 1]} : vector<432x128xf32> to vector<431x128xf32>
    %65 = tpu.concatenate %64, %60 in 0 : vector<431x128xf32>, vector<1x128xf32> -> vector<432x128xf32>
    %66 = arith.truncf %65 : vector<432x128xf32> to vector<432x128xbf16>
    %67 = tpu.concatenate %63, %58, %66 in 1 : vector<432x128xbf16>, vector<432x128xbf16>, vector<432x128xbf16> -> vector<432x384xbf16>
    %cst_30 = arith.constant 0.000000e+00 : f32
    %68 = vector.broadcast %cst_30 : f32 to vector<384x128xf32>
    %69 = vector.extract_strided_slice %67 {offsets = [0, 0], sizes = [384, 384], strides = [1, 1]} : vector<432x384xbf16> to vector<384x384xbf16>
    %c0_31 = arith.constant 0 : index
    %c0_32 = arith.constant 0 : index
    %c0_33 = arith.constant 0 : index
    %70 = vector.load %arg6[%c0_31, %c0_32, %c0_33] : memref<3x384x128xbf16, #tpu.memory_space<vmem>>, vector<1x384x128xbf16>
    %71 = vector.shape_cast %70 : vector<1x384x128xbf16> to vector<384x128xbf16>
    %cst_34 = arith.constant dense<0.000000e+00> : vector<384x128xf32>
    %72 = tpu.matmul %69, %71, %cst_34 {dimension_numbers = #tpu.dot_dimension_numbers<[1], [0], [0], [1], [0, 0, 1, 1], [], []>} : vector<384x384xbf16>, vector<384x128xbf16>, vector<384x128xf32> -> vector<384x128xf32>
    %73 = arith.addf %68, %72 : vector<384x128xf32>
    %74 = vector.extract_strided_slice %67 {offsets = [24, 0], sizes = [384, 384], strides = [1, 1]} : vector<432x384xbf16> to vector<384x384xbf16>
    %c1_35 = arith.constant 1 : index
    %c0_36 = arith.constant 0 : index
    %c0_37 = arith.constant 0 : index
    %75 = vector.load %arg6[%c1_35, %c0_36, %c0_37] : memref<3x384x128xbf16, #tpu.memory_space<vmem>>, vector<1x384x128xbf16>
    %76 = vector.shape_cast %75 : vector<1x384x128xbf16> to vector<384x128xbf16>
    %cst_38 = arith.constant dense<0.000000e+00> : vector<384x128xf32>
    %77 = tpu.matmul %74, %76, %cst_38 {dimension_numbers = #tpu.dot_dimension_numbers<[1], [0], [0], [1], [0, 0, 1, 1], [], []>} : vector<384x384xbf16>, vector<384x128xbf16>, vector<384x128xf32> -> vector<384x128xf32>
    %78 = arith.addf %73, %77 : vector<384x128xf32>
    %79 = vector.extract_strided_slice %67 {offsets = [48, 0], sizes = [384, 384], strides = [1, 1]} : vector<432x384xbf16> to vector<384x384xbf16>
    %c2_39 = arith.constant 2 : index
    %c0_40 = arith.constant 0 : index
    %c0_41 = arith.constant 0 : index
    %80 = vector.load %arg6[%c2_39, %c0_40, %c0_41] : memref<3x384x128xbf16, #tpu.memory_space<vmem>>, vector<1x384x128xbf16>
    %81 = vector.shape_cast %80 : vector<1x384x128xbf16> to vector<384x128xbf16>
    %cst_42 = arith.constant dense<0.000000e+00> : vector<384x128xf32>
    %82 = tpu.matmul %79, %81, %cst_42 {dimension_numbers = #tpu.dot_dimension_numbers<[1], [0], [0], [1], [0, 0, 1, 1], [], []>} : vector<384x384xbf16>, vector<384x128xbf16>, vector<384x128xf32> -> vector<384x128xf32>
    %83 = arith.addf %78, %82 : vector<384x128xf32>
    %c2_i32 = arith.constant 2 : i32
    %84 = arith.addi %1, %c2_i32 : i32
    %c0_43 = arith.constant 0 : index
    %85 = arith.index_cast %84 : i32 to index
    %c0_44 = arith.constant 0 : index
    %c0_45 = arith.constant 0 : index
    %86 = vector.load %arg2[%c0_43, %85, %c0_44, %c0_45] : memref<1x20x24x128xbf16, #tpu.memory_space<vmem>>, vector<1x16x24x128xbf16>
    %87 = vector.shape_cast %86 : vector<1x16x24x128xbf16> to vector<16x24x128xbf16>
    %88 = arith.extf %87 : vector<16x24x128xbf16> to vector<16x24x128xf32>
    %c0_46 = arith.constant 0 : index
    %c0_47 = arith.constant 0 : index
    %89 = vector.load %arg7[%c0_46, %c0_47] : memref<1x128xf32, #tpu.memory_space<vmem>>, vector<1x128xf32>
    %90 = vector.shape_cast %89 : vector<1x128xf32> to vector<128xf32>
    %91 = vector.shape_cast %90 : vector<128xf32> to vector<1x128xf32>
    %92 = vector.broadcast %91 : vector<1x128xf32> to vector<384x128xf32>
    %93 = arith.mulf %83, %92 : vector<384x128xf32>
    %c0_48 = arith.constant 0 : index
    %c0_49 = arith.constant 0 : index
    %94 = vector.load %arg8[%c0_48, %c0_49] : memref<1x128xf32, #tpu.memory_space<vmem>>, vector<1x128xf32>
    %95 = vector.shape_cast %94 : vector<1x128xf32> to vector<128xf32>
    %96 = vector.shape_cast %95 : vector<128xf32> to vector<1x128xf32>
    %97 = vector.broadcast %96 : vector<1x128xf32> to vector<384x128xf32>
    %98 = arith.addf %93, %97 : vector<384x128xf32>
    %99 = vector.shape_cast %88 : vector<16x24x128xf32> to vector<384x128xf32>
    %100 = arith.addf %98, %99 : vector<384x128xf32>
    %cst_50 = arith.constant 0.000000e+00 : f32
    %101 = vector.broadcast %cst_50 : f32 to vector<384x128xf32>
    %102 = arith.maximumf %100, %101 : vector<384x128xf32>
    %103 = vector.shape_cast %102 : vector<384x128xf32> to vector<16x24x128xf32>
    %104 = vector.extract_strided_slice %103 {offsets = [0, 0, 0], sizes = [16, 16, 128], strides = [1, 1, 1]} : vector<16x24x128xf32> to vector<16x16x128xf32>
    %105 = arith.truncf %104 : vector<16x16x128xf32> to vector<16x16x128xbf16>
    %c0_51 = arith.constant 0 : index
    %c0_52 = arith.constant 0 : index
    %c0_53 = arith.constant 0 : index
    %c0_54 = arith.constant 0 : index
    %106 = vector.load %arg9[%c0_51, %c0_52, %c0_53, %c0_54] : memref<1x16x16x128xbf16, #tpu.memory_space<vmem>>, vector<1x16x16x128xbf16>
    %107 = vector.shape_cast %106 : vector<1x16x16x128xbf16> to vector<16x16x128xbf16>
    %108 = vector.shape_cast %105 : vector<16x16x128xbf16> to vector<1x16x16x128xbf16>
    tpu.vector_store %arg9[%c0_51, %c0_52, %c0_53, %c0_54], %108 {strides = array<i32>} : memref<1x16x16x128xbf16, #tpu.memory_space<vmem>>, vector<1x16x16x128xbf16>,
    return
  }
  func.func @transform_0(%arg0: i32, %arg1: i32) -> (i32, i32, i32, i32) {
    %c0_i32 = arith.constant 0 : i32
    %c0_i32_0 = arith.constant 0 : i32
    %c0_i32_1 = arith.constant 0 : i32
    %c0_i32_2 = arith.constant 0 : i32
    return %arg0, %c0_i32, %c0_i32_0, %c0_i32_1 : i32, i32, i32, i32
  }
  func.func @transform_1(%arg0: i32, %arg1: i32) -> (i32, i32, i32) {
    %c0_i32 = arith.constant 0 : i32
    %c0_i32_0 = arith.constant 0 : i32
    %c0_i32_1 = arith.constant 0 : i32
    %c0_i32_2 = arith.constant 0 : i32
    return %c0_i32, %c0_i32_0, %c0_i32_1 : i32, i32, i32
  }
  func.func @transform_2(%arg0: i32, %arg1: i32) -> (i32, i32) {
    %c0_i32 = arith.constant 0 : i32
    %c0_i32_0 = arith.constant 0 : i32
    %c0_i32_1 = arith.constant 0 : i32
    return %c0_i32, %c0_i32_0 : i32, i32
  }
  func.func @transform_3(%arg0: i32, %arg1: i32) -> (i32, i32) {
    %c0_i32 = arith.constant 0 : i32
    %c0_i32_0 = arith.constant 0 : i32
    %c0_i32_1 = arith.constant 0 : i32
    return %c0_i32, %c0_i32_0 : i32, i32
  }
  func.func @transform_4(%arg0: i32, %arg1: i32) -> (i32, i32, i32) {
    %c0_i32 = arith.constant 0 : i32
    %c0_i32_0 = arith.constant 0 : i32
    %c0_i32_1 = arith.constant 0 : i32
    %c0_i32_2 = arith.constant 0 : i32
    return %c0_i32, %c0_i32_0, %c0_i32_1 : i32, i32, i32
  }
  func.func @transform_5(%arg0: i32, %arg1: i32) -> (i32, i32) {
    %c0_i32 = arith.constant 0 : i32
    %c0_i32_0 = arith.constant 0 : i32
    %c0_i32_1 = arith.constant 0 : i32
    return %c0_i32, %c0_i32_0 : i32, i32
  }
  func.func @transform_6(%arg0: i32, %arg1: i32) -> (i32, i32) {
    %c0_i32 = arith.constant 0 : i32
    %c0_i32_0 = arith.constant 0 : i32
    %c0_i32_1 = arith.constant 0 : i32
    return %c0_i32, %c0_i32_0 : i32, i32
  }
  func.func @transform_7(%arg0: i32, %arg1: i32) -> (i32, i32, i32, i32) {
    %c0_i32 = arith.constant 0 : i32
    %c0_i32_0 = arith.constant 0 : i32
    %c0_i32_1 = arith.constant 0 : i32
    return %arg0, %arg1, %c0_i32, %c0_i32_0 : i32, i32, i32, i32
  }
}

</mosaic_0001>

<llo_original>
// kernel: tpu_custom_call.1
$region0: #{tpu_custom_call.1}
  #allocation0 [shape = 'u32[]', space=smem, size = 0x4, offset = 0x4, fixed_abs, tag = 'smem constant byte address 0x4 - core index']
  #allocation1 [shape = 'u32[144,128]{1,0:T(1,128)}', space=vmem, size = 0x12000, scoped, tag = 'internal scratch']
  #allocation2 [shape = 'bf16[18,24,128]{2,1,0:T(8,128)(2,1)}', space=vmem, size = 0x1b000, scoped, tag = 'scratch operand']
  %s0 = inlined_call_operand.hbm [shape: bf16[2,20,24,128], index: 0, kind: input, shape index: {}]
  %s1 = inlined_call_operand.hbm [shape: bf16[3,384,128], index: 1, kind: input, shape index: {}]
  %s2 = inlined_call_operand.vmem [shape: f32[1,128], index: 2, kind: input, shape index: {}]
  %s3 = inlined_call_operand.vmem [shape: f32[1,128], index: 3, kind: input, shape index: {}]
  %s4 = inlined_call_operand.hbm [shape: bf16[3,384,128], index: 4, kind: input, shape index: {}]
  %s5 = inlined_call_operand.vmem [shape: f32[1,128], index: 5, kind: input, shape index: {}]
  %s6 = inlined_call_operand.vmem [shape: f32[1,128], index: 6, kind: input, shape index: {}]
  %s7 = inlined_call_operand.hbm [shape: bf16[2,16,16,128], index: 7, kind: output, shape index: {}]
  %s8 = sld [smem:[#allocation0]]
  $region77: #{tpu_custom_call.1} parent=0
    _
  %s10 = ssub.s32 1, %s8
  %s11 = scalar_select 0, %s10, %s8
  $region1: #{tpu_custom_call.1} parent=0
    #allocation3 [shape = 'u8[245760]{0}', space=vmem, size = 0x3c000, scoped, tag = 'input window, operand 0']
    #allocation4 [shape = 's32[2]{0}', space=sflag, size = 0x8, scoped, tag = 'scoped memory for tpu_custom_call.1']
    #allocation5 [shape = 's32[2]{0}', space=sflag, size = 0x8, scoped, tag = 'scoped memory for tpu_custom_call.1']
    #allocation6 [shape = 'u8[294912]{0}', space=vmem, size = 0x48000, scoped, tag = 'input window, operand 1, single buffered']
    #allocation7 [shape = 's32[1]{0}', space=sflag, size = 0x4, scoped, tag = 'scoped memory for tpu_custom_call.1']
    #allocation8 [shape = 'u8[294912]{0}', space=vmem, size = 0x48000, scoped, tag = 'input window, operand 4, single buffered']
    #allocation9 [shape = 'u8[131072]{0}', space=vmem, size = 0x20000, scoped, tag = 'output window, operand 0']
    %12 = vsyncpa [#allocation4], 0
    %s13 = scalar_lea.sflag [#allocation4], 1
    %14 = vsyncpa %s13, 0
    %15 = vsyncpa [#allocation7], 0
    %16 = vsyncpa [#allocation5], 0
    %s17 = scalar_lea.sflag [#allocation5], 1
    %18 = vsyncpa %s17, 0
    loop: start=0, step=1, limit=4
    $region2: #{tpu_custom_call.1} parent=1 // loop_pre_header
      _
    $region3: #{tpu_custom_call.1} parent=1 // loop_header
      %s20 = sphi 0, %s24
      %p21 = scmp.ge.s32.totalorder %s20, 4
      %s27 = sphi 0, %s39
      %s28 = sphi 0, %s35
      %s29 = sphi 0, %s27
      %s30 = sphi 0, %s28
      %s31 = sphi 0, %s29
      %s32 = sphi 0, %s30
      %s42 = sphi 0, %s44
      %s45 = sphi 0, %s42
      %s46 = sphi 0, %s45
      %s62 = sphi 0, %s46
      %s66 = sphi 0, %s66
      %s68 = sphi 0, %s66
      %s69 = sphi 0, %s68
      %s83 = sphi 0, %s69
      %s87 = sphi 0, %s87
      %s89 = sphi 0, %s87
      %s90 = sphi 0, %s89
      %s104 = sphi 0, %s90
      %s108 = sphi 0, %s108
      %s110 = sphi 0, %s108
      %s111 = sphi 0, %s110
      %s125 = sphi 0, %s111
      %s129 = sphi 0, %s129
      %s131 = sphi 0, %s129
      %s132 = sphi 0, %s131
      %s146 = sphi 0, %s132
      %s150 = sphi 0, %s150
      %s152 = sphi 0, %s150
      %s153 = sphi 0, %s152
      %s167 = sphi 0, %s153
      %s171 = sphi 0, %s171
      %s173 = sphi 0, %s171
      %s174 = sphi 0, %s173
      %s188 = sphi 0, %s174
      %s196 = sphi 0, %s198
      %s199 = sphi 0, %s196
      %s200 = sphi 0, %s199
      %s216 = sphi 0, %s200
    $region4: #{tpu_custom_call.1} parent=1 // loop_header_branch
      %23 = sbr.rel (%p21) target = $region8
    $region5: #{tpu_custom_call.1} parent=1 // loop_body
      %s25 = ssub.s32 %s20, 1
      %s26 = ssub.s32 %s20, 2
      %s33 = sadd.s32 1, %s28
      %p34 = scmp.ge.s32.totalorder %s33, 1
      %s35 = scalar_select %p34, 0, %s33
      %s36 = sadd.s32 1, %s27
      %s37 = scalar_select %p34, %s36, %s27
      %p38 = scmp.ge.s32.totalorder %s37, 2
      %s39 = scalar_select %p38, 0, %s37
      %s40 = ssub.s32 %s27, %s39
      %p41 = scmp.eq.s32.totalorder %s40, 0
      %s43 = sadd.s32 %s42, 1
      %s44 = scalar_select %p41, %s42, %s43
      %p47 = pneg %p41
      %p48 = scmp.eq.s32.totalorder %s20, 1
      %p49 = por %p47, %p48
      %p50 = scmp.ne.s32.totalorder %s42, %s45
      %p51 = scmp.eq.s32.totalorder %s20, 0
      %p52 = por %p50, %p51
      %p53 = scmp.ne.s32.totalorder %s42, %s45
      %p54 = scmp.eq.s32.totalorder %s25, 1
      %p55 = por %p53, %p54
      %p56 = scmp.ne.s32.totalorder %s45, %s46
      %p57 = scmp.eq.s32.totalorder %s25, 0
      %p58 = por %p56, %p57
      %p59 = scmp.ne.s32.totalorder %s45, %s46
      %p60 = scmp.eq.s32.totalorder %s26, 1
      %p61 = por %p59, %p60
      %p63 = scmp.ne.s32.totalorder %s46, %s62
      %p64 = scmp.eq.s32.totalorder %s26, 0
      %p65 = por %p63, %p64
      %s67 = sadd.s32 %s66, 1
      %p70 = scmp.eq.s32.totalorder %s20, 1
      %p71 = scmp.ne.s32.totalorder %s66, %s68
      %p72 = scmp.eq.s32.totalorder %s20, 0
      %p73 = por %p71, %p72
      %p74 = scmp.ne.s32.totalorder %s66, %s68
      %p75 = scmp.eq.s32.totalorder %s25, 1
      %p76 = por %p74, %p75
      %p77 = scmp.ne.s32.totalorder %s68, %s69
      %p78 = scmp.eq.s32.totalorder %s25, 0
      %p79 = por %p77, %p78
      %p80 = scmp.ne.s32.totalorder %s68, %s69
      %p81 = scmp.eq.s32.totalorder %s26, 1
      %p82 = por %p80, %p81
      %p84 = scmp.ne.s32.totalorder %s69, %s83
      %p85 = scmp.eq.s32.totalorder %s26, 0
      %p86 = por %p84, %p85
      %s88 = sadd.s32 %s87, 1
      %p91 = scmp.eq.s32.totalorder %s20, 1
      %p92 = scmp.ne.s32.totalorder %s87, %s89
      %p93 = scmp.eq.s32.totalorder %s20, 0
      %p94 = por %p92, %p93
      %p95 = scmp.ne.s32.totalorder %s87, %s89
      %p96 = scmp.eq.s32.totalorder %s25, 1
      %p97 = por %p95, %p96
      %p98 = scmp.ne.s32.totalorder %s89, %s90
      %p99 = scmp.eq.s32.totalorder %s25, 0
      %p100 = por %p98, %p99
      %p101 = scmp.ne.s32.totalorder %s89, %s90
      %p102 = scmp.eq.s32.totalorder %s26, 1
      %p103 = por %p101, %p102
      %p105 = scmp.ne.s32.totalorder %s90, %s104
      %p106 = scmp.eq.s32.totalorder %s26, 0
      %p107 = por %p105, %p106
      %s109 = sadd.s32 %s108, 1
      %p112 = scmp.eq.s32.totalorder %s20, 1
      %p113 = scmp.ne.s32.totalorder %s108, %s110
      %p114 = scmp.eq.s32.totalorder %s20, 0
      %p115 = por %p113, %p114
      %p116 = scmp.ne.s32.totalorder %s108, %s110
      %p117 = scmp.eq.s32.totalorder %s25, 1
      %p118 = por %p116, %p117
      %p119 = scmp.ne.s32.totalorder %s110, %s111
      %p120 = scmp.eq.s32.totalorder %s25, 0
      %p121 = por %p119, %p120
      %p122 = scmp.ne.s32.totalorder %s110, %s111
      %p123 = scmp.eq.s32.totalorder %s26, 1
      %p124 = por %p122, %p123
      %p126 = scmp.ne.s32.totalorder %s111, %s125
      %p127 = scmp.eq.s32.totalorder %s26, 0
      %p128 = por %p126, %p127
      %s130 = sadd.s32 %s129, 1
      %p133 = scmp.eq.s32.totalorder %s20, 1
      %p134 = scmp.ne.s32.totalorder %s129, %s131
      %p135 = scmp.eq.s32.totalorder %s20, 0
      %p136 = por %p134, %p135
      %p137 = scmp.ne.s32.totalorder %s129, %s131
      %p138 = scmp.eq.s32.totalorder %s25, 1
      %p139 = por %p137, %p138
      %p140 = scmp.ne.s32.totalorder %s131, %s132
      %p141 = scmp.eq.s32.totalorder %s25, 0
      %p142 = por %p140, %p141
      %p143 = scmp.ne.s32.totalorder %s131, %s132
      %p144 = scmp.eq.s32.totalorder %s26, 1
      %p145 = por %p143, %p144
      %p147 = scmp.ne.s32.totalorder %s132, %s146
      %p148 = scmp.eq.s32.totalorder %s26, 0
      %p149 = por %p147, %p148
      %s151 = sadd.s32 %s150, 1
      %p154 = scmp.eq.s32.totalorder %s20, 1
      %p155 = scmp.ne.s32.totalorder %s150, %s152
      %p156 = scmp.eq.s32.totalorder %s20, 0
      %p157 = por %p155, %p156
      %p158 = scmp.ne.s32.totalorder %s150, %s152
      %p159 = scmp.eq.s32.totalorder %s25, 1
      %p160 = por %p158, %p159
      %p161 = scmp.ne.s32.totalorder %s152, %s153
      %p162 = scmp.eq.s32.totalorder %s25, 0
      %p163 = por %p161, %p162
      %p164 = scmp.ne.s32.totalorder %s152, %s153
      %p165 = scmp.eq.s32.totalorder %s26, 1
      %p166 = por %p164, %p165
      %p168 = scmp.ne.s32.totalorder %s153, %s167
      %p169 = scmp.eq.s32.totalorder %s26, 0
      %p170 = por %p168, %p169
      %s172 = sadd.s32 %s171, 1
      %p175 = scmp.eq.s32.totalorder %s20, 1
      %p176 = scmp.ne.s32.totalorder %s171, %s173
      %p177 = scmp.eq.s32.totalorder %s20, 0
      %p178 = por %p176, %p177
      %p179 = scmp.ne.s32.totalorder %s171, %s173
      %p180 = scmp.eq.s32.totalorder %s25, 1
      %p181 = por %p179, %p180
      %p182 = scmp.ne.s32.totalorder %s173, %s174
      %p183 = scmp.eq.s32.totalorder %s25, 0
      %p184 = por %p182, %p183
      %p185 = scmp.ne.s32.totalorder %s173, %s174
      %p186 = scmp.eq.s32.totalorder %s26, 1
      %p187 = por %p185, %p186
      %p189 = scmp.ne.s32.totalorder %s174, %s188
      %p190 = scmp.eq.s32.totalorder %s26, 0
      %p191 = por %p189, %p190
      %s192 = ssub.s32 %s27, %s39
      %s193 = ssub.s32 %s28, %s35
      %s194 = sor.u32 %s192, %s193
      %p195 = scmp.eq.s32.totalorder %s194, 0
      %s197 = sadd.s32 %s196, 1
      %s198 = scalar_select %p195, %s196, %s197
      %p201 = pneg %p195
      %p202 = scmp.eq.s32.totalorder %s20, 1
      %p203 = por %p201, %p202
      %p204 = scmp.ne.s32.totalorder %s196, %s199
      %p205 = scmp.eq.s32.totalorder %s20, 0
      %p206 = por %p204, %p205
      %p207 = scmp.ne.s32.totalorder %s196, %s199
      %p208 = scmp.eq.s32.totalorder %s25, 1
      %p209 = por %p207, %p208
      %p210 = scmp.ne.s32.totalorder %s199, %s200
      %p211 = scmp.eq.s32.totalorder %s25, 0
      %p212 = por %p210, %p211
      %p213 = scmp.ne.s32.totalorder %s199, %s200
      %p214 = scmp.eq.s32.totalorder %s26, 1
      %p215 = por %p213, %p214
      %p217 = scmp.ne.s32.totalorder %s200, %s216
      %p218 = scmp.eq.s32.totalorder %s26, 0
      %p219 = por %p217, %p218
      %p220 = scmp.le.s32.totalorder 1, %s20
      %p221 = scmp.lt.s32.totalorder %s20, 3
      %p222 = pnand %p220, %p221
      %p223 = pneg %p222
      // Predicated region
      $region9: #{tpu_custom_call.1} parent=5 // pred_check
        _
      $region10: #{tpu_custom_call.1} parent=5 // pred_check_branch
        %225 = sbr.rel (%p222) target = $region12
      $region11: #{tpu_custom_call.1} parent=5 // pred_region
        %s226 = ssub.s32 %s20, 1
        // Predicated region
        $region13: #{tpu_custom_call.1} parent=11 // pred_check
          %p227 = pneg %p79
        $region14: #{tpu_custom_call.1} parent=11 // pred_check_branch
          %229 = sbr.rel (%p227) target = $region16
        $region15: #{tpu_custom_call.1} parent=11 // pred_region
          %s231 = ssub.s32 9216, 9216
          %232 = vsyncadd [#allocation7], %s231
          %s233 = sshll.u32 [#allocation6], 4
          %s234 = int_to_ptr.vmem [resolvable:$true] %s233
          %239 = dma.hbm_to_vmem [thread:$0]  %s1, 9216, %s234, [#allocation7], 64, 64, 4
        $region16: #{tpu_custom_call.1} parent=11 // pred_fallthru
          _
        // Predicated region
        $region17: #{tpu_custom_call.1} parent=11 // pred_check
          %p240 = pneg %p100
        $region18: #{tpu_custom_call.1} parent=11 // pred_check_branch
          %242 = sbr.rel (%p240) target = $region20
        $region19: #{tpu_custom_call.1} parent=11 // pred_region
          _
        $region20: #{tpu_custom_call.1} parent=11 // pred_fallthru
          _
        // Predicated region
        $region21: #{tpu_custom_call.1} parent=11 // pred_check
          %p243 = pneg %p121
        $region22: #{tpu_custom_call.1} parent=11 // pred_check_branch
          %245 = sbr.rel (%p243) target = $region24
        $region23: #{tpu_custom_call.1} parent=11 // pred_region
          _
        $region24: #{tpu_custom_call.1} parent=11 // pred_fallthru
          _
        // Predicated region
        $region25: #{tpu_custom_call.1} parent=11 // pred_check
          %p246 = pneg %p142
        $region26: #{tpu_custom_call.1} parent=11 // pred_check_branch
          %248 = sbr.rel (%p246) target = $region28
        $region27: #{tpu_custom_call.1} parent=11 // pred_region
          %s250 = ssub.s32 9216, 9216
          %251 = vsyncadd [#allocation7], %s250
          %s252 = sshll.u32 [#allocation8], 4
          %s253 = int_to_ptr.vmem [resolvable:$true] %s252
          %258 = dma.hbm_to_vmem [thread:$0]  %s4, 9216, %s253, [#allocation7], 64, 64, 4
        $region28: #{tpu_custom_call.1} parent=11 // pred_fallthru
          _
        // Predicated region
        $region29: #{tpu_custom_call.1} parent=11 // pred_check
          %p259 = pneg %p163
        $region30: #{tpu_custom_call.1} parent=11 // pred_check_branch
          %261 = sbr.rel (%p259) target = $region32
        $region31: #{tpu_custom_call.1} parent=11 // pred_region
          _
        $region32: #{tpu_custom_call.1} parent=11 // pred_fallthru
          _
        // Predicated region
        $region33: #{tpu_custom_call.1} parent=11 // pred_check
          %p262 = pneg %p184
        $region34: #{tpu_custom_call.1} parent=11 // pred_check_branch
          %264 = sbr.rel (%p262) target = $region36
        $region35: #{tpu_custom_call.1} parent=11 // pred_region
          _
        $region36: #{tpu_custom_call.1} parent=11 // pred_fallthru
          _
      $region12: #{tpu_custom_call.1} parent=5 // pred_fallthru
        _
      %p265 = scmp.lt.s32.totalorder %s20, 2
      // Predicated region
      $region37: #{tpu_custom_call.1} parent=5 // pred_check
        %p266 = pneg %p265
      $region38: #{tpu_custom_call.1} parent=5 // pred_check_branch
        %268 = sbr.rel (%p266) target = $region40
      $region39: #{tpu_custom_call.1} parent=5 // pred_region
        // Predicated region
        $region41: #{tpu_custom_call.1} parent=39 // pred_check
          %p269 = pneg %p52
        $region42: #{tpu_custom_call.1} parent=39 // pred_check_branch
          %271 = sbr.rel (%p269) target = $region44
        $region43: #{tpu_custom_call.1} parent=39 // pred_region
          %s272 = sand.u32 %s42, 1
          %s273 = scalar_lea.sflag [#allocation4], %s272
          %s274 = sand.u32 %s42, 1
          %s275 = smul.addr %s274, 240
          %s276 = scalar_lea.vmem [#allocation3], %s275
          %s278 = ssub.s32 3840, 3840
          %279 = vsyncadd %s273, %s278
          %s280 = smul.addr %s27, 60
          %s281 = smul.addr %s280, 64
          %s282 = scalar_lea.hbm %s0, %s281
          %s283 = sshll.u32 %s276, 4
          %s284 = int_to_ptr.vmem [resolvable:$true] %s283
          %289 = dma.hbm_to_vmem [thread:$0]  %s282, 3840, %s284, %s273, 64, 64, 4
        $region44: #{tpu_custom_call.1} parent=39 // pred_fallthru
          _
      $region40: #{tpu_custom_call.1} parent=5 // pred_fallthru
        _
      %p290 = scmp.le.s32.totalorder 1, %s20
      %p291 = scmp.lt.s32.totalorder %s20, 3
      %p292 = pnand %p290, %p291
      %p293 = pneg %p292
      // Predicated region
      $region45: #{tpu_custom_call.1} parent=5 // pred_check
        _
      $region46: #{tpu_custom_call.1} parent=5 // pred_check_branch
        %295 = sbr.rel (%p292) target = $region48
      $region47: #{tpu_custom_call.1} parent=5 // pred_region
        %s296 = ssub.s32 %s20, 1
        %s297 = sand.u32 %s45, 1
        %s298 = scalar_lea.sflag [#allocation4], %s297
        %s299 = sand.u32 %s45, 1
        %s300 = smul.addr %s299, 240
        %s301 = scalar_lea.vmem [#allocation3], %s300
        // Predicated region
        $region49: #{tpu_custom_call.1} parent=47 // pred_check
          %p302 = pneg %p58
        $region50: #{tpu_custom_call.1} parent=47 // pred_check_branch
          %304 = sbr.rel (%p302) target = $region52
        $region51: #{tpu_custom_call.1} parent=47 // pred_region
          %305 = dma.done %s298, 3840
        $region52: #{tpu_custom_call.1} parent=47 // pred_fallthru
          _
        // Predicated region
        $region53: #{tpu_custom_call.1} parent=47 // pred_check
          %p306 = pneg %p79
        $region54: #{tpu_custom_call.1} parent=47 // pred_check_branch
          %308 = sbr.rel (%p306) target = $region56
        $region55: #{tpu_custom_call.1} parent=47 // pred_region
          %309 = dma.done [#allocation7], 9216
        $region56: #{tpu_custom_call.1} parent=47 // pred_fallthru
          _
        // Predicated region
        $region57: #{tpu_custom_call.1} parent=47 // pred_check
          %p310 = pneg %p142
        $region58: #{tpu_custom_call.1} parent=47 // pred_check_branch
          %312 = sbr.rel (%p310) target = $region60
        $region59: #{tpu_custom_call.1} parent=47 // pred_region
          %313 = dma.done [#allocation7], 9216
        $region60: #{tpu_custom_call.1} parent=47 // pred_fallthru
          _
        %s314 = sand.u32 %s45, 1
        %s315 = scalar_lea.sflag [#allocation4], %s314
        %s316 = sand.u32 %s45, 1
        %s317 = smul.addr %s316, 240
        %s318 = scalar_lea.vmem [#allocation3], %s317
        %p319 = pneg %p58
        %p320 = pneg %p55
        %p321 = pneg %p79
        %p322 = pneg %p76
        %p323 = pneg %p100
        %p324 = pneg %p97
        %p325 = pneg %p121
        %p326 = pneg %p118
        %p327 = pneg %p142
        %p328 = pneg %p139
        %p329 = pneg %p163
        %p330 = pneg %p160
        %p331 = pneg %p184
        %p332 = pneg %p181
        %p333 = pneg %p212
        %p334 = pneg %p209
        %s335 = sand.u32 %s199, 1
        %s336 = scalar_lea.sflag [#allocation5], %s335
        %s337 = sand.u32 %s199, 1
        %s338 = smul.addr %s337, 128
        %s339 = scalar_lea.vmem [#allocation9], %s338
        %s340 = smul.u32 16, %s30
        %s342 = smul.u32 %s30, 16
        %s343 = smul.u32 %s342, 3
        %s344 = smul.addr %s343, 4
        %s345 = scalar_lea.vmem %s301, %s344 [#allocation3]
        %v346 = vld [vmem:[%s345] sm:$0xf]
        %v347 = vld [vmem:[%s345 + $0x4] sm:$0xf]
        %v348 = vld [vmem:[%s345 + $0x8] sm:$0xf]
        %v349 = vld [vmem:[%s345 + $0xc] sm:$0xf]
        %v350 = vld [vmem:[%s345 + $0x10] sm:$0xf]
        %v351 = vld [vmem:[%s345 + $0x14] sm:$0xf]
        %v352 = vld [vmem:[%s345 + $0x18] sm:$0xf]
        %v353 = vld [vmem:[%s345 + $0x1c] sm:$0xf]
        %v354 = vld [vmem:[%s345 + $0x20] sm:$0xf]
        %v355 = vld [vmem:[%s345 + $0x24] sm:$0xf]
        %v356 = vld [vmem:[%s345 + $0x28] sm:$0xf]
        %v357 = vld [vmem:[%s345 + $0x2c] sm:$0xf]
        %v358 = vld [vmem:[%s345 + $0x30] sm:$0xf]
        %v359 = vld [vmem:[%s345 + $0x34] sm:$0xf]
        %v360 = vld [vmem:[%s345 + $0x38] sm:$0xf]
        %v361 = vld [vmem:[%s345 + $0x3c] sm:$0xf]
        %v362 = vld [vmem:[%s345 + $0x40] sm:$0xf]
        %v363 = vld [vmem:[%s345 + $0x44] sm:$0xf]
        %v364 = vld [vmem:[%s345 + $0x48] sm:$0xf]
        %v365 = vld [vmem:[%s345 + $0x4c] sm:$0xf]
        %v366 = vld [vmem:[%s345 + $0x50] sm:$0xf]
        %v367 = vld [vmem:[%s345 + $0x54] sm:$0xf]
        %v368 = vld [vmem:[%s345 + $0x58] sm:$0xf]
        %v369 = vld [vmem:[%s345 + $0x5c] sm:$0xf]
        %v370 = vld [vmem:[%s345 + $0x60] sm:$0xf]
        %v371 = vld [vmem:[%s345 + $0x64] sm:$0xf]
        %v372 = vld [vmem:[%s345 + $0x68] sm:$0xf]
        %v373 = vld [vmem:[%s345 + $0x6c] sm:$0xf]
        %v374 = vld [vmem:[%s345 + $0x70] sm:$0xf]
        %v375 = vld [vmem:[%s345 + $0x74] sm:$0xf]
        %v376 = vld [vmem:[%s345 + $0x78] sm:$0xf]
        %v377 = vld [vmem:[%s345 + $0x7c] sm:$0xf]
        %v378 = vld [vmem:[%s345 + $0x80] sm:$0xf]
        %v379 = vld [vmem:[%s345 + $0x84] sm:$0xf]
        %v380 = vld [vmem:[%s345 + $0x88] sm:$0xf]
        %v381 = vld [vmem:[%s345 + $0x8c] sm:$0xf]
        %v382 = vld [vmem:[%s345 + $0x90] sm:$0xf]
        %v383 = vld [vmem:[%s345 + $0x94] sm:$0xf]
        %v384 = vld [vmem:[%s345 + $0x98] sm:$0xf]
        %v385 = vld [vmem:[%s345 + $0x9c] sm:$0xf]
        %v386 = vld [vmem:[%s345 + $0xa0] sm:$0xf]
        %v387 = vld [vmem:[%s345 + $0xa4] sm:$0xf]
        %v388 = vld [vmem:[%s345 + $0xa8] sm:$0xf]
        %v389 = vld [vmem:[%s345 + $0xac] sm:$0xf]
        %v390 = vld [vmem:[%s345 + $0xb0] sm:$0xf]
        %v391 = vld [vmem:[%s345 + $0xb4] sm:$0xf]
        %v392 = vld [vmem:[%s345 + $0xb8] sm:$0xf]
        %v393 = vld [vmem:[%s345 + $0xbc] sm:$0xf]
        %v394 = vld [vmem:[%s345 + $0xc0] sm:$0xf]
        %v395 = vld [vmem:[%s345 + $0xc4] sm:$0xf]
        %v396 = vld [vmem:[%s345 + $0xc8] sm:$0xf]
        %v397 = vld [vmem:[%s345 + $0xcc] sm:$0xf]
        %v398 = vld [vmem:[%s345 + $0xd0] sm:$0xf]
        %v399 = vld [vmem:[%s345 + $0xd4] sm:$0xf]
        %v400 = vld [vmem:[%s345 + $0xd8] sm:$0xf]
        %v401 = vld [vmem:[%s345 + $0xdc] sm:$0xf]
        %v402 = vld [vmem:[%s345 + $0xe0] sm:$0xf]
        %v403 = vld [vmem:[%s345 + $0xe4] sm:$0xf]
        %v404 = vld [vmem:[%s345 + $0xe8] sm:$0xf]
        %v405 = vld [vmem:[%s345 + $0xec] sm:$0xf]
        %v406 = vunpack.c.l.bf16 %v346
        %v407 = vunpack.c.l.bf16 %v347
        %v408 = vunpack.c.l.bf16 %v348
        %v409 = vunpack.c.l.bf16 %v349
        %v410 = vunpack.c.l.bf16 %v350
        %v411 = vunpack.c.l.bf16 %v351
        %v412 = vunpack.c.l.bf16 %v352
        %v413 = vunpack.c.l.bf16 %v353
        %v414 = vunpack.c.l.bf16 %v354
        %v415 = vunpack.c.l.bf16 %v355
        %v416 = vunpack.c.l.bf16 %v356
        %v417 = vunpack.c.l.bf16 %v357
        %v418 = vunpack.c.l.bf16 %v358
        %v419 = vunpack.c.l.bf16 %v359
        %v420 = vunpack.c.l.bf16 %v360
        %v421 = vunpack.c.l.bf16 %v361
        %v422 = vunpack.c.l.bf16 %v362
        %v423 = vunpack.c.l.bf16 %v363
        %v424 = vunpack.c.l.bf16 %v364
        %v425 = vunpack.c.l.bf16 %v365
        %v426 = vunpack.c.l.bf16 %v366
        %v427 = vunpack.c.l.bf16 %v367
        %v428 = vunpack.c.l.bf16 %v368
        %v429 = vunpack.c.l.bf16 %v369
        %v430 = vunpack.c.l.bf16 %v370
        %v431 = vunpack.c.l.bf16 %v371
        %v432 = vunpack.c.l.bf16 %v372
        %v433 = vunpack.c.l.bf16 %v373
        %v434 = vunpack.c.l.bf16 %v374
        %v435 = vunpack.c.l.bf16 %v375
        %v436 = vunpack.c.l.bf16 %v376
        %v437 = vunpack.c.l.bf16 %v377
        %v438 = vunpack.c.l.bf16 %v378
        %v439 = vunpack.c.l.bf16 %v379
        %v440 = vunpack.c.l.bf16 %v380
        %v441 = vunpack.c.l.bf16 %v381
        %v442 = vunpack.c.l.bf16 %v382
        %v443 = vunpack.c.l.bf16 %v383
        %v444 = vunpack.c.l.bf16 %v384
        %v445 = vunpack.c.l.bf16 %v385
        %v446 = vunpack.c.l.bf16 %v386
        %v447 = vunpack.c.l.bf16 %v387
        %v448 = vunpack.c.l.bf16 %v388
        %v449 = vunpack.c.l.bf16 %v389
        %v450 = vunpack.c.l.bf16 %v390
        %v451 = vunpack.c.l.bf16 %v391
        %v452 = vunpack.c.l.bf16 %v392
        %v453 = vunpack.c.l.bf16 %v393
        %v454 = vunpack.c.l.bf16 %v394
        %v455 = vunpack.c.l.bf16 %v395
        %v456 = vunpack.c.l.bf16 %v396
        %v457 = vunpack.c.l.bf16 %v397
        %v458 = vunpack.c.l.bf16 %v398
        %v459 = vunpack.c.l.bf16 %v399
        %v460 = vunpack.c.l.bf16 %v400
        %v461 = vunpack.c.l.bf16 %v401
        %v462 = vunpack.c.l.bf16 %v402
        %v463 = vunpack.c.l.bf16 %v403
        %v464 = vunpack.c.l.bf16 %v404
        %v465 = vunpack.c.l.bf16 %v405
        %vm526 = vcmask 1040384
        %v527 = vrot.slane %v406, 7
        %v528 = vrot.slane %v407, 7
        %v529 = vsel %vm526, %v527, %v528
        %v530 = vrot.slane %v408, 7
        %v531 = vsel %vm526, %v528, %v530
        %v532 = vrot.slane %v409, 7
        %v533 = vsel %vm526, %v530, %v532
        %v534 = vrot.slane %v410, 7
        %v535 = vsel %vm526, %v532, %v534
        %v536 = vrot.slane %v411, 7
        %v537 = vsel %vm526, %v534, %v536
        %v538 = vrot.slane %v412, 7
        %v539 = vsel %vm526, %v536, %v538
        %v540 = vrot.slane %v413, 7
        %v541 = vsel %vm526, %v538, %v540
        %v542 = vrot.slane %v414, 7
        %v543 = vsel %vm526, %v540, %v542
        %v544 = vrot.slane %v415, 7
        %v545 = vsel %vm526, %v542, %v544
        %v546 = vrot.slane %v416, 7
        %v547 = vsel %vm526, %v544, %v546
        %v548 = vrot.slane %v417, 7
        %v549 = vsel %vm526, %v546, %v548
        %v550 = vrot.slane %v418, 7
        %v551 = vsel %vm526, %v548, %v550
        %v552 = vrot.slane %v419, 7
        %v553 = vsel %vm526, %v550, %v552
        %v554 = vrot.slane %v420, 7
        %v555 = vsel %vm526, %v552, %v554
        %v556 = vrot.slane %v421, 7
        %v557 = vsel %vm526, %v554, %v556
        %v558 = vrot.slane %v422, 7
        %v559 = vsel %vm526, %v556, %v558
        %v560 = vrot.slane %v423, 7
        %v561 = vsel %vm526, %v558, %v560
        %v562 = vrot.slane %v424, 7
        %v563 = vsel %vm526, %v560, %v562
        %v564 = vrot.slane %v425, 7
        %v565 = vsel %vm526, %v562, %v564
        %v566 = vrot.slane %v426, 7
        %v567 = vsel %vm526, %v564, %v566
        %v568 = vrot.slane %v427, 7
        %v569 = vsel %vm526, %v566, %v568
        %v570 = vrot.slane %v428, 7
        %v571 = vsel %vm526, %v568, %v570
        %v572 = vrot.slane %v429, 7
        %v573 = vsel %vm526, %v570, %v572
        %v574 = vrot.slane %v430, 7
        %v575 = vsel %vm526, %v572, %v574
        %v576 = vrot.slane %v431, 7
        %v577 = vsel %vm526, %v574, %v576
        %v578 = vrot.slane %v432, 7
        %v579 = vsel %vm526, %v576, %v578
        %v580 = vrot.slane %v433, 7
        %v581 = vsel %vm526, %v578, %v580
        %v582 = vrot.slane %v434, 7
        %v583 = vsel %vm526, %v580, %v582
        %v584 = vrot.slane %v435, 7
        %v585 = vsel %vm526, %v582, %v584
        %v586 = vrot.slane %v436, 7
        %v587 = vsel %vm526, %v584, %v586
        %v588 = vrot.slane %v437, 7
        %v589 = vsel %vm526, %v586, %v588
        %v590 = vrot.slane %v438, 7
        %v591 = vsel %vm526, %v588, %v590
        %v592 = vrot.slane %v439, 7
        %v593 = vsel %vm526, %v590, %v592
        %v594 = vrot.slane %v440, 7
        %v595 = vsel %vm526, %v592, %v594
        %v596 = vrot.slane %v441, 7
        %v597 = vsel %vm526, %v594, %v596
        %v598 = vrot.slane %v442, 7
        %v599 = vsel %vm526, %v596, %v598
        %v600 = vrot.slane %v443, 7
        %v601 = vsel %vm526, %v598, %v600
        %v602 = vrot.slane %v444, 7
        %v603 = vsel %vm526, %v600, %v602
        %v604 = vrot.slane %v445, 7
        %v605 = vsel %vm526, %v602, %v604
        %v606 = vrot.slane %v446, 7
        %v607 = vsel %vm526, %v604, %v606
        %v608 = vrot.slane %v447, 7
        %v609 = vsel %vm526, %v606, %v608
        %v610 = vrot.slane %v448, 7
        %v611 = vsel %vm526, %v608, %v610
        %v612 = vrot.slane %v449, 7
        %v613 = vsel %vm526, %v610, %v612
        %v614 = vrot.slane %v450, 7
        %v615 = vsel %vm526, %v612, %v614
        %v616 = vrot.slane %v451, 7
        %v617 = vsel %vm526, %v614, %v616
        %v618 = vrot.slane %v452, 7
        %v619 = vsel %vm526, %v616, %v618
        %v620 = vrot.slane %v453, 7
        %v621 = vsel %vm526, %v618, %v620
        %v622 = vrot.slane %v454, 7
        %v623 = vsel %vm526, %v620, %v622
        %v624 = vrot.slane %v455, 7
        %v625 = vsel %vm526, %v622, %v624
        %v626 = vrot.slane %v456, 7
        %v627 = vsel %vm526, %v624, %v626
        %v628 = vrot.slane %v457, 7
        %v629 = vsel %vm526, %v626, %v628
        %v630 = vrot.slane %v458, 7
        %v631 = vsel %vm526, %v628, %v630
        %v632 = vrot.slane %v459, 7
        %v633 = vsel %vm526, %v630, %v632
        %v634 = vrot.slane %v460, 7
        %v635 = vsel %vm526, %v632, %v634
        %v636 = vrot.slane %v461, 7
        %v637 = vsel %vm526, %v634, %v636
        %v638 = vrot.slane %v462, 7
        %v639 = vsel %vm526, %v636, %v638
        %v640 = vrot.slane %v463, 7
        %v641 = vsel %vm526, %v638, %v640
        %v642 = vrot.slane %v464, 7
        %v643 = vsel %vm526, %v640, %v642
        %v644 = vrot.slane %v465, 7
        %v645 = vsel %vm526, %v642, %v644
        %v706 = vsel %vm526, 0.0, %v527
        %v707 = vpack.c.bf16 %v529, %v706
        %v708 = vpack.c.bf16 %v533, %v531
        %v709 = vpack.c.bf16 %v537, %v535
        %v710 = vpack.c.bf16 %v541, %v539
        %v711 = vpack.c.bf16 %v545, %v543
        %v712 = vpack.c.bf16 %v549, %v547
        %v713 = vpack.c.bf16 %v553, %v551
        %v714 = vpack.c.bf16 %v557, %v555
        %v715 = vpack.c.bf16 %v561, %v559
        %v716 = vpack.c.bf16 %v565, %v563
        %v717 = vpack.c.bf16 %v569, %v567
        %v718 = vpack.c.bf16 %v573, %v571
        %v719 = vpack.c.bf16 %v577, %v575
        %v720 = vpack.c.bf16 %v581, %v579
        %v721 = vpack.c.bf16 %v585, %v583
        %v722 = vpack.c.bf16 %v589, %v587
        %v723 = vpack.c.bf16 %v593, %v591
        %v724 = vpack.c.bf16 %v597, %v595
        %v725 = vpack.c.bf16 %v601, %v599
        %v726 = vpack.c.bf16 %v605, %v603
        %v727 = vpack.c.bf16 %v609, %v607
        %v728 = vpack.c.bf16 %v613, %v611
        %v729 = vpack.c.bf16 %v617, %v615
        %v730 = vpack.c.bf16 %v621, %v619
        %v731 = vpack.c.bf16 %v625, %v623
        %v732 = vpack.c.bf16 %v629, %v627
        %v733 = vpack.c.bf16 %v633, %v631
        %v734 = vpack.c.bf16 %v637, %v635
        %v735 = vpack.c.bf16 %v641, %v639
        %v736 = vpack.c.bf16 %v645, %v643
        %vm737 = vcmask 1046528
        %v738 = vrot.slane %v406, 1
        %v739 = vrot.slane %v407, 1
        %v740 = vsel %vm737, %v738, %v739
        %v741 = vrot.slane %v408, 1
        %v742 = vsel %vm737, %v739, %v741
        %v743 = vrot.slane %v409, 1
        %v744 = vsel %vm737, %v741, %v743
        %v745 = vrot.slane %v410, 1
        %v746 = vsel %vm737, %v743, %v745
        %v747 = vrot.slane %v411, 1
        %v748 = vsel %vm737, %v745, %v747
        %v749 = vrot.slane %v412, 1
        %v750 = vsel %vm737, %v747, %v749
        %v751 = vrot.slane %v413, 1
        %v752 = vsel %vm737, %v749, %v751
        %v753 = vrot.slane %v414, 1
        %v754 = vsel %vm737, %v751, %v753
        %v755 = vrot.slane %v415, 1
        %v756 = vsel %vm737, %v753, %v755
        %v757 = vrot.slane %v416, 1
        %v758 = vsel %vm737, %v755, %v757
        %v759 = vrot.slane %v417, 1
        %v760 = vsel %vm737, %v757, %v759
        %v761 = vrot.slane %v418, 1
        %v762 = vsel %vm737, %v759, %v761
        %v763 = vrot.slane %v419, 1
        %v764 = vsel %vm737, %v761, %v763
        %v765 = vrot.slane %v420, 1
        %v766 = vsel %vm737, %v763, %v765
        %v767 = vrot.slane %v421, 1
        %v768 = vsel %vm737, %v765, %v767
        %v769 = vrot.slane %v422, 1
        %v770 = vsel %vm737, %v767, %v769
        %v771 = vrot.slane %v423, 1
        %v772 = vsel %vm737, %v769, %v771
        %v773 = vrot.slane %v424, 1
        %v774 = vsel %vm737, %v771, %v773
        %v775 = vrot.slane %v425, 1
        %v776 = vsel %vm737, %v773, %v775
        %v777 = vrot.slane %v426, 1
        %v778 = vsel %vm737, %v775, %v777
        %v779 = vrot.slane %v427, 1
        %v780 = vsel %vm737, %v777, %v779
        %v781 = vrot.slane %v428, 1
        %v782 = vsel %vm737, %v779, %v781
        %v783 = vrot.slane %v429, 1
        %v784 = vsel %vm737, %v781, %v783
        %v785 = vrot.slane %v430, 1
        %v786 = vsel %vm737, %v783, %v785
        %v787 = vrot.slane %v431, 1
        %v788 = vsel %vm737, %v785, %v787
        %v789 = vrot.slane %v432, 1
        %v790 = vsel %vm737, %v787, %v789
        %v791 = vrot.slane %v433, 1
        %v792 = vsel %vm737, %v789, %v791
        %v793 = vrot.slane %v434, 1
        %v794 = vsel %vm737, %v791, %v793
        %v795 = vrot.slane %v435, 1
        %v796 = vsel %vm737, %v793, %v795
        %v797 = vrot.slane %v436, 1
        %v798 = vsel %vm737, %v795, %v797
        %v799 = vrot.slane %v437, 1
        %v800 = vsel %vm737, %v797, %v799
        %v801 = vrot.slane %v438, 1
        %v802 = vsel %vm737, %v799, %v801
        %v803 = vrot.slane %v439, 1
        %v804 = vsel %vm737, %v801, %v803
        %v805 = vrot.slane %v440, 1
        %v806 = vsel %vm737, %v803, %v805
        %v807 = vrot.slane %v441, 1
        %v808 = vsel %vm737, %v805, %v807
        %v809 = vrot.slane %v442, 1
        %v810 = vsel %vm737, %v807, %v809
        %v811 = vrot.slane %v443, 1
        %v812 = vsel %vm737, %v809, %v811
        %v813 = vrot.slane %v444, 1
        %v814 = vsel %vm737, %v811, %v813
        %v815 = vrot.slane %v445, 1
        %v816 = vsel %vm737, %v813, %v815
        %v817 = vrot.slane %v446, 1
        %v818 = vsel %vm737, %v815, %v817
        %v819 = vrot.slane %v447, 1
        %v820 = vsel %vm737, %v817, %v819
        %v821 = vrot.slane %v448, 1
        %v822 = vsel %vm737, %v819, %v821
        %v823 = vrot.slane %v449, 1
        %v824 = vsel %vm737, %v821, %v823
        %v825 = vrot.slane %v450, 1
        %v826 = vsel %vm737, %v823, %v825
        %v827 = vrot.slane %v451, 1
        %v828 = vsel %vm737, %v825, %v827
        %v829 = vrot.slane %v452, 1
        %v830 = vsel %vm737, %v827, %v829
        %v831 = vrot.slane %v453, 1
        %v832 = vsel %vm737, %v829, %v831
        %v833 = vrot.slane %v454, 1
        %v834 = vsel %vm737, %v831, %v833
        %v835 = vrot.slane %v455, 1
        %v836 = vsel %vm737, %v833, %v835
        %v837 = vrot.slane %v456, 1
        %v838 = vsel %vm737, %v835, %v837
        %v839 = vrot.slane %v457, 1
        %v840 = vsel %vm737, %v837, %v839
        %v841 = vrot.slane %v458, 1
        %v842 = vsel %vm737, %v839, %v841
        %v843 = vrot.slane %v459, 1
        %v844 = vsel %vm737, %v841, %v843
        %v845 = vrot.slane %v460, 1
        %v846 = vsel %vm737, %v843, %v845
        %v847 = vrot.slane %v461, 1
        %v848 = vsel %vm737, %v845, %v847
        %v849 = vrot.slane %v462, 1
        %v850 = vsel %vm737, %v847, %v849
        %v851 = vrot.slane %v463, 1
        %v852 = vsel %vm737, %v849, %v851
        %v853 = vrot.slane %v464, 1
        %v854 = vsel %vm737, %v851, %v853
        %v855 = vrot.slane %v465, 1
        %v856 = vsel %vm737, %v853, %v855
        %v917 = vsel %vm737, %v855, 0.0
        %v918 = vpack.c.bf16 %v742, %v740
        %v919 = vpack.c.bf16 %v746, %v744
        %v920 = vpack.c.bf16 %v750, %v748
        %v921 = vpack.c.bf16 %v754, %v752
        %v922 = vpack.c.bf16 %v758, %v756
        %v923 = vpack.c.bf16 %v762, %v760
        %v924 = vpack.c.bf16 %v766, %v764
        %v925 = vpack.c.bf16 %v770, %v768
        %v926 = vpack.c.bf16 %v774, %v772
        %v927 = vpack.c.bf16 %v778, %v776
        %v928 = vpack.c.bf16 %v782, %v780
        %v929 = vpack.c.bf16 %v786, %v784
        %v930 = vpack.c.bf16 %v790, %v788
        %v931 = vpack.c.bf16 %v794, %v792
        %v932 = vpack.c.bf16 %v798, %v796
        %v933 = vpack.c.bf16 %v802, %v800
        %v934 = vpack.c.bf16 %v806, %v804
        %v935 = vpack.c.bf16 %v810, %v808
        %v936 = vpack.c.bf16 %v814, %v812
        %v937 = vpack.c.bf16 %v818, %v816
        %v938 = vpack.c.bf16 %v822, %v820
        %v939 = vpack.c.bf16 %v826, %v824
        %v940 = vpack.c.bf16 %v830, %v828
        %v941 = vpack.c.bf16 %v834, %v832
        %v942 = vpack.c.bf16 %v838, %v836
        %v943 = vpack.c.bf16 %v842, %v840
        %v944 = vpack.c.bf16 %v846, %v844
        %v945 = vpack.c.bf16 %v850, %v848
        %v946 = vpack.c.bf16 %v854, %v852
        %v947 = vpack.c.bf16 %v917, %v856
        %v1008 = vunpack.c.l.b16 %v346
        %v1009 = vunpack.c.l.b16 %v347
        %v1010 = vunpack.c.l.b16 %v348
        %v1011 = vunpack.c.l.b16 %v349
        %v1012 = vunpack.c.l.b16 %v350
        %v1013 = vunpack.c.l.b16 %v351
        %v1014 = vunpack.c.l.b16 %v352
        %v1015 = vunpack.c.l.b16 %v353
        %v1016 = vunpack.c.l.b16 %v354
        %v1017 = vunpack.c.l.b16 %v355
        %v1018 = vunpack.c.l.b16 %v356
        %v1019 = vunpack.c.l.b16 %v357
        %v1020 = vunpack.c.l.b16 %v358
        %v1021 = vunpack.c.l.b16 %v359
        %v1022 = vunpack.c.l.b16 %v360
        %v1023 = vunpack.c.l.b16 %v361
        %v1024 = vunpack.c.l.b16 %v362
        %v1025 = vunpack.c.l.b16 %v363
        %v1026 = vunpack.c.l.b16 %v364
        %v1027 = vunpack.c.l.b16 %v365
        %v1028 = vunpack.c.l.b16 %v366
        %v1029 = vunpack.c.l.b16 %v367
        %v1030 = vunpack.c.l.b16 %v368
        %v1031 = vunpack.c.l.b16 %v369
        %v1032 = vunpack.c.l.b16 %v370
        %v1033 = vunpack.c.l.b16 %v371
        %v1034 = vunpack.c.l.b16 %v372
        %v1035 = vunpack.c.l.b16 %v373
        %v1036 = vunpack.c.l.b16 %v374
        %v1037 = vunpack.c.l.b16 %v375
        %v1038 = vunpack.c.l.b16 %v376
        %v1039 = vunpack.c.l.b16 %v377
        %v1040 = vunpack.c.l.b16 %v378
        %v1041 = vunpack.c.l.b16 %v379
        %v1042 = vunpack.c.l.b16 %v380
        %v1043 = vunpack.c.l.b16 %v381
        %v1044 = vunpack.c.l.b16 %v382
        %v1045 = vunpack.c.l.b16 %v383
        %v1046 = vunpack.c.l.b16 %v384
        %v1047 = vunpack.c.l.b16 %v385
        %v1048 = vunpack.c.l.b16 %v386
        %v1049 = vunpack.c.l.b16 %v387
        %v1050 = vunpack.c.l.b16 %v388
        %v1051 = vunpack.c.l.b16 %v389
        %v1052 = vunpack.c.l.b16 %v390
        %v1053 = vunpack.c.l.b16 %v391
        %v1054 = vunpack.c.l.b16 %v392
        %v1055 = vunpack.c.l.b16 %v393
        %v1056 = vunpack.c.l.b16 %v394
        %v1057 = vunpack.c.l.b16 %v395
        %v1058 = vunpack.c.l.b16 %v396
        %v1059 = vunpack.c.l.b16 %v397
        %v1060 = vunpack.c.l.b16 %v398
        %v1061 = vunpack.c.l.b16 %v399
        %v1062 = vunpack.c.l.b16 %v400
        %v1063 = vunpack.c.l.b16 %v401
        %v1064 = vunpack.c.l.b16 %v402
        %v1065 = vunpack.c.l.b16 %v403
        %v1066 = vunpack.c.l.b16 %v404
        %v1067 = vunpack.c.l.b16 %v405
        %v1068 = vpack.c.b16 %v1009, %v1008
        %v1069 = vpack.c.b16 %v1011, %v1010
        %v1070 = vpack.c.b16 %v1013, %v1012
        %v1071 = vpack.c.b16 %v1015, %v1014
        %v1072 = vpack.c.b16 %v1017, %v1016
        %v1073 = vpack.c.b16 %v1019, %v1018
        %v1074 = vpack.c.b16 %v1021, %v1020
        %v1075 = vpack.c.b16 %v1023, %v1022
        %v1076 = vpack.c.b16 %v1025, %v1024
        %v1077 = vpack.c.b16 %v1027, %v1026
        %v1078 = vpack.c.b16 %v1029, %v1028
        %v1079 = vpack.c.b16 %v1031, %v1030
        %v1080 = vpack.c.b16 %v1033, %v1032
        %v1081 = vpack.c.b16 %v1035, %v1034
        %v1082 = vpack.c.b16 %v1037, %v1036
        %v1083 = vpack.c.b16 %v1039, %v1038
        %v1084 = vpack.c.b16 %v1041, %v1040
        %v1085 = vpack.c.b16 %v1043, %v1042
        %v1086 = vpack.c.b16 %v1045, %v1044
        %v1087 = vpack.c.b16 %v1047, %v1046
        %v1088 = vpack.c.b16 %v1049, %v1048
        %v1089 = vpack.c.b16 %v1051, %v1050
        %v1090 = vpack.c.b16 %v1053, %v1052
        %v1091 = vpack.c.b16 %v1055, %v1054
        %v1092 = vpack.c.b16 %v1057, %v1056
        %v1093 = vpack.c.b16 %v1059, %v1058
        %v1094 = vpack.c.b16 %v1061, %v1060
        %v1095 = vpack.c.b16 %v1063, %v1062
        %v1096 = vpack.c.b16 %v1065, %v1064
        %v1097 = vpack.c.b16 %v1067, %v1066
        %v1128 = vld [vmem:[#allocation6] sm:$0xf]
        %v1129 = vld [vmem:[#allocation6 + $0x4] sm:$0xf]
        %v1130 = vld [vmem:[#allocation6 + $0x8] sm:$0xf]
        %v1131 = vld [vmem:[#allocation6 + $0xc] sm:$0xf]
        %v1132 = vld [vmem:[#allocation6 + $0x10] sm:$0xf]
        %v1133 = vld [vmem:[#allocation6 + $0x14] sm:$0xf]
        %v1134 = vld [vmem:[#allocation6 + $0x18] sm:$0xf]
        %v1135 = vld [vmem:[#allocation6 + $0x1c] sm:$0xf]
        %v1136 = vld [vmem:[#allocation6 + $0x20] sm:$0xf]
        %v1137 = vld [vmem:[#allocation6 + $0x24] sm:$0xf]
        %v1138 = vld [vmem:[#allocation6 + $0x28] sm:$0xf]
        %v1139 = vld [vmem:[#allocation6 + $0x2c] sm:$0xf]
        %v1140 = vld [vmem:[#allocation6 + $0x30] sm:$0xf]
        %v1141 = vld [vmem:[#allocation6 + $0x34] sm:$0xf]
        %v1142 = vld [vmem:[#allocation6 + $0x38] sm:$0xf]
        %v1143 = vld [vmem:[#allocation6 + $0x3c] sm:$0xf]
        %v1144 = vld [vmem:[#allocation6 + $0x40] sm:$0xf]
        %v1145 = vld [vmem:[#allocation6 + $0x44] sm:$0xf]
        %v1146 = vld [vmem:[#allocation6 + $0x48] sm:$0xf]
        %v1147 = vld [vmem:[#allocation6 + $0x4c] sm:$0xf]
        %v1148 = vld [vmem:[#allocation6 + $0x50] sm:$0xf]
        %v1149 = vld [vmem:[#allocation6 + $0x54] sm:$0xf]
        %v1150 = vld [vmem:[#allocation6 + $0x58] sm:$0xf]
        %v1151 = vld [vmem:[#allocation6 + $0x5c] sm:$0xf]
        %v1152 = vld [vmem:[#allocation6 + $0x60] sm:$0xf]
        %v1153 = vld [vmem:[#allocation6 + $0x64] sm:$0xf]
        %v1154 = vld [vmem:[#allocation6 + $0x68] sm:$0xf]
        %v1155 = vld [vmem:[#allocation6 + $0x6c] sm:$0xf]
        %v1156 = vld [vmem:[#allocation6 + $0x70] sm:$0xf]
        %v1157 = vld [vmem:[#allocation6 + $0x74] sm:$0xf]
        %v1158 = vld [vmem:[#allocation6 + $0x78] sm:$0xf]
        %v1159 = vld [vmem:[#allocation6 + $0x7c] sm:$0xf]
        %v1160 = vld [vmem:[#allocation6 + $0x80] sm:$0xf]
        %v1161 = vld [vmem:[#allocation6 + $0x84] sm:$0xf]
        %v1162 = vld [vmem:[#allocation6 + $0x88] sm:$0xf]
        %v1163 = vld [vmem:[#allocation6 + $0x8c] sm:$0xf]
        %v1164 = vld [vmem:[#allocation6 + $0x90] sm:$0xf]
        %v1165 = vld [vmem:[#allocation6 + $0x94] sm:$0xf]
        %v1166 = vld [vmem:[#allocation6 + $0x98] sm:$0xf]
        %v1167 = vld [vmem:[#allocation6 + $0x9c] sm:$0xf]
        %v1168 = vld [vmem:[#allocation6 + $0xa0] sm:$0xf]
        %v1169 = vld [vmem:[#allocation6 + $0xa4] sm:$0xf]
        %v1170 = vld [vmem:[#allocation6 + $0xa8] sm:$0xf]
        %v1171 = vld [vmem:[#allocation6 + $0xac] sm:$0xf]
        %v1172 = vld [vmem:[#allocation6 + $0xb0] sm:$0xf]
        %v1173 = vld [vmem:[#allocation6 + $0xb4] sm:$0xf]
        %v1174 = vld [vmem:[#allocation6 + $0xb8] sm:$0xf]
        %v1175 = vld [vmem:[#allocation6 + $0xbc] sm:$0xf]
        %s1176 = scalar_lea.vmem [#allocation6], 192
        %v1177 = vld [vmem:[%s1176] sm:$0xf]
        %v1178 = vld [vmem:[%s1176 + $0x4] sm:$0xf]
        %v1179 = vld [vmem:[%s1176 + $0x8] sm:$0xf]
        %v1180 = vld [vmem:[%s1176 + $0xc] sm:$0xf]
        %v1181 = vld [vmem:[%s1176 + $0x10] sm:$0xf]
        %v1182 = vld [vmem:[%s1176 + $0x14] sm:$0xf]
        %v1183 = vld [vmem:[%s1176 + $0x18] sm:$0xf]
        %v1184 = vld [vmem:[%s1176 + $0x1c] sm:$0xf]
        %v1185 = vld [vmem:[%s1176 + $0x20] sm:$0xf]
        %v1186 = vld [vmem:[%s1176 + $0x24] sm:$0xf]
        %v1187 = vld [vmem:[%s1176 + $0x28] sm:$0xf]
        %v1188 = vld [vmem:[%s1176 + $0x2c] sm:$0xf]
        %v1189 = vld [vmem:[%s1176 + $0x30] sm:$0xf]
        %v1190 = vld [vmem:[%s1176 + $0x34] sm:$0xf]
        %v1191 = vld [vmem:[%s1176 + $0x38] sm:$0xf]
        %v1192 = vld [vmem:[%s1176 + $0x3c] sm:$0xf]
        %v1193 = vld [vmem:[%s1176 + $0x40] sm:$0xf]
        %v1194 = vld [vmem:[%s1176 + $0x44] sm:$0xf]
        %v1195 = vld [vmem:[%s1176 + $0x48] sm:$0xf]
        %v1196 = vld [vmem:[%s1176 + $0x4c] sm:$0xf]
        %v1197 = vld [vmem:[%s1176 + $0x50] sm:$0xf]
        %v1198 = vld [vmem:[%s1176 + $0x54] sm:$0xf]
        %v1199 = vld [vmem:[%s1176 + $0x58] sm:$0xf]
        %v1200 = vld [vmem:[%s1176 + $0x5c] sm:$0xf]
        %v1201 = vld [vmem:[%s1176 + $0x60] sm:$0xf]
        %v1202 = vld [vmem:[%s1176 + $0x64] sm:$0xf]
        %v1203 = vld [vmem:[%s1176 + $0x68] sm:$0xf]
        %v1204 = vld [vmem:[%s1176 + $0x6c] sm:$0xf]
        %v1205 = vld [vmem:[%s1176 + $0x70] sm:$0xf]
        %v1206 = vld [vmem:[%s1176 + $0x74] sm:$0xf]
        %v1207 = vld [vmem:[%s1176 + $0x78] sm:$0xf]
        %v1208 = vld [vmem:[%s1176 + $0x7c] sm:$0xf]
        %v1209 = vld [vmem:[%s1176 + $0x80] sm:$0xf]
        %v1210 = vld [vmem:[%s1176 + $0x84] sm:$0xf]
        %v1211 = vld [vmem:[%s1176 + $0x88] sm:$0xf]
        %v1212 = vld [vmem:[%s1176 + $0x8c] sm:$0xf]
        %v1213 = vld [vmem:[%s1176 + $0x90] sm:$0xf]
        %v1214 = vld [vmem:[%s1176 + $0x94] sm:$0xf]
        %v1215 = vld [vmem:[%s1176 + $0x98] sm:$0xf]
        %v1216 = vld [vmem:[%s1176 + $0x9c] sm:$0xf]
        %v1217 = vld [vmem:[%s1176 + $0xa0] sm:$0xf]
        %v1218 = vld [vmem:[%s1176 + $0xa4] sm:$0xf]
        %v1219 = vld [vmem:[%s1176 + $0xa8] sm:$0xf]
        %v1220 = vld [vmem:[%s1176 + $0xac] sm:$0xf]
        %v1221 = vld [vmem:[%s1176 + $0xb0] sm:$0xf]
        %v1222 = vld [vmem:[%s1176 + $0xb4] sm:$0xf]
        %v1223 = vld [vmem:[%s1176 + $0xb8] sm:$0xf]
        %v1224 = vld [vmem:[%s1176 + $0xbc] sm:$0xf]
        %vm1281 = vcmask 1043456
        %v1282 = vrot.slane %v708, 4
        %v1283 = vrot.slane %v709, 4
        %v1284 = vsel %vm1281, %v1282, %v1283
        %v1285 = vrot.slane %v1069, 4
        %v1286 = vrot.slane %v1070, 4
        %v1287 = vsel %vm1281, %v1285, %v1286
        %v1288 = vrot.slane %v919, 4
        %v1289 = vrot.slane %v920, 4
        %v1290 = vsel %vm1281, %v1288, %v1289
        %v1291 = vrot.slane %v710, 4
        %v1292 = vsel %vm1281, %v1283, %v1291
        %v1293 = vrot.slane %v1071, 4
        %v1294 = vsel %vm1281, %v1286, %v1293
        %v1295 = vrot.slane %v921, 4
        %v1296 = vsel %vm1281, %v1289, %v1295
        %v1297 = vrot.slane %v711, 4
        %v1298 = vsel %vm1281, %v1291, %v1297
        %v1299 = vrot.slane %v1072, 4
        %v1300 = vsel %vm1281, %v1293, %v1299
        %v1301 = vrot.slane %v922, 4
        %v1302 = vsel %vm1281, %v1295, %v1301
        %v1303 = vrot.slane %v712, 4
        %v1304 = vsel %vm1281, %v1297, %v1303
        %v1305 = vrot.slane %v1073, 4
        %v1306 = vsel %vm1281, %v1299, %v1305
        %v1307 = vrot.slane %v923, 4
        %v1308 = vsel %vm1281, %v1301, %v1307
        %v1309 = vrot.slane %v713, 4
        %v1310 = vsel %vm1281, %v1303, %v1309
        %v1311 = vrot.slane %v1074, 4
        %v1312 = vsel %vm1281, %v1305, %v1311
        %v1313 = vrot.slane %v924, 4
        %v1314 = vsel %vm1281, %v1307, %v1313
        %v1315 = vrot.slane %v714, 4
        %v1316 = vsel %vm1281, %v1309, %v1315
        %v1317 = vrot.slane %v1075, 4
        %v1318 = vsel %vm1281, %v1311, %v1317
        %v1319 = vrot.slane %v925, 4
        %v1320 = vsel %vm1281, %v1313, %v1319
        %v1321 = vrot.slane %v715, 4
        %v1322 = vsel %vm1281, %v1315, %v1321
        %v1323 = vrot.slane %v1076, 4
        %v1324 = vsel %vm1281, %v1317, %v1323
        %v1325 = vrot.slane %v926, 4
        %v1326 = vsel %vm1281, %v1319, %v1325
        %v1327 = vrot.slane %v716, 4
        %v1328 = vsel %vm1281, %v1321, %v1327
        %v1329 = vrot.slane %v1077, 4
        %v1330 = vsel %vm1281, %v1323, %v1329
        %v1331 = vrot.slane %v927, 4
        %v1332 = vsel %vm1281, %v1325, %v1331
        %v1333 = vrot.slane %v717, 4
        %v1334 = vsel %vm1281, %v1327, %v1333
        %v1335 = vrot.slane %v1078, 4
        %v1336 = vsel %vm1281, %v1329, %v1335
        %v1337 = vrot.slane %v928, 4
        %v1338 = vsel %vm1281, %v1331, %v1337
        %v1339 = vrot.slane %v718, 4
        %v1340 = vsel %vm1281, %v1333, %v1339
        %v1341 = vrot.slane %v1079, 4
        %v1342 = vsel %vm1281, %v1335, %v1341
        %v1343 = vrot.slane %v929, 4
        %v1344 = vsel %vm1281, %v1337, %v1343
        %v1345 = vrot.slane %v719, 4
        %v1346 = vsel %vm1281, %v1339, %v1345
        %v1347 = vrot.slane %v1080, 4
        %v1348 = vsel %vm1281, %v1341, %v1347
        %v1349 = vrot.slane %v930, 4
        %v1350 = vsel %vm1281, %v1343, %v1349
        %v1351 = vrot.slane %v720, 4
        %v1352 = vsel %vm1281, %v1345, %v1351
        %v1353 = vrot.slane %v1081, 4
        %v1354 = vsel %vm1281, %v1347, %v1353
        %v1355 = vrot.slane %v931, 4
        %v1356 = vsel %vm1281, %v1349, %v1355
        %v1357 = vrot.slane %v721, 4
        %v1358 = vsel %vm1281, %v1351, %v1357
        %v1359 = vrot.slane %v1082, 4
        %v1360 = vsel %vm1281, %v1353, %v1359
        %v1361 = vrot.slane %v932, 4
        %v1362 = vsel %vm1281, %v1355, %v1361
        %v1363 = vrot.slane %v722, 4
        %v1364 = vsel %vm1281, %v1357, %v1363
        %v1365 = vrot.slane %v1083, 4
        %v1366 = vsel %vm1281, %v1359, %v1365
        %v1367 = vrot.slane %v933, 4
        %v1368 = vsel %vm1281, %v1361, %v1367
        %v1369 = vrot.slane %v723, 4
        %v1370 = vsel %vm1281, %v1363, %v1369
        %v1371 = vrot.slane %v1084, 4
        %v1372 = vsel %vm1281, %v1365, %v1371
        %v1373 = vrot.slane %v934, 4
        %v1374 = vsel %vm1281, %v1367, %v1373
        %v1375 = vrot.slane %v724, 4
        %v1376 = vsel %vm1281, %v1369, %v1375
        %v1377 = vrot.slane %v1085, 4
        %v1378 = vsel %vm1281, %v1371, %v1377
        %v1379 = vrot.slane %v935, 4
        %v1380 = vsel %vm1281, %v1373, %v1379
        %v1381 = vrot.slane %v725, 4
        %v1382 = vsel %vm1281, %v1375, %v1381
        %v1383 = vrot.slane %v1086, 4
        %v1384 = vsel %vm1281, %v1377, %v1383
        %v1385 = vrot.slane %v936, 4
        %v1386 = vsel %vm1281, %v1379, %v1385
        %v1387 = vrot.slane %v726, 4
        %v1388 = vsel %vm1281, %v1381, %v1387
        %v1389 = vrot.slane %v1087, 4
        %v1390 = vsel %vm1281, %v1383, %v1389
        %v1391 = vrot.slane %v937, 4
        %v1392 = vsel %vm1281, %v1385, %v1391
        %v1393 = vrot.slane %v727, 4
        %v1394 = vsel %vm1281, %v1387, %v1393
        %v1395 = vrot.slane %v1088, 4
        %v1396 = vsel %vm1281, %v1389, %v1395
        %v1397 = vrot.slane %v938, 4
        %v1398 = vsel %vm1281, %v1391, %v1397
        %v1399 = vrot.slane %v728, 4
        %v1400 = vsel %vm1281, %v1393, %v1399
        %v1401 = vrot.slane %v1089, 4
        %v1402 = vsel %vm1281, %v1395, %v1401
        %v1403 = vrot.slane %v939, 4
        %v1404 = vsel %vm1281, %v1397, %v1403
        %v1405 = vrot.slane %v729, 4
        %v1406 = vsel %vm1281, %v1399, %v1405
        %v1407 = vrot.slane %v1090, 4
        %v1408 = vsel %vm1281, %v1401, %v1407
        %v1409 = vrot.slane %v940, 4
        %v1410 = vsel %vm1281, %v1403, %v1409
        %v1411 = vrot.slane %v730, 4
        %v1412 = vsel %vm1281, %v1405, %v1411
        %v1413 = vrot.slane %v1091, 4
        %v1414 = vsel %vm1281, %v1407, %v1413
        %v1415 = vrot.slane %v941, 4
        %v1416 = vsel %vm1281, %v1409, %v1415
        %v1417 = vrot.slane %v731, 4
        %v1418 = vsel %vm1281, %v1411, %v1417
        %v1419 = vrot.slane %v1092, 4
        %v1420 = vsel %vm1281, %v1413, %v1419
        %v1421 = vrot.slane %v942, 4
        %v1422 = vsel %vm1281, %v1415, %v1421
        %v1423 = vrot.slane %v732, 4
        %v1424 = vsel %vm1281, %v1417, %v1423
        %v1425 = vrot.slane %v1093, 4
        %v1426 = vsel %vm1281, %v1419, %v1425
        %v1427 = vrot.slane %v943, 4
        %v1428 = vsel %vm1281, %v1421, %v1427
        %v1429 = vrot.slane %v733, 4
        %v1430 = vsel %vm1281, %v1423, %v1429
        %v1431 = vrot.slane %v1094, 4
        %v1432 = vsel %vm1281, %v1425, %v1431
        %v1433 = vrot.slane %v944, 4
        %v1434 = vsel %vm1281, %v1427, %v1433
        %v1435 = vrot.slane %v734, 4
        %v1436 = vsel %vm1281, %v1429, %v1435
        %v1437 = vrot.slane %v1095, 4
        %v1438 = vsel %vm1281, %v1431, %v1437
        %v1439 = vrot.slane %v945, 4
        %v1440 = vsel %vm1281, %v1433, %v1439
        %v1441 = vrot.slane %v735, 4
        %v1442 = vsel %vm1281, %v1435, %v1441
        %v1443 = vrot.slane %v1096, 4
        %v1444 = vsel %vm1281, %v1437, %v1443
        %v1445 = vrot.slane %v946, 4
        %v1446 = vsel %vm1281, %v1439, %v1445
        %v1576 = vunpack.c.l.b16 %v1177
        %v1577 = vunpack.c.l.b16 %v1178
        %v1578 = vunpack.c.l.b16 %v1179
        %v1579 = vunpack.c.l.b16 %v1180
        %v1580 = vunpack.c.l.b16 %v1181
        %v1581 = vunpack.c.l.b16 %v1182
        %v1582 = vunpack.c.l.b16 %v1183
        %v1583 = vunpack.c.l.b16 %v1184
        %v1584 = vunpack.c.l.b16 %v1185
        %v1585 = vunpack.c.l.b16 %v1186
        %v1586 = vunpack.c.l.b16 %v1187
        %v1587 = vunpack.c.l.b16 %v1188
        %v1588 = vunpack.c.l.b16 %v1189
        %v1589 = vunpack.c.l.b16 %v1190
        %v1590 = vunpack.c.l.b16 %v1191
        %v1591 = vunpack.c.l.b16 %v1192
        %v1592 = vunpack.c.l.b16 %v1193
        %v1593 = vunpack.c.l.b16 %v1194
        %v1594 = vunpack.c.l.b16 %v1195
        %v1595 = vunpack.c.l.b16 %v1196
        %v1596 = vunpack.c.l.b16 %v1197
        %v1597 = vunpack.c.l.b16 %v1198
        %v1598 = vunpack.c.l.b16 %v1199
        %v1599 = vunpack.c.l.b16 %v1200
        %v1600 = vunpack.c.l.b16 %v1201
        %v1601 = vunpack.c.l.b16 %v1202
        %v1602 = vunpack.c.l.b16 %v1203
        %v1603 = vunpack.c.l.b16 %v1204
        %v1604 = vunpack.c.l.b16 %v1205
        %v1605 = vunpack.c.l.b16 %v1206
        %v1606 = vunpack.c.l.b16 %v1207
        %v1607 = vunpack.c.l.b16 %v1208
        %v1608 = vunpack.c.l.b16 %v1209
        %v1609 = vunpack.c.l.b16 %v1210
        %v1610 = vunpack.c.l.b16 %v1211
        %v1611 = vunpack.c.l.b16 %v1212
        %v1612 = vunpack.c.l.b16 %v1213
        %v1613 = vunpack.c.l.b16 %v1214
        %v1614 = vunpack.c.l.b16 %v1215
        %v1615 = vunpack.c.l.b16 %v1216
        %v1616 = vunpack.c.l.b16 %v1217
        %v1617 = vunpack.c.l.b16 %v1218
        %v1618 = vunpack.c.l.b16 %v1219
        %v1619 = vunpack.c.l.b16 %v1220
        %v1620 = vunpack.c.l.b16 %v1221
        %v1621 = vunpack.c.l.b16 %v1222
        %v1622 = vunpack.c.l.b16 %v1223
        %v1623 = vunpack.c.l.b16 %v1224
        %v1624 = vpack.c.b16 %v1577, %v1576
        %v1625 = vpack.c.b16 %v1579, %v1578
        %v1626 = vpack.c.b16 %v1581, %v1580
        %v1627 = vpack.c.b16 %v1583, %v1582
        %v1628 = vpack.c.b16 %v1585, %v1584
        %v1629 = vpack.c.b16 %v1587, %v1586
        %v1630 = vpack.c.b16 %v1589, %v1588
        %v1631 = vpack.c.b16 %v1591, %v1590
        %v1632 = vpack.c.b16 %v1593, %v1592
        %v1633 = vpack.c.b16 %v1595, %v1594
        %v1634 = vpack.c.b16 %v1597, %v1596
        %v1635 = vpack.c.b16 %v1599, %v1598
        %v1636 = vpack.c.b16 %v1601, %v1600
        %v1637 = vpack.c.b16 %v1603, %v1602
        %v1638 = vpack.c.b16 %v1605, %v1604
        %v1639 = vpack.c.b16 %v1607, %v1606
        %v1640 = vpack.c.b16 %v1609, %v1608
        %v1641 = vpack.c.b16 %v1611, %v1610
        %v1642 = vpack.c.b16 %v1613, %v1612
        %v1643 = vpack.c.b16 %v1615, %v1614
        %v1644 = vpack.c.b16 %v1617, %v1616
        %v1645 = vpack.c.b16 %v1619, %v1618
        %v1646 = vpack.c.b16 %v1621, %v1620
        %v1647 = vpack.c.b16 %v1623, %v1622
        %1672 = vmatprep.subr.bf16.mxu0 0
        %1673 = vmatpush1.bf16.msra.mxu0 %v1631
        %1674 = vmatprep.subr.bf16.mxu0 0
        %1675 = vmatpush1.bf16.msra.mxu0 %v1630
        %1676 = vmatprep.subr.bf16.mxu0 0
        %1677 = vmatpush1.bf16.msra.mxu0 %v1629
        %1678 = vmatprep.subr.bf16.mxu0 0
        %1679 = vmatpush1.bf16.msra.mxu0 %v1628
        %1680 = vmatprep.subr.bf16.mxu0 0
        %1681 = vmatpush1.bf16.msra.mxu0 %v1627
        %1682 = vmatprep.subr.bf16.mxu0 0
        %1683 = vmatpush1.bf16.msra.mxu0 %v1626
        %1684 = vmatprep.subr.bf16.mxu0 0
        %1685 = vmatpush1.bf16.msra.mxu0 %v1625
        %1686 = vmatprep.subr.bf16.mxu0 0
        %1687 = vmatpush1.bf16.msra.mxu0 %v1624
        %1688 = vmatprep.subr.bf16.mxu0 0
        %1689 = vmatpush2.bf16.msra.mxu0 %v1639
        %1690 = vmatprep.subr.bf16.mxu0 0
        %1691 = vmatpush2.bf16.msra.mxu0 %v1638
        %1692 = vmatprep.subr.bf16.mxu0 0
        %1693 = vmatpush2.bf16.msra.mxu0 %v1637
        %1694 = vmatprep.subr.bf16.mxu0 0
        %1695 = vmatpush2.bf16.msra.mxu0 %v1636
        %1696 = vmatprep.subr.bf16.mxu0 0
        %1697 = vmatpush2.bf16.msra.mxu0 %v1635
        %1698 = vmatprep.subr.bf16.mxu0 0
        %1699 = vmatpush2.bf16.msra.mxu0 %v1634
        %1700 = vmatprep.subr.bf16.mxu0 0
        %1701 = vmatpush2.bf16.msra.mxu0 %v1633
        %1702 = vmatprep.subr.bf16.mxu0 0
        %1703 = vmatpush2.bf16.msra.mxu0 %v1632
        %1704 = vmatprep.mubr.bf16.mxu0 %v1287
        %1705 = vmatmul.mubr.bf16.gmra.mxu0 %v1284
        %v1706 = vpop.f32.mrf.mxu0
        %v1707 = vadd.f32 0.0, %v1706
        %v1708 = vpop.f32.mrf.mxu0
        %v1709 = vpop.f32.mrf.mxu0
        %v1710 = vadd.f32 0.0, %v1709
        %v1711 = vpop.f32.mrf.mxu0
        %1712 = vmatprep.mubr.bf16.mxu0 %v1294
        %1713 = vmatmul.mubr.bf16.gmra.mxu0 %v1292
        %v1714 = vpop.f32.mrf.mxu0
        %v1715 = vadd.f32 0.0, %v1714
        %v1716 = vpop.f32.mrf.mxu0
        %v1717 = vpop.f32.mrf.mxu0
        %v1718 = vadd.f32 0.0, %v1717
        %v1719 = vpop.f32.mrf.mxu0
        %1720 = vmatprep.mubr.bf16.mxu0 %v1300
        %1721 = vmatmul.mubr.bf16.gmra.mxu0 %v1298
        %v1722 = vpop.f32.mrf.mxu0
        %v1723 = vadd.f32 0.0, %v1722
        %v1724 = vpop.f32.mrf.mxu0
        %v1725 = vpop.f32.mrf.mxu0
        %v1726 = vadd.f32 0.0, %v1725
        %v1727 = vpop.f32.mrf.mxu0
        %1728 = vmatprep.mubr.bf16.mxu0 %v1306
        %1729 = vmatmul.mubr.bf16.gmra.mxu0 %v1304
        %v1730 = vpop.f32.mrf.mxu0
        %v1731 = vadd.f32 0.0, %v1730
        %v1732 = vpop.f32.mrf.mxu0
        %v1733 = vpop.f32.mrf.mxu0
        %v1734 = vadd.f32 0.0, %v1733
        %v1735 = vpop.f32.mrf.mxu0
        %1736 = vmatprep.mubr.bf16.mxu0 %v1312
        %1737 = vmatmul.mubr.bf16.gmra.mxu0 %v1310
        %v1738 = vpop.f32.mrf.mxu0
        %v1739 = vadd.f32 0.0, %v1738
        %v1740 = vpop.f32.mrf.mxu0
        %v1741 = vpop.f32.mrf.mxu0
        %v1742 = vadd.f32 0.0, %v1741
        %v1743 = vpop.f32.mrf.mxu0
        %1744 = vmatprep.mubr.bf16.mxu0 %v1318
        %1745 = vmatmul.mubr.bf16.gmra.mxu0 %v1316
        %v1746 = vpop.f32.mrf.mxu0
        %v1747 = vadd.f32 0.0, %v1746
        %v1748 = vpop.f32.mrf.mxu0
        %v1749 = vpop.f32.mrf.mxu0
        %v1750 = vadd.f32 0.0, %v1749
        %v1751 = vpop.f32.mrf.mxu0
        %1752 = vmatprep.mubr.bf16.mxu0 %v1324
        %1753 = vmatmul.mubr.bf16.gmra.mxu0 %v1322
        %v1754 = vpop.f32.mrf.mxu0
        %v1755 = vadd.f32 0.0, %v1754
        %v1756 = vpop.f32.mrf.mxu0
        %v1757 = vpop.f32.mrf.mxu0
        %v1758 = vadd.f32 0.0, %v1757
        %v1759 = vpop.f32.mrf.mxu0
        %1760 = vmatprep.mubr.bf16.mxu0 %v1330
        %1761 = vmatmul.mubr.bf16.gmra.mxu0 %v1328
        %v1762 = vpop.f32.mrf.mxu0
        %v1763 = vadd.f32 0.0, %v1762
        %v1764 = vpop.f32.mrf.mxu0
        %v1765 = vpop.f32.mrf.mxu0
        %v1766 = vadd.f32 0.0, %v1765
        %v1767 = vpop.f32.mrf.mxu0
        %1768 = vmatprep.mubr.bf16.mxu0 %v1336
        %1769 = vmatmul.mubr.bf16.gmra.mxu0 %v1334
        %v1770 = vpop.f32.mrf.mxu0
        %v1771 = vadd.f32 0.0, %v1770
        %v1772 = vpop.f32.mrf.mxu0
        %v1773 = vpop.f32.mrf.mxu0
        %v1774 = vadd.f32 0.0, %v1773
        %v1775 = vpop.f32.mrf.mxu0
        %1776 = vmatprep.mubr.bf16.mxu0 %v1342
        %1777 = vmatmul.mubr.bf16.gmra.mxu0 %v1340
        %v1778 = vpop.f32.mrf.mxu0
        %v1779 = vadd.f32 0.0, %v1778
        %v1780 = vpop.f32.mrf.mxu0
        %v1781 = vpop.f32.mrf.mxu0
        %v1782 = vadd.f32 0.0, %v1781
        %v1783 = vpop.f32.mrf.mxu0
        %1784 = vmatprep.mubr.bf16.mxu0 %v1348
        %1785 = vmatmul.mubr.bf16.gmra.mxu0 %v1346
        %v1786 = vpop.f32.mrf.mxu0
        %v1787 = vadd.f32 0.0, %v1786
        %v1788 = vpop.f32.mrf.mxu0
        %v1789 = vpop.f32.mrf.mxu0
        %v1790 = vadd.f32 0.0, %v1789
        %v1791 = vpop.f32.mrf.mxu0
        %1792 = vmatprep.mubr.bf16.mxu0 %v1354
        %1793 = vmatmul.mubr.bf16.gmra.mxu0 %v1352
        %v1794 = vpop.f32.mrf.mxu0
        %v1795 = vadd.f32 0.0, %v1794
        %v1796 = vpop.f32.mrf.mxu0
        %v1797 = vpop.f32.mrf.mxu0
        %v1798 = vadd.f32 0.0, %v1797
        %v1799 = vpop.f32.mrf.mxu0
        %1800 = vmatprep.mubr.bf16.mxu0 %v1360
        %1801 = vmatmul.mubr.bf16.gmra.mxu0 %v1358
        %v1802 = vpop.f32.mrf.mxu0
        %v1803 = vadd.f32 0.0, %v1802
        %v1804 = vpop.f32.mrf.mxu0
        %v1805 = vpop.f32.mrf.mxu0
        %v1806 = vadd.f32 0.0, %v1805
        %v1807 = vpop.f32.mrf.mxu0
        %1808 = vmatprep.mubr.bf16.mxu0 %v1366
        %1809 = vmatmul.mubr.bf16.gmra.mxu0 %v1364
        %v1810 = vpop.f32.mrf.mxu0
        %v1811 = vadd.f32 0.0, %v1810
        %v1812 = vpop.f32.mrf.mxu0
        %v1813 = vpop.f32.mrf.mxu0
        %v1814 = vadd.f32 0.0, %v1813
        %v1815 = vpop.f32.mrf.mxu0
        %1816 = vmatprep.mubr.bf16.mxu0 %v1372
        %1817 = vmatmul.mubr.bf16.gmra.mxu0 %v1370
        %v1818 = vpop.f32.mrf.mxu0
        %v1819 = vadd.f32 0.0, %v1818
        %v1820 = vpop.f32.mrf.mxu0
        %v1821 = vpop.f32.mrf.mxu0
        %v1822 = vadd.f32 0.0, %v1821
        %v1823 = vpop.f32.mrf.mxu0
        %1824 = vmatprep.mubr.bf16.mxu0 %v1378
        %1825 = vmatmul.mubr.bf16.gmra.mxu0 %v1376
        %v1826 = vpop.f32.mrf.mxu0
        %v1827 = vadd.f32 0.0, %v1826
        %v1828 = vpop.f32.mrf.mxu0
        %v1829 = vpop.f32.mrf.mxu0
        %v1830 = vadd.f32 0.0, %v1829
        %v1831 = vpop.f32.mrf.mxu0
        %1832 = vmatprep.mubr.bf16.mxu0 %v1384
        %1833 = vmatmul.mubr.bf16.gmra.mxu0 %v1382
        %v1834 = vpop.f32.mrf.mxu0
        %v1835 = vadd.f32 0.0, %v1834
        %v1836 = vpop.f32.mrf.mxu0
        %v1837 = vpop.f32.mrf.mxu0
        %v1838 = vadd.f32 0.0, %v1837
        %v1839 = vpop.f32.mrf.mxu0
        %1840 = vmatprep.mubr.bf16.mxu0 %v1390
        %1841 = vmatmul.mubr.bf16.gmra.mxu0 %v1388
        %v1842 = vpop.f32.mrf.mxu0
        %v1843 = vadd.f32 0.0, %v1842
        %v1844 = vpop.f32.mrf.mxu0
        %v1845 = vpop.f32.mrf.mxu0
        %v1846 = vadd.f32 0.0, %v1845
        %v1847 = vpop.f32.mrf.mxu0
        %1848 = vmatprep.mubr.bf16.mxu0 %v1396
        %1849 = vmatmul.mubr.bf16.gmra.mxu0 %v1394
        %v1850 = vpop.f32.mrf.mxu0
        %v1851 = vadd.f32 0.0, %v1850
        %v1852 = vpop.f32.mrf.mxu0
        %v1853 = vpop.f32.mrf.mxu0
        %v1854 = vadd.f32 0.0, %v1853
        %v1855 = vpop.f32.mrf.mxu0
        %1856 = vmatprep.mubr.bf16.mxu0 %v1402
        %1857 = vmatmul.mubr.bf16.gmra.mxu0 %v1400
        %v1858 = vpop.f32.mrf.mxu0
        %v1859 = vadd.f32 0.0, %v1858
        %v1860 = vpop.f32.mrf.mxu0
        %v1861 = vpop.f32.mrf.mxu0
        %v1862 = vadd.f32 0.0, %v1861
        %v1863 = vpop.f32.mrf.mxu0
        %1864 = vmatprep.mubr.bf16.mxu0 %v1408
        %1865 = vmatmul.mubr.bf16.gmra.mxu0 %v1406
        %v1866 = vpop.f32.mrf.mxu0
        %v1867 = vadd.f32 0.0, %v1866
        %v1868 = vpop.f32.mrf.mxu0
        %v1869 = vpop.f32.mrf.mxu0
        %v1870 = vadd.f32 0.0, %v1869
        %v1871 = vpop.f32.mrf.mxu0
        %1872 = vmatprep.mubr.bf16.mxu0 %v1414
        %1873 = vmatmul.mubr.bf16.gmra.mxu0 %v1412
        %v1874 = vpop.f32.mrf.mxu0
        %v1875 = vadd.f32 0.0, %v1874
        %v1876 = vpop.f32.mrf.mxu0
        %v1877 = vpop.f32.mrf.mxu0
        %v1878 = vadd.f32 0.0, %v1877
        %v1879 = vpop.f32.mrf.mxu0
        %1880 = vmatprep.mubr.bf16.mxu0 %v1420
        %1881 = vmatmul.mubr.bf16.gmra.mxu0 %v1418
        %v1882 = vpop.f32.mrf.mxu0
        %v1883 = vadd.f32 0.0, %v1882
        %v1884 = vpop.f32.mrf.mxu0
        %v1885 = vpop.f32.mrf.mxu0
        %v1886 = vadd.f32 0.0, %v1885
        %v1887 = vpop.f32.mrf.mxu0
        %1888 = vmatprep.mubr.bf16.mxu0 %v1426
        %1889 = vmatmul.mubr.bf16.gmra.mxu0 %v1424
        %v1890 = vpop.f32.mrf.mxu0
        %v1891 = vadd.f32 0.0, %v1890
        %v1892 = vpop.f32.mrf.mxu0
        %v1893 = vpop.f32.mrf.mxu0
        %v1894 = vadd.f32 0.0, %v1893
        %v1895 = vpop.f32.mrf.mxu0
        %1896 = vmatprep.mubr.bf16.mxu0 %v1432
        %1897 = vmatmul.mubr.bf16.gmra.mxu0 %v1430
        %v1898 = vpop.f32.mrf.mxu0
        %v1899 = vadd.f32 0.0, %v1898
        %v1900 = vpop.f32.mrf.mxu0
        %v1901 = vpop.f32.mrf.mxu0
        %v1902 = vadd.f32 0.0, %v1901
        %v1903 = vpop.f32.mrf.mxu0
        %1904 = vmatprep.mubr.bf16.mxu0 %v1438
        %1905 = vmatmul.mubr.bf16.gmra.mxu0 %v1436
        %v1906 = vpop.f32.mrf.mxu0
        %v1907 = vadd.f32 0.0, %v1906
        %v1908 = vpop.f32.mrf.mxu0
        %v1909 = vpop.f32.mrf.mxu0
        %v1910 = vadd.f32 0.0, %v1909
        %v1911 = vpop.f32.mrf.mxu0
        %1912 = vmatprep.mubr.bf16.mxu0 %v1444
        %1913 = vmatmul.mubr.bf16.gmra.mxu0 %v1442
        %v1914 = vpop.f32.mrf.mxu0
        %v1915 = vadd.f32 0.0, %v1914
        %v1916 = vpop.f32.mrf.mxu0
        %v1917 = vpop.f32.mrf.mxu0
        %v1918 = vadd.f32 0.0, %v1917
        %v1919 = vpop.f32.mrf.mxu0
        %1920 = vdwg.mxu0
        %1921 = vmatprep.subr.bf16.mxu0 0
        %1922 = vmatpush1.bf16.msra.mxu0 %v1647
        %1923 = vmatprep.subr.bf16.mxu0 0
        %1924 = vmatpush1.bf16.msra.mxu0 %v1646
        %1925 = vmatprep.subr.bf16.mxu0 0
        %1926 = vmatpush1.bf16.msra.mxu0 %v1645
        %1927 = vmatprep.subr.bf16.mxu0 0
        %1928 = vmatpush1.bf16.msra.mxu0 %v1644
        %1929 = vmatprep.subr.bf16.mxu0 0
        %1930 = vmatpush1.bf16.msra.mxu0 %v1643
        %1931 = vmatprep.subr.bf16.mxu0 0
        %1932 = vmatpush1.bf16.msra.mxu0 %v1642
        %1933 = vmatprep.subr.bf16.mxu0 0
        %1934 = vmatpush1.bf16.msra.mxu0 %v1641
        %1935 = vmatprep.subr.bf16.mxu0 0
        %1936 = vmatpush1.bf16.msra.mxu0 %v1640
        %1937 = vmatprep.subr.bf16.mxu0 0
        %1938 = vmatpush2.bf16.msra.mxu0 0
        %1939 = vmatprep.subr.bf16.mxu0 0
        %1940 = vmatpush2.bf16.msra.mxu0 0
        %1941 = vmatprep.subr.bf16.mxu0 0
        %1942 = vmatpush2.bf16.msra.mxu0 0
        %1943 = vmatprep.subr.bf16.mxu0 0
        %1944 = vmatpush2.bf16.msra.mxu0 0
        %1945 = vmatprep.subr.bf16.mxu0 0
        %1946 = vmatpush2.bf16.msra.mxu0 0
        %1947 = vmatprep.subr.bf16.mxu0 0
        %1948 = vmatpush2.bf16.msra.mxu0 0
        %1949 = vmatprep.subr.bf16.mxu0 0
        %1950 = vmatpush2.bf16.msra.mxu0 0
        %1951 = vmatprep.subr.bf16.mxu0 0
        %1952 = vmatpush2.bf16.msra.mxu0 0
        %1953 = vmatprep.mubr.bf16.mxu0 0
        %1954 = vmatmul.mubr.bf16.gmra.mxu0 %v1290
        %v1955 = vpop.f32.mrf.mxu0
        %v1956 = vadd.f32 %v1707, %v1955
        %v1957 = vpop.f32.mrf.mxu0
        %v1958 = vpop.f32.mrf.mxu0
        %v1959 = vadd.f32 %v1710, %v1958
        %v1960 = vpop.f32.mrf.mxu0
        %1961 = vmatprep.mubr.bf16.mxu0 0
        %1962 = vmatmul.mubr.bf16.gmra.mxu0 %v1296
        %v1963 = vpop.f32.mrf.mxu0
        %v1964 = vadd.f32 %v1715, %v1963
        %v1965 = vpop.f32.mrf.mxu0
        %v1966 = vpop.f32.mrf.mxu0
        %v1967 = vadd.f32 %v1718, %v1966
        %v1968 = vpop.f32.mrf.mxu0
        %1969 = vmatprep.mubr.bf16.mxu0 0
        %1970 = vmatmul.mubr.bf16.gmra.mxu0 %v1302
        %v1971 = vpop.f32.mrf.mxu0
        %v1972 = vadd.f32 %v1723, %v1971
        %v1973 = vpop.f32.mrf.mxu0
        %v1974 = vpop.f32.mrf.mxu0
        %v1975 = vadd.f32 %v1726, %v1974
        %v1976 = vpop.f32.mrf.mxu0
        %1977 = vmatprep.mubr.bf16.mxu0 0
        %1978 = vmatmul.mubr.bf16.gmra.mxu0 %v1308
        %v1979 = vpop.f32.mrf.mxu0
        %v1980 = vadd.f32 %v1731, %v1979
        %v1981 = vpop.f32.mrf.mxu0
        %v1982 = vpop.f32.mrf.mxu0
        %v1983 = vadd.f32 %v1734, %v1982
        %v1984 = vpop.f32.mrf.mxu0
        %1985 = vmatprep.mubr.bf16.mxu0 0
        %1986 = vmatmul.mubr.bf16.gmra.mxu0 %v1314
        %v1987 = vpop.f32.mrf.mxu0
        %v1988 = vadd.f32 %v1739, %v1987
        %v1989 = vpop.f32.mrf.mxu0
        %v1990 = vpop.f32.mrf.mxu0
        %v1991 = vadd.f32 %v1742, %v1990
        %v1992 = vpop.f32.mrf.mxu0
        %1993 = vmatprep.mubr.bf16.mxu0 0
        %1994 = vmatmul.mubr.bf16.gmra.mxu0 %v1320
        %v1995 = vpop.f32.mrf.mxu0
        %v1996 = vadd.f32 %v1747, %v1995
        %v1997 = vpop.f32.mrf.mxu0
        %v1998 = vpop.f32.mrf.mxu0
        %v1999 = vadd.f32 %v1750, %v1998
        %v2000 = vpop.f32.mrf.mxu0
        %2001 = vmatprep.mubr.bf16.mxu0 0
        %2002 = vmatmul.mubr.bf16.gmra.mxu0 %v1326
        %v2003 = vpop.f32.mrf.mxu0
        %v2004 = vadd.f32 %v1755, %v2003
        %v2005 = vpop.f32.mrf.mxu0
        %v2006 = vpop.f32.mrf.mxu0
        %v2007 = vadd.f32 %v1758, %v2006
        %v2008 = vpop.f32.mrf.mxu0
        %2009 = vmatprep.mubr.bf16.mxu0 0
        %2010 = vmatmul.mubr.bf16.gmra.mxu0 %v1332
        %v2011 = vpop.f32.mrf.mxu0
        %v2012 = vadd.f32 %v1763, %v2011
        %v2013 = vpop.f32.mrf.mxu0
        %v2014 = vpop.f32.mrf.mxu0
        %v2015 = vadd.f32 %v1766, %v2014
        %v2016 = vpop.f32.mrf.mxu0
        %2017 = vmatprep.mubr.bf16.mxu0 0
        %2018 = vmatmul.mubr.bf16.gmra.mxu0 %v1338
        %v2019 = vpop.f32.mrf.mxu0
        %v2020 = vadd.f32 %v1771, %v2019
        %v2021 = vpop.f32.mrf.mxu0
        %v2022 = vpop.f32.mrf.mxu0
        %v2023 = vadd.f32 %v1774, %v2022
        %v2024 = vpop.f32.mrf.mxu0
        %2025 = vmatprep.mubr.bf16.mxu0 0
        %2026 = vmatmul.mubr.bf16.gmra.mxu0 %v1344
        %v2027 = vpop.f32.mrf.mxu0
        %v2028 = vadd.f32 %v1779, %v2027
        %v2029 = vpop.f32.mrf.mxu0
        %v2030 = vpop.f32.mrf.mxu0
        %v2031 = vadd.f32 %v1782, %v2030
        %v2032 = vpop.f32.mrf.mxu0
        %2033 = vmatprep.mubr.bf16.mxu0 0
        %2034 = vmatmul.mubr.bf16.gmra.mxu0 %v1350
        %v2035 = vpop.f32.mrf.mxu0
        %v2036 = vadd.f32 %v1787, %v2035
        %v2037 = vpop.f32.mrf.mxu0
        %v2038 = vpop.f32.mrf.mxu0
        %v2039 = vadd.f32 %v1790, %v2038
        %v2040 = vpop.f32.mrf.mxu0
        %2041 = vmatprep.mubr.bf16.mxu0 0
        %2042 = vmatmul.mubr.bf16.gmra.mxu0 %v1356
        %v2043 = vpop.f32.mrf.mxu0
        %v2044 = vadd.f32 %v1795, %v2043
        %v2045 = vpop.f32.mrf.mxu0
        %v2046 = vpop.f32.mrf.mxu0
        %v2047 = vadd.f32 %v1798, %v2046
        %v2048 = vpop.f32.mrf.mxu0
        %2049 = vmatprep.mubr.bf16.mxu0 0
        %2050 = vmatmul.mubr.bf16.gmra.mxu0 %v1362
        %v2051 = vpop.f32.mrf.mxu0
        %v2052 = vadd.f32 %v1803, %v2051
        %v2053 = vpop.f32.mrf.mxu0
        %v2054 = vpop.f32.mrf.mxu0
        %v2055 = vadd.f32 %v1806, %v2054
        %v2056 = vpop.f32.mrf.mxu0
        %2057 = vmatprep.mubr.bf16.mxu0 0
        %2058 = vmatmul.mubr.bf16.gmra.mxu0 %v1368
        %v2059 = vpop.f32.mrf.mxu0
        %v2060 = vadd.f32 %v1811, %v2059
        %v2061 = vpop.f32.mrf.mxu0
        %v2062 = vpop.f32.mrf.mxu0
        %v2063 = vadd.f32 %v1814, %v2062
        %v2064 = vpop.f32.mrf.mxu0
        %2065 = vmatprep.mubr.bf16.mxu0 0
        %2066 = vmatmul.mubr.bf16.gmra.mxu0 %v1374
        %v2067 = vpop.f32.mrf.mxu0
        %v2068 = vadd.f32 %v1819, %v2067
        %v2069 = vpop.f32.mrf.mxu0
        %v2070 = vpop.f32.mrf.mxu0
        %v2071 = vadd.f32 %v1822, %v2070
        %v2072 = vpop.f32.mrf.mxu0
        %2073 = vmatprep.mubr.bf16.mxu0 0
        %2074 = vmatmul.mubr.bf16.gmra.mxu0 %v1380
        %v2075 = vpop.f32.mrf.mxu0
        %v2076 = vadd.f32 %v1827, %v2075
        %v2077 = vpop.f32.mrf.mxu0
        %v2078 = vpop.f32.mrf.mxu0
        %v2079 = vadd.f32 %v1830, %v2078
        %v2080 = vpop.f32.mrf.mxu0
        %2081 = vmatprep.mubr.bf16.mxu0 0
        %2082 = vmatmul.mubr.bf16.gmra.mxu0 %v1386
        %v2083 = vpop.f32.mrf.mxu0
        %v2084 = vadd.f32 %v1835, %v2083
        %v2085 = vpop.f32.mrf.mxu0
        %v2086 = vpop.f32.mrf.mxu0
        %v2087 = vadd.f32 %v1838, %v2086
        %v2088 = vpop.f32.mrf.mxu0
        %2089 = vmatprep.mubr.bf16.mxu0 0
        %2090 = vmatmul.mubr.bf16.gmra.mxu0 %v1392
        %v2091 = vpop.f32.mrf.mxu0
        %v2092 = vadd.f32 %v1843, %v2091
        %v2093 = vpop.f32.mrf.mxu0
        %v2094 = vpop.f32.mrf.mxu0
        %v2095 = vadd.f32 %v1846, %v2094
        %v2096 = vpop.f32.mrf.mxu0
        %2097 = vmatprep.mubr.bf16.mxu0 0
        %2098 = vmatmul.mubr.bf16.gmra.mxu0 %v1398
        %v2099 = vpop.f32.mrf.mxu0
        %v2100 = vadd.f32 %v1851, %v2099
        %v2101 = vpop.f32.mrf.mxu0
        %v2102 = vpop.f32.mrf.mxu0
        %v2103 = vadd.f32 %v1854, %v2102
        %v2104 = vpop.f32.mrf.mxu0
        %2105 = vmatprep.mubr.bf16.mxu0 0
        %2106 = vmatmul.mubr.bf16.gmra.mxu0 %v1404
        %v2107 = vpop.f32.mrf.mxu0
        %v2108 = vadd.f32 %v1859, %v2107
        %v2109 = vpop.f32.mrf.mxu0
        %v2110 = vpop.f32.mrf.mxu0
        %v2111 = vadd.f32 %v1862, %v2110
        %v2112 = vpop.f32.mrf.mxu0
        %2113 = vmatprep.mubr.bf16.mxu0 0
        %2114 = vmatmul.mubr.bf16.gmra.mxu0 %v1410
        %v2115 = vpop.f32.mrf.mxu0
        %v2116 = vadd.f32 %v1867, %v2115
        %v2117 = vpop.f32.mrf.mxu0
        %v2118 = vpop.f32.mrf.mxu0
        %v2119 = vadd.f32 %v1870, %v2118
        %v2120 = vpop.f32.mrf.mxu0
        %2121 = vmatprep.mubr.bf16.mxu0 0
        %2122 = vmatmul.mubr.bf16.gmra.mxu0 %v1416
        %v2123 = vpop.f32.mrf.mxu0
        %v2124 = vadd.f32 %v1875, %v2123
        %v2125 = vpop.f32.mrf.mxu0
        %v2126 = vpop.f32.mrf.mxu0
        %v2127 = vadd.f32 %v1878, %v2126
        %v2128 = vpop.f32.mrf.mxu0
        %2129 = vmatprep.mubr.bf16.mxu0 0
        %2130 = vmatmul.mubr.bf16.gmra.mxu0 %v1422
        %v2131 = vpop.f32.mrf.mxu0
        %v2132 = vadd.f32 %v1883, %v2131
        %v2133 = vpop.f32.mrf.mxu0
        %v2134 = vpop.f32.mrf.mxu0
        %v2135 = vadd.f32 %v1886, %v2134
        %v2136 = vpop.f32.mrf.mxu0
        %2137 = vmatprep.mubr.bf16.mxu0 0
        %2138 = vmatmul.mubr.bf16.gmra.mxu0 %v1428
        %v2139 = vpop.f32.mrf.mxu0
        %v2140 = vadd.f32 %v1891, %v2139
        %v2141 = vpop.f32.mrf.mxu0
        %v2142 = vpop.f32.mrf.mxu0
        %v2143 = vadd.f32 %v1894, %v2142
        %v2144 = vpop.f32.mrf.mxu0
        %2145 = vmatprep.mubr.bf16.mxu0 0
        %2146 = vmatmul.mubr.bf16.gmra.mxu0 %v1434
        %v2147 = vpop.f32.mrf.mxu0
        %v2148 = vadd.f32 %v1899, %v2147
        %v2149 = vpop.f32.mrf.mxu0
        %v2150 = vpop.f32.mrf.mxu0
        %v2151 = vadd.f32 %v1902, %v2150
        %v2152 = vpop.f32.mrf.mxu0
        %2153 = vmatprep.mubr.bf16.mxu0 0
        %2154 = vmatmul.mubr.bf16.gmra.mxu0 %v1440
        %v2155 = vpop.f32.mrf.mxu0
        %v2156 = vadd.f32 %v1907, %v2155
        %v2157 = vpop.f32.mrf.mxu0
        %v2158 = vpop.f32.mrf.mxu0
        %v2159 = vadd.f32 %v1910, %v2158
        %v2160 = vpop.f32.mrf.mxu0
        %2161 = vmatprep.mubr.bf16.mxu0 0
        %2162 = vmatmul.mubr.bf16.gmra.mxu0 %v1446
        %v2163 = vpop.f32.mrf.mxu0
        %v2164 = vadd.f32 %v1915, %v2163
        %v2165 = vpop.f32.mrf.mxu0
        %v2166 = vpop.f32.mrf.mxu0
        %v2167 = vadd.f32 %v1918, %v2166
        %v2168 = vpop.f32.mrf.mxu0
        %2169 = vdwg.mxu0
        %v2218 = vunpack.c.l.b16 %v1128
        %v2219 = vunpack.c.l.b16 %v1129
        %v2220 = vunpack.c.l.b16 %v1130
        %v2221 = vunpack.c.l.b16 %v1131
        %v2222 = vunpack.c.l.b16 %v1132
        %v2223 = vunpack.c.l.b16 %v1133
        %v2224 = vunpack.c.l.b16 %v1134
        %v2225 = vunpack.c.l.b16 %v1135
        %v2226 = vunpack.c.l.b16 %v1136
        %v2227 = vunpack.c.l.b16 %v1137
        %v2228 = vunpack.c.l.b16 %v1138
        %v2229 = vunpack.c.l.b16 %v1139
        %v2230 = vunpack.c.l.b16 %v1140
        %v2231 = vunpack.c.l.b16 %v1141
        %v2232 = vunpack.c.l.b16 %v1142
        %v2233 = vunpack.c.l.b16 %v1143
        %v2234 = vunpack.c.l.b16 %v1144
        %v2235 = vunpack.c.l.b16 %v1145
        %v2236 = vunpack.c.l.b16 %v1146
        %v2237 = vunpack.c.l.b16 %v1147
        %v2238 = vunpack.c.l.b16 %v1148
        %v2239 = vunpack.c.l.b16 %v1149
        %v2240 = vunpack.c.l.b16 %v1150
        %v2241 = vunpack.c.l.b16 %v1151
        %v2242 = vunpack.c.l.b16 %v1152
        %v2243 = vunpack.c.l.b16 %v1153
        %v2244 = vunpack.c.l.b16 %v1154
        %v2245 = vunpack.c.l.b16 %v1155
        %v2246 = vunpack.c.l.b16 %v1156
        %v2247 = vunpack.c.l.b16 %v1157
        %v2248 = vunpack.c.l.b16 %v1158
        %v2249 = vunpack.c.l.b16 %v1159
        %v2250 = vunpack.c.l.b16 %v1160
        %v2251 = vunpack.c.l.b16 %v1161
        %v2252 = vunpack.c.l.b16 %v1162
        %v2253 = vunpack.c.l.b16 %v1163
        %v2254 = vunpack.c.l.b16 %v1164
        %v2255 = vunpack.c.l.b16 %v1165
        %v2256 = vunpack.c.l.b16 %v1166
        %v2257 = vunpack.c.l.b16 %v1167
        %v2258 = vunpack.c.l.b16 %v1168
        %v2259 = vunpack.c.l.b16 %v1169
        %v2260 = vunpack.c.l.b16 %v1170
        %v2261 = vunpack.c.l.b16 %v1171
        %v2262 = vunpack.c.l.b16 %v1172
        %v2263 = vunpack.c.l.b16 %v1173
        %v2264 = vunpack.c.l.b16 %v1174
        %v2265 = vunpack.c.l.b16 %v1175
        %v2266 = vpack.c.b16 %v2219, %v2218
        %v2267 = vpack.c.b16 %v2221, %v2220
        %v2268 = vpack.c.b16 %v2223, %v2222
        %v2269 = vpack.c.b16 %v2225, %v2224
        %v2270 = vpack.c.b16 %v2227, %v2226
        %v2271 = vpack.c.b16 %v2229, %v2228
        %v2272 = vpack.c.b16 %v2231, %v2230
        %v2273 = vpack.c.b16 %v2233, %v2232
        %v2274 = vpack.c.b16 %v2235, %v2234
        %v2275 = vpack.c.b16 %v2237, %v2236
        %v2276 = vpack.c.b16 %v2239, %v2238
        %v2277 = vpack.c.b16 %v2241, %v2240
        %v2278 = vpack.c.b16 %v2243, %v2242
        %v2279 = vpack.c.b16 %v2245, %v2244
        %v2280 = vpack.c.b16 %v2247, %v2246
        %v2281 = vpack.c.b16 %v2249, %v2248
        %v2282 = vpack.c.b16 %v2251, %v2250
        %v2283 = vpack.c.b16 %v2253, %v2252
        %v2284 = vpack.c.b16 %v2255, %v2254
        %v2285 = vpack.c.b16 %v2257, %v2256
        %v2286 = vpack.c.b16 %v2259, %v2258
        %v2287 = vpack.c.b16 %v2261, %v2260
        %v2288 = vpack.c.b16 %v2263, %v2262
        %v2289 = vpack.c.b16 %v2265, %v2264
        %2314 = vmatprep.subr.bf16.mxu0 0
        %2315 = vmatpush1.bf16.msra.mxu0 %v2273
        %2316 = vmatprep.subr.bf16.mxu0 0
        %2317 = vmatpush1.bf16.msra.mxu0 %v2272
        %2318 = vmatprep.subr.bf16.mxu0 0
        %2319 = vmatpush1.bf16.msra.mxu0 %v2271
        %2320 = vmatprep.subr.bf16.mxu0 0
        %2321 = vmatpush1.bf16.msra.mxu0 %v2270
        %2322 = vmatprep.subr.bf16.mxu0 0
        %2323 = vmatpush1.bf16.msra.mxu0 %v2269
        %2324 = vmatprep.subr.bf16.mxu0 0
        %2325 = vmatpush1.bf16.msra.mxu0 %v2268
        %2326 = vmatprep.subr.bf16.mxu0 0
        %2327 = vmatpush1.bf16.msra.mxu0 %v2267
        %2328 = vmatprep.subr.bf16.mxu0 0
        %2329 = vmatpush1.bf16.msra.mxu0 %v2266
        %2330 = vmatprep.subr.bf16.mxu0 0
        %2331 = vmatpush2.bf16.msra.mxu0 %v2281
        %2332 = vmatprep.subr.bf16.mxu0 0
        %2333 = vmatpush2.bf16.msra.mxu0 %v2280
        %2334 = vmatprep.subr.bf16.mxu0 0
        %2335 = vmatpush2.bf16.msra.mxu0 %v2279
        %2336 = vmatprep.subr.bf16.mxu0 0
        %2337 = vmatpush2.bf16.msra.mxu0 %v2278
        %2338 = vmatprep.subr.bf16.mxu0 0
        %2339 = vmatpush2.bf16.msra.mxu0 %v2277
        %2340 = vmatprep.subr.bf16.mxu0 0
        %2341 = vmatpush2.bf16.msra.mxu0 %v2276
        %2342 = vmatprep.subr.bf16.mxu0 0
        %2343 = vmatpush2.bf16.msra.mxu0 %v2275
        %2344 = vmatprep.subr.bf16.mxu0 0
        %2345 = vmatpush2.bf16.msra.mxu0 %v2274
        %2346 = vmatprep.mubr.bf16.mxu0 %v1068
        %2347 = vmatmul.mubr.bf16.gmra.mxu0 %v707
        %v2348 = vpop.f32.mrf.mxu0
        %v2349 = vadd.f32 %v1956, %v2348
        %v2350 = vpop.f32.mrf.mxu0
        %v2351 = vpop.f32.mrf.mxu0
        %v2352 = vadd.f32 %v1959, %v2351
        %v2353 = vpop.f32.mrf.mxu0
        %2354 = vmatprep.mubr.bf16.mxu0 %v1069
        %2355 = vmatmul.mubr.bf16.gmra.mxu0 %v708
        %v2356 = vpop.f32.mrf.mxu0
        %v2357 = vadd.f32 %v1964, %v2356
        %v2358 = vpop.f32.mrf.mxu0
        %v2359 = vpop.f32.mrf.mxu0
        %v2360 = vadd.f32 %v1967, %v2359
        %v2361 = vpop.f32.mrf.mxu0
        %2362 = vmatprep.mubr.bf16.mxu0 %v1070
        %2363 = vmatmul.mubr.bf16.gmra.mxu0 %v709
        %v2364 = vpop.f32.mrf.mxu0
        %v2365 = vadd.f32 %v1972, %v2364
        %v2366 = vpop.f32.mrf.mxu0
        %v2367 = vpop.f32.mrf.mxu0
        %v2368 = vadd.f32 %v1975, %v2367
        %v2369 = vpop.f32.mrf.mxu0
        %2370 = vmatprep.mubr.bf16.mxu0 %v1071
        %2371 = vmatmul.mubr.bf16.gmra.mxu0 %v710
        %v2372 = vpop.f32.mrf.mxu0
        %v2373 = vadd.f32 %v1980, %v2372
        %v2374 = vpop.f32.mrf.mxu0
        %v2375 = vpop.f32.mrf.mxu0
        %v2376 = vadd.f32 %v1983, %v2375
        %v2377 = vpop.f32.mrf.mxu0
        %2378 = vmatprep.mubr.bf16.mxu0 %v1072
        %2379 = vmatmul.mubr.bf16.gmra.mxu0 %v711
        %v2380 = vpop.f32.mrf.mxu0
        %v2381 = vadd.f32 %v1988, %v2380
        %v2382 = vpop.f32.mrf.mxu0
        %v2383 = vpop.f32.mrf.mxu0
        %v2384 = vadd.f32 %v1991, %v2383
        %v2385 = vpop.f32.mrf.mxu0
        %2386 = vmatprep.mubr.bf16.mxu0 %v1073
        %2387 = vmatmul.mubr.bf16.gmra.mxu0 %v712
        %v2388 = vpop.f32.mrf.mxu0
        %v2389 = vadd.f32 %v1996, %v2388
        %v2390 = vpop.f32.mrf.mxu0
        %v2391 = vpop.f32.mrf.mxu0
        %v2392 = vadd.f32 %v1999, %v2391
        %v2393 = vpop.f32.mrf.mxu0
        %2394 = vmatprep.mubr.bf16.mxu0 %v1074
        %2395 = vmatmul.mubr.bf16.gmra.mxu0 %v713
        %v2396 = vpop.f32.mrf.mxu0
        %v2397 = vadd.f32 %v2004, %v2396
        %v2398 = vpop.f32.mrf.mxu0
        %v2399 = vpop.f32.mrf.mxu0
        %v2400 = vadd.f32 %v2007, %v2399
        %v2401 = vpop.f32.mrf.mxu0
        %2402 = vmatprep.mubr.bf16.mxu0 %v1075
        %2403 = vmatmul.mubr.bf16.gmra.mxu0 %v714
        %v2404 = vpop.f32.mrf.mxu0
        %v2405 = vadd.f32 %v2012, %v2404
        %v2406 = vpop.f32.mrf.mxu0
        %v2407 = vpop.f32.mrf.mxu0
        %v2408 = vadd.f32 %v2015, %v2407
        %v2409 = vpop.f32.mrf.mxu0
        %2410 = vmatprep.mubr.bf16.mxu0 %v1076
        %2411 = vmatmul.mubr.bf16.gmra.mxu0 %v715
        %v2412 = vpop.f32.mrf.mxu0
        %v2413 = vadd.f32 %v2020, %v2412
        %v2414 = vpop.f32.mrf.mxu0
        %v2415 = vpop.f32.mrf.mxu0
        %v2416 = vadd.f32 %v2023, %v2415
        %v2417 = vpop.f32.mrf.mxu0
        %2418 = vmatprep.mubr.bf16.mxu0 %v1077
        %2419 = vmatmul.mubr.bf16.gmra.mxu0 %v716
        %v2420 = vpop.f32.mrf.mxu0
        %v2421 = vadd.f32 %v2028, %v2420
        %v2422 = vpop.f32.mrf.mxu0
        %v2423 = vpop.f32.mrf.mxu0
        %v2424 = vadd.f32 %v2031, %v2423
        %v2425 = vpop.f32.mrf.mxu0
        %2426 = vmatprep.mubr.bf16.mxu0 %v1078
        %2427 = vmatmul.mubr.bf16.gmra.mxu0 %v717
        %v2428 = vpop.f32.mrf.mxu0
        %v2429 = vadd.f32 %v2036, %v2428
        %v2430 = vpop.f32.mrf.mxu0
        %v2431 = vpop.f32.mrf.mxu0
        %v2432 = vadd.f32 %v2039, %v2431
        %v2433 = vpop.f32.mrf.mxu0
        %2434 = vmatprep.mubr.bf16.mxu0 %v1079
        %2435 = vmatmul.mubr.bf16.gmra.mxu0 %v718
        %v2436 = vpop.f32.mrf.mxu0
        %v2437 = vadd.f32 %v2044, %v2436
        %v2438 = vpop.f32.mrf.mxu0
        %v2439 = vpop.f32.mrf.mxu0
        %v2440 = vadd.f32 %v2047, %v2439
        %v2441 = vpop.f32.mrf.mxu0
        %2442 = vmatprep.mubr.bf16.mxu0 %v1080
        %2443 = vmatmul.mubr.bf16.gmra.mxu0 %v719
        %v2444 = vpop.f32.mrf.mxu0
        %v2445 = vadd.f32 %v2052, %v2444
        %v2446 = vpop.f32.mrf.mxu0
        %v2447 = vpop.f32.mrf.mxu0
        %v2448 = vadd.f32 %v2055, %v2447
        %v2449 = vpop.f32.mrf.mxu0
        %2450 = vmatprep.mubr.bf16.mxu0 %v1081
        %2451 = vmatmul.mubr.bf16.gmra.mxu0 %v720
        %v2452 = vpop.f32.mrf.mxu0
        %v2453 = vadd.f32 %v2060, %v2452
        %v2454 = vpop.f32.mrf.mxu0
        %v2455 = vpop.f32.mrf.mxu0
        %v2456 = vadd.f32 %v2063, %v2455
        %v2457 = vpop.f32.mrf.mxu0
        %2458 = vmatprep.mubr.bf16.mxu0 %v1082
        %2459 = vmatmul.mubr.bf16.gmra.mxu0 %v721
        %v2460 = vpop.f32.mrf.mxu0
        %v2461 = vadd.f32 %v2068, %v2460
        %v2462 = vpop.f32.mrf.mxu0
        %v2463 = vpop.f32.mrf.mxu0
        %v2464 = vadd.f32 %v2071, %v2463
        %v2465 = vpop.f32.mrf.mxu0
        %2466 = vmatprep.mubr.bf16.mxu0 %v1083
        %2467 = vmatmul.mubr.bf16.gmra.mxu0 %v722
        %v2468 = vpop.f32.mrf.mxu0
        %v2469 = vadd.f32 %v2076, %v2468
        %v2470 = vpop.f32.mrf.mxu0
        %v2471 = vpop.f32.mrf.mxu0
        %v2472 = vadd.f32 %v2079, %v2471
        %v2473 = vpop.f32.mrf.mxu0
        %2474 = vmatprep.mubr.bf16.mxu0 %v1084
        %2475 = vmatmul.mubr.bf16.gmra.mxu0 %v723
        %v2476 = vpop.f32.mrf.mxu0
        %v2477 = vadd.f32 %v2084, %v2476
        %v2478 = vpop.f32.mrf.mxu0
        %v2479 = vpop.f32.mrf.mxu0
        %v2480 = vadd.f32 %v2087, %v2479
        %v2481 = vpop.f32.mrf.mxu0
        %2482 = vmatprep.mubr.bf16.mxu0 %v1085
        %2483 = vmatmul.mubr.bf16.gmra.mxu0 %v724
        %v2484 = vpop.f32.mrf.mxu0
        %v2485 = vadd.f32 %v2092, %v2484
        %v2486 = vpop.f32.mrf.mxu0
        %v2487 = vpop.f32.mrf.mxu0
        %v2488 = vadd.f32 %v2095, %v2487
        %v2489 = vpop.f32.mrf.mxu0
        %2490 = vmatprep.mubr.bf16.mxu0 %v1086
        %2491 = vmatmul.mubr.bf16.gmra.mxu0 %v725
        %v2492 = vpop.f32.mrf.mxu0
        %v2493 = vadd.f32 %v2100, %v2492
        %v2494 = vpop.f32.mrf.mxu0
        %v2495 = vpop.f32.mrf.mxu0
        %v2496 = vadd.f32 %v2103, %v2495
        %v2497 = vpop.f32.mrf.mxu0
        %2498 = vmatprep.mubr.bf16.mxu0 %v1087
        %2499 = vmatmul.mubr.bf16.gmra.mxu0 %v726
        %v2500 = vpop.f32.mrf.mxu0
        %v2501 = vadd.f32 %v2108, %v2500
        %v2502 = vpop.f32.mrf.mxu0
        %v2503 = vpop.f32.mrf.mxu0
        %v2504 = vadd.f32 %v2111, %v2503
        %v2505 = vpop.f32.mrf.mxu0
        %2506 = vmatprep.mubr.bf16.mxu0 %v1088
        %2507 = vmatmul.mubr.bf16.gmra.mxu0 %v727
        %v2508 = vpop.f32.mrf.mxu0
        %v2509 = vadd.f32 %v2116, %v2508
        %v2510 = vpop.f32.mrf.mxu0
        %v2511 = vpop.f32.mrf.mxu0
        %v2512 = vadd.f32 %v2119, %v2511
        %v2513 = vpop.f32.mrf.mxu0
        %2514 = vmatprep.mubr.bf16.mxu0 %v1089
        %2515 = vmatmul.mubr.bf16.gmra.mxu0 %v728
        %v2516 = vpop.f32.mrf.mxu0
        %v2517 = vadd.f32 %v2124, %v2516
        %v2518 = vpop.f32.mrf.mxu0
        %v2519 = vpop.f32.mrf.mxu0
        %v2520 = vadd.f32 %v2127, %v2519
        %v2521 = vpop.f32.mrf.mxu0
        %2522 = vmatprep.mubr.bf16.mxu0 %v1090
        %2523 = vmatmul.mubr.bf16.gmra.mxu0 %v729
        %v2524 = vpop.f32.mrf.mxu0
        %v2525 = vadd.f32 %v2132, %v2524
        %v2526 = vpop.f32.mrf.mxu0
        %v2527 = vpop.f32.mrf.mxu0
        %v2528 = vadd.f32 %v2135, %v2527
        %v2529 = vpop.f32.mrf.mxu0
        %2530 = vmatprep.mubr.bf16.mxu0 %v1091
        %2531 = vmatmul.mubr.bf16.gmra.mxu0 %v730
        %v2532 = vpop.f32.mrf.mxu0
        %v2533 = vadd.f32 %v2140, %v2532
        %v2534 = vpop.f32.mrf.mxu0
        %v2535 = vpop.f32.mrf.mxu0
        %v2536 = vadd.f32 %v2143, %v2535
        %v2537 = vpop.f32.mrf.mxu0
        %2538 = vmatprep.mubr.bf16.mxu0 %v1092
        %2539 = vmatmul.mubr.bf16.gmra.mxu0 %v731
        %v2540 = vpop.f32.mrf.mxu0
        %v2541 = vadd.f32 %v2148, %v2540
        %v2542 = vpop.f32.mrf.mxu0
        %v2543 = vpop.f32.mrf.mxu0
        %v2544 = vadd.f32 %v2151, %v2543
        %v2545 = vpop.f32.mrf.mxu0
        %2546 = vmatprep.mubr.bf16.mxu0 %v1093
        %2547 = vmatmul.mubr.bf16.gmra.mxu0 %v732
        %v2548 = vpop.f32.mrf.mxu0
        %v2549 = vadd.f32 %v2156, %v2548
        %v2550 = vpop.f32.mrf.mxu0
        %v2551 = vpop.f32.mrf.mxu0
        %v2552 = vadd.f32 %v2159, %v2551
        %v2553 = vpop.f32.mrf.mxu0
        %2554 = vmatprep.mubr.bf16.mxu0 %v1094
        %2555 = vmatmul.mubr.bf16.gmra.mxu0 %v733
        %v2556 = vpop.f32.mrf.mxu0
        %v2557 = vadd.f32 %v2164, %v2556
        %v2558 = vpop.f32.mrf.mxu0
        %v2559 = vpop.f32.mrf.mxu0
        %v2560 = vadd.f32 %v2167, %v2559
        %v2561 = vpop.f32.mrf.mxu0
        %2562 = vdwg.mxu0
        %2563 = vmatprep.subr.bf16.mxu0 0
        %2564 = vmatpush1.bf16.msra.mxu0 %v2289
        %2565 = vmatprep.subr.bf16.mxu0 0
        %2566 = vmatpush1.bf16.msra.mxu0 %v2288
        %2567 = vmatprep.subr.bf16.mxu0 0
        %2568 = vmatpush1.bf16.msra.mxu0 %v2287
        %2569 = vmatprep.subr.bf16.mxu0 0
        %2570 = vmatpush1.bf16.msra.mxu0 %v2286
        %2571 = vmatprep.subr.bf16.mxu0 0
        %2572 = vmatpush1.bf16.msra.mxu0 %v2285
        %2573 = vmatprep.subr.bf16.mxu0 0
        %2574 = vmatpush1.bf16.msra.mxu0 %v2284
        %2575 = vmatprep.subr.bf16.mxu0 0
        %2576 = vmatpush1.bf16.msra.mxu0 %v2283
        %2577 = vmatprep.subr.bf16.mxu0 0
        %2578 = vmatpush1.bf16.msra.mxu0 %v2282
        %2579 = vmatprep.subr.bf16.mxu0 0
        %2580 = vmatpush2.bf16.msra.mxu0 0
        %2581 = vmatprep.subr.bf16.mxu0 0
        %2582 = vmatpush2.bf16.msra.mxu0 0
        %2583 = vmatprep.subr.bf16.mxu0 0
        %2584 = vmatpush2.bf16.msra.mxu0 0
        %2585 = vmatprep.subr.bf16.mxu0 0
        %2586 = vmatpush2.bf16.msra.mxu0 0
        %2587 = vmatprep.subr.bf16.mxu0 0
        %2588 = vmatpush2.bf16.msra.mxu0 0
        %2589 = vmatprep.subr.bf16.mxu0 0
        %2590 = vmatpush2.bf16.msra.mxu0 0
        %2591 = vmatprep.subr.bf16.mxu0 0
        %2592 = vmatpush2.bf16.msra.mxu0 0
        %2593 = vmatprep.subr.bf16.mxu0 0
        %2594 = vmatpush2.bf16.msra.mxu0 0
        %2595 = vmatprep.mubr.bf16.mxu0 0
        %2596 = vmatmul.mubr.bf16.gmra.mxu0 %v918
        %v2597 = vpop.f32.mrf.mxu0
        %v2598 = vadd.f32 %v2349, %v2597
        %v2599 = vpop.f32.mrf.mxu0
        %v2600 = vpop.f32.mrf.mxu0
        %v2601 = vadd.f32 %v2352, %v2600
        %v2602 = vpop.f32.mrf.mxu0
        %2603 = vmatprep.mubr.bf16.mxu0 0
        %2604 = vmatmul.mubr.bf16.gmra.mxu0 %v919
        %v2605 = vpop.f32.mrf.mxu0
        %v2606 = vadd.f32 %v2357, %v2605
        %v2607 = vpop.f32.mrf.mxu0
        %v2608 = vpop.f32.mrf.mxu0
        %v2609 = vadd.f32 %v2360, %v2608
        %v2610 = vpop.f32.mrf.mxu0
        %2611 = vmatprep.mubr.bf16.mxu0 0
        %2612 = vmatmul.mubr.bf16.gmra.mxu0 %v920
        %v2613 = vpop.f32.mrf.mxu0
        %v2614 = vadd.f32 %v2365, %v2613
        %v2615 = vpop.f32.mrf.mxu0
        %v2616 = vpop.f32.mrf.mxu0
        %v2617 = vadd.f32 %v2368, %v2616
        %v2618 = vpop.f32.mrf.mxu0
        %2619 = vmatprep.mubr.bf16.mxu0 0
        %2620 = vmatmul.mubr.bf16.gmra.mxu0 %v921
        %v2621 = vpop.f32.mrf.mxu0
        %v2622 = vadd.f32 %v2373, %v2621
        %v2623 = vpop.f32.mrf.mxu0
        %v2624 = vpop.f32.mrf.mxu0
        %v2625 = vadd.f32 %v2376, %v2624
        %v2626 = vpop.f32.mrf.mxu0
        %2627 = vmatprep.mubr.bf16.mxu0 0
        %2628 = vmatmul.mubr.bf16.gmra.mxu0 %v922
        %v2629 = vpop.f32.mrf.mxu0
        %v2630 = vadd.f32 %v2381, %v2629
        %v2631 = vpop.f32.mrf.mxu0
        %v2632 = vpop.f32.mrf.mxu0
        %v2633 = vadd.f32 %v2384, %v2632
        %v2634 = vpop.f32.mrf.mxu0
        %2635 = vmatprep.mubr.bf16.mxu0 0
        %2636 = vmatmul.mubr.bf16.gmra.mxu0 %v923
        %v2637 = vpop.f32.mrf.mxu0
        %v2638 = vadd.f32 %v2389, %v2637
        %v2639 = vpop.f32.mrf.mxu0
        %v2640 = vpop.f32.mrf.mxu0
        %v2641 = vadd.f32 %v2392, %v2640
        %v2642 = vpop.f32.mrf.mxu0
        %2643 = vmatprep.mubr.bf16.mxu0 0
        %2644 = vmatmul.mubr.bf16.gmra.mxu0 %v924
        %v2645 = vpop.f32.mrf.mxu0
        %v2646 = vadd.f32 %v2397, %v2645
        %v2647 = vpop.f32.mrf.mxu0
        %v2648 = vpop.f32.mrf.mxu0
        %v2649 = vadd.f32 %v2400, %v2648
        %v2650 = vpop.f32.mrf.mxu0
        %2651 = vmatprep.mubr.bf16.mxu0 0
        %2652 = vmatmul.mubr.bf16.gmra.mxu0 %v925
        %v2653 = vpop.f32.mrf.mxu0
        %v2654 = vadd.f32 %v2405, %v2653
        %v2655 = vpop.f32.mrf.mxu0
        %v2656 = vpop.f32.mrf.mxu0
        %v2657 = vadd.f32 %v2408, %v2656
        %v2658 = vpop.f32.mrf.mxu0
        %2659 = vmatprep.mubr.bf16.mxu0 0
        %2660 = vmatmul.mubr.bf16.gmra.mxu0 %v926
        %v2661 = vpop.f32.mrf.mxu0
        %v2662 = vadd.f32 %v2413, %v2661
        %v2663 = vpop.f32.mrf.mxu0
        %v2664 = vpop.f32.mrf.mxu0
        %v2665 = vadd.f32 %v2416, %v2664
        %v2666 = vpop.f32.mrf.mxu0
        %2667 = vmatprep.mubr.bf16.mxu0 0
        %2668 = vmatmul.mubr.bf16.gmra.mxu0 %v927
        %v2669 = vpop.f32.mrf.mxu0
        %v2670 = vadd.f32 %v2421, %v2669
        %v2671 = vpop.f32.mrf.mxu0
        %v2672 = vpop.f32.mrf.mxu0
        %v2673 = vadd.f32 %v2424, %v2672
        %v2674 = vpop.f32.mrf.mxu0
        %2675 = vmatprep.mubr.bf16.mxu0 0
        %2676 = vmatmul.mubr.bf16.gmra.mxu0 %v928
        %v2677 = vpop.f32.mrf.mxu0
        %v2678 = vadd.f32 %v2429, %v2677
        %v2679 = vpop.f32.mrf.mxu0
        %v2680 = vpop.f32.mrf.mxu0
        %v2681 = vadd.f32 %v2432, %v2680
        %v2682 = vpop.f32.mrf.mxu0
        %2683 = vmatprep.mubr.bf16.mxu0 0
        %2684 = vmatmul.mubr.bf16.gmra.mxu0 %v929
        %v2685 = vpop.f32.mrf.mxu0
        %v2686 = vadd.f32 %v2437, %v2685
        %v2687 = vpop.f32.mrf.mxu0
        %v2688 = vpop.f32.mrf.mxu0
        %v2689 = vadd.f32 %v2440, %v2688
        %v2690 = vpop.f32.mrf.mxu0
        %2691 = vmatprep.mubr.bf16.mxu0 0
        %2692 = vmatmul.mubr.bf16.gmra.mxu0 %v930
        %v2693 = vpop.f32.mrf.mxu0
        %v2694 = vadd.f32 %v2445, %v2693
        %v2695 = vpop.f32.mrf.mxu0
        %v2696 = vpop.f32.mrf.mxu0
        %v2697 = vadd.f32 %v2448, %v2696
        %v2698 = vpop.f32.mrf.mxu0
        %2699 = vmatprep.mubr.bf16.mxu0 0
        %2700 = vmatmul.mubr.bf16.gmra.mxu0 %v931
        %v2701 = vpop.f32.mrf.mxu0
        %v2702 = vadd.f32 %v2453, %v2701
        %v2703 = vpop.f32.mrf.mxu0
        %v2704 = vpop.f32.mrf.mxu0
        %v2705 = vadd.f32 %v2456, %v2704
        %v2706 = vpop.f32.mrf.mxu0
        %2707 = vmatprep.mubr.bf16.mxu0 0
        %2708 = vmatmul.mubr.bf16.gmra.mxu0 %v932
        %v2709 = vpop.f32.mrf.mxu0
        %v2710 = vadd.f32 %v2461, %v2709
        %v2711 = vpop.f32.mrf.mxu0
        %v2712 = vpop.f32.mrf.mxu0
        %v2713 = vadd.f32 %v2464, %v2712
        %v2714 = vpop.f32.mrf.mxu0
        %2715 = vmatprep.mubr.bf16.mxu0 0
        %2716 = vmatmul.mubr.bf16.gmra.mxu0 %v933
        %v2717 = vpop.f32.mrf.mxu0
        %v2718 = vadd.f32 %v2469, %v2717
        %v2719 = vpop.f32.mrf.mxu0
        %v2720 = vpop.f32.mrf.mxu0
        %v2721 = vadd.f32 %v2472, %v2720
        %v2722 = vpop.f32.mrf.mxu0
        %2723 = vmatprep.mubr.bf16.mxu0 0
        %2724 = vmatmul.mubr.bf16.gmra.mxu0 %v934
        %v2725 = vpop.f32.mrf.mxu0
        %v2726 = vadd.f32 %v2477, %v2725
        %v2727 = vpop.f32.mrf.mxu0
        %v2728 = vpop.f32.mrf.mxu0
        %v2729 = vadd.f32 %v2480, %v2728
        %v2730 = vpop.f32.mrf.mxu0
        %2731 = vmatprep.mubr.bf16.mxu0 0
        %2732 = vmatmul.mubr.bf16.gmra.mxu0 %v935
        %v2733 = vpop.f32.mrf.mxu0
        %v2734 = vadd.f32 %v2485, %v2733
        %v2735 = vpop.f32.mrf.mxu0
        %v2736 = vpop.f32.mrf.mxu0
        %v2737 = vadd.f32 %v2488, %v2736
        %v2738 = vpop.f32.mrf.mxu0
        %2739 = vmatprep.mubr.bf16.mxu0 0
        %2740 = vmatmul.mubr.bf16.gmra.mxu0 %v936
        %v2741 = vpop.f32.mrf.mxu0
        %v2742 = vadd.f32 %v2493, %v2741
        %v2743 = vpop.f32.mrf.mxu0
        %v2744 = vpop.f32.mrf.mxu0
        %v2745 = vadd.f32 %v2496, %v2744
        %v2746 = vpop.f32.mrf.mxu0
        %2747 = vmatprep.mubr.bf16.mxu0 0
        %2748 = vmatmul.mubr.bf16.gmra.mxu0 %v937
        %v2749 = vpop.f32.mrf.mxu0
        %v2750 = vadd.f32 %v2501, %v2749
        %v2751 = vpop.f32.mrf.mxu0
        %v2752 = vpop.f32.mrf.mxu0
        %v2753 = vadd.f32 %v2504, %v2752
        %v2754 = vpop.f32.mrf.mxu0
        %2755 = vmatprep.mubr.bf16.mxu0 0
        %2756 = vmatmul.mubr.bf16.gmra.mxu0 %v938
        %v2757 = vpop.f32.mrf.mxu0
        %v2758 = vadd.f32 %v2509, %v2757
        %v2759 = vpop.f32.mrf.mxu0
        %v2760 = vpop.f32.mrf.mxu0
        %v2761 = vadd.f32 %v2512, %v2760
        %v2762 = vpop.f32.mrf.mxu0
        %2763 = vmatprep.mubr.bf16.mxu0 0
        %2764 = vmatmul.mubr.bf16.gmra.mxu0 %v939
        %v2765 = vpop.f32.mrf.mxu0
        %v2766 = vadd.f32 %v2517, %v2765
        %v2767 = vpop.f32.mrf.mxu0
        %v2768 = vpop.f32.mrf.mxu0
        %v2769 = vadd.f32 %v2520, %v2768
        %v2770 = vpop.f32.mrf.mxu0
        %2771 = vmatprep.mubr.bf16.mxu0 0
        %2772 = vmatmul.mubr.bf16.gmra.mxu0 %v940
        %v2773 = vpop.f32.mrf.mxu0
        %v2774 = vadd.f32 %v2525, %v2773
        %v2775 = vpop.f32.mrf.mxu0
        %v2776 = vpop.f32.mrf.mxu0
        %v2777 = vadd.f32 %v2528, %v2776
        %v2778 = vpop.f32.mrf.mxu0
        %2779 = vmatprep.mubr.bf16.mxu0 0
        %2780 = vmatmul.mubr.bf16.gmra.mxu0 %v941
        %v2781 = vpop.f32.mrf.mxu0
        %v2782 = vadd.f32 %v2533, %v2781
        %v2783 = vpop.f32.mrf.mxu0
        %v2784 = vpop.f32.mrf.mxu0
        %v2785 = vadd.f32 %v2536, %v2784
        %v2786 = vpop.f32.mrf.mxu0
        %2787 = vmatprep.mubr.bf16.mxu0 0
        %2788 = vmatmul.mubr.bf16.gmra.mxu0 %v942
        %v2789 = vpop.f32.mrf.mxu0
        %v2790 = vadd.f32 %v2541, %v2789
        %v2791 = vpop.f32.mrf.mxu0
        %v2792 = vpop.f32.mrf.mxu0
        %v2793 = vadd.f32 %v2544, %v2792
        %v2794 = vpop.f32.mrf.mxu0
        %2795 = vmatprep.mubr.bf16.mxu0 0
        %2796 = vmatmul.mubr.bf16.gmra.mxu0 %v943
        %v2797 = vpop.f32.mrf.mxu0
        %v2798 = vadd.f32 %v2549, %v2797
        %v2799 = vpop.f32.mrf.mxu0
        %v2800 = vpop.f32.mrf.mxu0
        %v2801 = vadd.f32 %v2552, %v2800
        %v2802 = vpop.f32.mrf.mxu0
        %2803 = vmatprep.mubr.bf16.mxu0 0
        %2804 = vmatmul.mubr.bf16.gmra.mxu0 %v944
        %v2805 = vpop.f32.mrf.mxu0
        %v2806 = vadd.f32 %v2557, %v2805
        %v2807 = vpop.f32.mrf.mxu0
        %v2808 = vpop.f32.mrf.mxu0
        %v2809 = vadd.f32 %v2560, %v2808
        %v2810 = vpop.f32.mrf.mxu0
        %2811 = vdwg.mxu0
        %s2812 = scalar_lea.vmem [#allocation6], 384
        %v2813 = vld [vmem:[%s2812] sm:$0xf]
        %v2814 = vld [vmem:[%s2812 + $0x4] sm:$0xf]
        %v2815 = vld [vmem:[%s2812 + $0x8] sm:$0xf]
        %v2816 = vld [vmem:[%s2812 + $0xc] sm:$0xf]
        %v2817 = vld [vmem:[%s2812 + $0x10] sm:$0xf]
        %v2818 = vld [vmem:[%s2812 + $0x14] sm:$0xf]
        %v2819 = vld [vmem:[%s2812 + $0x18] sm:$0xf]
        %v2820 = vld [vmem:[%s2812 + $0x1c] sm:$0xf]
        %v2821 = vld [vmem:[%s2812 + $0x20] sm:$0xf]
        %v2822 = vld [vmem:[%s2812 + $0x24] sm:$0xf]
        %v2823 = vld [vmem:[%s2812 + $0x28] sm:$0xf]
        %v2824 = vld [vmem:[%s2812 + $0x2c] sm:$0xf]
        %v2825 = vld [vmem:[%s2812 + $0x30] sm:$0xf]
        %v2826 = vld [vmem:[%s2812 + $0x34] sm:$0xf]
        %v2827 = vld [vmem:[%s2812 + $0x38] sm:$0xf]
        %v2828 = vld [vmem:[%s2812 + $0x3c] sm:$0xf]
        %v2829 = vld [vmem:[%s2812 + $0x40] sm:$0xf]
        %v2830 = vld [vmem:[%s2812 + $0x44] sm:$0xf]
        %v2831 = vld [vmem:[%s2812 + $0x48] sm:$0xf]
        %v2832 = vld [vmem:[%s2812 + $0x4c] sm:$0xf]
        %v2833 = vld [vmem:[%s2812 + $0x50] sm:$0xf]
        %v2834 = vld [vmem:[%s2812 + $0x54] sm:$0xf]
        %v2835 = vld [vmem:[%s2812 + $0x58] sm:$0xf]
        %v2836 = vld [vmem:[%s2812 + $0x5c] sm:$0xf]
        %v2837 = vld [vmem:[%s2812 + $0x60] sm:$0xf]
        %v2838 = vld [vmem:[%s2812 + $0x64] sm:$0xf]
        %v2839 = vld [vmem:[%s2812 + $0x68] sm:$0xf]
        %v2840 = vld [vmem:[%s2812 + $0x6c] sm:$0xf]
        %v2841 = vld [vmem:[%s2812 + $0x70] sm:$0xf]
        %v2842 = vld [vmem:[%s2812 + $0x74] sm:$0xf]
        %v2843 = vld [vmem:[%s2812 + $0x78] sm:$0xf]
        %v2844 = vld [vmem:[%s2812 + $0x7c] sm:$0xf]
        %v2845 = vld [vmem:[%s2812 + $0x80] sm:$0xf]
        %v2846 = vld [vmem:[%s2812 + $0x84] sm:$0xf]
        %v2847 = vld [vmem:[%s2812 + $0x88] sm:$0xf]
        %v2848 = vld [vmem:[%s2812 + $0x8c] sm:$0xf]
        %v2849 = vld [vmem:[%s2812 + $0x90] sm:$0xf]
        %v2850 = vld [vmem:[%s2812 + $0x94] sm:$0xf]
        %v2851 = vld [vmem:[%s2812 + $0x98] sm:$0xf]
        %v2852 = vld [vmem:[%s2812 + $0x9c] sm:$0xf]
        %v2853 = vld [vmem:[%s2812 + $0xa0] sm:$0xf]
        %v2854 = vld [vmem:[%s2812 + $0xa4] sm:$0xf]
        %v2855 = vld [vmem:[%s2812 + $0xa8] sm:$0xf]
        %v2856 = vld [vmem:[%s2812 + $0xac] sm:$0xf]
        %v2857 = vld [vmem:[%s2812 + $0xb0] sm:$0xf]
        %v2858 = vld [vmem:[%s2812 + $0xb4] sm:$0xf]
        %v2859 = vld [vmem:[%s2812 + $0xb8] sm:$0xf]
        %v2860 = vld [vmem:[%s2812 + $0xbc] sm:$0xf]
        %v2909 = vunpack.c.l.b16 %v2813
        %v2910 = vunpack.c.l.b16 %v2814
        %v2911 = vunpack.c.l.b16 %v2815
        %v2912 = vunpack.c.l.b16 %v2816
        %v2913 = vunpack.c.l.b16 %v2817
        %v2914 = vunpack.c.l.b16 %v2818
        %v2915 = vunpack.c.l.b16 %v2819
        %v2916 = vunpack.c.l.b16 %v2820
        %v2917 = vunpack.c.l.b16 %v2821
        %v2918 = vunpack.c.l.b16 %v2822
        %v2919 = vunpack.c.l.b16 %v2823
        %v2920 = vunpack.c.l.b16 %v2824
        %v2921 = vunpack.c.l.b16 %v2825
        %v2922 = vunpack.c.l.b16 %v2826
        %v2923 = vunpack.c.l.b16 %v2827
        %v2924 = vunpack.c.l.b16 %v2828
        %v2925 = vunpack.c.l.b16 %v2829
        %v2926 = vunpack.c.l.b16 %v2830
        %v2927 = vunpack.c.l.b16 %v2831
        %v2928 = vunpack.c.l.b16 %v2832
        %v2929 = vunpack.c.l.b16 %v2833
        %v2930 = vunpack.c.l.b16 %v2834
        %v2931 = vunpack.c.l.b16 %v2835
        %v2932 = vunpack.c.l.b16 %v2836
        %v2933 = vunpack.c.l.b16 %v2837
        %v2934 = vunpack.c.l.b16 %v2838
        %v2935 = vunpack.c.l.b16 %v2839
        %v2936 = vunpack.c.l.b16 %v2840
        %v2937 = vunpack.c.l.b16 %v2841
        %v2938 = vunpack.c.l.b16 %v2842
        %v2939 = vunpack.c.l.b16 %v2843
        %v2940 = vunpack.c.l.b16 %v2844
        %v2941 = vunpack.c.l.b16 %v2845
        %v2942 = vunpack.c.l.b16 %v2846
        %v2943 = vunpack.c.l.b16 %v2847
        %v2944 = vunpack.c.l.b16 %v2848
        %v2945 = vunpack.c.l.b16 %v2849
        %v2946 = vunpack.c.l.b16 %v2850
        %v2947 = vunpack.c.l.b16 %v2851
        %v2948 = vunpack.c.l.b16 %v2852
        %v2949 = vunpack.c.l.b16 %v2853
        %v2950 = vunpack.c.l.b16 %v2854
        %v2951 = vunpack.c.l.b16 %v2855
        %v2952 = vunpack.c.l.b16 %v2856
        %v2953 = vunpack.c.l.b16 %v2857
        %v2954 = vunpack.c.l.b16 %v2858
        %v2955 = vunpack.c.l.b16 %v2859
        %v2956 = vunpack.c.l.b16 %v2860
        %v2957 = vpack.c.b16 %v2910, %v2909
        %v2958 = vpack.c.b16 %v2912, %v2911
        %v2959 = vpack.c.b16 %v2914, %v2913
        %v2960 = vpack.c.b16 %v2916, %v2915
        %v2961 = vpack.c.b16 %v2918, %v2917
        %v2962 = vpack.c.b16 %v2920, %v2919
        %v2963 = vpack.c.b16 %v2922, %v2921
        %v2964 = vpack.c.b16 %v2924, %v2923
        %v2965 = vpack.c.b16 %v2926, %v2925
        %v2966 = vpack.c.b16 %v2928, %v2927
        %v2967 = vpack.c.b16 %v2930, %v2929
        %v2968 = vpack.c.b16 %v2932, %v2931
        %v2969 = vpack.c.b16 %v2934, %v2933
        %v2970 = vpack.c.b16 %v2936, %v2935
        %v2971 = vpack.c.b16 %v2938, %v2937
        %v2972 = vpack.c.b16 %v2940, %v2939
        %v2973 = vpack.c.b16 %v2942, %v2941
        %v2974 = vpack.c.b16 %v2944, %v2943
        %v2975 = vpack.c.b16 %v2946, %v2945
        %v2976 = vpack.c.b16 %v2948, %v2947
        %v2977 = vpack.c.b16 %v2950, %v2949
        %v2978 = vpack.c.b16 %v2952, %v2951
        %v2979 = vpack.c.b16 %v2954, %v2953
        %v2980 = vpack.c.b16 %v2956, %v2955
        %3005 = vmatprep.subr.bf16.mxu0 0
        %3006 = vmatpush1.bf16.msra.mxu0 %v2964
        %3007 = vmatprep.subr.bf16.mxu0 0
        %3008 = vmatpush1.bf16.msra.mxu0 %v2963
        %3009 = vmatprep.subr.bf16.mxu0 0
        %3010 = vmatpush1.bf16.msra.mxu0 %v2962
        %3011 = vmatprep.subr.bf16.mxu0 0
        %3012 = vmatpush1.bf16.msra.mxu0 %v2961
        %3013 = vmatprep.subr.bf16.mxu0 0
        %3014 = vmatpush1.bf16.msra.mxu0 %v2960
        %3015 = vmatprep.subr.bf16.mxu0 0
        %3016 = vmatpush1.bf16.msra.mxu0 %v2959
        %3017 = vmatprep.subr.bf16.mxu0 0
        %3018 = vmatpush1.bf16.msra.mxu0 %v2958
        %3019 = vmatprep.subr.bf16.mxu0 0
        %3020 = vmatpush1.bf16.msra.mxu0 %v2957
        %3021 = vmatprep.subr.bf16.mxu0 0
        %3022 = vmatpush2.bf16.msra.mxu0 %v2972
        %3023 = vmatprep.subr.bf16.mxu0 0
        %3024 = vmatpush2.bf16.msra.mxu0 %v2971
        %3025 = vmatprep.subr.bf16.mxu0 0
        %3026 = vmatpush2.bf16.msra.mxu0 %v2970
        %3027 = vmatprep.subr.bf16.mxu0 0
        %3028 = vmatpush2.bf16.msra.mxu0 %v2969
        %3029 = vmatprep.subr.bf16.mxu0 0
        %3030 = vmatpush2.bf16.msra.mxu0 %v2968
        %3031 = vmatprep.subr.bf16.mxu0 0
        %3032 = vmatpush2.bf16.msra.mxu0 %v2967
        %3033 = vmatprep.subr.bf16.mxu0 0
        %3034 = vmatpush2.bf16.msra.mxu0 %v2966
        %3035 = vmatprep.subr.bf16.mxu0 0
        %3036 = vmatpush2.bf16.msra.mxu0 %v2965
        %3037 = vmatprep.mubr.bf16.mxu0 %v1071
        %3038 = vmatmul.mubr.bf16.gmra.mxu0 %v710
        %v3039 = vpop.f32.mrf.mxu0
        %v3040 = vadd.f32 0.0, %v3039
        %v3041 = vpop.f32.mrf.mxu0
        %v3042 = vpop.f32.mrf.mxu0
        %v3043 = vadd.f32 0.0, %v3042
        %v3044 = vpop.f32.mrf.mxu0
        %3045 = vmatprep.mubr.bf16.mxu0 %v1072
        %3046 = vmatmul.mubr.bf16.gmra.mxu0 %v711
        %v3047 = vpop.f32.mrf.mxu0
        %v3048 = vadd.f32 0.0, %v3047
        %v3049 = vpop.f32.mrf.mxu0
        %v3050 = vpop.f32.mrf.mxu0
        %v3051 = vadd.f32 0.0, %v3050
        %v3052 = vpop.f32.mrf.mxu0
        %3053 = vmatprep.mubr.bf16.mxu0 %v1073
        %3054 = vmatmul.mubr.bf16.gmra.mxu0 %v712
        %v3055 = vpop.f32.mrf.mxu0
        %v3056 = vadd.f32 0.0, %v3055
        %v3057 = vpop.f32.mrf.mxu0
        %v3058 = vpop.f32.mrf.mxu0
        %v3059 = vadd.f32 0.0, %v3058
        %v3060 = vpop.f32.mrf.mxu0
        %3061 = vmatprep.mubr.bf16.mxu0 %v1074
        %3062 = vmatmul.mubr.bf16.gmra.mxu0 %v713
        %v3063 = vpop.f32.mrf.mxu0
        %v3064 = vadd.f32 0.0, %v3063
        %v3065 = vpop.f32.mrf.mxu0
        %v3066 = vpop.f32.mrf.mxu0
        %v3067 = vadd.f32 0.0, %v3066
        %v3068 = vpop.f32.mrf.mxu0
        %3069 = vmatprep.mubr.bf16.mxu0 %v1075
        %3070 = vmatmul.mubr.bf16.gmra.mxu0 %v714
        %v3071 = vpop.f32.mrf.mxu0
        %v3072 = vadd.f32 0.0, %v3071
        %v3073 = vpop.f32.mrf.mxu0
        %v3074 = vpop.f32.mrf.mxu0
        %v3075 = vadd.f32 0.0, %v3074
        %v3076 = vpop.f32.mrf.mxu0
        %3077 = vmatprep.mubr.bf16.mxu0 %v1076
        %3078 = vmatmul.mubr.bf16.gmra.mxu0 %v715
        %v3079 = vpop.f32.mrf.mxu0
        %v3080 = vadd.f32 0.0, %v3079
        %v3081 = vpop.f32.mrf.mxu0
        %v3082 = vpop.f32.mrf.mxu0
        %v3083 = vadd.f32 0.0, %v3082
        %v3084 = vpop.f32.mrf.mxu0
        %3085 = vmatprep.mubr.bf16.mxu0 %v1077
        %3086 = vmatmul.mubr.bf16.gmra.mxu0 %v716
        %v3087 = vpop.f32.mrf.mxu0
        %v3088 = vadd.f32 0.0, %v3087
        %v3089 = vpop.f32.mrf.mxu0
        %v3090 = vpop.f32.mrf.mxu0
        %v3091 = vadd.f32 0.0, %v3090
        %v3092 = vpop.f32.mrf.mxu0
        %3093 = vmatprep.mubr.bf16.mxu0 %v1078
        %3094 = vmatmul.mubr.bf16.gmra.mxu0 %v717
        %v3095 = vpop.f32.mrf.mxu0
        %v3096 = vadd.f32 0.0, %v3095
        %v3097 = vpop.f32.mrf.mxu0
        %v3098 = vpop.f32.mrf.mxu0
        %v3099 = vadd.f32 0.0, %v3098
        %v3100 = vpop.f32.mrf.mxu0
        %3101 = vmatprep.mubr.bf16.mxu0 %v1079
        %3102 = vmatmul.mubr.bf16.gmra.mxu0 %v718
        %v3103 = vpop.f32.mrf.mxu0
        %v3104 = vadd.f32 0.0, %v3103
        %v3105 = vpop.f32.mrf.mxu0
        %v3106 = vpop.f32.mrf.mxu0
        %v3107 = vadd.f32 0.0, %v3106
        %v3108 = vpop.f32.mrf.mxu0
        %3109 = vmatprep.mubr.bf16.mxu0 %v1080
        %3110 = vmatmul.mubr.bf16.gmra.mxu0 %v719
        %v3111 = vpop.f32.mrf.mxu0
        %v3112 = vadd.f32 0.0, %v3111
        %v3113 = vpop.f32.mrf.mxu0
        %v3114 = vpop.f32.mrf.mxu0
        %v3115 = vadd.f32 0.0, %v3114
        %v3116 = vpop.f32.mrf.mxu0
        %3117 = vmatprep.mubr.bf16.mxu0 %v1081
        %3118 = vmatmul.mubr.bf16.gmra.mxu0 %v720
        %v3119 = vpop.f32.mrf.mxu0
        %v3120 = vadd.f32 0.0, %v3119
        %v3121 = vpop.f32.mrf.mxu0
        %v3122 = vpop.f32.mrf.mxu0
        %v3123 = vadd.f32 0.0, %v3122
        %v3124 = vpop.f32.mrf.mxu0
        %3125 = vmatprep.mubr.bf16.mxu0 %v1082
        %3126 = vmatmul.mubr.bf16.gmra.mxu0 %v721
        %v3127 = vpop.f32.mrf.mxu0
        %v3128 = vadd.f32 0.0, %v3127
        %v3129 = vpop.f32.mrf.mxu0
        %v3130 = vpop.f32.mrf.mxu0
        %v3131 = vadd.f32 0.0, %v3130
        %v3132 = vpop.f32.mrf.mxu0
        %3133 = vmatprep.mubr.bf16.mxu0 %v1083
        %3134 = vmatmul.mubr.bf16.gmra.mxu0 %v722
        %v3135 = vpop.f32.mrf.mxu0
        %v3136 = vadd.f32 0.0, %v3135
        %v3137 = vpop.f32.mrf.mxu0
        %v3138 = vpop.f32.mrf.mxu0
        %v3139 = vadd.f32 0.0, %v3138
        %v3140 = vpop.f32.mrf.mxu0
        %3141 = vmatprep.mubr.bf16.mxu0 %v1084
        %3142 = vmatmul.mubr.bf16.gmra.mxu0 %v723
        %v3143 = vpop.f32.mrf.mxu0
        %v3144 = vadd.f32 0.0, %v3143
        %v3145 = vpop.f32.mrf.mxu0
        %v3146 = vpop.f32.mrf.mxu0
        %v3147 = vadd.f32 0.0, %v3146
        %v3148 = vpop.f32.mrf.mxu0
        %3149 = vmatprep.mubr.bf16.mxu0 %v1085
        %3150 = vmatmul.mubr.bf16.gmra.mxu0 %v724
        %v3151 = vpop.f32.mrf.mxu0
        %v3152 = vadd.f32 0.0, %v3151
        %v3153 = vpop.f32.mrf.mxu0
        %v3154 = vpop.f32.mrf.mxu0
        %v3155 = vadd.f32 0.0, %v3154
        %v3156 = vpop.f32.mrf.mxu0
        %3157 = vmatprep.mubr.bf16.mxu0 %v1086
        %3158 = vmatmul.mubr.bf16.gmra.mxu0 %v725
        %v3159 = vpop.f32.mrf.mxu0
        %v3160 = vadd.f32 0.0, %v3159
        %v3161 = vpop.f32.mrf.mxu0
        %v3162 = vpop.f32.mrf.mxu0
        %v3163 = vadd.f32 0.0, %v3162
        %v3164 = vpop.f32.mrf.mxu0
        %3165 = vmatprep.mubr.bf16.mxu0 %v1087
        %3166 = vmatmul.mubr.bf16.gmra.mxu0 %v726
        %v3167 = vpop.f32.mrf.mxu0
        %v3168 = vadd.f32 0.0, %v3167
        %v3169 = vpop.f32.mrf.mxu0
        %v3170 = vpop.f32.mrf.mxu0
        %v3171 = vadd.f32 0.0, %v3170
        %v3172 = vpop.f32.mrf.mxu0
        %3173 = vmatprep.mubr.bf16.mxu0 %v1088
        %3174 = vmatmul.mubr.bf16.gmra.mxu0 %v727
        %v3175 = vpop.f32.mrf.mxu0
        %v3176 = vadd.f32 0.0, %v3175
        %v3177 = vpop.f32.mrf.mxu0
        %v3178 = vpop.f32.mrf.mxu0
        %v3179 = vadd.f32 0.0, %v3178
        %v3180 = vpop.f32.mrf.mxu0
        %3181 = vmatprep.mubr.bf16.mxu0 %v1089
        %3182 = vmatmul.mubr.bf16.gmra.mxu0 %v728
        %v3183 = vpop.f32.mrf.mxu0
        %v3184 = vadd.f32 0.0, %v3183
        %v3185 = vpop.f32.mrf.mxu0
        %v3186 = vpop.f32.mrf.mxu0
        %v3187 = vadd.f32 0.0, %v3186
        %v3188 = vpop.f32.mrf.mxu0
        %3189 = vmatprep.mubr.bf16.mxu0 %v1090
        %3190 = vmatmul.mubr.bf16.gmra.mxu0 %v729
        %v3191 = vpop.f32.mrf.mxu0
        %v3192 = vadd.f32 0.0, %v3191
        %v3193 = vpop.f32.mrf.mxu0
        %v3194 = vpop.f32.mrf.mxu0
        %v3195 = vadd.f32 0.0, %v3194
        %v3196 = vpop.f32.mrf.mxu0
        %3197 = vmatprep.mubr.bf16.mxu0 %v1091
        %3198 = vmatmul.mubr.bf16.gmra.mxu0 %v730
        %v3199 = vpop.f32.mrf.mxu0
        %v3200 = vadd.f32 0.0, %v3199
        %v3201 = vpop.f32.mrf.mxu0
        %v3202 = vpop.f32.mrf.mxu0
        %v3203 = vadd.f32 0.0, %v3202
        %v3204 = vpop.f32.mrf.mxu0
        %3205 = vmatprep.mubr.bf16.mxu0 %v1092
        %3206 = vmatmul.mubr.bf16.gmra.mxu0 %v731
        %v3207 = vpop.f32.mrf.mxu0
        %v3208 = vadd.f32 0.0, %v3207
        %v3209 = vpop.f32.mrf.mxu0
        %v3210 = vpop.f32.mrf.mxu0
        %v3211 = vadd.f32 0.0, %v3210
        %v3212 = vpop.f32.mrf.mxu0
        %3213 = vmatprep.mubr.bf16.mxu0 %v1093
        %3214 = vmatmul.mubr.bf16.gmra.mxu0 %v732
        %v3215 = vpop.f32.mrf.mxu0
        %v3216 = vadd.f32 0.0, %v3215
        %v3217 = vpop.f32.mrf.mxu0
        %v3218 = vpop.f32.mrf.mxu0
        %v3219 = vadd.f32 0.0, %v3218
        %v3220 = vpop.f32.mrf.mxu0
        %3221 = vmatprep.mubr.bf16.mxu0 %v1094
        %3222 = vmatmul.mubr.bf16.gmra.mxu0 %v733
        %v3223 = vpop.f32.mrf.mxu0
        %v3224 = vadd.f32 0.0, %v3223
        %v3225 = vpop.f32.mrf.mxu0
        %v3226 = vpop.f32.mrf.mxu0
        %v3227 = vadd.f32 0.0, %v3226
        %v3228 = vpop.f32.mrf.mxu0
        %3229 = vmatprep.mubr.bf16.mxu0 %v1095
        %3230 = vmatmul.mubr.bf16.gmra.mxu0 %v734
        %v3231 = vpop.f32.mrf.mxu0
        %v3232 = vadd.f32 0.0, %v3231
        %v3233 = vpop.f32.mrf.mxu0
        %v3234 = vpop.f32.mrf.mxu0
        %v3235 = vadd.f32 0.0, %v3234
        %v3236 = vpop.f32.mrf.mxu0
        %3237 = vmatprep.mubr.bf16.mxu0 %v1096
        %3238 = vmatmul.mubr.bf16.gmra.mxu0 %v735
        %v3239 = vpop.f32.mrf.mxu0
        %v3240 = vadd.f32 0.0, %v3239
        %v3241 = vpop.f32.mrf.mxu0
        %v3242 = vpop.f32.mrf.mxu0
        %v3243 = vadd.f32 0.0, %v3242
        %v3244 = vpop.f32.mrf.mxu0
        %3245 = vmatprep.mubr.bf16.mxu0 %v1097
        %3246 = vmatmul.mubr.bf16.gmra.mxu0 %v736
        %v3247 = vpop.f32.mrf.mxu0
        %v3248 = vadd.f32 0.0, %v3247
        %v3249 = vpop.f32.mrf.mxu0
        %v3250 = vpop.f32.mrf.mxu0
        %v3251 = vadd.f32 0.0, %v3250
        %v3252 = vpop.f32.mrf.mxu0
        %3253 = vdwg.mxu0
        %3254 = vmatprep.subr.bf16.mxu0 0
        %3255 = vmatpush1.bf16.msra.mxu0 %v2980
        %3256 = vmatprep.subr.bf16.mxu0 0
        %3257 = vmatpush1.bf16.msra.mxu0 %v2979
        %3258 = vmatprep.subr.bf16.mxu0 0
        %3259 = vmatpush1.bf16.msra.mxu0 %v2978
        %3260 = vmatprep.subr.bf16.mxu0 0
        %3261 = vmatpush1.bf16.msra.mxu0 %v2977
        %3262 = vmatprep.subr.bf16.mxu0 0
        %3263 = vmatpush1.bf16.msra.mxu0 %v2976
        %3264 = vmatprep.subr.bf16.mxu0 0
        %3265 = vmatpush1.bf16.msra.mxu0 %v2975
        %3266 = vmatprep.subr.bf16.mxu0 0
        %3267 = vmatpush1.bf16.msra.mxu0 %v2974
        %3268 = vmatprep.subr.bf16.mxu0 0
        %3269 = vmatpush1.bf16.msra.mxu0 %v2973
        %3270 = vmatprep.subr.bf16.mxu0 0
        %3271 = vmatpush2.bf16.msra.mxu0 0
        %3272 = vmatprep.subr.bf16.mxu0 0
        %3273 = vmatpush2.bf16.msra.mxu0 0
        %3274 = vmatprep.subr.bf16.mxu0 0
        %3275 = vmatpush2.bf16.msra.mxu0 0
        %3276 = vmatprep.subr.bf16.mxu0 0
        %3277 = vmatpush2.bf16.msra.mxu0 0
        %3278 = vmatprep.subr.bf16.mxu0 0
        %3279 = vmatpush2.bf16.msra.mxu0 0
        %3280 = vmatprep.subr.bf16.mxu0 0
        %3281 = vmatpush2.bf16.msra.mxu0 0
        %3282 = vmatprep.subr.bf16.mxu0 0
        %3283 = vmatpush2.bf16.msra.mxu0 0
        %3284 = vmatprep.subr.bf16.mxu0 0
        %3285 = vmatpush2.bf16.msra.mxu0 0
        %3286 = vmatprep.mubr.bf16.mxu0 0
        %3287 = vmatmul.mubr.bf16.gmra.mxu0 %v921
        %v3288 = vpop.f32.mrf.mxu0
        %v3289 = vadd.f32 %v3040, %v3288
        %v3290 = vpop.f32.mrf.mxu0
        %v3291 = vpop.f32.mrf.mxu0
        %v3292 = vadd.f32 %v3043, %v3291
        %v3293 = vpop.f32.mrf.mxu0
        %3294 = vmatprep.mubr.bf16.mxu0 0
        %3295 = vmatmul.mubr.bf16.gmra.mxu0 %v922
        %v3296 = vpop.f32.mrf.mxu0
        %v3297 = vadd.f32 %v3048, %v3296
        %v3298 = vpop.f32.mrf.mxu0
        %v3299 = vpop.f32.mrf.mxu0
        %v3300 = vadd.f32 %v3051, %v3299
        %v3301 = vpop.f32.mrf.mxu0
        %3302 = vmatprep.mubr.bf16.mxu0 0
        %3303 = vmatmul.mubr.bf16.gmra.mxu0 %v923
        %v3304 = vpop.f32.mrf.mxu0
        %v3305 = vadd.f32 %v3056, %v3304
        %v3306 = vpop.f32.mrf.mxu0
        %v3307 = vpop.f32.mrf.mxu0
        %v3308 = vadd.f32 %v3059, %v3307
        %v3309 = vpop.f32.mrf.mxu0
        %3310 = vmatprep.mubr.bf16.mxu0 0
        %3311 = vmatmul.mubr.bf16.gmra.mxu0 %v924
        %v3312 = vpop.f32.mrf.mxu0
        %v3313 = vadd.f32 %v3064, %v3312
        %v3314 = vpop.f32.mrf.mxu0
        %v3315 = vpop.f32.mrf.mxu0
        %v3316 = vadd.f32 %v3067, %v3315
        %v3317 = vpop.f32.mrf.mxu0
        %3318 = vmatprep.mubr.bf16.mxu0 0
        %3319 = vmatmul.mubr.bf16.gmra.mxu0 %v925
        %v3320 = vpop.f32.mrf.mxu0
        %v3321 = vadd.f32 %v3072, %v3320
        %v3322 = vpop.f32.mrf.mxu0
        %v3323 = vpop.f32.mrf.mxu0
        %v3324 = vadd.f32 %v3075, %v3323
        %v3325 = vpop.f32.mrf.mxu0
        %3326 = vmatprep.mubr.bf16.mxu0 0
        %3327 = vmatmul.mubr.bf16.gmra.mxu0 %v926
        %v3328 = vpop.f32.mrf.mxu0
        %v3329 = vadd.f32 %v3080, %v3328
        %v3330 = vpop.f32.mrf.mxu0
        %v3331 = vpop.f32.mrf.mxu0
        %v3332 = vadd.f32 %v3083, %v3331
        %v3333 = vpop.f32.mrf.mxu0
        %3334 = vmatprep.mubr.bf16.mxu0 0
        %3335 = vmatmul.mubr.bf16.gmra.mxu0 %v927
        %v3336 = vpop.f32.mrf.mxu0
        %v3337 = vadd.f32 %v3088, %v3336
        %v3338 = vpop.f32.mrf.mxu0
        %v3339 = vpop.f32.mrf.mxu0
        %v3340 = vadd.f32 %v3091, %v3339
        %v3341 = vpop.f32.mrf.mxu0
        %3342 = vmatprep.mubr.bf16.mxu0 0
        %3343 = vmatmul.mubr.bf16.gmra.mxu0 %v928
        %v3344 = vpop.f32.mrf.mxu0
        %v3345 = vadd.f32 %v3096, %v3344
        %v3346 = vpop.f32.mrf.mxu0
        %v3347 = vpop.f32.mrf.mxu0
        %v3348 = vadd.f32 %v3099, %v3347
        %v3349 = vpop.f32.mrf.mxu0
        %3350 = vmatprep.mubr.bf16.mxu0 0
        %3351 = vmatmul.mubr.bf16.gmra.mxu0 %v929
        %v3352 = vpop.f32.mrf.mxu0
        %v3353 = vadd.f32 %v3104, %v3352
        %v3354 = vpop.f32.mrf.mxu0
        %v3355 = vpop.f32.mrf.mxu0
        %v3356 = vadd.f32 %v3107, %v3355
        %v3357 = vpop.f32.mrf.mxu0
        %3358 = vmatprep.mubr.bf16.mxu0 0
        %3359 = vmatmul.mubr.bf16.gmra.mxu0 %v930
        %v3360 = vpop.f32.mrf.mxu0
        %v3361 = vadd.f32 %v3112, %v3360
        %v3362 = vpop.f32.mrf.mxu0
        %v3363 = vpop.f32.mrf.mxu0
        %v3364 = vadd.f32 %v3115, %v3363
        %v3365 = vpop.f32.mrf.mxu0
        %3366 = vmatprep.mubr.bf16.mxu0 0
        %3367 = vmatmul.mubr.bf16.gmra.mxu0 %v931
        %v3368 = vpop.f32.mrf.mxu0
        %v3369 = vadd.f32 %v3120, %v3368
        %v3370 = vpop.f32.mrf.mxu0
        %v3371 = vpop.f32.mrf.mxu0
        %v3372 = vadd.f32 %v3123, %v3371
        %v3373 = vpop.f32.mrf.mxu0
        %3374 = vmatprep.mubr.bf16.mxu0 0
        %3375 = vmatmul.mubr.bf16.gmra.mxu0 %v932
        %v3376 = vpop.f32.mrf.mxu0
        %v3377 = vadd.f32 %v3128, %v3376
        %v3378 = vpop.f32.mrf.mxu0
        %v3379 = vpop.f32.mrf.mxu0
        %v3380 = vadd.f32 %v3131, %v3379
        %v3381 = vpop.f32.mrf.mxu0
        %3382 = vmatprep.mubr.bf16.mxu0 0
        %3383 = vmatmul.mubr.bf16.gmra.mxu0 %v933
        %v3384 = vpop.f32.mrf.mxu0
        %v3385 = vadd.f32 %v3136, %v3384
        %v3386 = vpop.f32.mrf.mxu0
        %v3387 = vpop.f32.mrf.mxu0
        %v3388 = vadd.f32 %v3139, %v3387
        %v3389 = vpop.f32.mrf.mxu0
        %3390 = vmatprep.mubr.bf16.mxu0 0
        %3391 = vmatmul.mubr.bf16.gmra.mxu0 %v934
        %v3392 = vpop.f32.mrf.mxu0
        %v3393 = vadd.f32 %v3144, %v3392
        %v3394 = vpop.f32.mrf.mxu0
        %v3395 = vpop.f32.mrf.mxu0
        %v3396 = vadd.f32 %v3147, %v3395
        %v3397 = vpop.f32.mrf.mxu0
        %3398 = vmatprep.mubr.bf16.mxu0 0
        %3399 = vmatmul.mubr.bf16.gmra.mxu0 %v935
        %v3400 = vpop.f32.mrf.mxu0
        %v3401 = vadd.f32 %v3152, %v3400
        %v3402 = vpop.f32.mrf.mxu0
        %v3403 = vpop.f32.mrf.mxu0
        %v3404 = vadd.f32 %v3155, %v3403
        %v3405 = vpop.f32.mrf.mxu0
        %3406 = vmatprep.mubr.bf16.mxu0 0
        %3407 = vmatmul.mubr.bf16.gmra.mxu0 %v936
        %v3408 = vpop.f32.mrf.mxu0
        %v3409 = vadd.f32 %v3160, %v3408
        %v3410 = vpop.f32.mrf.mxu0
        %v3411 = vpop.f32.mrf.mxu0
        %v3412 = vadd.f32 %v3163, %v3411
        %v3413 = vpop.f32.mrf.mxu0
        %3414 = vmatprep.mubr.bf16.mxu0 0
        %3415 = vmatmul.mubr.bf16.gmra.mxu0 %v937
        %v3416 = vpop.f32.mrf.mxu0
        %v3417 = vadd.f32 %v3168, %v3416
        %v3418 = vpop.f32.mrf.mxu0
        %v3419 = vpop.f32.mrf.mxu0
        %v3420 = vadd.f32 %v3171, %v3419
        %v3421 = vpop.f32.mrf.mxu0
        %3422 = vmatprep.mubr.bf16.mxu0 0
        %3423 = vmatmul.mubr.bf16.gmra.mxu0 %v938
        %v3424 = vpop.f32.mrf.mxu0
        %v3425 = vadd.f32 %v3176, %v3424
        %v3426 = vpop.f32.mrf.mxu0
        %v3427 = vpop.f32.mrf.mxu0
        %v3428 = vadd.f32 %v3179, %v3427
        %v3429 = vpop.f32.mrf.mxu0
        %3430 = vmatprep.mubr.bf16.mxu0 0
        %3431 = vmatmul.mubr.bf16.gmra.mxu0 %v939
        %v3432 = vpop.f32.mrf.mxu0
        %v3433 = vadd.f32 %v3184, %v3432
        %v3434 = vpop.f32.mrf.mxu0
        %v3435 = vpop.f32.mrf.mxu0
        %v3436 = vadd.f32 %v3187, %v3435
        %v3437 = vpop.f32.mrf.mxu0
        %3438 = vmatprep.mubr.bf16.mxu0 0
        %3439 = vmatmul.mubr.bf16.gmra.mxu0 %v940
        %v3440 = vpop.f32.mrf.mxu0
        %v3441 = vadd.f32 %v3192, %v3440
        %v3442 = vpop.f32.mrf.mxu0
        %v3443 = vpop.f32.mrf.mxu0
        %v3444 = vadd.f32 %v3195, %v3443
        %v3445 = vpop.f32.mrf.mxu0
        %3446 = vmatprep.mubr.bf16.mxu0 0
        %3447 = vmatmul.mubr.bf16.gmra.mxu0 %v941
        %v3448 = vpop.f32.mrf.mxu0
        %v3449 = vadd.f32 %v3200, %v3448
        %v3450 = vpop.f32.mrf.mxu0
        %v3451 = vpop.f32.mrf.mxu0
        %v3452 = vadd.f32 %v3203, %v3451
        %v3453 = vpop.f32.mrf.mxu0
        %3454 = vmatprep.mubr.bf16.mxu0 0
        %3455 = vmatmul.mubr.bf16.gmra.mxu0 %v942
        %v3456 = vpop.f32.mrf.mxu0
        %v3457 = vadd.f32 %v3208, %v3456
        %v3458 = vpop.f32.mrf.mxu0
        %v3459 = vpop.f32.mrf.mxu0
        %v3460 = vadd.f32 %v3211, %v3459
        %v3461 = vpop.f32.mrf.mxu0
        %3462 = vmatprep.mubr.bf16.mxu0 0
        %3463 = vmatmul.mubr.bf16.gmra.mxu0 %v943
        %v3464 = vpop.f32.mrf.mxu0
        %v3465 = vadd.f32 %v3216, %v3464
        %v3466 = vpop.f32.mrf.mxu0
        %v3467 = vpop.f32.mrf.mxu0
        %v3468 = vadd.f32 %v3219, %v3467
        %v3469 = vpop.f32.mrf.mxu0
        %3470 = vmatprep.mubr.bf16.mxu0 0
        %3471 = vmatmul.mubr.bf16.gmra.mxu0 %v944
        %v3472 = vpop.f32.mrf.mxu0
        %v3473 = vadd.f32 %v3224, %v3472
        %v3474 = vpop.f32.mrf.mxu0
        %v3475 = vpop.f32.mrf.mxu0
        %v3476 = vadd.f32 %v3227, %v3475
        %v3477 = vpop.f32.mrf.mxu0
        %3478 = vmatprep.mubr.bf16.mxu0 0
        %3479 = vmatmul.mubr.bf16.gmra.mxu0 %v945
        %v3480 = vpop.f32.mrf.mxu0
        %v3481 = vadd.f32 %v3232, %v3480
        %v3482 = vpop.f32.mrf.mxu0
        %v3483 = vpop.f32.mrf.mxu0
        %v3484 = vadd.f32 %v3235, %v3483
        %v3485 = vpop.f32.mrf.mxu0
        %3486 = vmatprep.mubr.bf16.mxu0 0
        %3487 = vmatmul.mubr.bf16.gmra.mxu0 %v946
        %v3488 = vpop.f32.mrf.mxu0
        %v3489 = vadd.f32 %v3240, %v3488
        %v3490 = vpop.f32.mrf.mxu0
        %v3491 = vpop.f32.mrf.mxu0
        %v3492 = vadd.f32 %v3243, %v3491
        %v3493 = vpop.f32.mrf.mxu0
        %3494 = vmatprep.mubr.bf16.mxu0 0
        %3495 = vmatmul.mubr.bf16.gmra.mxu0 %v947
        %v3496 = vpop.f32.mrf.mxu0
        %v3497 = vadd.f32 %v3248, %v3496
        %v3498 = vpop.f32.mrf.mxu0
        %v3499 = vpop.f32.mrf.mxu0
        %v3500 = vadd.f32 %v3251, %v3499
        %v3501 = vpop.f32.mrf.mxu0
        %3502 = vdwg.mxu0
        %v3503 = vadd.f32 %v2598, %v3289
        %v3504 = vadd.f32 %v2601, %v3292
        %v3505 = vadd.f32 %v2606, %v3297
        %v3506 = vadd.f32 %v2609, %v3300
        %v3507 = vadd.f32 %v2614, %v3305
        %v3508 = vadd.f32 %v2617, %v3308
        %v3509 = vadd.f32 %v2622, %v3313
        %v3510 = vadd.f32 %v2625, %v3316
        %v3511 = vadd.f32 %v2630, %v3321
        %v3512 = vadd.f32 %v2633, %v3324
        %v3513 = vadd.f32 %v2638, %v3329
        %v3514 = vadd.f32 %v2641, %v3332
        %v3515 = vadd.f32 %v2646, %v3337
        %v3516 = vadd.f32 %v2649, %v3340
        %v3517 = vadd.f32 %v2654, %v3345
        %v3518 = vadd.f32 %v2657, %v3348
        %v3519 = vadd.f32 %v2662, %v3353
        %v3520 = vadd.f32 %v2665, %v3356
        %v3521 = vadd.f32 %v2670, %v3361
        %v3522 = vadd.f32 %v2673, %v3364
        %v3523 = vadd.f32 %v2678, %v3369
        %v3524 = vadd.f32 %v2681, %v3372
        %v3525 = vadd.f32 %v2686, %v3377
        %v3526 = vadd.f32 %v2689, %v3380
        %v3527 = vadd.f32 %v2694, %v3385
        %v3528 = vadd.f32 %v2697, %v3388
        %v3529 = vadd.f32 %v2702, %v3393
        %v3530 = vadd.f32 %v2705, %v3396
        %v3531 = vadd.f32 %v2710, %v3401
        %v3532 = vadd.f32 %v2713, %v3404
        %v3533 = vadd.f32 %v2718, %v3409
        %v3534 = vadd.f32 %v2721, %v3412
        %v3535 = vadd.f32 %v2726, %v3417
        %v3536 = vadd.f32 %v2729, %v3420
        %v3537 = vadd.f32 %v2734, %v3425
        %v3538 = vadd.f32 %v2737, %v3428
        %v3539 = vadd.f32 %v2742, %v3433
        %v3540 = vadd.f32 %v2745, %v3436
        %v3541 = vadd.f32 %v2750, %v3441
        %v3542 = vadd.f32 %v2753, %v3444
        %v3543 = vadd.f32 %v2758, %v3449
        %v3544 = vadd.f32 %v2761, %v3452
        %v3545 = vadd.f32 %v2766, %v3457
        %v3546 = vadd.f32 %v2769, %v3460
        %v3547 = vadd.f32 %v2774, %v3465
        %v3548 = vadd.f32 %v2777, %v3468
        %v3549 = vadd.f32 %v2782, %v3473
        %v3550 = vadd.f32 %v2785, %v3476
        %v3551 = vadd.f32 %v2790, %v3481
        %v3552 = vadd.f32 %v2793, %v3484
        %v3553 = vadd.f32 %v2798, %v3489
        %v3554 = vadd.f32 %v2801, %v3492
        %v3555 = vadd.f32 %v2806, %v3497
        %v3556 = vadd.f32 %v2809, %v3500
        %v3557 = vld [vmem:[%s2] sm:$0x1]
        %v3559 = vlaneseq
        %v3560 = vshrl.u32 %v3559, 7
        %v3561 = vsub.s32 0, %v3560
        %v3562 = vrot.slane %v3557, %v3561
        %v3564 = vmul.f32 %v3503, %v3562
        %v3565 = vmul.f32 %v3504, %v3562
        %v3566 = vmul.f32 %v3505, %v3562
        %v3567 = vmul.f32 %v3506, %v3562
        %v3568 = vmul.f32 %v3507, %v3562
        %v3569 = vmul.f32 %v3508, %v3562
        %v3570 = vmul.f32 %v3509, %v3562
        %v3571 = vmul.f32 %v3510, %v3562
        %v3572 = vmul.f32 %v3511, %v3562
        %v3573 = vmul.f32 %v3512, %v3562
        %v3574 = vmul.f32 %v3513, %v3562
        %v3575 = vmul.f32 %v3514, %v3562
        %v3576 = vmul.f32 %v3515, %v3562
        %v3577 = vmul.f32 %v3516, %v3562
        %v3578 = vmul.f32 %v3517, %v3562
        %v3579 = vmul.f32 %v3518, %v3562
        %v3580 = vmul.f32 %v3519, %v3562
        %v3581 = vmul.f32 %v3520, %v3562
        %v3582 = vmul.f32 %v3521, %v3562
        %v3583 = vmul.f32 %v3522, %v3562
        %v3584 = vmul.f32 %v3523, %v3562
        %v3585 = vmul.f32 %v3524, %v3562
        %v3586 = vmul.f32 %v3525, %v3562
        %v3587 = vmul.f32 %v3526, %v3562
        %v3588 = vmul.f32 %v3527, %v3562
        %v3589 = vmul.f32 %v3528, %v3562
        %v3590 = vmul.f32 %v3529, %v3562
        %v3591 = vmul.f32 %v3530, %v3562
        %v3592 = vmul.f32 %v3531, %v3562
        %v3593 = vmul.f32 %v3532, %v3562
        %v3594 = vmul.f32 %v3533, %v3562
        %v3595 = vmul.f32 %v3534, %v3562
        %v3596 = vmul.f32 %v3535, %v3562
        %v3597 = vmul.f32 %v3536, %v3562
        %v3598 = vmul.f32 %v3537, %v3562
        %v3599 = vmul.f32 %v3538, %v3562
        %v3600 = vmul.f32 %v3539, %v3562
        %v3601 = vmul.f32 %v3540, %v3562
        %v3602 = vmul.f32 %v3541, %v3562
        %v3603 = vmul.f32 %v3542, %v3562
        %v3604 = vmul.f32 %v3543, %v3562
        %v3605 = vmul.f32 %v3544, %v3562
        %v3606 = vmul.f32 %v3545, %v3562
        %v3607 = vmul.f32 %v3546, %v3562
        %v3608 = vmul.f32 %v3547, %v3562
        %v3609 = vmul.f32 %v3548, %v3562
        %v3610 = vmul.f32 %v3549, %v3562
        %v3611 = vmul.f32 %v3550, %v3562
        %v3612 = vmul.f32 %v3551, %v3562
        %v3613 = vmul.f32 %v3552, %v3562
        %v3614 = vmul.f32 %v3553, %v3562
        %v3615 = vmul.f32 %v3554, %v3562
        %v3616 = vmul.f32 %v3555, %v3562
        %v3617 = vmul.f32 %v3556, %v3562
        %v3618 = vld [vmem:[%s3] sm:$0x1]
        %v3620 = vlaneseq
        %v3621 = vshrl.u32 %v3620, 7
        %v3622 = vsub.s32 0, %v3621
        %v3623 = vrot.slane %v3618, %v3622
        %v3625 = vadd.f32 %v3564, %v3623
        %v3626 = vadd.f32 %v3565, %v3623
        %v3627 = vadd.f32 %v3566, %v3623
        %v3628 = vadd.f32 %v3567, %v3623
        %v3629 = vadd.f32 %v3568, %v3623
        %v3630 = vadd.f32 %v3569, %v3623
        %v3631 = vadd.f32 %v3570, %v3623
        %v3632 = vadd.f32 %v3571, %v3623
        %v3633 = vadd.f32 %v3572, %v3623
        %v3634 = vadd.f32 %v3573, %v3623
        %v3635 = vadd.f32 %v3574, %v3623
        %v3636 = vadd.f32 %v3575, %v3623
        %v3637 = vadd.f32 %v3576, %v3623
        %v3638 = vadd.f32 %v3577, %v3623
        %v3639 = vadd.f32 %v3578, %v3623
        %v3640 = vadd.f32 %v3579, %v3623
        %v3641 = vadd.f32 %v3580, %v3623
        %v3642 = vadd.f32 %v3581, %v3623
        %v3643 = vadd.f32 %v3582, %v3623
        %v3644 = vadd.f32 %v3583, %v3623
        %v3645 = vadd.f32 %v3584, %v3623
        %v3646 = vadd.f32 %v3585, %v3623
        %v3647 = vadd.f32 %v3586, %v3623
        %v3648 = vadd.f32 %v3587, %v3623
        %v3649 = vadd.f32 %v3588, %v3623
        %v3650 = vadd.f32 %v3589, %v3623
        %v3651 = vadd.f32 %v3590, %v3623
        %v3652 = vadd.f32 %v3591, %v3623
        %v3653 = vadd.f32 %v3592, %v3623
        %v3654 = vadd.f32 %v3593, %v3623
        %v3655 = vadd.f32 %v3594, %v3623
        %v3656 = vadd.f32 %v3595, %v3623
        %v3657 = vadd.f32 %v3596, %v3623
        %v3658 = vadd.f32 %v3597, %v3623
        %v3659 = vadd.f32 %v3598, %v3623
        %v3660 = vadd.f32 %v3599, %v3623
        %v3661 = vadd.f32 %v3600, %v3623
        %v3662 = vadd.f32 %v3601, %v3623
        %v3663 = vadd.f32 %v3602, %v3623
        %v3664 = vadd.f32 %v3603, %v3623
        %v3665 = vadd.f32 %v3604, %v3623
        %v3666 = vadd.f32 %v3605, %v3623
        %v3667 = vadd.f32 %v3606, %v3623
        %v3668 = vadd.f32 %v3607, %v3623
        %v3669 = vadd.f32 %v3608, %v3623
        %v3670 = vadd.f32 %v3609, %v3623
        %v3671 = vadd.f32 %v3610, %v3623
        %v3672 = vadd.f32 %v3611, %v3623
        %v3673 = vadd.f32 %v3612, %v3623
        %v3674 = vadd.f32 %v3613, %v3623
        %v3675 = vadd.f32 %v3614, %v3623
        %v3676 = vadd.f32 %v3615, %v3623
        %v3677 = vadd.f32 %v3616, %v3623
        %v3678 = vadd.f32 %v3617, %v3623
        %v3679 = vmax.f32 %v3625, 0.0
        %v3680 = vmax.f32 %v3626, 0.0
        %v3681 = vmax.f32 %v3627, 0.0
        %v3682 = vmax.f32 %v3628, 0.0
        %v3683 = vmax.f32 %v3629, 0.0
        %v3684 = vmax.f32 %v3630, 0.0
        %v3685 = vmax.f32 %v3631, 0.0
        %v3686 = vmax.f32 %v3632, 0.0
        %v3687 = vmax.f32 %v3633, 0.0
        %v3688 = vmax.f32 %v3634, 0.0
        %v3689 = vmax.f32 %v3635, 0.0
        %v3690 = vmax.f32 %v3636, 0.0
        %v3691 = vmax.f32 %v3637, 0.0
        %v3692 = vmax.f32 %v3638, 0.0
        %v3693 = vmax.f32 %v3639, 0.0
        %v3694 = vmax.f32 %v3640, 0.0
        %v3695 = vmax.f32 %v3641, 0.0
        %v3696 = vmax.f32 %v3642, 0.0
        %v3697 = vmax.f32 %v3643, 0.0
        %v3698 = vmax.f32 %v3644, 0.0
        %v3699 = vmax.f32 %v3645, 0.0
        %v3700 = vmax.f32 %v3646, 0.0
        %v3701 = vmax.f32 %v3647, 0.0
        %v3702 = vmax.f32 %v3648, 0.0
        %v3703 = vmax.f32 %v3649, 0.0
        %v3704 = vmax.f32 %v3650, 0.0
        %v3705 = vmax.f32 %v3651, 0.0
        %v3706 = vmax.f32 %v3652, 0.0
        %v3707 = vmax.f32 %v3653, 0.0
        %v3708 = vmax.f32 %v3654, 0.0
        %v3709 = vmax.f32 %v3655, 0.0
        %v3710 = vmax.f32 %v3656, 0.0
        %v3711 = vmax.f32 %v3657, 0.0
        %v3712 = vmax.f32 %v3658, 0.0
        %v3713 = vmax.f32 %v3659, 0.0
        %v3714 = vmax.f32 %v3660, 0.0
        %v3715 = vmax.f32 %v3661, 0.0
        %v3716 = vmax.f32 %v3662, 0.0
        %v3717 = vmax.f32 %v3663, 0.0
        %v3718 = vmax.f32 %v3664, 0.0
        %v3719 = vmax.f32 %v3665, 0.0
        %v3720 = vmax.f32 %v3666, 0.0
        %v3721 = vmax.f32 %v3667, 0.0
        %v3722 = vmax.f32 %v3668, 0.0
        %v3723 = vmax.f32 %v3669, 0.0
        %v3724 = vmax.f32 %v3670, 0.0
        %v3725 = vmax.f32 %v3671, 0.0
        %v3726 = vmax.f32 %v3672, 0.0
        %v3727 = vmax.f32 %v3673, 0.0
        %v3728 = vmax.f32 %v3674, 0.0
        %v3729 = vmax.f32 %v3675, 0.0
        %v3730 = vmax.f32 %v3676, 0.0
        %v3731 = vmax.f32 %v3677, 0.0
        %v3732 = vmax.f32 %v3678, 0.0
        %v3733 = vlaneseq
        %v3734 = vshrl.u32 %v3733, 7
        %v3735 = vadd.s32 %v3734, 8
        %v3736 = vadd.s32 %v3734, 16
        %vm3737 = vcmp.lt.s32.totalorder %v3734, 16
        %vm3738 = vcmp.lt.s32.totalorder %v3735, 16
        %vm3739 = vcmp.lt.s32.totalorder %v3736, 16
        %v3740 = vsel %vm3737, %v3679, 0.0
        %v3741 = vsel %vm3738, %v3680, 0.0
        %v3742 = vsel %vm3739, %v3681, 0.0
        %v3743 = vsel %vm3737, %v3682, 0.0
        %v3744 = vsel %vm3738, %v3683, 0.0
        %v3745 = vsel %vm3739, %v3684, 0.0
        %v3746 = vsel %vm3737, %v3685, 0.0
        %v3747 = vsel %vm3738, %v3686, 0.0
        %v3748 = vsel %vm3739, %v3687, 0.0
        %v3749 = vsel %vm3737, %v3688, 0.0
        %v3750 = vsel %vm3738, %v3689, 0.0
        %v3751 = vsel %vm3739, %v3690, 0.0
        %v3752 = vsel %vm3737, %v3691, 0.0
        %v3753 = vsel %vm3738, %v3692, 0.0
        %v3754 = vsel %vm3739, %v3693, 0.0
        %v3755 = vsel %vm3737, %v3694, 0.0
        %v3756 = vsel %vm3738, %v3695, 0.0
        %v3757 = vsel %vm3739, %v3696, 0.0
        %v3758 = vsel %vm3737, %v3697, 0.0
        %v3759 = vsel %vm3738, %v3698, 0.0
        %v3760 = vsel %vm3739, %v3699, 0.0
        %v3761 = vsel %vm3737, %v3700, 0.0
        %v3762 = vsel %vm3738, %v3701, 0.0
        %v3763 = vsel %vm3739, %v3702, 0.0
        %v3764 = vsel %vm3737, %v3703, 0.0
        %v3765 = vsel %vm3738, %v3704, 0.0
        %v3766 = vsel %vm3739, %v3705, 0.0
        %v3767 = vsel %vm3737, %v3706, 0.0
        %v3768 = vsel %vm3738, %v3707, 0.0
        %v3769 = vsel %vm3739, %v3708, 0.0
        %v3770 = vsel %vm3737, %v3709, 0.0
        %v3771 = vsel %vm3738, %v3710, 0.0
        %v3772 = vsel %vm3739, %v3711, 0.0
        %v3773 = vsel %vm3737, %v3712, 0.0
        %v3774 = vsel %vm3738, %v3713, 0.0
        %v3775 = vsel %vm3739, %v3714, 0.0
        %v3776 = vsel %vm3737, %v3715, 0.0
        %v3777 = vsel %vm3738, %v3716, 0.0
        %v3778 = vsel %vm3739, %v3717, 0.0
        %v3779 = vsel %vm3737, %v3718, 0.0
        %v3780 = vsel %vm3738, %v3719, 0.0
        %v3781 = vsel %vm3739, %v3720, 0.0
        %v3782 = vsel %vm3737, %v3721, 0.0
        %v3783 = vsel %vm3738, %v3722, 0.0
        %v3784 = vsel %vm3739, %v3723, 0.0
        %v3785 = vsel %vm3737, %v3724, 0.0
        %v3786 = vsel %vm3738, %v3725, 0.0
        %v3787 = vsel %vm3739, %v3726, 0.0
        %v3788 = vsel %vm3737, %v3727, 0.0
        %v3789 = vsel %vm3738, %v3728, 0.0
        %v3790 = vsel %vm3739, %v3729, 0.0
        %v3791 = vsel %vm3737, %v3730, 0.0
        %v3792 = vsel %vm3738, %v3731, 0.0
        %v3793 = vsel %vm3739, %v3732, 0.0
        %v3794 = vpack.c.bf16 %v3741, %v3740
        %v3795 = vpack.c.bf16 %v3742, %v3742
        %v3796 = vpack.c.bf16 %v3744, %v3743
        %v3797 = vpack.c.bf16 %v3745, %v3745
        %v3798 = vpack.c.bf16 %v3747, %v3746
        %v3799 = vpack.c.bf16 %v3748, %v3748
        %v3800 = vpack.c.bf16 %v3750, %v3749
        %v3801 = vpack.c.bf16 %v3751, %v3751
        %v3802 = vpack.c.bf16 %v3753, %v3752
        %v3803 = vpack.c.bf16 %v3754, %v3754
        %v3804 = vpack.c.bf16 %v3756, %v3755
        %v3805 = vpack.c.bf16 %v3757, %v3757
        %v3806 = vpack.c.bf16 %v3759, %v3758
        %v3807 = vpack.c.bf16 %v3760, %v3760
        %v3808 = vpack.c.bf16 %v3762, %v3761
        %v3809 = vpack.c.bf16 %v3763, %v3763
        %v3810 = vpack.c.bf16 %v3765, %v3764
        %v3811 = vpack.c.bf16 %v3766, %v3766
        %v3812 = vpack.c.bf16 %v3768, %v3767
        %v3813 = vpack.c.bf16 %v3769, %v3769
        %v3814 = vpack.c.bf16 %v3771, %v3770
        %v3815 = vpack.c.bf16 %v3772, %v3772
        %v3816 = vpack.c.bf16 %v3774, %v3773
        %v3817 = vpack.c.bf16 %v3775, %v3775
        %v3818 = vpack.c.bf16 %v3777, %v3776
        %v3819 = vpack.c.bf16 %v3778, %v3778
        %v3820 = vpack.c.bf16 %v3780, %v3779
        %v3821 = vpack.c.bf16 %v3781, %v3781
        %v3822 = vpack.c.bf16 %v3783, %v3782
        %v3823 = vpack.c.bf16 %v3784, %v3784
        %v3824 = vpack.c.bf16 %v3786, %v3785
        %v3825 = vpack.c.bf16 %v3787, %v3787
        %v3826 = vpack.c.bf16 %v3789, %v3788
        %v3827 = vpack.c.bf16 %v3790, %v3790
        %v3828 = vpack.c.bf16 %v3792, %v3791
        %v3829 = vpack.c.bf16 %v3793, %v3793
        %v3866 = vunpack.c.l.b16 %v3794
        %v3867 = vunpack.c.h.b16 %v3794
        %v3868 = vunpack.c.l.b16 %v3795
        %v3869 = vunpack.c.l.b16 %v3796
        %v3870 = vunpack.c.h.b16 %v3796
        %v3871 = vunpack.c.l.b16 %v3797
        %v3872 = vunpack.c.l.b16 %v3798
        %v3873 = vunpack.c.h.b16 %v3798
        %v3874 = vunpack.c.l.b16 %v3799
        %v3875 = vunpack.c.l.b16 %v3800
        %v3876 = vunpack.c.h.b16 %v3800
        %v3877 = vunpack.c.l.b16 %v3801
        %v3878 = vunpack.c.l.b16 %v3802
        %v3879 = vunpack.c.h.b16 %v3802
        %v3880 = vunpack.c.l.b16 %v3803
        %v3881 = vunpack.c.l.b16 %v3804
        %v3882 = vunpack.c.h.b16 %v3804
        %v3883 = vunpack.c.l.b16 %v3805
        %v3884 = vunpack.c.l.b16 %v3806
        %v3885 = vunpack.c.h.b16 %v3806
        %v3886 = vunpack.c.l.b16 %v3807
        %v3887 = vunpack.c.l.b16 %v3808
        %v3888 = vunpack.c.h.b16 %v3808
        %v3889 = vunpack.c.l.b16 %v3809
        %v3890 = vunpack.c.l.b16 %v3810
        %v3891 = vunpack.c.h.b16 %v3810
        %v3892 = vunpack.c.l.b16 %v3811
        %v3893 = vunpack.c.l.b16 %v3812
        %v3894 = vunpack.c.h.b16 %v3812
        %v3895 = vunpack.c.l.b16 %v3813
        %v3896 = vunpack.c.l.b16 %v3814
        %v3897 = vunpack.c.h.b16 %v3814
        %v3898 = vunpack.c.l.b16 %v3815
        %v3899 = vunpack.c.l.b16 %v3816
        %v3900 = vunpack.c.h.b16 %v3816
        %v3901 = vunpack.c.l.b16 %v3817
        %v3902 = vunpack.c.l.b16 %v3818
        %v3903 = vunpack.c.h.b16 %v3818
        %v3904 = vunpack.c.l.b16 %v3819
        %v3905 = vunpack.c.l.b16 %v3820
        %v3906 = vunpack.c.h.b16 %v3820
        %v3907 = vunpack.c.l.b16 %v3821
        %v3908 = vunpack.c.l.b16 %v3822
        %v3909 = vunpack.c.h.b16 %v3822
        %v3910 = vunpack.c.l.b16 %v3823
        %v3911 = vunpack.c.l.b16 %v3824
        %v3912 = vunpack.c.h.b16 %v3824
        %v3913 = vunpack.c.l.b16 %v3825
        %v3914 = vunpack.c.l.b16 %v3826
        %v3915 = vunpack.c.h.b16 %v3826
        %v3916 = vunpack.c.l.b16 %v3827
        %v3917 = vunpack.c.l.b16 %v3828
        %v3918 = vunpack.c.h.b16 %v3828
        %v3919 = vunpack.c.l.b16 %v3829
        %v3920 = vpack.c.b16 %v3866, %v3866
        %v3921 = vpack.c.b16 %v3867, %v3867
        %v3922 = vpack.c.b16 %v3868, %v3868
        %v3923 = vpack.c.b16 %v3869, %v3869
        %v3924 = vpack.c.b16 %v3870, %v3870
        %v3925 = vpack.c.b16 %v3871, %v3871
        %v3926 = vpack.c.b16 %v3872, %v3872
        %v3927 = vpack.c.b16 %v3873, %v3873
        %v3928 = vpack.c.b16 %v3874, %v3874
        %v3929 = vpack.c.b16 %v3875, %v3875
        %v3930 = vpack.c.b16 %v3876, %v3876
        %v3931 = vpack.c.b16 %v3877, %v3877
        %v3932 = vpack.c.b16 %v3878, %v3878
        %v3933 = vpack.c.b16 %v3879, %v3879
        %v3934 = vpack.c.b16 %v3880, %v3880
        %v3935 = vpack.c.b16 %v3881, %v3881
        %v3936 = vpack.c.b16 %v3882, %v3882
        %v3937 = vpack.c.b16 %v3883, %v3883
        %v3938 = vpack.c.b16 %v3884, %v3884
        %v3939 = vpack.c.b16 %v3885, %v3885
        %v3940 = vpack.c.b16 %v3886, %v3886
        %v3941 = vpack.c.b16 %v3887, %v3887
        %v3942 = vpack.c.b16 %v3888, %v3888
        %v3943 = vpack.c.b16 %v3889, %v3889
        %v3944 = vpack.c.b16 %v3890, %v3890
        %v3945 = vpack.c.b16 %v3891, %v3891
        %v3946 = vpack.c.b16 %v3892, %v3892
        %v3947 = vpack.c.b16 %v3893, %v3893
        %v3948 = vpack.c.b16 %v3894, %v3894
        %v3949 = vpack.c.b16 %v3895, %v3895
        %v3950 = vpack.c.b16 %v3896, %v3896
        %v3951 = vpack.c.b16 %v3897, %v3897
        %v3952 = vpack.c.b16 %v3898, %v3898
        %v3953 = vpack.c.b16 %v3899, %v3899
        %v3954 = vpack.c.b16 %v3900, %v3900
        %v3955 = vpack.c.b16 %v3901, %v3901
        %v3956 = vpack.c.b16 %v3902, %v3902
        %v3957 = vpack.c.b16 %v3903, %v3903
        %v3958 = vpack.c.b16 %v3904, %v3904
        %v3959 = vpack.c.b16 %v3905, %v3905
        %v3960 = vpack.c.b16 %v3906, %v3906
        %v3961 = vpack.c.b16 %v3907, %v3907
        %v3962 = vpack.c.b16 %v3908, %v3908
        %v3963 = vpack.c.b16 %v3909, %v3909
        %v3964 = vpack.c.b16 %v3910, %v3910
        %v3965 = vpack.c.b16 %v3911, %v3911
        %v3966 = vpack.c.b16 %v3912, %v3912
        %v3967 = vpack.c.b16 %v3913, %v3913
        %v3968 = vpack.c.b16 %v3914, %v3914
        %v3969 = vpack.c.b16 %v3915, %v3915
        %v3970 = vpack.c.b16 %v3916, %v3916
        %v3971 = vpack.c.b16 %v3917, %v3917
        %v3972 = vpack.c.b16 %v3918, %v3918
        %v3973 = vpack.c.b16 %v3919, %v3919
        %4028 = vst [vmem:[#allocation2] sm:$0xf] %v3920
        %4029 = vst [vmem:[#allocation2 + $0x4] sm:$0xf] %v3921
        %4030 = vst [vmem:[#allocation2 + $0x8] sm:$0xf] %v3922
        %4031 = vst [vmem:[#allocation2 + $0xc] sm:$0xf] %v3923
        %4032 = vst [vmem:[#allocation2 + $0x10] sm:$0xf] %v3924
        %4033 = vst [vmem:[#allocation2 + $0x14] sm:$0xf] %v3925
        %4034 = vst [vmem:[#allocation2 + $0x18] sm:$0xf] %v3926
        %4035 = vst [vmem:[#allocation2 + $0x1c] sm:$0xf] %v3927
        %4036 = vst [vmem:[#allocation2 + $0x20] sm:$0xf] %v3928
        %4037 = vst [vmem:[#allocation2 + $0x24] sm:$0xf] %v3929
        %4038 = vst [vmem:[#allocation2 + $0x28] sm:$0xf] %v3930
        %4039 = vst [vmem:[#allocation2 + $0x2c] sm:$0xf] %v3931
        %4040 = vst [vmem:[#allocation2 + $0x30] sm:$0xf] %v3932
        %4041 = vst [vmem:[#allocation2 + $0x34] sm:$0xf] %v3933
        %4042 = vst [vmem:[#allocation2 + $0x38] sm:$0xf] %v3934
        %4043 = vst [vmem:[#allocation2 + $0x3c] sm:$0xf] %v3935
        %4044 = vst [vmem:[#allocation2 + $0x40] sm:$0xf] %v3936
        %4045 = vst [vmem:[#allocation2 + $0x44] sm:$0xf] %v3937
        %4046 = vst [vmem:[#allocation2 + $0x48] sm:$0xf] %v3938
        %4047 = vst [vmem:[#allocation2 + $0x4c] sm:$0xf] %v3939
        %4048 = vst [vmem:[#allocation2 + $0x50] sm:$0xf] %v3940
        %4049 = vst [vmem:[#allocation2 + $0x54] sm:$0xf] %v3941
        %4050 = vst [vmem:[#allocation2 + $0x58] sm:$0xf] %v3942
        %4051 = vst [vmem:[#allocation2 + $0x5c] sm:$0xf] %v3943
        %4052 = vst [vmem:[#allocation2 + $0x60] sm:$0xf] %v3944
        %4053 = vst [vmem:[#allocation2 + $0x64] sm:$0xf] %v3945
        %4054 = vst [vmem:[#allocation2 + $0x68] sm:$0xf] %v3946
        %4055 = vst [vmem:[#allocation2 + $0x6c] sm:$0xf] %v3947
        %4056 = vst [vmem:[#allocation2 + $0x70] sm:$0xf] %v3948
        %4057 = vst [vmem:[#allocation2 + $0x74] sm:$0xf] %v3949
        %4058 = vst [vmem:[#allocation2 + $0x78] sm:$0xf] %v3950
        %4059 = vst [vmem:[#allocation2 + $0x7c] sm:$0xf] %v3951
        %4060 = vst [vmem:[#allocation2 + $0x80] sm:$0xf] %v3952
        %4061 = vst [vmem:[#allocation2 + $0x84] sm:$0xf] %v3953
        %4062 = vst [vmem:[#allocation2 + $0x88] sm:$0xf] %v3954
        %4063 = vst [vmem:[#allocation2 + $0x8c] sm:$0xf] %v3955
        %4064 = vst [vmem:[#allocation2 + $0x90] sm:$0xf] %v3956
        %4065 = vst [vmem:[#allocation2 + $0x94] sm:$0xf] %v3957
        %4066 = vst [vmem:[#allocation2 + $0x98] sm:$0xf] %v3958
        %4067 = vst [vmem:[#allocation2 + $0x9c] sm:$0xf] %v3959
        %4068 = vst [vmem:[#allocation2 + $0xa0] sm:$0xf] %v3960
        %4069 = vst [vmem:[#allocation2 + $0xa4] sm:$0xf] %v3961
        %4070 = vst [vmem:[#allocation2 + $0xa8] sm:$0xf] %v3962
        %4071 = vst [vmem:[#allocation2 + $0xac] sm:$0xf] %v3963
        %4072 = vst [vmem:[#allocation2 + $0xb0] sm:$0xf] %v3964
        %4073 = vst [vmem:[#allocation2 + $0xb4] sm:$0xf] %v3965
        %4074 = vst [vmem:[#allocation2 + $0xb8] sm:$0xf] %v3966
        %4075 = vst [vmem:[#allocation2 + $0xbc] sm:$0xf] %v3967
        %4076 = vst [vmem:[#allocation2 + $0xc0] sm:$0xf] %v3968
        %4077 = vst [vmem:[#allocation2 + $0xc4] sm:$0xf] %v3969
        %4078 = vst [vmem:[#allocation2 + $0xc8] sm:$0xf] %v3970
        %4079 = vst [vmem:[#allocation2 + $0xcc] sm:$0xf] %v3971
        %4080 = vst [vmem:[#allocation2 + $0xd0] sm:$0xf] %v3972
        %4081 = vst [vmem:[#allocation2 + $0xd4] sm:$0xf] %v3973
        %p4082 = scmp.eq.s32.totalorder %s30, 0
        // Predicated region
        $region61: #{tpu_custom_call.1} parent=47 // pred_check
          %p4083 = pneg %p4082
        $region62: #{tpu_custom_call.1} parent=47 // pred_check_branch
          %4085 = sbr.rel (%p4083) target = $region64
        $region63: #{tpu_custom_call.1} parent=47 // pred_region
          %4086 = vst [vmem:[#allocation2] sm:$0xf] 0
          %4087 = vst [vmem:[#allocation2 + $0x4] sm:$0xf] 0
          %4088 = vst [vmem:[#allocation2 + $0x8] sm:$0xf] 0
          %s4089 = scalar_lea.vmem [#allocation2], 204
          %4090 = vst [vmem:[%s4089] sm:$0xf] 0
          %4091 = vst [vmem:[%s4089 + $0x4] sm:$0xf] 0
          %4092 = vst [vmem:[%s4089 + $0x8] sm:$0xf] 0
        $region64: #{tpu_custom_call.1} parent=47 // pred_fallthru
          _
        %v4093 = vld [vmem:[#allocation2] sm:$0xf]
        %v4094 = vld [vmem:[#allocation2 + $0x4] sm:$0xf]
        %v4095 = vld [vmem:[#allocation2 + $0x8] sm:$0xf]
        %v4096 = vld [vmem:[#allocation2 + $0xc] sm:$0xf]
        %v4097 = vld [vmem:[#allocation2 + $0x10] sm:$0xf]
        %v4098 = vld [vmem:[#allocation2 + $0x14] sm:$0xf]
        %v4099 = vld [vmem:[#allocation2 + $0x18] sm:$0xf]
        %v4100 = vld [vmem:[#allocation2 + $0x1c] sm:$0xf]
        %v4101 = vld [vmem:[#allocation2 + $0x20] sm:$0xf]
        %v4102 = vld [vmem:[#allocation2 + $0x24] sm:$0xf]
        %v4103 = vld [vmem:[#allocation2 + $0x28] sm:$0xf]
        %v4104 = vld [vmem:[#allocation2 + $0x2c] sm:$0xf]
        %v4105 = vld [vmem:[#allocation2 + $0x30] sm:$0xf]
        %v4106 = vld [vmem:[#allocation2 + $0x34] sm:$0xf]
        %v4107 = vld [vmem:[#allocation2 + $0x38] sm:$0xf]
        %v4108 = vld [vmem:[#allocation2 + $0x3c] sm:$0xf]
        %v4109 = vld [vmem:[#allocation2 + $0x40] sm:$0xf]
        %v4110 = vld [vmem:[#allocation2 + $0x44] sm:$0xf]
        %v4111 = vld [vmem:[#allocation2 + $0x48] sm:$0xf]
        %v4112 = vld [vmem:[#allocation2 + $0x4c] sm:$0xf]
        %v4113 = vld [vmem:[#allocation2 + $0x50] sm:$0xf]
        %v4114 = vld [vmem:[#allocation2 + $0x54] sm:$0xf]
        %v4115 = vld [vmem:[#allocation2 + $0x58] sm:$0xf]
        %v4116 = vld [vmem:[#allocation2 + $0x5c] sm:$0xf]
        %v4117 = vld [vmem:[#allocation2 + $0x60] sm:$0xf]
        %v4118 = vld [vmem:[#allocation2 + $0x64] sm:$0xf]
        %v4119 = vld [vmem:[#allocation2 + $0x68] sm:$0xf]
        %v4120 = vld [vmem:[#allocation2 + $0x6c] sm:$0xf]
        %v4121 = vld [vmem:[#allocation2 + $0x70] sm:$0xf]
        %v4122 = vld [vmem:[#allocation2 + $0x74] sm:$0xf]
        %v4123 = vld [vmem:[#allocation2 + $0x78] sm:$0xf]
        %v4124 = vld [vmem:[#allocation2 + $0x7c] sm:$0xf]
        %v4125 = vld [vmem:[#allocation2 + $0x80] sm:$0xf]
        %v4126 = vld [vmem:[#allocation2 + $0x84] sm:$0xf]
        %v4127 = vld [vmem:[#allocation2 + $0x88] sm:$0xf]
        %v4128 = vld [vmem:[#allocation2 + $0x8c] sm:$0xf]
        %v4129 = vld [vmem:[#allocation2 + $0x90] sm:$0xf]
        %v4130 = vld [vmem:[#allocation2 + $0x94] sm:$0xf]
        %v4131 = vld [vmem:[#allocation2 + $0x98] sm:$0xf]
        %v4132 = vld [vmem:[#allocation2 + $0x9c] sm:$0xf]
        %v4133 = vld [vmem:[#allocation2 + $0xa0] sm:$0xf]
        %v4134 = vld [vmem:[#allocation2 + $0xa4] sm:$0xf]
        %v4135 = vld [vmem:[#allocation2 + $0xa8] sm:$0xf]
        %v4136 = vld [vmem:[#allocation2 + $0xac] sm:$0xf]
        %v4137 = vld [vmem:[#allocation2 + $0xb0] sm:$0xf]
        %v4138 = vld [vmem:[#allocation2 + $0xb4] sm:$0xf]
        %v4139 = vld [vmem:[#allocation2 + $0xb8] sm:$0xf]
        %v4140 = vld [vmem:[#allocation2 + $0xbc] sm:$0xf]
        %v4141 = vld [vmem:[#allocation2 + $0xc0] sm:$0xf]
        %v4142 = vld [vmem:[#allocation2 + $0xc4] sm:$0xf]
        %v4143 = vld [vmem:[#allocation2 + $0xc8] sm:$0xf]
        %v4144 = vld [vmem:[#allocation2 + $0xcc] sm:$0xf]
        %v4145 = vld [vmem:[#allocation2 + $0xd0] sm:$0xf]
        %v4146 = vld [vmem:[#allocation2 + $0xd4] sm:$0xf]
        %v4147 = vunpack.c.l.bf16 %v4093
        %v4148 = vunpack.c.l.bf16 %v4094
        %v4149 = vunpack.c.l.bf16 %v4095
        %v4150 = vunpack.c.l.bf16 %v4096
        %v4151 = vunpack.c.l.bf16 %v4097
        %v4152 = vunpack.c.l.bf16 %v4098
        %v4153 = vunpack.c.l.bf16 %v4099
        %v4154 = vunpack.c.l.bf16 %v4100
        %v4155 = vunpack.c.l.bf16 %v4101
        %v4156 = vunpack.c.l.bf16 %v4102
        %v4157 = vunpack.c.l.bf16 %v4103
        %v4158 = vunpack.c.l.bf16 %v4104
        %v4159 = vunpack.c.l.bf16 %v4105
        %v4160 = vunpack.c.l.bf16 %v4106
        %v4161 = vunpack.c.l.bf16 %v4107
        %v4162 = vunpack.c.l.bf16 %v4108
        %v4163 = vunpack.c.l.bf16 %v4109
        %v4164 = vunpack.c.l.bf16 %v4110
        %v4165 = vunpack.c.l.bf16 %v4111
        %v4166 = vunpack.c.l.bf16 %v4112
        %v4167 = vunpack.c.l.bf16 %v4113
        %v4168 = vunpack.c.l.bf16 %v4114
        %v4169 = vunpack.c.l.bf16 %v4115
        %v4170 = vunpack.c.l.bf16 %v4116
        %v4171 = vunpack.c.l.bf16 %v4117
        %v4172 = vunpack.c.l.bf16 %v4118
        %v4173 = vunpack.c.l.bf16 %v4119
        %v4174 = vunpack.c.l.bf16 %v4120
        %v4175 = vunpack.c.l.bf16 %v4121
        %v4176 = vunpack.c.l.bf16 %v4122
        %v4177 = vunpack.c.l.bf16 %v4123
        %v4178 = vunpack.c.l.bf16 %v4124
        %v4179 = vunpack.c.l.bf16 %v4125
        %v4180 = vunpack.c.l.bf16 %v4126
        %v4181 = vunpack.c.l.bf16 %v4127
        %v4182 = vunpack.c.l.bf16 %v4128
        %v4183 = vunpack.c.l.bf16 %v4129
        %v4184 = vunpack.c.l.bf16 %v4130
        %v4185 = vunpack.c.l.bf16 %v4131
        %v4186 = vunpack.c.l.bf16 %v4132
        %v4187 = vunpack.c.l.bf16 %v4133
        %v4188 = vunpack.c.l.bf16 %v4134
        %v4189 = vunpack.c.l.bf16 %v4135
        %v4190 = vunpack.c.l.bf16 %v4136
        %v4191 = vunpack.c.l.bf16 %v4137
        %v4192 = vunpack.c.l.bf16 %v4138
        %v4193 = vunpack.c.l.bf16 %v4139
        %v4194 = vunpack.c.l.bf16 %v4140
        %v4195 = vunpack.c.l.bf16 %v4141
        %v4196 = vunpack.c.l.bf16 %v4142
        %v4197 = vunpack.c.l.bf16 %v4143
        %v4198 = vunpack.c.l.bf16 %v4144
        %v4199 = vunpack.c.l.bf16 %v4145
        %v4200 = vunpack.c.l.bf16 %v4146
        %v4255 = vrot.slane %v4147, 7
        %v4256 = vrot.slane %v4148, 7
        %v4257 = vsel %vm526, %v4255, %v4256
        %v4258 = vrot.slane %v4149, 7
        %v4259 = vsel %vm526, %v4256, %v4258
        %v4260 = vrot.slane %v4150, 7
        %v4261 = vsel %vm526, %v4258, %v4260
        %v4262 = vrot.slane %v4151, 7
        %v4263 = vsel %vm526, %v4260, %v4262
        %v4264 = vrot.slane %v4152, 7
        %v4265 = vsel %vm526, %v4262, %v4264
        %v4266 = vrot.slane %v4153, 7
        %v4267 = vsel %vm526, %v4264, %v4266
        %v4268 = vrot.slane %v4154, 7
        %v4269 = vsel %vm526, %v4266, %v4268
        %v4270 = vrot.slane %v4155, 7
        %v4271 = vsel %vm526, %v4268, %v4270
        %v4272 = vrot.slane %v4156, 7
        %v4273 = vsel %vm526, %v4270, %v4272
        %v4274 = vrot.slane %v4157, 7
        %v4275 = vsel %vm526, %v4272, %v4274
        %v4276 = vrot.slane %v4158, 7
        %v4277 = vsel %vm526, %v4274, %v4276
        %v4278 = vrot.slane %v4159, 7
        %v4279 = vsel %vm526, %v4276, %v4278
        %v4280 = vrot.slane %v4160, 7
        %v4281 = vsel %vm526, %v4278, %v4280
        %v4282 = vrot.slane %v4161, 7
        %v4283 = vsel %vm526, %v4280, %v4282
        %v4284 = vrot.slane %v4162, 7
        %v4285 = vsel %vm526, %v4282, %v4284
        %v4286 = vrot.slane %v4163, 7
        %v4287 = vsel %vm526, %v4284, %v4286
        %v4288 = vrot.slane %v4164, 7
        %v4289 = vsel %vm526, %v4286, %v4288
        %v4290 = vrot.slane %v4165, 7
        %v4291 = vsel %vm526, %v4288, %v4290
        %v4292 = vrot.slane %v4166, 7
        %v4293 = vsel %vm526, %v4290, %v4292
        %v4294 = vrot.slane %v4167, 7
        %v4295 = vsel %vm526, %v4292, %v4294
        %v4296 = vrot.slane %v4168, 7
        %v4297 = vsel %vm526, %v4294, %v4296
        %v4298 = vrot.slane %v4169, 7
        %v4299 = vsel %vm526, %v4296, %v4298
        %v4300 = vrot.slane %v4170, 7
        %v4301 = vsel %vm526, %v4298, %v4300
        %v4302 = vrot.slane %v4171, 7
        %v4303 = vsel %vm526, %v4300, %v4302
        %v4304 = vrot.slane %v4172, 7
        %v4305 = vsel %vm526, %v4302, %v4304
        %v4306 = vrot.slane %v4173, 7
        %v4307 = vsel %vm526, %v4304, %v4306
        %v4308 = vrot.slane %v4174, 7
        %v4309 = vsel %vm526, %v4306, %v4308
        %v4310 = vrot.slane %v4175, 7
        %v4311 = vsel %vm526, %v4308, %v4310
        %v4312 = vrot.slane %v4176, 7
        %v4313 = vsel %vm526, %v4310, %v4312
        %v4314 = vrot.slane %v4177, 7
        %v4315 = vsel %vm526, %v4312, %v4314
        %v4316 = vrot.slane %v4178, 7
        %v4317 = vsel %vm526, %v4314, %v4316
        %v4318 = vrot.slane %v4179, 7
        %v4319 = vsel %vm526, %v4316, %v4318
        %v4320 = vrot.slane %v4180, 7
        %v4321 = vsel %vm526, %v4318, %v4320
        %v4322 = vrot.slane %v4181, 7
        %v4323 = vsel %vm526, %v4320, %v4322
        %v4324 = vrot.slane %v4182, 7
        %v4325 = vsel %vm526, %v4322, %v4324
        %v4326 = vrot.slane %v4183, 7
        %v4327 = vsel %vm526, %v4324, %v4326
        %v4328 = vrot.slane %v4184, 7
        %v4329 = vsel %vm526, %v4326, %v4328
        %v4330 = vrot.slane %v4185, 7
        %v4331 = vsel %vm526, %v4328, %v4330
        %v4332 = vrot.slane %v4186, 7
        %v4333 = vsel %vm526, %v4330, %v4332
        %v4334 = vrot.slane %v4187, 7
        %v4335 = vsel %vm526, %v4332, %v4334
        %v4336 = vrot.slane %v4188, 7
        %v4337 = vsel %vm526, %v4334, %v4336
        %v4338 = vrot.slane %v4189, 7
        %v4339 = vsel %vm526, %v4336, %v4338
        %v4340 = vrot.slane %v4190, 7
        %v4341 = vsel %vm526, %v4338, %v4340
        %v4342 = vrot.slane %v4191, 7
        %v4343 = vsel %vm526, %v4340, %v4342
        %v4344 = vrot.slane %v4192, 7
        %v4345 = vsel %vm526, %v4342, %v4344
        %v4346 = vrot.slane %v4193, 7
        %v4347 = vsel %vm526, %v4344, %v4346
        %v4348 = vrot.slane %v4194, 7
        %v4349 = vsel %vm526, %v4346, %v4348
        %v4350 = vrot.slane %v4195, 7
        %v4351 = vsel %vm526, %v4348, %v4350
        %v4352 = vrot.slane %v4196, 7
        %v4353 = vsel %vm526, %v4350, %v4352
        %v4354 = vrot.slane %v4197, 7
        %v4355 = vsel %vm526, %v4352, %v4354
        %v4356 = vrot.slane %v4198, 7
        %v4357 = vsel %vm526, %v4354, %v4356
        %v4358 = vrot.slane %v4199, 7
        %v4359 = vsel %vm526, %v4356, %v4358
        %v4360 = vrot.slane %v4200, 7
        %v4361 = vsel %vm526, %v4358, %v4360
        %v4416 = vsel %vm526, 0.0, %v4255
        %v4417 = vpack.c.bf16 %v4257, %v4416
        %v4418 = vpack.c.bf16 %v4261, %v4259
        %v4419 = vpack.c.bf16 %v4265, %v4263
        %v4420 = vpack.c.bf16 %v4269, %v4267
        %v4421 = vpack.c.bf16 %v4273, %v4271
        %v4422 = vpack.c.bf16 %v4277, %v4275
        %v4423 = vpack.c.bf16 %v4281, %v4279
        %v4424 = vpack.c.bf16 %v4285, %v4283
        %v4425 = vpack.c.bf16 %v4289, %v4287
        %v4426 = vpack.c.bf16 %v4293, %v4291
        %v4427 = vpack.c.bf16 %v4297, %v4295
        %v4428 = vpack.c.bf16 %v4301, %v4299
        %v4429 = vpack.c.bf16 %v4305, %v4303
        %v4430 = vpack.c.bf16 %v4309, %v4307
        %v4431 = vpack.c.bf16 %v4313, %v4311
        %v4432 = vpack.c.bf16 %v4317, %v4315
        %v4433 = vpack.c.bf16 %v4321, %v4319
        %v4434 = vpack.c.bf16 %v4325, %v4323
        %v4435 = vpack.c.bf16 %v4329, %v4327
        %v4436 = vpack.c.bf16 %v4333, %v4331
        %v4437 = vpack.c.bf16 %v4337, %v4335
        %v4438 = vpack.c.bf16 %v4341, %v4339
        %v4439 = vpack.c.bf16 %v4345, %v4343
        %v4440 = vpack.c.bf16 %v4349, %v4347
        %v4441 = vpack.c.bf16 %v4353, %v4351
        %v4442 = vpack.c.bf16 %v4357, %v4355
        %v4443 = vpack.c.bf16 %v4361, %v4359
        %v4444 = vrot.slane %v4147, 1
        %v4445 = vrot.slane %v4148, 1
        %v4446 = vsel %vm737, %v4444, %v4445
        %v4447 = vrot.slane %v4149, 1
        %v4448 = vsel %vm737, %v4445, %v4447
        %v4449 = vrot.slane %v4150, 1
        %v4450 = vsel %vm737, %v4447, %v4449
        %v4451 = vrot.slane %v4151, 1
        %v4452 = vsel %vm737, %v4449, %v4451
        %v4453 = vrot.slane %v4152, 1
        %v4454 = vsel %vm737, %v4451, %v4453
        %v4455 = vrot.slane %v4153, 1
        %v4456 = vsel %vm737, %v4453, %v4455
        %v4457 = vrot.slane %v4154, 1
        %v4458 = vsel %vm737, %v4455, %v4457
        %v4459 = vrot.slane %v4155, 1
        %v4460 = vsel %vm737, %v4457, %v4459
        %v4461 = vrot.slane %v4156, 1
        %v4462 = vsel %vm737, %v4459, %v4461
        %v4463 = vrot.slane %v4157, 1
        %v4464 = vsel %vm737, %v4461, %v4463
        %v4465 = vrot.slane %v4158, 1
        %v4466 = vsel %vm737, %v4463, %v4465
        %v4467 = vrot.slane %v4159, 1
        %v4468 = vsel %vm737, %v4465, %v4467
        %v4469 = vrot.slane %v4160, 1
        %v4470 = vsel %vm737, %v4467, %v4469
        %v4471 = vrot.slane %v4161, 1
        %v4472 = vsel %vm737, %v4469, %v4471
        %v4473 = vrot.slane %v4162, 1
        %v4474 = vsel %vm737, %v4471, %v4473
        %v4475 = vrot.slane %v4163, 1
        %v4476 = vsel %vm737, %v4473, %v4475
        %v4477 = vrot.slane %v4164, 1
        %v4478 = vsel %vm737, %v4475, %v4477
        %v4479 = vrot.slane %v4165, 1
        %v4480 = vsel %vm737, %v4477, %v4479
        %v4481 = vrot.slane %v4166, 1
        %v4482 = vsel %vm737, %v4479, %v4481
        %v4483 = vrot.slane %v4167, 1
        %v4484 = vsel %vm737, %v4481, %v4483
        %v4485 = vrot.slane %v4168, 1
        %v4486 = vsel %vm737, %v4483, %v4485
        %v4487 = vrot.slane %v4169, 1
        %v4488 = vsel %vm737, %v4485, %v4487
        %v4489 = vrot.slane %v4170, 1
        %v4490 = vsel %vm737, %v4487, %v4489
        %v4491 = vrot.slane %v4171, 1
        %v4492 = vsel %vm737, %v4489, %v4491
        %v4493 = vrot.slane %v4172, 1
        %v4494 = vsel %vm737, %v4491, %v4493
        %v4495 = vrot.slane %v4173, 1
        %v4496 = vsel %vm737, %v4493, %v4495
        %v4497 = vrot.slane %v4174, 1
        %v4498 = vsel %vm737, %v4495, %v4497
        %v4499 = vrot.slane %v4175, 1
        %v4500 = vsel %vm737, %v4497, %v4499
        %v4501 = vrot.slane %v4176, 1
        %v4502 = vsel %vm737, %v4499, %v4501
        %v4503 = vrot.slane %v4177, 1
        %v4504 = vsel %vm737, %v4501, %v4503
        %v4505 = vrot.slane %v4178, 1
        %v4506 = vsel %vm737, %v4503, %v4505
        %v4507 = vrot.slane %v4179, 1
        %v4508 = vsel %vm737, %v4505, %v4507
        %v4509 = vrot.slane %v4180, 1
        %v4510 = vsel %vm737, %v4507, %v4509
        %v4511 = vrot.slane %v4181, 1
        %v4512 = vsel %vm737, %v4509, %v4511
        %v4513 = vrot.slane %v4182, 1
        %v4514 = vsel %vm737, %v4511, %v4513
        %v4515 = vrot.slane %v4183, 1
        %v4516 = vsel %vm737, %v4513, %v4515
        %v4517 = vrot.slane %v4184, 1
        %v4518 = vsel %vm737, %v4515, %v4517
        %v4519 = vrot.slane %v4185, 1
        %v4520 = vsel %vm737, %v4517, %v4519
        %v4521 = vrot.slane %v4186, 1
        %v4522 = vsel %vm737, %v4519, %v4521
        %v4523 = vrot.slane %v4187, 1
        %v4524 = vsel %vm737, %v4521, %v4523
        %v4525 = vrot.slane %v4188, 1
        %v4526 = vsel %vm737, %v4523, %v4525
        %v4527 = vrot.slane %v4189, 1
        %v4528 = vsel %vm737, %v4525, %v4527
        %v4529 = vrot.slane %v4190, 1
        %v4530 = vsel %vm737, %v4527, %v4529
        %v4531 = vrot.slane %v4191, 1
        %v4532 = vsel %vm737, %v4529, %v4531
        %v4533 = vrot.slane %v4192, 1
        %v4534 = vsel %vm737, %v4531, %v4533
        %v4535 = vrot.slane %v4193, 1
        %v4536 = vsel %vm737, %v4533, %v4535
        %v4537 = vrot.slane %v4194, 1
        %v4538 = vsel %vm737, %v4535, %v4537
        %v4539 = vrot.slane %v4195, 1
        %v4540 = vsel %vm737, %v4537, %v4539
        %v4541 = vrot.slane %v4196, 1
        %v4542 = vsel %vm737, %v4539, %v4541
        %v4543 = vrot.slane %v4197, 1
        %v4544 = vsel %vm737, %v4541, %v4543
        %v4545 = vrot.slane %v4198, 1
        %v4546 = vsel %vm737, %v4543, %v4545
        %v4547 = vrot.slane %v4199, 1
        %v4548 = vsel %vm737, %v4545, %v4547
        %v4549 = vrot.slane %v4200, 1
        %v4550 = vsel %vm737, %v4547, %v4549
        %v4605 = vsel %vm737, %v4549, 0.0
        %v4606 = vpack.c.bf16 %v4448, %v4446
        %v4607 = vpack.c.bf16 %v4452, %v4450
        %v4608 = vpack.c.bf16 %v4456, %v4454
        %v4609 = vpack.c.bf16 %v4460, %v4458
        %v4610 = vpack.c.bf16 %v4464, %v4462
        %v4611 = vpack.c.bf16 %v4468, %v4466
        %v4612 = vpack.c.bf16 %v4472, %v4470
        %v4613 = vpack.c.bf16 %v4476, %v4474
        %v4614 = vpack.c.bf16 %v4480, %v4478
        %v4615 = vpack.c.bf16 %v4484, %v4482
        %v4616 = vpack.c.bf16 %v4488, %v4486
        %v4617 = vpack.c.bf16 %v4492, %v4490
        %v4618 = vpack.c.bf16 %v4496, %v4494
        %v4619 = vpack.c.bf16 %v4500, %v4498
        %v4620 = vpack.c.bf16 %v4504, %v4502
        %v4621 = vpack.c.bf16 %v4508, %v4506
        %v4622 = vpack.c.bf16 %v4512, %v4510
        %v4623 = vpack.c.bf16 %v4516, %v4514
        %v4624 = vpack.c.bf16 %v4520, %v4518
        %v4625 = vpack.c.bf16 %v4524, %v4522
        %v4626 = vpack.c.bf16 %v4528, %v4526
        %v4627 = vpack.c.bf16 %v4532, %v4530
        %v4628 = vpack.c.bf16 %v4536, %v4534
        %v4629 = vpack.c.bf16 %v4540, %v4538
        %v4630 = vpack.c.bf16 %v4544, %v4542
        %v4631 = vpack.c.bf16 %v4548, %v4546
        %v4632 = vpack.c.bf16 %v4605, %v4550
        %v4687 = vunpack.c.l.b16 %v4093
        %v4688 = vunpack.c.l.b16 %v4094
        %v4689 = vunpack.c.l.b16 %v4095
        %v4690 = vunpack.c.l.b16 %v4096
        %v4691 = vunpack.c.l.b16 %v4097
        %v4692 = vunpack.c.l.b16 %v4098
        %v4693 = vunpack.c.l.b16 %v4099
        %v4694 = vunpack.c.l.b16 %v4100
        %v4695 = vunpack.c.l.b16 %v4101
        %v4696 = vunpack.c.l.b16 %v4102
        %v4697 = vunpack.c.l.b16 %v4103
        %v4698 = vunpack.c.l.b16 %v4104
        %v4699 = vunpack.c.l.b16 %v4105
        %v4700 = vunpack.c.l.b16 %v4106
        %v4701 = vunpack.c.l.b16 %v4107
        %v4702 = vunpack.c.l.b16 %v4108
        %v4703 = vunpack.c.l.b16 %v4109
        %v4704 = vunpack.c.l.b16 %v4110
        %v4705 = vunpack.c.l.b16 %v4111
        %v4706 = vunpack.c.l.b16 %v4112
        %v4707 = vunpack.c.l.b16 %v4113
        %v4708 = vunpack.c.l.b16 %v4114
        %v4709 = vunpack.c.l.b16 %v4115
        %v4710 = vunpack.c.l.b16 %v4116
        %v4711 = vunpack.c.l.b16 %v4117
        %v4712 = vunpack.c.l.b16 %v4118
        %v4713 = vunpack.c.l.b16 %v4119
        %v4714 = vunpack.c.l.b16 %v4120
        %v4715 = vunpack.c.l.b16 %v4121
        %v4716 = vunpack.c.l.b16 %v4122
        %v4717 = vunpack.c.l.b16 %v4123
        %v4718 = vunpack.c.l.b16 %v4124
        %v4719 = vunpack.c.l.b16 %v4125
        %v4720 = vunpack.c.l.b16 %v4126
        %v4721 = vunpack.c.l.b16 %v4127
        %v4722 = vunpack.c.l.b16 %v4128
        %v4723 = vunpack.c.l.b16 %v4129
        %v4724 = vunpack.c.l.b16 %v4130
        %v4725 = vunpack.c.l.b16 %v4131
        %v4726 = vunpack.c.l.b16 %v4132
        %v4727 = vunpack.c.l.b16 %v4133
        %v4728 = vunpack.c.l.b16 %v4134
        %v4729 = vunpack.c.l.b16 %v4135
        %v4730 = vunpack.c.l.b16 %v4136
        %v4731 = vunpack.c.l.b16 %v4137
        %v4732 = vunpack.c.l.b16 %v4138
        %v4733 = vunpack.c.l.b16 %v4139
        %v4734 = vunpack.c.l.b16 %v4140
        %v4735 = vunpack.c.l.b16 %v4141
        %v4736 = vunpack.c.l.b16 %v4142
        %v4737 = vunpack.c.l.b16 %v4143
        %v4738 = vunpack.c.l.b16 %v4144
        %v4739 = vunpack.c.l.b16 %v4145
        %v4740 = vunpack.c.l.b16 %v4146
        %v4741 = vpack.c.b16 %v4688, %v4687
        %v4742 = vpack.c.b16 %v4690, %v4689
        %v4743 = vpack.c.b16 %v4692, %v4691
        %v4744 = vpack.c.b16 %v4694, %v4693
        %v4745 = vpack.c.b16 %v4696, %v4695
        %v4746 = vpack.c.b16 %v4698, %v4697
        %v4747 = vpack.c.b16 %v4700, %v4699
        %v4748 = vpack.c.b16 %v4702, %v4701
        %v4749 = vpack.c.b16 %v4704, %v4703
        %v4750 = vpack.c.b16 %v4706, %v4705
        %v4751 = vpack.c.b16 %v4708, %v4707
        %v4752 = vpack.c.b16 %v4710, %v4709
        %v4753 = vpack.c.b16 %v4712, %v4711
        %v4754 = vpack.c.b16 %v4714, %v4713
        %v4755 = vpack.c.b16 %v4716, %v4715
        %v4756 = vpack.c.b16 %v4718, %v4717
        %v4757 = vpack.c.b16 %v4720, %v4719
        %v4758 = vpack.c.b16 %v4722, %v4721
        %v4759 = vpack.c.b16 %v4724, %v4723
        %v4760 = vpack.c.b16 %v4726, %v4725
        %v4761 = vpack.c.b16 %v4728, %v4727
        %v4762 = vpack.c.b16 %v4730, %v4729
        %v4763 = vpack.c.b16 %v4732, %v4731
        %v4764 = vpack.c.b16 %v4734, %v4733
        %v4765 = vpack.c.b16 %v4736, %v4735
        %v4766 = vpack.c.b16 %v4738, %v4737
        %v4767 = vpack.c.b16 %v4740, %v4739
        %v4795 = vld [vmem:[#allocation8] sm:$0xf]
        %v4796 = vld [vmem:[#allocation8 + $0x4] sm:$0xf]
        %v4797 = vld [vmem:[#allocation8 + $0x8] sm:$0xf]
        %v4798 = vld [vmem:[#allocation8 + $0xc] sm:$0xf]
        %v4799 = vld [vmem:[#allocation8 + $0x10] sm:$0xf]
        %v4800 = vld [vmem:[#allocation8 + $0x14] sm:$0xf]
        %v4801 = vld [vmem:[#allocation8 + $0x18] sm:$0xf]
        %v4802 = vld [vmem:[#allocation8 + $0x1c] sm:$0xf]
        %v4803 = vld [vmem:[#allocation8 + $0x20] sm:$0xf]
        %v4804 = vld [vmem:[#allocation8 + $0x24] sm:$0xf]
        %v4805 = vld [vmem:[#allocation8 + $0x28] sm:$0xf]
        %v4806 = vld [vmem:[#allocation8 + $0x2c] sm:$0xf]
        %v4807 = vld [vmem:[#allocation8 + $0x30] sm:$0xf]
        %v4808 = vld [vmem:[#allocation8 + $0x34] sm:$0xf]
        %v4809 = vld [vmem:[#allocation8 + $0x38] sm:$0xf]
        %v4810 = vld [vmem:[#allocation8 + $0x3c] sm:$0xf]
        %v4811 = vld [vmem:[#allocation8 + $0x40] sm:$0xf]
        %v4812 = vld [vmem:[#allocation8 + $0x44] sm:$0xf]
        %v4813 = vld [vmem:[#allocation8 + $0x48] sm:$0xf]
        %v4814 = vld [vmem:[#allocation8 + $0x4c] sm:$0xf]
        %v4815 = vld [vmem:[#allocation8 + $0x50] sm:$0xf]
        %v4816 = vld [vmem:[#allocation8 + $0x54] sm:$0xf]
        %v4817 = vld [vmem:[#allocation8 + $0x58] sm:$0xf]
        %v4818 = vld [vmem:[#allocation8 + $0x5c] sm:$0xf]
        %v4819 = vld [vmem:[#allocation8 + $0x60] sm:$0xf]
        %v4820 = vld [vmem:[#allocation8 + $0x64] sm:$0xf]
        %v4821 = vld [vmem:[#allocation8 + $0x68] sm:$0xf]
        %v4822 = vld [vmem:[#allocation8 + $0x6c] sm:$0xf]
        %v4823 = vld [vmem:[#allocation8 + $0x70] sm:$0xf]
        %v4824 = vld [vmem:[#allocation8 + $0x74] sm:$0xf]
        %v4825 = vld [vmem:[#allocation8 + $0x78] sm:$0xf]
        %v4826 = vld [vmem:[#allocation8 + $0x7c] sm:$0xf]
        %v4827 = vld [vmem:[#allocation8 + $0x80] sm:$0xf]
        %v4828 = vld [vmem:[#allocation8 + $0x84] sm:$0xf]
        %v4829 = vld [vmem:[#allocation8 + $0x88] sm:$0xf]
        %v4830 = vld [vmem:[#allocation8 + $0x8c] sm:$0xf]
        %v4831 = vld [vmem:[#allocation8 + $0x90] sm:$0xf]
        %v4832 = vld [vmem:[#allocation8 + $0x94] sm:$0xf]
        %v4833 = vld [vmem:[#allocation8 + $0x98] sm:$0xf]
        %v4834 = vld [vmem:[#allocation8 + $0x9c] sm:$0xf]
        %v4835 = vld [vmem:[#allocation8 + $0xa0] sm:$0xf]
        %v4836 = vld [vmem:[#allocation8 + $0xa4] sm:$0xf]
        %v4837 = vld [vmem:[#allocation8 + $0xa8] sm:$0xf]
        %v4838 = vld [vmem:[#allocation8 + $0xac] sm:$0xf]
        %v4839 = vld [vmem:[#allocation8 + $0xb0] sm:$0xf]
        %v4840 = vld [vmem:[#allocation8 + $0xb4] sm:$0xf]
        %v4841 = vld [vmem:[#allocation8 + $0xb8] sm:$0xf]
        %v4842 = vld [vmem:[#allocation8 + $0xbc] sm:$0xf]
        %s4843 = scalar_lea.vmem [#allocation8], 192
        %v4844 = vld [vmem:[%s4843] sm:$0xf]
        %v4845 = vld [vmem:[%s4843 + $0x4] sm:$0xf]
        %v4846 = vld [vmem:[%s4843 + $0x8] sm:$0xf]
        %v4847 = vld [vmem:[%s4843 + $0xc] sm:$0xf]
        %v4848 = vld [vmem:[%s4843 + $0x10] sm:$0xf]
        %v4849 = vld [vmem:[%s4843 + $0x14] sm:$0xf]
        %v4850 = vld [vmem:[%s4843 + $0x18] sm:$0xf]
        %v4851 = vld [vmem:[%s4843 + $0x1c] sm:$0xf]
        %v4852 = vld [vmem:[%s4843 + $0x20] sm:$0xf]
        %v4853 = vld [vmem:[%s4843 + $0x24] sm:$0xf]
        %v4854 = vld [vmem:[%s4843 + $0x28] sm:$0xf]
        %v4855 = vld [vmem:[%s4843 + $0x2c] sm:$0xf]
        %v4856 = vld [vmem:[%s4843 + $0x30] sm:$0xf]
        %v4857 = vld [vmem:[%s4843 + $0x34] sm:$0xf]
        %v4858 = vld [vmem:[%s4843 + $0x38] sm:$0xf]
        %v4859 = vld [vmem:[%s4843 + $0x3c] sm:$0xf]
        %v4860 = vld [vmem:[%s4843 + $0x40] sm:$0xf]
        %v4861 = vld [vmem:[%s4843 + $0x44] sm:$0xf]
        %v4862 = vld [vmem:[%s4843 + $0x48] sm:$0xf]
        %v4863 = vld [vmem:[%s4843 + $0x4c] sm:$0xf]
        %v4864 = vld [vmem:[%s4843 + $0x50] sm:$0xf]
        %v4865 = vld [vmem:[%s4843 + $0x54] sm:$0xf]
        %v4866 = vld [vmem:[%s4843 + $0x58] sm:$0xf]
        %v4867 = vld [vmem:[%s4843 + $0x5c] sm:$0xf]
        %v4868 = vld [vmem:[%s4843 + $0x60] sm:$0xf]
        %v4869 = vld [vmem:[%s4843 + $0x64] sm:$0xf]
        %v4870 = vld [vmem:[%s4843 + $0x68] sm:$0xf]
        %v4871 = vld [vmem:[%s4843 + $0x6c] sm:$0xf]
        %v4872 = vld [vmem:[%s4843 + $0x70] sm:$0xf]
        %v4873 = vld [vmem:[%s4843 + $0x74] sm:$0xf]
        %v4874 = vld [vmem:[%s4843 + $0x78] sm:$0xf]
        %v4875 = vld [vmem:[%s4843 + $0x7c] sm:$0xf]
        %v4876 = vld [vmem:[%s4843 + $0x80] sm:$0xf]
        %v4877 = vld [vmem:[%s4843 + $0x84] sm:$0xf]
        %v4878 = vld [vmem:[%s4843 + $0x88] sm:$0xf]
        %v4879 = vld [vmem:[%s4843 + $0x8c] sm:$0xf]
        %v4880 = vld [vmem:[%s4843 + $0x90] sm:$0xf]
        %v4881 = vld [vmem:[%s4843 + $0x94] sm:$0xf]
        %v4882 = vld [vmem:[%s4843 + $0x98] sm:$0xf]
        %v4883 = vld [vmem:[%s4843 + $0x9c] sm:$0xf]
        %v4884 = vld [vmem:[%s4843 + $0xa0] sm:$0xf]
        %v4885 = vld [vmem:[%s4843 + $0xa4] sm:$0xf]
        %v4886 = vld [vmem:[%s4843 + $0xa8] sm:$0xf]
        %v4887 = vld [vmem:[%s4843 + $0xac] sm:$0xf]
        %v4888 = vld [vmem:[%s4843 + $0xb0] sm:$0xf]
        %v4889 = vld [vmem:[%s4843 + $0xb4] sm:$0xf]
        %v4890 = vld [vmem:[%s4843 + $0xb8] sm:$0xf]
        %v4891 = vld [vmem:[%s4843 + $0xbc] sm:$0xf]
        %v4942 = vrot.slane %v4418, 4
        %v4943 = vrot.slane %v4419, 4
        %v4944 = vsel %vm1281, %v4942, %v4943
        %v4945 = vrot.slane %v4742, 4
        %v4946 = vrot.slane %v4743, 4
        %v4947 = vsel %vm1281, %v4945, %v4946
        %v4948 = vrot.slane %v4607, 4
        %v4949 = vrot.slane %v4608, 4
        %v4950 = vsel %vm1281, %v4948, %v4949
        %v4951 = vrot.slane %v4420, 4
        %v4952 = vsel %vm1281, %v4943, %v4951
        %v4953 = vrot.slane %v4744, 4
        %v4954 = vsel %vm1281, %v4946, %v4953
        %v4955 = vrot.slane %v4609, 4
        %v4956 = vsel %vm1281, %v4949, %v4955
        %v4957 = vrot.slane %v4421, 4
        %v4958 = vsel %vm1281, %v4951, %v4957
        %v4959 = vrot.slane %v4745, 4
        %v4960 = vsel %vm1281, %v4953, %v4959
        %v4961 = vrot.slane %v4610, 4
        %v4962 = vsel %vm1281, %v4955, %v4961
        %v4963 = vrot.slane %v4422, 4
        %v4964 = vsel %vm1281, %v4957, %v4963
        %v4965 = vrot.slane %v4746, 4
        %v4966 = vsel %vm1281, %v4959, %v4965
        %v4967 = vrot.slane %v4611, 4
        %v4968 = vsel %vm1281, %v4961, %v4967
        %v4969 = vrot.slane %v4423, 4
        %v4970 = vsel %vm1281, %v4963, %v4969
        %v4971 = vrot.slane %v4747, 4
        %v4972 = vsel %vm1281, %v4965, %v4971
        %v4973 = vrot.slane %v4612, 4
        %v4974 = vsel %vm1281, %v4967, %v4973
        %v4975 = vrot.slane %v4424, 4
        %v4976 = vsel %vm1281, %v4969, %v4975
        %v4977 = vrot.slane %v4748, 4
        %v4978 = vsel %vm1281, %v4971, %v4977
        %v4979 = vrot.slane %v4613, 4
        %v4980 = vsel %vm1281, %v4973, %v4979
        %v4981 = vrot.slane %v4425, 4
        %v4982 = vsel %vm1281, %v4975, %v4981
        %v4983 = vrot.slane %v4749, 4
        %v4984 = vsel %vm1281, %v4977, %v4983
        %v4985 = vrot.slane %v4614, 4
        %v4986 = vsel %vm1281, %v4979, %v4985
        %v4987 = vrot.slane %v4426, 4
        %v4988 = vsel %vm1281, %v4981, %v4987
        %v4989 = vrot.slane %v4750, 4
        %v4990 = vsel %vm1281, %v4983, %v4989
        %v4991 = vrot.slane %v4615, 4
        %v4992 = vsel %vm1281, %v4985, %v4991
        %v4993 = vrot.slane %v4427, 4
        %v4994 = vsel %vm1281, %v4987, %v4993
        %v4995 = vrot.slane %v4751, 4
        %v4996 = vsel %vm1281, %v4989, %v4995
        %v4997 = vrot.slane %v4616, 4
        %v4998 = vsel %vm1281, %v4991, %v4997
        %v4999 = vrot.slane %v4428, 4
        %v5000 = vsel %vm1281, %v4993, %v4999
        %v5001 = vrot.slane %v4752, 4
        %v5002 = vsel %vm1281, %v4995, %v5001
        %v5003 = vrot.slane %v4617, 4
        %v5004 = vsel %vm1281, %v4997, %v5003
        %v5005 = vrot.slane %v4429, 4
        %v5006 = vsel %vm1281, %v4999, %v5005
        %v5007 = vrot.slane %v4753, 4
        %v5008 = vsel %vm1281, %v5001, %v5007
        %v5009 = vrot.slane %v4618, 4
        %v5010 = vsel %vm1281, %v5003, %v5009
        %v5011 = vrot.slane %v4430, 4
        %v5012 = vsel %vm1281, %v5005, %v5011
        %v5013 = vrot.slane %v4754, 4
        %v5014 = vsel %vm1281, %v5007, %v5013
        %v5015 = vrot.slane %v4619, 4
        %v5016 = vsel %vm1281, %v5009, %v5015
        %v5017 = vrot.slane %v4431, 4
        %v5018 = vsel %vm1281, %v5011, %v5017
        %v5019 = vrot.slane %v4755, 4
        %v5020 = vsel %vm1281, %v5013, %v5019
        %v5021 = vrot.slane %v4620, 4
        %v5022 = vsel %vm1281, %v5015, %v5021
        %v5023 = vrot.slane %v4432, 4
        %v5024 = vsel %vm1281, %v5017, %v5023
        %v5025 = vrot.slane %v4756, 4
        %v5026 = vsel %vm1281, %v5019, %v5025
        %v5027 = vrot.slane %v4621, 4
        %v5028 = vsel %vm1281, %v5021, %v5027
        %v5029 = vrot.slane %v4433, 4
        %v5030 = vsel %vm1281, %v5023, %v5029
        %v5031 = vrot.slane %v4757, 4
        %v5032 = vsel %vm1281, %v5025, %v5031
        %v5033 = vrot.slane %v4622, 4
        %v5034 = vsel %vm1281, %v5027, %v5033
        %v5035 = vrot.slane %v4434, 4
        %v5036 = vsel %vm1281, %v5029, %v5035
        %v5037 = vrot.slane %v4758, 4
        %v5038 = vsel %vm1281, %v5031, %v5037
        %v5039 = vrot.slane %v4623, 4
        %v5040 = vsel %vm1281, %v5033, %v5039
        %v5041 = vrot.slane %v4435, 4
        %v5042 = vsel %vm1281, %v5035, %v5041
        %v5043 = vrot.slane %v4759, 4
        %v5044 = vsel %vm1281, %v5037, %v5043
        %v5045 = vrot.slane %v4624, 4
        %v5046 = vsel %vm1281, %v5039, %v5045
        %v5047 = vrot.slane %v4436, 4
        %v5048 = vsel %vm1281, %v5041, %v5047
        %v5049 = vrot.slane %v4760, 4
        %v5050 = vsel %vm1281, %v5043, %v5049
        %v5051 = vrot.slane %v4625, 4
        %v5052 = vsel %vm1281, %v5045, %v5051
        %v5053 = vrot.slane %v4437, 4
        %v5054 = vsel %vm1281, %v5047, %v5053
        %v5055 = vrot.slane %v4761, 4
        %v5056 = vsel %vm1281, %v5049, %v5055
        %v5057 = vrot.slane %v4626, 4
        %v5058 = vsel %vm1281, %v5051, %v5057
        %v5059 = vrot.slane %v4438, 4
        %v5060 = vsel %vm1281, %v5053, %v5059
        %v5061 = vrot.slane %v4762, 4
        %v5062 = vsel %vm1281, %v5055, %v5061
        %v5063 = vrot.slane %v4627, 4
        %v5064 = vsel %vm1281, %v5057, %v5063
        %v5065 = vrot.slane %v4439, 4
        %v5066 = vsel %vm1281, %v5059, %v5065
        %v5067 = vrot.slane %v4763, 4
        %v5068 = vsel %vm1281, %v5061, %v5067
        %v5069 = vrot.slane %v4628, 4
        %v5070 = vsel %vm1281, %v5063, %v5069
        %v5071 = vrot.slane %v4440, 4
        %v5072 = vsel %vm1281, %v5065, %v5071
        %v5073 = vrot.slane %v4764, 4
        %v5074 = vsel %vm1281, %v5067, %v5073
        %v5075 = vrot.slane %v4629, 4
        %v5076 = vsel %vm1281, %v5069, %v5075
        %v5077 = vrot.slane %v4441, 4
        %v5078 = vsel %vm1281, %v5071, %v5077
        %v5079 = vrot.slane %v4765, 4
        %v5080 = vsel %vm1281, %v5073, %v5079
        %v5081 = vrot.slane %v4630, 4
        %v5082 = vsel %vm1281, %v5075, %v5081
        %v5083 = vrot.slane %v4442, 4
        %v5084 = vsel %vm1281, %v5077, %v5083
        %v5085 = vrot.slane %v4766, 4
        %v5086 = vsel %vm1281, %v5079, %v5085
        %v5087 = vrot.slane %v4631, 4
        %v5088 = vsel %vm1281, %v5081, %v5087
        %v5209 = vunpack.c.l.b16 %v4844
        %v5210 = vunpack.c.l.b16 %v4845
        %v5211 = vunpack.c.l.b16 %v4846
        %v5212 = vunpack.c.l.b16 %v4847
        %v5213 = vunpack.c.l.b16 %v4848
        %v5214 = vunpack.c.l.b16 %v4849
        %v5215 = vunpack.c.l.b16 %v4850
        %v5216 = vunpack.c.l.b16 %v4851
        %v5217 = vunpack.c.l.b16 %v4852
        %v5218 = vunpack.c.l.b16 %v4853
        %v5219 = vunpack.c.l.b16 %v4854
        %v5220 = vunpack.c.l.b16 %v4855
        %v5221 = vunpack.c.l.b16 %v4856
        %v5222 = vunpack.c.l.b16 %v4857
        %v5223 = vunpack.c.l.b16 %v4858
        %v5224 = vunpack.c.l.b16 %v4859
        %v5225 = vunpack.c.l.b16 %v4860
        %v5226 = vunpack.c.l.b16 %v4861
        %v5227 = vunpack.c.l.b16 %v4862
        %v5228 = vunpack.c.l.b16 %v4863
        %v5229 = vunpack.c.l.b16 %v4864
        %v5230 = vunpack.c.l.b16 %v4865
        %v5231 = vunpack.c.l.b16 %v4866
        %v5232 = vunpack.c.l.b16 %v4867
        %v5233 = vunpack.c.l.b16 %v4868
        %v5234 = vunpack.c.l.b16 %v4869
        %v5235 = vunpack.c.l.b16 %v4870
        %v5236 = vunpack.c.l.b16 %v4871
        %v5237 = vunpack.c.l.b16 %v4872
        %v5238 = vunpack.c.l.b16 %v4873
        %v5239 = vunpack.c.l.b16 %v4874
        %v5240 = vunpack.c.l.b16 %v4875
        %v5241 = vunpack.c.l.b16 %v4876
        %v5242 = vunpack.c.l.b16 %v4877
        %v5243 = vunpack.c.l.b16 %v4878
        %v5244 = vunpack.c.l.b16 %v4879
        %v5245 = vunpack.c.l.b16 %v4880
        %v5246 = vunpack.c.l.b16 %v4881
        %v5247 = vunpack.c.l.b16 %v4882
        %v5248 = vunpack.c.l.b16 %v4883
        %v5249 = vunpack.c.l.b16 %v4884
        %v5250 = vunpack.c.l.b16 %v4885
        %v5251 = vunpack.c.l.b16 %v4886
        %v5252 = vunpack.c.l.b16 %v4887
        %v5253 = vunpack.c.l.b16 %v4888
        %v5254 = vunpack.c.l.b16 %v4889
        %v5255 = vunpack.c.l.b16 %v4890
        %v5256 = vunpack.c.l.b16 %v4891
        %v5257 = vpack.c.b16 %v5210, %v5209
        %v5258 = vpack.c.b16 %v5212, %v5211
        %v5259 = vpack.c.b16 %v5214, %v5213
        %v5260 = vpack.c.b16 %v5216, %v5215
        %v5261 = vpack.c.b16 %v5218, %v5217
        %v5262 = vpack.c.b16 %v5220, %v5219
        %v5263 = vpack.c.b16 %v5222, %v5221
        %v5264 = vpack.c.b16 %v5224, %v5223
        %v5265 = vpack.c.b16 %v5226, %v5225
        %v5266 = vpack.c.b16 %v5228, %v5227
        %v5267 = vpack.c.b16 %v5230, %v5229
        %v5268 = vpack.c.b16 %v5232, %v5231
        %v5269 = vpack.c.b16 %v5234, %v5233
        %v5270 = vpack.c.b16 %v5236, %v5235
        %v5271 = vpack.c.b16 %v5238, %v5237
        %v5272 = vpack.c.b16 %v5240, %v5239
        %v5273 = vpack.c.b16 %v5242, %v5241
        %v5274 = vpack.c.b16 %v5244, %v5243
        %v5275 = vpack.c.b16 %v5246, %v5245
        %v5276 = vpack.c.b16 %v5248, %v5247
        %v5277 = vpack.c.b16 %v5250, %v5249
        %v5278 = vpack.c.b16 %v5252, %v5251
        %v5279 = vpack.c.b16 %v5254, %v5253
        %v5280 = vpack.c.b16 %v5256, %v5255
        %5305 = vmatprep.subr.bf16.mxu0 0
        %5306 = vmatpush1.bf16.msra.mxu0 %v5264
        %5307 = vmatprep.subr.bf16.mxu0 0
        %5308 = vmatpush1.bf16.msra.mxu0 %v5263
        %5309 = vmatprep.subr.bf16.mxu0 0
        %5310 = vmatpush1.bf16.msra.mxu0 %v5262
        %5311 = vmatprep.subr.bf16.mxu0 0
        %5312 = vmatpush1.bf16.msra.mxu0 %v5261
        %5313 = vmatprep.subr.bf16.mxu0 0
        %5314 = vmatpush1.bf16.msra.mxu0 %v5260
        %5315 = vmatprep.subr.bf16.mxu0 0
        %5316 = vmatpush1.bf16.msra.mxu0 %v5259
        %5317 = vmatprep.subr.bf16.mxu0 0
        %5318 = vmatpush1.bf16.msra.mxu0 %v5258
        %5319 = vmatprep.subr.bf16.mxu0 0
        %5320 = vmatpush1.bf16.msra.mxu0 %v5257
        %5321 = vmatprep.subr.bf16.mxu0 0
        %5322 = vmatpush2.bf16.msra.mxu0 %v5272
        %5323 = vmatprep.subr.bf16.mxu0 0
        %5324 = vmatpush2.bf16.msra.mxu0 %v5271
        %5325 = vmatprep.subr.bf16.mxu0 0
        %5326 = vmatpush2.bf16.msra.mxu0 %v5270
        %5327 = vmatprep.subr.bf16.mxu0 0
        %5328 = vmatpush2.bf16.msra.mxu0 %v5269
        %5329 = vmatprep.subr.bf16.mxu0 0
        %5330 = vmatpush2.bf16.msra.mxu0 %v5268
        %5331 = vmatprep.subr.bf16.mxu0 0
        %5332 = vmatpush2.bf16.msra.mxu0 %v5267
        %5333 = vmatprep.subr.bf16.mxu0 0
        %5334 = vmatpush2.bf16.msra.mxu0 %v5266
        %5335 = vmatprep.subr.bf16.mxu0 0
        %5336 = vmatpush2.bf16.msra.mxu0 %v5265
        %5337 = vmatprep.mubr.bf16.mxu0 %v4947
        %5338 = vmatmul.mubr.bf16.gmra.mxu0 %v4944
        %v5339 = vpop.f32.mrf.mxu0
        %v5340 = vadd.f32 0.0, %v5339
        %v5341 = vpop.f32.mrf.mxu0
        %v5342 = vpop.f32.mrf.mxu0
        %v5343 = vadd.f32 0.0, %v5342
        %v5344 = vpop.f32.mrf.mxu0
        %5345 = vmatprep.mubr.bf16.mxu0 %v4954
        %5346 = vmatmul.mubr.bf16.gmra.mxu0 %v4952
        %v5347 = vpop.f32.mrf.mxu0
        %v5348 = vpop.f32.mrf.mxu0
        %v5349 = vpop.f32.mrf.mxu0
        %v5350 = vadd.f32 0.0, %v5349
        %v5351 = vpop.f32.mrf.mxu0
        %5352 = vmatprep.mubr.bf16.mxu0 %v4960
        %5353 = vmatmul.mubr.bf16.gmra.mxu0 %v4958
        %v5354 = vpop.f32.mrf.mxu0
        %v5355 = vadd.f32 0.0, %v5354
        %v5356 = vpop.f32.mrf.mxu0
        %v5357 = vpop.f32.mrf.mxu0
        %v5358 = vpop.f32.mrf.mxu0
        %5359 = vmatprep.mubr.bf16.mxu0 %v4966
        %5360 = vmatmul.mubr.bf16.gmra.mxu0 %v4964
        %v5361 = vpop.f32.mrf.mxu0
        %v5362 = vadd.f32 0.0, %v5361
        %v5363 = vpop.f32.mrf.mxu0
        %v5364 = vpop.f32.mrf.mxu0
        %v5365 = vadd.f32 0.0, %v5364
        %v5366 = vpop.f32.mrf.mxu0
        %5367 = vmatprep.mubr.bf16.mxu0 %v4972
        %5368 = vmatmul.mubr.bf16.gmra.mxu0 %v4970
        %v5369 = vpop.f32.mrf.mxu0
        %v5370 = vpop.f32.mrf.mxu0
        %v5371 = vpop.f32.mrf.mxu0
        %v5372 = vadd.f32 0.0, %v5371
        %v5373 = vpop.f32.mrf.mxu0
        %5374 = vmatprep.mubr.bf16.mxu0 %v4978
        %5375 = vmatmul.mubr.bf16.gmra.mxu0 %v4976
        %v5376 = vpop.f32.mrf.mxu0
        %v5377 = vadd.f32 0.0, %v5376
        %v5378 = vpop.f32.mrf.mxu0
        %v5379 = vpop.f32.mrf.mxu0
        %v5380 = vpop.f32.mrf.mxu0
        %5381 = vmatprep.mubr.bf16.mxu0 %v4984
        %5382 = vmatmul.mubr.bf16.gmra.mxu0 %v4982
        %v5383 = vpop.f32.mrf.mxu0
        %v5384 = vadd.f32 0.0, %v5383
        %v5385 = vpop.f32.mrf.mxu0
        %v5386 = vpop.f32.mrf.mxu0
        %v5387 = vadd.f32 0.0, %v5386
        %v5388 = vpop.f32.mrf.mxu0
        %5389 = vmatprep.mubr.bf16.mxu0 %v4990
        %5390 = vmatmul.mubr.bf16.gmra.mxu0 %v4988
        %v5391 = vpop.f32.mrf.mxu0
        %v5392 = vpop.f32.mrf.mxu0
        %v5393 = vpop.f32.mrf.mxu0
        %v5394 = vadd.f32 0.0, %v5393
        %v5395 = vpop.f32.mrf.mxu0
        %5396 = vmatprep.mubr.bf16.mxu0 %v4996
        %5397 = vmatmul.mubr.bf16.gmra.mxu0 %v4994
        %v5398 = vpop.f32.mrf.mxu0
        %v5399 = vadd.f32 0.0, %v5398
        %v5400 = vpop.f32.mrf.mxu0
        %v5401 = vpop.f32.mrf.mxu0
        %v5402 = vpop.f32.mrf.mxu0
        %5403 = vmatprep.mubr.bf16.mxu0 %v5002
        %5404 = vmatmul.mubr.bf16.gmra.mxu0 %v5000
        %v5405 = vpop.f32.mrf.mxu0
        %v5406 = vadd.f32 0.0, %v5405
        %v5407 = vpop.f32.mrf.mxu0
        %v5408 = vpop.f32.mrf.mxu0
        %v5409 = vadd.f32 0.0, %v5408
        %v5410 = vpop.f32.mrf.mxu0
        %5411 = vmatprep.mubr.bf16.mxu0 %v5008
        %5412 = vmatmul.mubr.bf16.gmra.mxu0 %v5006
        %v5413 = vpop.f32.mrf.mxu0
        %v5414 = vpop.f32.mrf.mxu0
        %v5415 = vpop.f32.mrf.mxu0
        %v5416 = vadd.f32 0.0, %v5415
        %v5417 = vpop.f32.mrf.mxu0
        %5418 = vmatprep.mubr.bf16.mxu0 %v5014
        %5419 = vmatmul.mubr.bf16.gmra.mxu0 %v5012
        %v5420 = vpop.f32.mrf.mxu0
        %v5421 = vadd.f32 0.0, %v5420
        %v5422 = vpop.f32.mrf.mxu0
        %v5423 = vpop.f32.mrf.mxu0
        %v5424 = vpop.f32.mrf.mxu0
        %5425 = vmatprep.mubr.bf16.mxu0 %v5020
        %5426 = vmatmul.mubr.bf16.gmra.mxu0 %v5018
        %v5427 = vpop.f32.mrf.mxu0
        %v5428 = vadd.f32 0.0, %v5427
        %v5429 = vpop.f32.mrf.mxu0
        %v5430 = vpop.f32.mrf.mxu0
        %v5431 = vadd.f32 0.0, %v5430
        %v5432 = vpop.f32.mrf.mxu0
        %5433 = vmatprep.mubr.bf16.mxu0 %v5026
        %5434 = vmatmul.mubr.bf16.gmra.mxu0 %v5024
        %v5435 = vpop.f32.mrf.mxu0
        %v5436 = vpop.f32.mrf.mxu0
        %v5437 = vpop.f32.mrf.mxu0
        %v5438 = vadd.f32 0.0, %v5437
        %v5439 = vpop.f32.mrf.mxu0
        %5440 = vmatprep.mubr.bf16.mxu0 %v5032
        %5441 = vmatmul.mubr.bf16.gmra.mxu0 %v5030
        %v5442 = vpop.f32.mrf.mxu0
        %v5443 = vadd.f32 0.0, %v5442
        %v5444 = vpop.f32.mrf.mxu0
        %v5445 = vpop.f32.mrf.mxu0
        %v5446 = vpop.f32.mrf.mxu0
        %5447 = vmatprep.mubr.bf16.mxu0 %v5038
        %5448 = vmatmul.mubr.bf16.gmra.mxu0 %v5036
        %v5449 = vpop.f32.mrf.mxu0
        %v5450 = vadd.f32 0.0, %v5449
        %v5451 = vpop.f32.mrf.mxu0
        %v5452 = vpop.f32.mrf.mxu0
        %v5453 = vadd.f32 0.0, %v5452
        %v5454 = vpop.f32.mrf.mxu0
        %5455 = vmatprep.mubr.bf16.mxu0 %v5044
        %5456 = vmatmul.mubr.bf16.gmra.mxu0 %v5042
        %v5457 = vpop.f32.mrf.mxu0
        %v5458 = vpop.f32.mrf.mxu0
        %v5459 = vpop.f32.mrf.mxu0
        %v5460 = vadd.f32 0.0, %v5459
        %v5461 = vpop.f32.mrf.mxu0
        %5462 = vmatprep.mubr.bf16.mxu0 %v5050
        %5463 = vmatmul.mubr.bf16.gmra.mxu0 %v5048
        %v5464 = vpop.f32.mrf.mxu0
        %v5465 = vadd.f32 0.0, %v5464
        %v5466 = vpop.f32.mrf.mxu0
        %v5467 = vpop.f32.mrf.mxu0
        %v5468 = vpop.f32.mrf.mxu0
        %5469 = vmatprep.mubr.bf16.mxu0 %v5056
        %5470 = vmatmul.mubr.bf16.gmra.mxu0 %v5054
        %v5471 = vpop.f32.mrf.mxu0
        %v5472 = vadd.f32 0.0, %v5471
        %v5473 = vpop.f32.mrf.mxu0
        %v5474 = vpop.f32.mrf.mxu0
        %v5475 = vadd.f32 0.0, %v5474
        %v5476 = vpop.f32.mrf.mxu0
        %5477 = vmatprep.mubr.bf16.mxu0 %v5062
        %5478 = vmatmul.mubr.bf16.gmra.mxu0 %v5060
        %v5479 = vpop.f32.mrf.mxu0
        %v5480 = vpop.f32.mrf.mxu0
        %v5481 = vpop.f32.mrf.mxu0
        %v5482 = vadd.f32 0.0, %v5481
        %v5483 = vpop.f32.mrf.mxu0
        %5484 = vmatprep.mubr.bf16.mxu0 %v5068
        %5485 = vmatmul.mubr.bf16.gmra.mxu0 %v5066
        %v5486 = vpop.f32.mrf.mxu0
        %v5487 = vadd.f32 0.0, %v5486
        %v5488 = vpop.f32.mrf.mxu0
        %v5489 = vpop.f32.mrf.mxu0
        %v5490 = vpop.f32.mrf.mxu0
        %5491 = vmatprep.mubr.bf16.mxu0 %v5074
        %5492 = vmatmul.mubr.bf16.gmra.mxu0 %v5072
        %v5493 = vpop.f32.mrf.mxu0
        %v5494 = vadd.f32 0.0, %v5493
        %v5495 = vpop.f32.mrf.mxu0
        %v5496 = vpop.f32.mrf.mxu0
        %v5497 = vadd.f32 0.0, %v5496
        %v5498 = vpop.f32.mrf.mxu0
        %5499 = vmatprep.mubr.bf16.mxu0 %v5080
        %5500 = vmatmul.mubr.bf16.gmra.mxu0 %v5078
        %v5501 = vpop.f32.mrf.mxu0
        %v5502 = vpop.f32.mrf.mxu0
        %v5503 = vpop.f32.mrf.mxu0
        %v5504 = vadd.f32 0.0, %v5503
        %v5505 = vpop.f32.mrf.mxu0
        %5506 = vmatprep.mubr.bf16.mxu0 %v5086
        %5507 = vmatmul.mubr.bf16.gmra.mxu0 %v5084
        %v5508 = vpop.f32.mrf.mxu0
        %v5509 = vadd.f32 0.0, %v5508
        %v5510 = vpop.f32.mrf.mxu0
        %v5511 = vpop.f32.mrf.mxu0
        %v5512 = vpop.f32.mrf.mxu0
        %5513 = vdwg.mxu0
        %5514 = vmatprep.subr.bf16.mxu0 0
        %5515 = vmatpush1.bf16.msra.mxu0 %v5280
        %5516 = vmatprep.subr.bf16.mxu0 0
        %5517 = vmatpush1.bf16.msra.mxu0 %v5279
        %5518 = vmatprep.subr.bf16.mxu0 0
        %5519 = vmatpush1.bf16.msra.mxu0 %v5278
        %5520 = vmatprep.subr.bf16.mxu0 0
        %5521 = vmatpush1.bf16.msra.mxu0 %v5277
        %5522 = vmatprep.subr.bf16.mxu0 0
        %5523 = vmatpush1.bf16.msra.mxu0 %v5276
        %5524 = vmatprep.subr.bf16.mxu0 0
        %5525 = vmatpush1.bf16.msra.mxu0 %v5275
        %5526 = vmatprep.subr.bf16.mxu0 0
        %5527 = vmatpush1.bf16.msra.mxu0 %v5274
        %5528 = vmatprep.subr.bf16.mxu0 0
        %5529 = vmatpush1.bf16.msra.mxu0 %v5273
        %5530 = vmatprep.subr.bf16.mxu0 0
        %5531 = vmatpush2.bf16.msra.mxu0 0
        %5532 = vmatprep.subr.bf16.mxu0 0
        %5533 = vmatpush2.bf16.msra.mxu0 0
        %5534 = vmatprep.subr.bf16.mxu0 0
        %5535 = vmatpush2.bf16.msra.mxu0 0
        %5536 = vmatprep.subr.bf16.mxu0 0
        %5537 = vmatpush2.bf16.msra.mxu0 0
        %5538 = vmatprep.subr.bf16.mxu0 0
        %5539 = vmatpush2.bf16.msra.mxu0 0
        %5540 = vmatprep.subr.bf16.mxu0 0
        %5541 = vmatpush2.bf16.msra.mxu0 0
        %5542 = vmatprep.subr.bf16.mxu0 0
        %5543 = vmatpush2.bf16.msra.mxu0 0
        %5544 = vmatprep.subr.bf16.mxu0 0
        %5545 = vmatpush2.bf16.msra.mxu0 0
        %5546 = vmatprep.mubr.bf16.mxu0 0
        %5547 = vmatmul.mubr.bf16.gmra.mxu0 %v4950
        %v5548 = vpop.f32.mrf.mxu0
        %v5549 = vadd.f32 %v5340, %v5548
        %v5550 = vpop.f32.mrf.mxu0
        %v5551 = vpop.f32.mrf.mxu0
        %v5552 = vadd.f32 %v5343, %v5551
        %v5553 = vpop.f32.mrf.mxu0
        %5554 = vmatprep.mubr.bf16.mxu0 0
        %5555 = vmatmul.mubr.bf16.gmra.mxu0 %v4956
        %v5556 = vpop.f32.mrf.mxu0
        %v5557 = vpop.f32.mrf.mxu0
        %v5558 = vpop.f32.mrf.mxu0
        %v5559 = vadd.f32 %v5350, %v5558
        %v5560 = vpop.f32.mrf.mxu0
        %5561 = vmatprep.mubr.bf16.mxu0 0
        %5562 = vmatmul.mubr.bf16.gmra.mxu0 %v4962
        %v5563 = vpop.f32.mrf.mxu0
        %v5564 = vadd.f32 %v5355, %v5563
        %v5565 = vpop.f32.mrf.mxu0
        %v5566 = vpop.f32.mrf.mxu0
        %v5567 = vpop.f32.mrf.mxu0
        %5568 = vmatprep.mubr.bf16.mxu0 0
        %5569 = vmatmul.mubr.bf16.gmra.mxu0 %v4968
        %v5570 = vpop.f32.mrf.mxu0
        %v5571 = vadd.f32 %v5362, %v5570
        %v5572 = vpop.f32.mrf.mxu0
        %v5573 = vpop.f32.mrf.mxu0
        %v5574 = vadd.f32 %v5365, %v5573
        %v5575 = vpop.f32.mrf.mxu0
        %5576 = vmatprep.mubr.bf16.mxu0 0
        %5577 = vmatmul.mubr.bf16.gmra.mxu0 %v4974
        %v5578 = vpop.f32.mrf.mxu0
        %v5579 = vpop.f32.mrf.mxu0
        %v5580 = vpop.f32.mrf.mxu0
        %v5581 = vadd.f32 %v5372, %v5580
        %v5582 = vpop.f32.mrf.mxu0
        %5583 = vmatprep.mubr.bf16.mxu0 0
        %5584 = vmatmul.mubr.bf16.gmra.mxu0 %v4980
        %v5585 = vpop.f32.mrf.mxu0
        %v5586 = vadd.f32 %v5377, %v5585
        %v5587 = vpop.f32.mrf.mxu0
        %v5588 = vpop.f32.mrf.mxu0
        %v5589 = vpop.f32.mrf.mxu0
        %5590 = vmatprep.mubr.bf16.mxu0 0
        %5591 = vmatmul.mubr.bf16.gmra.mxu0 %v4986
        %v5592 = vpop.f32.mrf.mxu0
        %v5593 = vadd.f32 %v5384, %v5592
        %v5594 = vpop.f32.mrf.mxu0
        %v5595 = vpop.f32.mrf.mxu0
        %v5596 = vadd.f32 %v5387, %v5595
        %v5597 = vpop.f32.mrf.mxu0
        %5598 = vmatprep.mubr.bf16.mxu0 0
        %5599 = vmatmul.mubr.bf16.gmra.mxu0 %v4992
        %v5600 = vpop.f32.mrf.mxu0
        %v5601 = vpop.f32.mrf.mxu0
        %v5602 = vpop.f32.mrf.mxu0
        %v5603 = vadd.f32 %v5394, %v5602
        %v5604 = vpop.f32.mrf.mxu0
        %5605 = vmatprep.mubr.bf16.mxu0 0
        %5606 = vmatmul.mubr.bf16.gmra.mxu0 %v4998
        %v5607 = vpop.f32.mrf.mxu0
        %v5608 = vadd.f32 %v5399, %v5607
        %v5609 = vpop.f32.mrf.mxu0
        %v5610 = vpop.f32.mrf.mxu0
        %v5611 = vpop.f32.mrf.mxu0
        %5612 = vmatprep.mubr.bf16.mxu0 0
        %5613 = vmatmul.mubr.bf16.gmra.mxu0 %v5004
        %v5614 = vpop.f32.mrf.mxu0
        %v5615 = vadd.f32 %v5406, %v5614
        %v5616 = vpop.f32.mrf.mxu0
        %v5617 = vpop.f32.mrf.mxu0
        %v5618 = vadd.f32 %v5409, %v5617
        %v5619 = vpop.f32.mrf.mxu0
        %5620 = vmatprep.mubr.bf16.mxu0 0
        %5621 = vmatmul.mubr.bf16.gmra.mxu0 %v5010
        %v5622 = vpop.f32.mrf.mxu0
        %v5623 = vpop.f32.mrf.mxu0
        %v5624 = vpop.f32.mrf.mxu0
        %v5625 = vadd.f32 %v5416, %v5624
        %v5626 = vpop.f32.mrf.mxu0
        %5627 = vmatprep.mubr.bf16.mxu0 0
        %5628 = vmatmul.mubr.bf16.gmra.mxu0 %v5016
        %v5629 = vpop.f32.mrf.mxu0
        %v5630 = vadd.f32 %v5421, %v5629
        %v5631 = vpop.f32.mrf.mxu0
        %v5632 = vpop.f32.mrf.mxu0
        %v5633 = vpop.f32.mrf.mxu0
        %5634 = vmatprep.mubr.bf16.mxu0 0
        %5635 = vmatmul.mubr.bf16.gmra.mxu0 %v5022
        %v5636 = vpop.f32.mrf.mxu0
        %v5637 = vadd.f32 %v5428, %v5636
        %v5638 = vpop.f32.mrf.mxu0
        %v5639 = vpop.f32.mrf.mxu0
        %v5640 = vadd.f32 %v5431, %v5639
        %v5641 = vpop.f32.mrf.mxu0
        %5642 = vmatprep.mubr.bf16.mxu0 0
        %5643 = vmatmul.mubr.bf16.gmra.mxu0 %v5028
        %v5644 = vpop.f32.mrf.mxu0
        %v5645 = vpop.f32.mrf.mxu0
        %v5646 = vpop.f32.mrf.mxu0
        %v5647 = vadd.f32 %v5438, %v5646
        %v5648 = vpop.f32.mrf.mxu0
        %5649 = vmatprep.mubr.bf16.mxu0 0
        %5650 = vmatmul.mubr.bf16.gmra.mxu0 %v5034
        %v5651 = vpop.f32.mrf.mxu0
        %v5652 = vadd.f32 %v5443, %v5651
        %v5653 = vpop.f32.mrf.mxu0
        %v5654 = vpop.f32.mrf.mxu0
        %v5655 = vpop.f32.mrf.mxu0
        %5656 = vmatprep.mubr.bf16.mxu0 0
        %5657 = vmatmul.mubr.bf16.gmra.mxu0 %v5040
        %v5658 = vpop.f32.mrf.mxu0
        %v5659 = vadd.f32 %v5450, %v5658
        %v5660 = vpop.f32.mrf.mxu0
        %v5661 = vpop.f32.mrf.mxu0
        %v5662 = vadd.f32 %v5453, %v5661
        %v5663 = vpop.f32.mrf.mxu0
        %5664 = vmatprep.mubr.bf16.mxu0 0
        %5665 = vmatmul.mubr.bf16.gmra.mxu0 %v5046
        %v5666 = vpop.f32.mrf.mxu0
        %v5667 = vpop.f32.mrf.mxu0
        %v5668 = vpop.f32.mrf.mxu0
        %v5669 = vadd.f32 %v5460, %v5668
        %v5670 = vpop.f32.mrf.mxu0
        %5671 = vmatprep.mubr.bf16.mxu0 0
        %5672 = vmatmul.mubr.bf16.gmra.mxu0 %v5052
        %v5673 = vpop.f32.mrf.mxu0
        %v5674 = vadd.f32 %v5465, %v5673
        %v5675 = vpop.f32.mrf.mxu0
        %v5676 = vpop.f32.mrf.mxu0
        %v5677 = vpop.f32.mrf.mxu0
        %5678 = vmatprep.mubr.bf16.mxu0 0
        %5679 = vmatmul.mubr.bf16.gmra.mxu0 %v5058
        %v5680 = vpop.f32.mrf.mxu0
        %v5681 = vadd.f32 %v5472, %v5680
        %v5682 = vpop.f32.mrf.mxu0
        %v5683 = vpop.f32.mrf.mxu0
        %v5684 = vadd.f32 %v5475, %v5683
        %v5685 = vpop.f32.mrf.mxu0
        %5686 = vmatprep.mubr.bf16.mxu0 0
        %5687 = vmatmul.mubr.bf16.gmra.mxu0 %v5064
        %v5688 = vpop.f32.mrf.mxu0
        %v5689 = vpop.f32.mrf.mxu0
        %v5690 = vpop.f32.mrf.mxu0
        %v5691 = vadd.f32 %v5482, %v5690
        %v5692 = vpop.f32.mrf.mxu0
        %5693 = vmatprep.mubr.bf16.mxu0 0
        %5694 = vmatmul.mubr.bf16.gmra.mxu0 %v5070
        %v5695 = vpop.f32.mrf.mxu0
        %v5696 = vadd.f32 %v5487, %v5695
        %v5697 = vpop.f32.mrf.mxu0
        %v5698 = vpop.f32.mrf.mxu0
        %v5699 = vpop.f32.mrf.mxu0
        %5700 = vmatprep.mubr.bf16.mxu0 0
        %5701 = vmatmul.mubr.bf16.gmra.mxu0 %v5076
        %v5702 = vpop.f32.mrf.mxu0
        %v5703 = vadd.f32 %v5494, %v5702
        %v5704 = vpop.f32.mrf.mxu0
        %v5705 = vpop.f32.mrf.mxu0
        %v5706 = vadd.f32 %v5497, %v5705
        %v5707 = vpop.f32.mrf.mxu0
        %5708 = vmatprep.mubr.bf16.mxu0 0
        %5709 = vmatmul.mubr.bf16.gmra.mxu0 %v5082
        %v5710 = vpop.f32.mrf.mxu0
        %v5711 = vpop.f32.mrf.mxu0
        %v5712 = vpop.f32.mrf.mxu0
        %v5713 = vadd.f32 %v5504, %v5712
        %v5714 = vpop.f32.mrf.mxu0
        %5715 = vmatprep.mubr.bf16.mxu0 0
        %5716 = vmatmul.mubr.bf16.gmra.mxu0 %v5088
        %v5717 = vpop.f32.mrf.mxu0
        %v5718 = vadd.f32 %v5509, %v5717
        %v5719 = vpop.f32.mrf.mxu0
        %v5720 = vpop.f32.mrf.mxu0
        %v5721 = vpop.f32.mrf.mxu0
        %5722 = vdwg.mxu0
        %v5771 = vunpack.c.l.b16 %v4795
        %v5772 = vunpack.c.l.b16 %v4796
        %v5773 = vunpack.c.l.b16 %v4797
        %v5774 = vunpack.c.l.b16 %v4798
        %v5775 = vunpack.c.l.b16 %v4799
        %v5776 = vunpack.c.l.b16 %v4800
        %v5777 = vunpack.c.l.b16 %v4801
        %v5778 = vunpack.c.l.b16 %v4802
        %v5779 = vunpack.c.l.b16 %v4803
        %v5780 = vunpack.c.l.b16 %v4804
        %v5781 = vunpack.c.l.b16 %v4805
        %v5782 = vunpack.c.l.b16 %v4806
        %v5783 = vunpack.c.l.b16 %v4807
        %v5784 = vunpack.c.l.b16 %v4808
        %v5785 = vunpack.c.l.b16 %v4809
        %v5786 = vunpack.c.l.b16 %v4810
        %v5787 = vunpack.c.l.b16 %v4811
        %v5788 = vunpack.c.l.b16 %v4812
        %v5789 = vunpack.c.l.b16 %v4813
        %v5790 = vunpack.c.l.b16 %v4814
        %v5791 = vunpack.c.l.b16 %v4815
        %v5792 = vunpack.c.l.b16 %v4816
        %v5793 = vunpack.c.l.b16 %v4817
        %v5794 = vunpack.c.l.b16 %v4818
        %v5795 = vunpack.c.l.b16 %v4819
        %v5796 = vunpack.c.l.b16 %v4820
        %v5797 = vunpack.c.l.b16 %v4821
        %v5798 = vunpack.c.l.b16 %v4822
        %v5799 = vunpack.c.l.b16 %v4823
        %v5800 = vunpack.c.l.b16 %v4824
        %v5801 = vunpack.c.l.b16 %v4825
        %v5802 = vunpack.c.l.b16 %v4826
        %v5803 = vunpack.c.l.b16 %v4827
        %v5804 = vunpack.c.l.b16 %v4828
        %v5805 = vunpack.c.l.b16 %v4829
        %v5806 = vunpack.c.l.b16 %v4830
        %v5807 = vunpack.c.l.b16 %v4831
        %v5808 = vunpack.c.l.b16 %v4832
        %v5809 = vunpack.c.l.b16 %v4833
        %v5810 = vunpack.c.l.b16 %v4834
        %v5811 = vunpack.c.l.b16 %v4835
        %v5812 = vunpack.c.l.b16 %v4836
        %v5813 = vunpack.c.l.b16 %v4837
        %v5814 = vunpack.c.l.b16 %v4838
        %v5815 = vunpack.c.l.b16 %v4839
        %v5816 = vunpack.c.l.b16 %v4840
        %v5817 = vunpack.c.l.b16 %v4841
        %v5818 = vunpack.c.l.b16 %v4842
        %v5819 = vpack.c.b16 %v5772, %v5771
        %v5820 = vpack.c.b16 %v5774, %v5773
        %v5821 = vpack.c.b16 %v5776, %v5775
        %v5822 = vpack.c.b16 %v5778, %v5777
        %v5823 = vpack.c.b16 %v5780, %v5779
        %v5824 = vpack.c.b16 %v5782, %v5781
        %v5825 = vpack.c.b16 %v5784, %v5783
        %v5826 = vpack.c.b16 %v5786, %v5785
        %v5827 = vpack.c.b16 %v5788, %v5787
        %v5828 = vpack.c.b16 %v5790, %v5789
        %v5829 = vpack.c.b16 %v5792, %v5791
        %v5830 = vpack.c.b16 %v5794, %v5793
        %v5831 = vpack.c.b16 %v5796, %v5795
        %v5832 = vpack.c.b16 %v5798, %v5797
        %v5833 = vpack.c.b16 %v5800, %v5799
        %v5834 = vpack.c.b16 %v5802, %v5801
        %v5835 = vpack.c.b16 %v5804, %v5803
        %v5836 = vpack.c.b16 %v5806, %v5805
        %v5837 = vpack.c.b16 %v5808, %v5807
        %v5838 = vpack.c.b16 %v5810, %v5809
        %v5839 = vpack.c.b16 %v5812, %v5811
        %v5840 = vpack.c.b16 %v5814, %v5813
        %v5841 = vpack.c.b16 %v5816, %v5815
        %v5842 = vpack.c.b16 %v5818, %v5817
        %5867 = vmatprep.subr.bf16.mxu0 0
        %5868 = vmatpush1.bf16.msra.mxu0 %v5826
        %5869 = vmatprep.subr.bf16.mxu0 0
        %5870 = vmatpush1.bf16.msra.mxu0 %v5825
        %5871 = vmatprep.subr.bf16.mxu0 0
        %5872 = vmatpush1.bf16.msra.mxu0 %v5824
        %5873 = vmatprep.subr.bf16.mxu0 0
        %5874 = vmatpush1.bf16.msra.mxu0 %v5823
        %5875 = vmatprep.subr.bf16.mxu0 0
        %5876 = vmatpush1.bf16.msra.mxu0 %v5822
        %5877 = vmatprep.subr.bf16.mxu0 0
        %5878 = vmatpush1.bf16.msra.mxu0 %v5821
        %5879 = vmatprep.subr.bf16.mxu0 0
        %5880 = vmatpush1.bf16.msra.mxu0 %v5820
        %5881 = vmatprep.subr.bf16.mxu0 0
        %5882 = vmatpush1.bf16.msra.mxu0 %v5819
        %5883 = vmatprep.subr.bf16.mxu0 0
        %5884 = vmatpush2.bf16.msra.mxu0 %v5834
        %5885 = vmatprep.subr.bf16.mxu0 0
        %5886 = vmatpush2.bf16.msra.mxu0 %v5833
        %5887 = vmatprep.subr.bf16.mxu0 0
        %5888 = vmatpush2.bf16.msra.mxu0 %v5832
        %5889 = vmatprep.subr.bf16.mxu0 0
        %5890 = vmatpush2.bf16.msra.mxu0 %v5831
        %5891 = vmatprep.subr.bf16.mxu0 0
        %5892 = vmatpush2.bf16.msra.mxu0 %v5830
        %5893 = vmatprep.subr.bf16.mxu0 0
        %5894 = vmatpush2.bf16.msra.mxu0 %v5829
        %5895 = vmatprep.subr.bf16.mxu0 0
        %5896 = vmatpush2.bf16.msra.mxu0 %v5828
        %5897 = vmatprep.subr.bf16.mxu0 0
        %5898 = vmatpush2.bf16.msra.mxu0 %v5827
        %5899 = vmatprep.mubr.bf16.mxu0 %v4741
        %5900 = vmatmul.mubr.bf16.gmra.mxu0 %v4417
        %v5901 = vpop.f32.mrf.mxu0
        %v5902 = vadd.f32 %v5549, %v5901
        %v5903 = vpop.f32.mrf.mxu0
        %v5904 = vpop.f32.mrf.mxu0
        %v5905 = vadd.f32 %v5552, %v5904
        %v5906 = vpop.f32.mrf.mxu0
        %5907 = vmatprep.mubr.bf16.mxu0 %v4742
        %5908 = vmatmul.mubr.bf16.gmra.mxu0 %v4418
        %v5909 = vpop.f32.mrf.mxu0
        %v5910 = vpop.f32.mrf.mxu0
        %v5911 = vpop.f32.mrf.mxu0
        %v5912 = vadd.f32 %v5559, %v5911
        %v5913 = vpop.f32.mrf.mxu0
        %5914 = vmatprep.mubr.bf16.mxu0 %v4743
        %5915 = vmatmul.mubr.bf16.gmra.mxu0 %v4419
        %v5916 = vpop.f32.mrf.mxu0
        %v5917 = vadd.f32 %v5564, %v5916
        %v5918 = vpop.f32.mrf.mxu0
        %v5919 = vpop.f32.mrf.mxu0
        %v5920 = vpop.f32.mrf.mxu0
        %5921 = vmatprep.mubr.bf16.mxu0 %v4744
        %5922 = vmatmul.mubr.bf16.gmra.mxu0 %v4420
        %v5923 = vpop.f32.mrf.mxu0
        %v5924 = vadd.f32 %v5571, %v5923
        %v5925 = vpop.f32.mrf.mxu0
        %v5926 = vpop.f32.mrf.mxu0
        %v5927 = vadd.f32 %v5574, %v5926
        %v5928 = vpop.f32.mrf.mxu0
        %5929 = vmatprep.mubr.bf16.mxu0 %v4745
        %5930 = vmatmul.mubr.bf16.gmra.mxu0 %v4421
        %v5931 = vpop.f32.mrf.mxu0
        %v5932 = vpop.f32.mrf.mxu0
        %v5933 = vpop.f32.mrf.mxu0
        %v5934 = vadd.f32 %v5581, %v5933
        %v5935 = vpop.f32.mrf.mxu0
        %5936 = vmatprep.mubr.bf16.mxu0 %v4746
        %5937 = vmatmul.mubr.bf16.gmra.mxu0 %v4422
        %v5938 = vpop.f32.mrf.mxu0
        %v5939 = vadd.f32 %v5586, %v5938
        %v5940 = vpop.f32.mrf.mxu0
        %v5941 = vpop.f32.mrf.mxu0
        %v5942 = vpop.f32.mrf.mxu0
        %5943 = vmatprep.mubr.bf16.mxu0 %v4747
        %5944 = vmatmul.mubr.bf16.gmra.mxu0 %v4423
        %v5945 = vpop.f32.mrf.mxu0
        %v5946 = vadd.f32 %v5593, %v5945
        %v5947 = vpop.f32.mrf.mxu0
        %v5948 = vpop.f32.mrf.mxu0
        %v5949 = vadd.f32 %v5596, %v5948
        %v5950 = vpop.f32.mrf.mxu0
        %5951 = vmatprep.mubr.bf16.mxu0 %v4748
        %5952 = vmatmul.mubr.bf16.gmra.mxu0 %v4424
        %v5953 = vpop.f32.mrf.mxu0
        %v5954 = vpop.f32.mrf.mxu0
        %v5955 = vpop.f32.mrf.mxu0
        %v5956 = vadd.f32 %v5603, %v5955
        %v5957 = vpop.f32.mrf.mxu0
        %5958 = vmatprep.mubr.bf16.mxu0 %v4749
        %5959 = vmatmul.mubr.bf16.gmra.mxu0 %v4425
        %v5960 = vpop.f32.mrf.mxu0
        %v5961 = vadd.f32 %v5608, %v5960
        %v5962 = vpop.f32.mrf.mxu0
        %v5963 = vpop.f32.mrf.mxu0
        %v5964 = vpop.f32.mrf.mxu0
        %5965 = vmatprep.mubr.bf16.mxu0 %v4750
        %5966 = vmatmul.mubr.bf16.gmra.mxu0 %v4426
        %v5967 = vpop.f32.mrf.mxu0
        %v5968 = vadd.f32 %v5615, %v5967
        %v5969 = vpop.f32.mrf.mxu0
        %v5970 = vpop.f32.mrf.mxu0
        %v5971 = vadd.f32 %v5618, %v5970
        %v5972 = vpop.f32.mrf.mxu0
        %5973 = vmatprep.mubr.bf16.mxu0 %v4751
        %5974 = vmatmul.mubr.bf16.gmra.mxu0 %v4427
        %v5975 = vpop.f32.mrf.mxu0
        %v5976 = vpop.f32.mrf.mxu0
        %v5977 = vpop.f32.mrf.mxu0
        %v5978 = vadd.f32 %v5625, %v5977
        %v5979 = vpop.f32.mrf.mxu0
        %5980 = vmatprep.mubr.bf16.mxu0 %v4752
        %5981 = vmatmul.mubr.bf16.gmra.mxu0 %v4428
        %v5982 = vpop.f32.mrf.mxu0
        %v5983 = vadd.f32 %v5630, %v5982
        %v5984 = vpop.f32.mrf.mxu0
        %v5985 = vpop.f32.mrf.mxu0
        %v5986 = vpop.f32.mrf.mxu0
        %5987 = vmatprep.mubr.bf16.mxu0 %v4753
        %5988 = vmatmul.mubr.bf16.gmra.mxu0 %v4429
        %v5989 = vpop.f32.mrf.mxu0
        %v5990 = vadd.f32 %v5637, %v5989
        %v5991 = vpop.f32.mrf.mxu0
        %v5992 = vpop.f32.mrf.mxu0
        %v5993 = vadd.f32 %v5640, %v5992
        %v5994 = vpop.f32.mrf.mxu0
        %5995 = vmatprep.mubr.bf16.mxu0 %v4754
        %5996 = vmatmul.mubr.bf16.gmra.mxu0 %v4430
        %v5997 = vpop.f32.mrf.mxu0
        %v5998 = vpop.f32.mrf.mxu0
        %v5999 = vpop.f32.mrf.mxu0
        %v6000 = vadd.f32 %v5647, %v5999
        %v6001 = vpop.f32.mrf.mxu0
        %6002 = vmatprep.mubr.bf16.mxu0 %v4755
        %6003 = vmatmul.mubr.bf16.gmra.mxu0 %v4431
        %v6004 = vpop.f32.mrf.mxu0
        %v6005 = vadd.f32 %v5652, %v6004
        %v6006 = vpop.f32.mrf.mxu0
        %v6007 = vpop.f32.mrf.mxu0
        %v6008 = vpop.f32.mrf.mxu0
        %6009 = vmatprep.mubr.bf16.mxu0 %v4756
        %6010 = vmatmul.mubr.bf16.gmra.mxu0 %v4432
        %v6011 = vpop.f32.mrf.mxu0
        %v6012 = vadd.f32 %v5659, %v6011
        %v6013 = vpop.f32.mrf.mxu0
        %v6014 = vpop.f32.mrf.mxu0
        %v6015 = vadd.f32 %v5662, %v6014
        %v6016 = vpop.f32.mrf.mxu0
        %6017 = vmatprep.mubr.bf16.mxu0 %v4757
        %6018 = vmatmul.mubr.bf16.gmra.mxu0 %v4433
        %v6019 = vpop.f32.mrf.mxu0
        %v6020 = vpop.f32.mrf.mxu0
        %v6021 = vpop.f32.mrf.mxu0
        %v6022 = vadd.f32 %v5669, %v6021
        %v6023 = vpop.f32.mrf.mxu0
        %6024 = vmatprep.mubr.bf16.mxu0 %v4758
        %6025 = vmatmul.mubr.bf16.gmra.mxu0 %v4434
        %v6026 = vpop.f32.mrf.mxu0
        %v6027 = vadd.f32 %v5674, %v6026
        %v6028 = vpop.f32.mrf.mxu0
        %v6029 = vpop.f32.mrf.mxu0
        %v6030 = vpop.f32.mrf.mxu0
        %6031 = vmatprep.mubr.bf16.mxu0 %v4759
        %6032 = vmatmul.mubr.bf16.gmra.mxu0 %v4435
        %v6033 = vpop.f32.mrf.mxu0
        %v6034 = vadd.f32 %v5681, %v6033
        %v6035 = vpop.f32.mrf.mxu0
        %v6036 = vpop.f32.mrf.mxu0
        %v6037 = vadd.f32 %v5684, %v6036
        %v6038 = vpop.f32.mrf.mxu0
        %6039 = vmatprep.mubr.bf16.mxu0 %v4760
        %6040 = vmatmul.mubr.bf16.gmra.mxu0 %v4436
        %v6041 = vpop.f32.mrf.mxu0
        %v6042 = vpop.f32.mrf.mxu0
        %v6043 = vpop.f32.mrf.mxu0
        %v6044 = vadd.f32 %v5691, %v6043
        %v6045 = vpop.f32.mrf.mxu0
        %6046 = vmatprep.mubr.bf16.mxu0 %v4761
        %6047 = vmatmul.mubr.bf16.gmra.mxu0 %v4437
        %v6048 = vpop.f32.mrf.mxu0
        %v6049 = vadd.f32 %v5696, %v6048
        %v6050 = vpop.f32.mrf.mxu0
        %v6051 = vpop.f32.mrf.mxu0
        %v6052 = vpop.f32.mrf.mxu0
        %6053 = vmatprep.mubr.bf16.mxu0 %v4762
        %6054 = vmatmul.mubr.bf16.gmra.mxu0 %v4438
        %v6055 = vpop.f32.mrf.mxu0
        %v6056 = vadd.f32 %v5703, %v6055
        %v6057 = vpop.f32.mrf.mxu0
        %v6058 = vpop.f32.mrf.mxu0
        %v6059 = vadd.f32 %v5706, %v6058
        %v6060 = vpop.f32.mrf.mxu0
        %6061 = vmatprep.mubr.bf16.mxu0 %v4763
        %6062 = vmatmul.mubr.bf16.gmra.mxu0 %v4439
        %v6063 = vpop.f32.mrf.mxu0
        %v6064 = vpop.f32.mrf.mxu0
        %v6065 = vpop.f32.mrf.mxu0
        %v6066 = vadd.f32 %v5713, %v6065
        %v6067 = vpop.f32.mrf.mxu0
        %6068 = vmatprep.mubr.bf16.mxu0 %v4764
        %6069 = vmatmul.mubr.bf16.gmra.mxu0 %v4440
        %v6070 = vpop.f32.mrf.mxu0
        %v6071 = vadd.f32 %v5718, %v6070
        %v6072 = vpop.f32.mrf.mxu0
        %v6073 = vpop.f32.mrf.mxu0
        %v6074 = vpop.f32.mrf.mxu0
        %6075 = vdwg.mxu0
        %6076 = vmatprep.subr.bf16.mxu0 0
        %6077 = vmatpush1.bf16.msra.mxu0 %v5842
        %6078 = vmatprep.subr.bf16.mxu0 0
        %6079 = vmatpush1.bf16.msra.mxu0 %v5841
        %6080 = vmatprep.subr.bf16.mxu0 0
        %6081 = vmatpush1.bf16.msra.mxu0 %v5840
        %6082 = vmatprep.subr.bf16.mxu0 0
        %6083 = vmatpush1.bf16.msra.mxu0 %v5839
        %6084 = vmatprep.subr.bf16.mxu0 0
        %6085 = vmatpush1.bf16.msra.mxu0 %v5838
        %6086 = vmatprep.subr.bf16.mxu0 0
        %6087 = vmatpush1.bf16.msra.mxu0 %v5837
        %6088 = vmatprep.subr.bf16.mxu0 0
        %6089 = vmatpush1.bf16.msra.mxu0 %v5836
        %6090 = vmatprep.subr.bf16.mxu0 0
        %6091 = vmatpush1.bf16.msra.mxu0 %v5835
        %6092 = vmatprep.subr.bf16.mxu0 0
        %6093 = vmatpush2.bf16.msra.mxu0 0
        %6094 = vmatprep.subr.bf16.mxu0 0
        %6095 = vmatpush2.bf16.msra.mxu0 0
        %6096 = vmatprep.subr.bf16.mxu0 0
        %6097 = vmatpush2.bf16.msra.mxu0 0
        %6098 = vmatprep.subr.bf16.mxu0 0
        %6099 = vmatpush2.bf16.msra.mxu0 0
        %6100 = vmatprep.subr.bf16.mxu0 0
        %6101 = vmatpush2.bf16.msra.mxu0 0
        %6102 = vmatprep.subr.bf16.mxu0 0
        %6103 = vmatpush2.bf16.msra.mxu0 0
        %6104 = vmatprep.subr.bf16.mxu0 0
        %6105 = vmatpush2.bf16.msra.mxu0 0
        %6106 = vmatprep.subr.bf16.mxu0 0
        %6107 = vmatpush2.bf16.msra.mxu0 0
        %6108 = vmatprep.mubr.bf16.mxu0 0
        %6109 = vmatmul.mubr.bf16.gmra.mxu0 %v4606
        %v6110 = vpop.f32.mrf.mxu0
        %v6111 = vadd.f32 %v5902, %v6110
        %v6112 = vpop.f32.mrf.mxu0
        %v6113 = vpop.f32.mrf.mxu0
        %v6114 = vadd.f32 %v5905, %v6113
        %v6115 = vpop.f32.mrf.mxu0
        %6116 = vmatprep.mubr.bf16.mxu0 0
        %6117 = vmatmul.mubr.bf16.gmra.mxu0 %v4607
        %v6118 = vpop.f32.mrf.mxu0
        %v6119 = vpop.f32.mrf.mxu0
        %v6120 = vpop.f32.mrf.mxu0
        %v6121 = vadd.f32 %v5912, %v6120
        %v6122 = vpop.f32.mrf.mxu0
        %6123 = vmatprep.mubr.bf16.mxu0 0
        %6124 = vmatmul.mubr.bf16.gmra.mxu0 %v4608
        %v6125 = vpop.f32.mrf.mxu0
        %v6126 = vadd.f32 %v5917, %v6125
        %v6127 = vpop.f32.mrf.mxu0
        %v6128 = vpop.f32.mrf.mxu0
        %v6129 = vpop.f32.mrf.mxu0
        %6130 = vmatprep.mubr.bf16.mxu0 0
        %6131 = vmatmul.mubr.bf16.gmra.mxu0 %v4609
        %v6132 = vpop.f32.mrf.mxu0
        %v6133 = vadd.f32 %v5924, %v6132
        %v6134 = vpop.f32.mrf.mxu0
        %v6135 = vpop.f32.mrf.mxu0
        %v6136 = vadd.f32 %v5927, %v6135
        %v6137 = vpop.f32.mrf.mxu0
        %6138 = vmatprep.mubr.bf16.mxu0 0
        %6139 = vmatmul.mubr.bf16.gmra.mxu0 %v4610
        %v6140 = vpop.f32.mrf.mxu0
        %v6141 = vpop.f32.mrf.mxu0
        %v6142 = vpop.f32.mrf.mxu0
        %v6143 = vadd.f32 %v5934, %v6142
        %v6144 = vpop.f32.mrf.mxu0
        %6145 = vmatprep.mubr.bf16.mxu0 0
        %6146 = vmatmul.mubr.bf16.gmra.mxu0 %v4611
        %v6147 = vpop.f32.mrf.mxu0
        %v6148 = vadd.f32 %v5939, %v6147
        %v6149 = vpop.f32.mrf.mxu0
        %v6150 = vpop.f32.mrf.mxu0
        %v6151 = vpop.f32.mrf.mxu0
        %6152 = vmatprep.mubr.bf16.mxu0 0
        %6153 = vmatmul.mubr.bf16.gmra.mxu0 %v4612
        %v6154 = vpop.f32.mrf.mxu0
        %v6155 = vadd.f32 %v5946, %v6154
        %v6156 = vpop.f32.mrf.mxu0
        %v6157 = vpop.f32.mrf.mxu0
        %v6158 = vadd.f32 %v5949, %v6157
        %v6159 = vpop.f32.mrf.mxu0
        %6160 = vmatprep.mubr.bf16.mxu0 0
        %6161 = vmatmul.mubr.bf16.gmra.mxu0 %v4613
        %v6162 = vpop.f32.mrf.mxu0
        %v6163 = vpop.f32.mrf.mxu0
        %v6164 = vpop.f32.mrf.mxu0
        %v6165 = vadd.f32 %v5956, %v6164
        %v6166 = vpop.f32.mrf.mxu0
        %6167 = vmatprep.mubr.bf16.mxu0 0
        %6168 = vmatmul.mubr.bf16.gmra.mxu0 %v4614
        %v6169 = vpop.f32.mrf.mxu0
        %v6170 = vadd.f32 %v5961, %v6169
        %v6171 = vpop.f32.mrf.mxu0
        %v6172 = vpop.f32.mrf.mxu0
        %v6173 = vpop.f32.mrf.mxu0
        %6174 = vmatprep.mubr.bf16.mxu0 0
        %6175 = vmatmul.mubr.bf16.gmra.mxu0 %v4615
        %v6176 = vpop.f32.mrf.mxu0
        %v6177 = vadd.f32 %v5968, %v6176
        %v6178 = vpop.f32.mrf.mxu0
        %v6179 = vpop.f32.mrf.mxu0
        %v6180 = vadd.f32 %v5971, %v6179
        %v6181 = vpop.f32.mrf.mxu0
        %6182 = vmatprep.mubr.bf16.mxu0 0
        %6183 = vmatmul.mubr.bf16.gmra.mxu0 %v4616
        %v6184 = vpop.f32.mrf.mxu0
        %v6185 = vpop.f32.mrf.mxu0
        %v6186 = vpop.f32.mrf.mxu0
        %v6187 = vadd.f32 %v5978, %v6186
        %v6188 = vpop.f32.mrf.mxu0
        %6189 = vmatprep.mubr.bf16.mxu0 0
        %6190 = vmatmul.mubr.bf16.gmra.mxu0 %v4617
        %v6191 = vpop.f32.mrf.mxu0
        %v6192 = vadd.f32 %v5983, %v6191
        %v6193 = vpop.f32.mrf.mxu0
        %v6194 = vpop.f32.mrf.mxu0
        %v6195 = vpop.f32.mrf.mxu0
        %6196 = vmatprep.mubr.bf16.mxu0 0
        %6197 = vmatmul.mubr.bf16.gmra.mxu0 %v4618
        %v6198 = vpop.f32.mrf.mxu0
        %v6199 = vadd.f32 %v5990, %v6198
        %v6200 = vpop.f32.mrf.mxu0
        %v6201 = vpop.f32.mrf.mxu0
        %v6202 = vadd.f32 %v5993, %v6201
        %v6203 = vpop.f32.mrf.mxu0
        %6204 = vmatprep.mubr.bf16.mxu0 0
        %6205 = vmatmul.mubr.bf16.gmra.mxu0 %v4619
        %v6206 = vpop.f32.mrf.mxu0
        %v6207 = vpop.f32.mrf.mxu0
        %v6208 = vpop.f32.mrf.mxu0
        %v6209 = vadd.f32 %v6000, %v6208
        %v6210 = vpop.f32.mrf.mxu0
        %6211 = vmatprep.mubr.bf16.mxu0 0
        %6212 = vmatmul.mubr.bf16.gmra.mxu0 %v4620
        %v6213 = vpop.f32.mrf.mxu0
        %v6214 = vadd.f32 %v6005, %v6213
        %v6215 = vpop.f32.mrf.mxu0
        %v6216 = vpop.f32.mrf.mxu0
        %v6217 = vpop.f32.mrf.mxu0
        %6218 = vmatprep.mubr.bf16.mxu0 0
        %6219 = vmatmul.mubr.bf16.gmra.mxu0 %v4621
        %v6220 = vpop.f32.mrf.mxu0
        %v6221 = vadd.f32 %v6012, %v6220
        %v6222 = vpop.f32.mrf.mxu0
        %v6223 = vpop.f32.mrf.mxu0
        %v6224 = vadd.f32 %v6015, %v6223
        %v6225 = vpop.f32.mrf.mxu0
        %6226 = vmatprep.mubr.bf16.mxu0 0
        %6227 = vmatmul.mubr.bf16.gmra.mxu0 %v4622
        %v6228 = vpop.f32.mrf.mxu0
        %v6229 = vpop.f32.mrf.mxu0
        %v6230 = vpop.f32.mrf.mxu0
        %v6231 = vadd.f32 %v6022, %v6230
        %v6232 = vpop.f32.mrf.mxu0
        %6233 = vmatprep.mubr.bf16.mxu0 0
        %6234 = vmatmul.mubr.bf16.gmra.mxu0 %v4623
        %v6235 = vpop.f32.mrf.mxu0
        %v6236 = vadd.f32 %v6027, %v6235
        %v6237 = vpop.f32.mrf.mxu0
        %v6238 = vpop.f32.mrf.mxu0
        %v6239 = vpop.f32.mrf.mxu0
        %6240 = vmatprep.mubr.bf16.mxu0 0
        %6241 = vmatmul.mubr.bf16.gmra.mxu0 %v4624
        %v6242 = vpop.f32.mrf.mxu0
        %v6243 = vadd.f32 %v6034, %v6242
        %v6244 = vpop.f32.mrf.mxu0
        %v6245 = vpop.f32.mrf.mxu0
        %v6246 = vadd.f32 %v6037, %v6245
        %v6247 = vpop.f32.mrf.mxu0
        %6248 = vmatprep.mubr.bf16.mxu0 0
        %6249 = vmatmul.mubr.bf16.gmra.mxu0 %v4625
        %v6250 = vpop.f32.mrf.mxu0
        %v6251 = vpop.f32.mrf.mxu0
        %v6252 = vpop.f32.mrf.mxu0
        %v6253 = vadd.f32 %v6044, %v6252
        %v6254 = vpop.f32.mrf.mxu0
        %6255 = vmatprep.mubr.bf16.mxu0 0
        %6256 = vmatmul.mubr.bf16.gmra.mxu0 %v4626
        %v6257 = vpop.f32.mrf.mxu0
        %v6258 = vadd.f32 %v6049, %v6257
        %v6259 = vpop.f32.mrf.mxu0
        %v6260 = vpop.f32.mrf.mxu0
        %v6261 = vpop.f32.mrf.mxu0
        %6262 = vmatprep.mubr.bf16.mxu0 0
        %6263 = vmatmul.mubr.bf16.gmra.mxu0 %v4627
        %v6264 = vpop.f32.mrf.mxu0
        %v6265 = vadd.f32 %v6056, %v6264
        %v6266 = vpop.f32.mrf.mxu0
        %v6267 = vpop.f32.mrf.mxu0
        %v6268 = vadd.f32 %v6059, %v6267
        %v6269 = vpop.f32.mrf.mxu0
        %6270 = vmatprep.mubr.bf16.mxu0 0
        %6271 = vmatmul.mubr.bf16.gmra.mxu0 %v4628
        %v6272 = vpop.f32.mrf.mxu0
        %v6273 = vpop.f32.mrf.mxu0
        %v6274 = vpop.f32.mrf.mxu0
        %v6275 = vadd.f32 %v6066, %v6274
        %v6276 = vpop.f32.mrf.mxu0
        %6277 = vmatprep.mubr.bf16.mxu0 0
        %6278 = vmatmul.mubr.bf16.gmra.mxu0 %v4629
        %v6279 = vpop.f32.mrf.mxu0
        %v6280 = vadd.f32 %v6071, %v6279
        %v6281 = vpop.f32.mrf.mxu0
        %v6282 = vpop.f32.mrf.mxu0
        %v6283 = vpop.f32.mrf.mxu0
        %6284 = vdwg.mxu0
        %s6285 = scalar_lea.vmem [#allocation8], 384
        %v6286 = vld [vmem:[%s6285] sm:$0xf]
        %v6287 = vld [vmem:[%s6285 + $0x4] sm:$0xf]
        %v6288 = vld [vmem:[%s6285 + $0x8] sm:$0xf]
        %v6289 = vld [vmem:[%s6285 + $0xc] sm:$0xf]
        %v6290 = vld [vmem:[%s6285 + $0x10] sm:$0xf]
        %v6291 = vld [vmem:[%s6285 + $0x14] sm:$0xf]
        %v6292 = vld [vmem:[%s6285 + $0x18] sm:$0xf]
        %v6293 = vld [vmem:[%s6285 + $0x1c] sm:$0xf]
        %v6294 = vld [vmem:[%s6285 + $0x20] sm:$0xf]
        %v6295 = vld [vmem:[%s6285 + $0x24] sm:$0xf]
        %v6296 = vld [vmem:[%s6285 + $0x28] sm:$0xf]
        %v6297 = vld [vmem:[%s6285 + $0x2c] sm:$0xf]
        %v6298 = vld [vmem:[%s6285 + $0x30] sm:$0xf]
        %v6299 = vld [vmem:[%s6285 + $0x34] sm:$0xf]
        %v6300 = vld [vmem:[%s6285 + $0x38] sm:$0xf]
        %v6301 = vld [vmem:[%s6285 + $0x3c] sm:$0xf]
        %v6302 = vld [vmem:[%s6285 + $0x40] sm:$0xf]
        %v6303 = vld [vmem:[%s6285 + $0x44] sm:$0xf]
        %v6304 = vld [vmem:[%s6285 + $0x48] sm:$0xf]
        %v6305 = vld [vmem:[%s6285 + $0x4c] sm:$0xf]
        %v6306 = vld [vmem:[%s6285 + $0x50] sm:$0xf]
        %v6307 = vld [vmem:[%s6285 + $0x54] sm:$0xf]
        %v6308 = vld [vmem:[%s6285 + $0x58] sm:$0xf]
        %v6309 = vld [vmem:[%s6285 + $0x5c] sm:$0xf]
        %v6310 = vld [vmem:[%s6285 + $0x60] sm:$0xf]
        %v6311 = vld [vmem:[%s6285 + $0x64] sm:$0xf]
        %v6312 = vld [vmem:[%s6285 + $0x68] sm:$0xf]
        %v6313 = vld [vmem:[%s6285 + $0x6c] sm:$0xf]
        %v6314 = vld [vmem:[%s6285 + $0x70] sm:$0xf]
        %v6315 = vld [vmem:[%s6285 + $0x74] sm:$0xf]
        %v6316 = vld [vmem:[%s6285 + $0x78] sm:$0xf]
        %v6317 = vld [vmem:[%s6285 + $0x7c] sm:$0xf]
        %v6318 = vld [vmem:[%s6285 + $0x80] sm:$0xf]
        %v6319 = vld [vmem:[%s6285 + $0x84] sm:$0xf]
        %v6320 = vld [vmem:[%s6285 + $0x88] sm:$0xf]
        %v6321 = vld [vmem:[%s6285 + $0x8c] sm:$0xf]
        %v6322 = vld [vmem:[%s6285 + $0x90] sm:$0xf]
        %v6323 = vld [vmem:[%s6285 + $0x94] sm:$0xf]
        %v6324 = vld [vmem:[%s6285 + $0x98] sm:$0xf]
        %v6325 = vld [vmem:[%s6285 + $0x9c] sm:$0xf]
        %v6326 = vld [vmem:[%s6285 + $0xa0] sm:$0xf]
        %v6327 = vld [vmem:[%s6285 + $0xa4] sm:$0xf]
        %v6328 = vld [vmem:[%s6285 + $0xa8] sm:$0xf]
        %v6329 = vld [vmem:[%s6285 + $0xac] sm:$0xf]
        %v6330 = vld [vmem:[%s6285 + $0xb0] sm:$0xf]
        %v6331 = vld [vmem:[%s6285 + $0xb4] sm:$0xf]
        %v6332 = vld [vmem:[%s6285 + $0xb8] sm:$0xf]
        %v6333 = vld [vmem:[%s6285 + $0xbc] sm:$0xf]
        %v6382 = vunpack.c.l.b16 %v6286
        %v6383 = vunpack.c.l.b16 %v6287
        %v6384 = vunpack.c.l.b16 %v6288
        %v6385 = vunpack.c.l.b16 %v6289
        %v6386 = vunpack.c.l.b16 %v6290
        %v6387 = vunpack.c.l.b16 %v6291
        %v6388 = vunpack.c.l.b16 %v6292
        %v6389 = vunpack.c.l.b16 %v6293
        %v6390 = vunpack.c.l.b16 %v6294
        %v6391 = vunpack.c.l.b16 %v6295
        %v6392 = vunpack.c.l.b16 %v6296
        %v6393 = vunpack.c.l.b16 %v6297
        %v6394 = vunpack.c.l.b16 %v6298
        %v6395 = vunpack.c.l.b16 %v6299
        %v6396 = vunpack.c.l.b16 %v6300
        %v6397 = vunpack.c.l.b16 %v6301
        %v6398 = vunpack.c.l.b16 %v6302
        %v6399 = vunpack.c.l.b16 %v6303
        %v6400 = vunpack.c.l.b16 %v6304
        %v6401 = vunpack.c.l.b16 %v6305
        %v6402 = vunpack.c.l.b16 %v6306
        %v6403 = vunpack.c.l.b16 %v6307
        %v6404 = vunpack.c.l.b16 %v6308
        %v6405 = vunpack.c.l.b16 %v6309
        %v6406 = vunpack.c.l.b16 %v6310
        %v6407 = vunpack.c.l.b16 %v6311
        %v6408 = vunpack.c.l.b16 %v6312
        %v6409 = vunpack.c.l.b16 %v6313
        %v6410 = vunpack.c.l.b16 %v6314
        %v6411 = vunpack.c.l.b16 %v6315
        %v6412 = vunpack.c.l.b16 %v6316
        %v6413 = vunpack.c.l.b16 %v6317
        %v6414 = vunpack.c.l.b16 %v6318
        %v6415 = vunpack.c.l.b16 %v6319
        %v6416 = vunpack.c.l.b16 %v6320
        %v6417 = vunpack.c.l.b16 %v6321
        %v6418 = vunpack.c.l.b16 %v6322
        %v6419 = vunpack.c.l.b16 %v6323
        %v6420 = vunpack.c.l.b16 %v6324
        %v6421 = vunpack.c.l.b16 %v6325
        %v6422 = vunpack.c.l.b16 %v6326
        %v6423 = vunpack.c.l.b16 %v6327
        %v6424 = vunpack.c.l.b16 %v6328
        %v6425 = vunpack.c.l.b16 %v6329
        %v6426 = vunpack.c.l.b16 %v6330
        %v6427 = vunpack.c.l.b16 %v6331
        %v6428 = vunpack.c.l.b16 %v6332
        %v6429 = vunpack.c.l.b16 %v6333
        %v6430 = vpack.c.b16 %v6383, %v6382
        %v6431 = vpack.c.b16 %v6385, %v6384
        %v6432 = vpack.c.b16 %v6387, %v6386
        %v6433 = vpack.c.b16 %v6389, %v6388
        %v6434 = vpack.c.b16 %v6391, %v6390
        %v6435 = vpack.c.b16 %v6393, %v6392
        %v6436 = vpack.c.b16 %v6395, %v6394
        %v6437 = vpack.c.b16 %v6397, %v6396
        %v6438 = vpack.c.b16 %v6399, %v6398
        %v6439 = vpack.c.b16 %v6401, %v6400
        %v6440 = vpack.c.b16 %v6403, %v6402
        %v6441 = vpack.c.b16 %v6405, %v6404
        %v6442 = vpack.c.b16 %v6407, %v6406
        %v6443 = vpack.c.b16 %v6409, %v6408
        %v6444 = vpack.c.b16 %v6411, %v6410
        %v6445 = vpack.c.b16 %v6413, %v6412
        %v6446 = vpack.c.b16 %v6415, %v6414
        %v6447 = vpack.c.b16 %v6417, %v6416
        %v6448 = vpack.c.b16 %v6419, %v6418
        %v6449 = vpack.c.b16 %v6421, %v6420
        %v6450 = vpack.c.b16 %v6423, %v6422
        %v6451 = vpack.c.b16 %v6425, %v6424
        %v6452 = vpack.c.b16 %v6427, %v6426
        %v6453 = vpack.c.b16 %v6429, %v6428
        %6478 = vmatprep.subr.bf16.mxu0 0
        %6479 = vmatpush1.bf16.msra.mxu0 %v6437
        %6480 = vmatprep.subr.bf16.mxu0 0
        %6481 = vmatpush1.bf16.msra.mxu0 %v6436
        %6482 = vmatprep.subr.bf16.mxu0 0
        %6483 = vmatpush1.bf16.msra.mxu0 %v6435
        %6484 = vmatprep.subr.bf16.mxu0 0
        %6485 = vmatpush1.bf16.msra.mxu0 %v6434
        %6486 = vmatprep.subr.bf16.mxu0 0
        %6487 = vmatpush1.bf16.msra.mxu0 %v6433
        %6488 = vmatprep.subr.bf16.mxu0 0
        %6489 = vmatpush1.bf16.msra.mxu0 %v6432
        %6490 = vmatprep.subr.bf16.mxu0 0
        %6491 = vmatpush1.bf16.msra.mxu0 %v6431
        %6492 = vmatprep.subr.bf16.mxu0 0
        %6493 = vmatpush1.bf16.msra.mxu0 %v6430
        %6494 = vmatprep.subr.bf16.mxu0 0
        %6495 = vmatpush2.bf16.msra.mxu0 %v6445
        %6496 = vmatprep.subr.bf16.mxu0 0
        %6497 = vmatpush2.bf16.msra.mxu0 %v6444
        %6498 = vmatprep.subr.bf16.mxu0 0
        %6499 = vmatpush2.bf16.msra.mxu0 %v6443
        %6500 = vmatprep.subr.bf16.mxu0 0
        %6501 = vmatpush2.bf16.msra.mxu0 %v6442
        %6502 = vmatprep.subr.bf16.mxu0 0
        %6503 = vmatpush2.bf16.msra.mxu0 %v6441
        %6504 = vmatprep.subr.bf16.mxu0 0
        %6505 = vmatpush2.bf16.msra.mxu0 %v6440
        %6506 = vmatprep.subr.bf16.mxu0 0
        %6507 = vmatpush2.bf16.msra.mxu0 %v6439
        %6508 = vmatprep.subr.bf16.mxu0 0
        %6509 = vmatpush2.bf16.msra.mxu0 %v6438
        %6510 = vmatprep.mubr.bf16.mxu0 %v4744
        %6511 = vmatmul.mubr.bf16.gmra.mxu0 %v4420
        %v6512 = vpop.f32.mrf.mxu0
        %v6513 = vadd.f32 0.0, %v6512
        %v6514 = vpop.f32.mrf.mxu0
        %v6515 = vpop.f32.mrf.mxu0
        %v6516 = vadd.f32 0.0, %v6515
        %v6517 = vpop.f32.mrf.mxu0
        %6518 = vmatprep.mubr.bf16.mxu0 %v4745
        %6519 = vmatmul.mubr.bf16.gmra.mxu0 %v4421
        %v6520 = vpop.f32.mrf.mxu0
        %v6521 = vpop.f32.mrf.mxu0
        %v6522 = vpop.f32.mrf.mxu0
        %v6523 = vadd.f32 0.0, %v6522
        %v6524 = vpop.f32.mrf.mxu0
        %6525 = vmatprep.mubr.bf16.mxu0 %v4746
        %6526 = vmatmul.mubr.bf16.gmra.mxu0 %v4422
        %v6527 = vpop.f32.mrf.mxu0
        %v6528 = vadd.f32 0.0, %v6527
        %v6529 = vpop.f32.mrf.mxu0
        %v6530 = vpop.f32.mrf.mxu0
        %v6531 = vpop.f32.mrf.mxu0
        %6532 = vmatprep.mubr.bf16.mxu0 %v4747
        %6533 = vmatmul.mubr.bf16.gmra.mxu0 %v4423
        %v6534 = vpop.f32.mrf.mxu0
        %v6535 = vadd.f32 0.0, %v6534
        %v6536 = vpop.f32.mrf.mxu0
        %v6537 = vpop.f32.mrf.mxu0
        %v6538 = vadd.f32 0.0, %v6537
        %v6539 = vpop.f32.mrf.mxu0
        %6540 = vmatprep.mubr.bf16.mxu0 %v4748
        %6541 = vmatmul.mubr.bf16.gmra.mxu0 %v4424
        %v6542 = vpop.f32.mrf.mxu0
        %v6543 = vpop.f32.mrf.mxu0
        %v6544 = vpop.f32.mrf.mxu0
        %v6545 = vadd.f32 0.0, %v6544
        %v6546 = vpop.f32.mrf.mxu0
        %6547 = vmatprep.mubr.bf16.mxu0 %v4749
        %6548 = vmatmul.mubr.bf16.gmra.mxu0 %v4425
        %v6549 = vpop.f32.mrf.mxu0
        %v6550 = vadd.f32 0.0, %v6549
        %v6551 = vpop.f32.mrf.mxu0
        %v6552 = vpop.f32.mrf.mxu0
        %v6553 = vpop.f32.mrf.mxu0
        %6554 = vmatprep.mubr.bf16.mxu0 %v4750
        %6555 = vmatmul.mubr.bf16.gmra.mxu0 %v4426
        %v6556 = vpop.f32.mrf.mxu0
        %v6557 = vadd.f32 0.0, %v6556
        %v6558 = vpop.f32.mrf.mxu0
        %v6559 = vpop.f32.mrf.mxu0
        %v6560 = vadd.f32 0.0, %v6559
        %v6561 = vpop.f32.mrf.mxu0
        %6562 = vmatprep.mubr.bf16.mxu0 %v4751
        %6563 = vmatmul.mubr.bf16.gmra.mxu0 %v4427
        %v6564 = vpop.f32.mrf.mxu0
        %v6565 = vpop.f32.mrf.mxu0
        %v6566 = vpop.f32.mrf.mxu0
        %v6567 = vadd.f32 0.0, %v6566
        %v6568 = vpop.f32.mrf.mxu0
        %6569 = vmatprep.mubr.bf16.mxu0 %v4752
        %6570 = vmatmul.mubr.bf16.gmra.mxu0 %v4428
        %v6571 = vpop.f32.mrf.mxu0
        %v6572 = vadd.f32 0.0, %v6571
        %v6573 = vpop.f32.mrf.mxu0
        %v6574 = vpop.f32.mrf.mxu0
        %v6575 = vpop.f32.mrf.mxu0
        %6576 = vmatprep.mubr.bf16.mxu0 %v4753
        %6577 = vmatmul.mubr.bf16.gmra.mxu0 %v4429
        %v6578 = vpop.f32.mrf.mxu0
        %v6579 = vadd.f32 0.0, %v6578
        %v6580 = vpop.f32.mrf.mxu0
        %v6581 = vpop.f32.mrf.mxu0
        %v6582 = vadd.f32 0.0, %v6581
        %v6583 = vpop.f32.mrf.mxu0
        %6584 = vmatprep.mubr.bf16.mxu0 %v4754
        %6585 = vmatmul.mubr.bf16.gmra.mxu0 %v4430
        %v6586 = vpop.f32.mrf.mxu0
        %v6587 = vpop.f32.mrf.mxu0
        %v6588 = vpop.f32.mrf.mxu0
        %v6589 = vadd.f32 0.0, %v6588
        %v6590 = vpop.f32.mrf.mxu0
        %6591 = vmatprep.mubr.bf16.mxu0 %v4755
        %6592 = vmatmul.mubr.bf16.gmra.mxu0 %v4431
        %v6593 = vpop.f32.mrf.mxu0
        %v6594 = vadd.f32 0.0, %v6593
        %v6595 = vpop.f32.mrf.mxu0
        %v6596 = vpop.f32.mrf.mxu0
        %v6597 = vpop.f32.mrf.mxu0
        %6598 = vmatprep.mubr.bf16.mxu0 %v4756
        %6599 = vmatmul.mubr.bf16.gmra.mxu0 %v4432
        %v6600 = vpop.f32.mrf.mxu0
        %v6601 = vadd.f32 0.0, %v6600
        %v6602 = vpop.f32.mrf.mxu0
        %v6603 = vpop.f32.mrf.mxu0
        %v6604 = vadd.f32 0.0, %v6603
        %v6605 = vpop.f32.mrf.mxu0
        %6606 = vmatprep.mubr.bf16.mxu0 %v4757
        %6607 = vmatmul.mubr.bf16.gmra.mxu0 %v4433
        %v6608 = vpop.f32.mrf.mxu0
        %v6609 = vpop.f32.mrf.mxu0
        %v6610 = vpop.f32.mrf.mxu0
        %v6611 = vadd.f32 0.0, %v6610
        %v6612 = vpop.f32.mrf.mxu0
        %6613 = vmatprep.mubr.bf16.mxu0 %v4758
        %6614 = vmatmul.mubr.bf16.gmra.mxu0 %v4434
        %v6615 = vpop.f32.mrf.mxu0
        %v6616 = vadd.f32 0.0, %v6615
        %v6617 = vpop.f32.mrf.mxu0
        %v6618 = vpop.f32.mrf.mxu0
        %v6619 = vpop.f32.mrf.mxu0
        %6620 = vmatprep.mubr.bf16.mxu0 %v4759
        %6621 = vmatmul.mubr.bf16.gmra.mxu0 %v4435
        %v6622 = vpop.f32.mrf.mxu0
        %v6623 = vadd.f32 0.0, %v6622
        %v6624 = vpop.f32.mrf.mxu0
        %v6625 = vpop.f32.mrf.mxu0
        %v6626 = vadd.f32 0.0, %v6625
        %v6627 = vpop.f32.mrf.mxu0
        %6628 = vmatprep.mubr.bf16.mxu0 %v4760
        %6629 = vmatmul.mubr.bf16.gmra.mxu0 %v4436
        %v6630 = vpop.f32.mrf.mxu0
        %v6631 = vpop.f32.mrf.mxu0
        %v6632 = vpop.f32.mrf.mxu0
        %v6633 = vadd.f32 0.0, %v6632
        %v6634 = vpop.f32.mrf.mxu0
        %6635 = vmatprep.mubr.bf16.mxu0 %v4761
        %6636 = vmatmul.mubr.bf16.gmra.mxu0 %v4437
        %v6637 = vpop.f32.mrf.mxu0
        %v6638 = vadd.f32 0.0, %v6637
        %v6639 = vpop.f32.mrf.mxu0
        %v6640 = vpop.f32.mrf.mxu0
        %v6641 = vpop.f32.mrf.mxu0
        %6642 = vmatprep.mubr.bf16.mxu0 %v4762
        %6643 = vmatmul.mubr.bf16.gmra.mxu0 %v4438
        %v6644 = vpop.f32.mrf.mxu0
        %v6645 = vadd.f32 0.0, %v6644
        %v6646 = vpop.f32.mrf.mxu0
        %v6647 = vpop.f32.mrf.mxu0
        %v6648 = vadd.f32 0.0, %v6647
        %v6649 = vpop.f32.mrf.mxu0
        %6650 = vmatprep.mubr.bf16.mxu0 %v4763
        %6651 = vmatmul.mubr.bf16.gmra.mxu0 %v4439
        %v6652 = vpop.f32.mrf.mxu0
        %v6653 = vpop.f32.mrf.mxu0
        %v6654 = vpop.f32.mrf.mxu0
        %v6655 = vadd.f32 0.0, %v6654
        %v6656 = vpop.f32.mrf.mxu0
        %6657 = vmatprep.mubr.bf16.mxu0 %v4764
        %6658 = vmatmul.mubr.bf16.gmra.mxu0 %v4440
        %v6659 = vpop.f32.mrf.mxu0
        %v6660 = vadd.f32 0.0, %v6659
        %v6661 = vpop.f32.mrf.mxu0
        %v6662 = vpop.f32.mrf.mxu0
        %v6663 = vpop.f32.mrf.mxu0
        %6664 = vmatprep.mubr.bf16.mxu0 %v4765
        %6665 = vmatmul.mubr.bf16.gmra.mxu0 %v4441
        %v6666 = vpop.f32.mrf.mxu0
        %v6667 = vadd.f32 0.0, %v6666
        %v6668 = vpop.f32.mrf.mxu0
        %v6669 = vpop.f32.mrf.mxu0
        %v6670 = vadd.f32 0.0, %v6669
        %v6671 = vpop.f32.mrf.mxu0
        %6672 = vmatprep.mubr.bf16.mxu0 %v4766
        %6673 = vmatmul.mubr.bf16.gmra.mxu0 %v4442
        %v6674 = vpop.f32.mrf.mxu0
        %v6675 = vpop.f32.mrf.mxu0
        %v6676 = vpop.f32.mrf.mxu0
        %v6677 = vadd.f32 0.0, %v6676
        %v6678 = vpop.f32.mrf.mxu0
        %6679 = vmatprep.mubr.bf16.mxu0 %v4767
        %6680 = vmatmul.mubr.bf16.gmra.mxu0 %v4443
        %v6681 = vpop.f32.mrf.mxu0
        %v6682 = vadd.f32 0.0, %v6681
        %v6683 = vpop.f32.mrf.mxu0
        %v6684 = vpop.f32.mrf.mxu0
        %v6685 = vpop.f32.mrf.mxu0
        %6686 = vdwg.mxu0
        %6687 = vmatprep.subr.bf16.mxu0 0
        %6688 = vmatpush1.bf16.msra.mxu0 %v6453
        %6689 = vmatprep.subr.bf16.mxu0 0
        %6690 = vmatpush1.bf16.msra.mxu0 %v6452
        %6691 = vmatprep.subr.bf16.mxu0 0
        %6692 = vmatpush1.bf16.msra.mxu0 %v6451
        %6693 = vmatprep.subr.bf16.mxu0 0
        %6694 = vmatpush1.bf16.msra.mxu0 %v6450
        %6695 = vmatprep.subr.bf16.mxu0 0
        %6696 = vmatpush1.bf16.msra.mxu0 %v6449
        %6697 = vmatprep.subr.bf16.mxu0 0
        %6698 = vmatpush1.bf16.msra.mxu0 %v6448
        %6699 = vmatprep.subr.bf16.mxu0 0
        %6700 = vmatpush1.bf16.msra.mxu0 %v6447
        %6701 = vmatprep.subr.bf16.mxu0 0
        %6702 = vmatpush1.bf16.msra.mxu0 %v6446
        %6703 = vmatprep.subr.bf16.mxu0 0
        %6704 = vmatpush2.bf16.msra.mxu0 0
        %6705 = vmatprep.subr.bf16.mxu0 0
        %6706 = vmatpush2.bf16.msra.mxu0 0
        %6707 = vmatprep.subr.bf16.mxu0 0
        %6708 = vmatpush2.bf16.msra.mxu0 0
        %6709 = vmatprep.subr.bf16.mxu0 0
        %6710 = vmatpush2.bf16.msra.mxu0 0
        %6711 = vmatprep.subr.bf16.mxu0 0
        %6712 = vmatpush2.bf16.msra.mxu0 0
        %6713 = vmatprep.subr.bf16.mxu0 0
        %6714 = vmatpush2.bf16.msra.mxu0 0
        %6715 = vmatprep.subr.bf16.mxu0 0
        %6716 = vmatpush2.bf16.msra.mxu0 0
        %6717 = vmatprep.subr.bf16.mxu0 0
        %6718 = vmatpush2.bf16.msra.mxu0 0
        %6719 = vmatprep.mubr.bf16.mxu0 0
        %6720 = vmatmul.mubr.bf16.gmra.mxu0 %v4609
        %v6721 = vpop.f32.mrf.mxu0
        %v6722 = vadd.f32 %v6513, %v6721
        %v6723 = vpop.f32.mrf.mxu0
        %v6724 = vpop.f32.mrf.mxu0
        %v6725 = vadd.f32 %v6516, %v6724
        %v6726 = vpop.f32.mrf.mxu0
        %6727 = vmatprep.mubr.bf16.mxu0 0
        %6728 = vmatmul.mubr.bf16.gmra.mxu0 %v4610
        %v6729 = vpop.f32.mrf.mxu0
        %v6730 = vpop.f32.mrf.mxu0
        %v6731 = vpop.f32.mrf.mxu0
        %v6732 = vadd.f32 %v6523, %v6731
        %v6733 = vpop.f32.mrf.mxu0
        %6734 = vmatprep.mubr.bf16.mxu0 0
        %6735 = vmatmul.mubr.bf16.gmra.mxu0 %v4611
        %v6736 = vpop.f32.mrf.mxu0
        %v6737 = vadd.f32 %v6528, %v6736
        %v6738 = vpop.f32.mrf.mxu0
        %v6739 = vpop.f32.mrf.mxu0
        %v6740 = vpop.f32.mrf.mxu0
        %6741 = vmatprep.mubr.bf16.mxu0 0
        %6742 = vmatmul.mubr.bf16.gmra.mxu0 %v4612
        %v6743 = vpop.f32.mrf.mxu0
        %v6744 = vadd.f32 %v6535, %v6743
        %v6745 = vpop.f32.mrf.mxu0
        %v6746 = vpop.f32.mrf.mxu0
        %v6747 = vadd.f32 %v6538, %v6746
        %v6748 = vpop.f32.mrf.mxu0
        %6749 = vmatprep.mubr.bf16.mxu0 0
        %6750 = vmatmul.mubr.bf16.gmra.mxu0 %v4613
        %v6751 = vpop.f32.mrf.mxu0
        %v6752 = vpop.f32.mrf.mxu0
        %v6753 = vpop.f32.mrf.mxu0
        %v6754 = vadd.f32 %v6545, %v6753
        %v6755 = vpop.f32.mrf.mxu0
        %6756 = vmatprep.mubr.bf16.mxu0 0
        %6757 = vmatmul.mubr.bf16.gmra.mxu0 %v4614
        %v6758 = vpop.f32.mrf.mxu0
        %v6759 = vadd.f32 %v6550, %v6758
        %v6760 = vpop.f32.mrf.mxu0
        %v6761 = vpop.f32.mrf.mxu0
        %v6762 = vpop.f32.mrf.mxu0
        %6763 = vmatprep.mubr.bf16.mxu0 0
        %6764 = vmatmul.mubr.bf16.gmra.mxu0 %v4615
        %v6765 = vpop.f32.mrf.mxu0
        %v6766 = vadd.f32 %v6557, %v6765
        %v6767 = vpop.f32.mrf.mxu0
        %v6768 = vpop.f32.mrf.mxu0
        %v6769 = vadd.f32 %v6560, %v6768
        %v6770 = vpop.f32.mrf.mxu0
        %6771 = vmatprep.mubr.bf16.mxu0 0
        %6772 = vmatmul.mubr.bf16.gmra.mxu0 %v4616
        %v6773 = vpop.f32.mrf.mxu0
        %v6774 = vpop.f32.mrf.mxu0
        %v6775 = vpop.f32.mrf.mxu0
        %v6776 = vadd.f32 %v6567, %v6775
        %v6777 = vpop.f32.mrf.mxu0
        %6778 = vmatprep.mubr.bf16.mxu0 0
        %6779 = vmatmul.mubr.bf16.gmra.mxu0 %v4617
        %v6780 = vpop.f32.mrf.mxu0
        %v6781 = vadd.f32 %v6572, %v6780
        %v6782 = vpop.f32.mrf.mxu0
        %v6783 = vpop.f32.mrf.mxu0
        %v6784 = vpop.f32.mrf.mxu0
        %6785 = vmatprep.mubr.bf16.mxu0 0
        %6786 = vmatmul.mubr.bf16.gmra.mxu0 %v4618
        %v6787 = vpop.f32.mrf.mxu0
        %v6788 = vadd.f32 %v6579, %v6787
        %v6789 = vpop.f32.mrf.mxu0
        %v6790 = vpop.f32.mrf.mxu0
        %v6791 = vadd.f32 %v6582, %v6790
        %v6792 = vpop.f32.mrf.mxu0
        %6793 = vmatprep.mubr.bf16.mxu0 0
        %6794 = vmatmul.mubr.bf16.gmra.mxu0 %v4619
        %v6795 = vpop.f32.mrf.mxu0
        %v6796 = vpop.f32.mrf.mxu0
        %v6797 = vpop.f32.mrf.mxu0
        %v6798 = vadd.f32 %v6589, %v6797
        %v6799 = vpop.f32.mrf.mxu0
        %6800 = vmatprep.mubr.bf16.mxu0 0
        %6801 = vmatmul.mubr.bf16.gmra.mxu0 %v4620
        %v6802 = vpop.f32.mrf.mxu0
        %v6803 = vadd.f32 %v6594, %v6802
        %v6804 = vpop.f32.mrf.mxu0
        %v6805 = vpop.f32.mrf.mxu0
        %v6806 = vpop.f32.mrf.mxu0
        %6807 = vmatprep.mubr.bf16.mxu0 0
        %6808 = vmatmul.mubr.bf16.gmra.mxu0 %v4621
        %v6809 = vpop.f32.mrf.mxu0
        %v6810 = vadd.f32 %v6601, %v6809
        %v6811 = vpop.f32.mrf.mxu0
        %v6812 = vpop.f32.mrf.mxu0
        %v6813 = vadd.f32 %v6604, %v6812
        %v6814 = vpop.f32.mrf.mxu0
        %6815 = vmatprep.mubr.bf16.mxu0 0
        %6816 = vmatmul.mubr.bf16.gmra.mxu0 %v4622
        %v6817 = vpop.f32.mrf.mxu0
        %v6818 = vpop.f32.mrf.mxu0
        %v6819 = vpop.f32.mrf.mxu0
        %v6820 = vadd.f32 %v6611, %v6819
        %v6821 = vpop.f32.mrf.mxu0
        %6822 = vmatprep.mubr.bf16.mxu0 0
        %6823 = vmatmul.mubr.bf16.gmra.mxu0 %v4623
        %v6824 = vpop.f32.mrf.mxu0
        %v6825 = vadd.f32 %v6616, %v6824
        %v6826 = vpop.f32.mrf.mxu0
        %v6827 = vpop.f32.mrf.mxu0
        %v6828 = vpop.f32.mrf.mxu0
        %6829 = vmatprep.mubr.bf16.mxu0 0
        %6830 = vmatmul.mubr.bf16.gmra.mxu0 %v4624
        %v6831 = vpop.f32.mrf.mxu0
        %v6832 = vadd.f32 %v6623, %v6831
        %v6833 = vpop.f32.mrf.mxu0
        %v6834 = vpop.f32.mrf.mxu0
        %v6835 = vadd.f32 %v6626, %v6834
        %v6836 = vpop.f32.mrf.mxu0
        %6837 = vmatprep.mubr.bf16.mxu0 0
        %6838 = vmatmul.mubr.bf16.gmra.mxu0 %v4625
        %v6839 = vpop.f32.mrf.mxu0
        %v6840 = vpop.f32.mrf.mxu0
        %v6841 = vpop.f32.mrf.mxu0
        %v6842 = vadd.f32 %v6633, %v6841
        %v6843 = vpop.f32.mrf.mxu0
        %6844 = vmatprep.mubr.bf16.mxu0 0
        %6845 = vmatmul.mubr.bf16.gmra.mxu0 %v4626
        %v6846 = vpop.f32.mrf.mxu0
        %v6847 = vadd.f32 %v6638, %v6846
        %v6848 = vpop.f32.mrf.mxu0
        %v6849 = vpop.f32.mrf.mxu0
        %v6850 = vpop.f32.mrf.mxu0
        %6851 = vmatprep.mubr.bf16.mxu0 0
        %6852 = vmatmul.mubr.bf16.gmra.mxu0 %v4627
        %v6853 = vpop.f32.mrf.mxu0
        %v6854 = vadd.f32 %v6645, %v6853
        %v6855 = vpop.f32.mrf.mxu0
        %v6856 = vpop.f32.mrf.mxu0
        %v6857 = vadd.f32 %v6648, %v6856
        %v6858 = vpop.f32.mrf.mxu0
        %6859 = vmatprep.mubr.bf16.mxu0 0
        %6860 = vmatmul.mubr.bf16.gmra.mxu0 %v4628
        %v6861 = vpop.f32.mrf.mxu0
        %v6862 = vpop.f32.mrf.mxu0
        %v6863 = vpop.f32.mrf.mxu0
        %v6864 = vadd.f32 %v6655, %v6863
        %v6865 = vpop.f32.mrf.mxu0
        %6866 = vmatprep.mubr.bf16.mxu0 0
        %6867 = vmatmul.mubr.bf16.gmra.mxu0 %v4629
        %v6868 = vpop.f32.mrf.mxu0
        %v6869 = vadd.f32 %v6660, %v6868
        %v6870 = vpop.f32.mrf.mxu0
        %v6871 = vpop.f32.mrf.mxu0
        %v6872 = vpop.f32.mrf.mxu0
        %6873 = vmatprep.mubr.bf16.mxu0 0
        %6874 = vmatmul.mubr.bf16.gmra.mxu0 %v4630
        %v6875 = vpop.f32.mrf.mxu0
        %v6876 = vadd.f32 %v6667, %v6875
        %v6877 = vpop.f32.mrf.mxu0
        %v6878 = vpop.f32.mrf.mxu0
        %v6879 = vadd.f32 %v6670, %v6878
        %v6880 = vpop.f32.mrf.mxu0
        %6881 = vmatprep.mubr.bf16.mxu0 0
        %6882 = vmatmul.mubr.bf16.gmra.mxu0 %v4631
        %v6883 = vpop.f32.mrf.mxu0
        %v6884 = vpop.f32.mrf.mxu0
        %v6885 = vpop.f32.mrf.mxu0
        %v6886 = vadd.f32 %v6677, %v6885
        %v6887 = vpop.f32.mrf.mxu0
        %6888 = vmatprep.mubr.bf16.mxu0 0
        %6889 = vmatmul.mubr.bf16.gmra.mxu0 %v4632
        %v6890 = vpop.f32.mrf.mxu0
        %v6891 = vadd.f32 %v6682, %v6890
        %v6892 = vpop.f32.mrf.mxu0
        %v6893 = vpop.f32.mrf.mxu0
        %v6894 = vpop.f32.mrf.mxu0
        %6895 = vdwg.mxu0
        %v6896 = vadd.f32 %v6111, %v6722
        %v6897 = vadd.f32 %v6114, %v6725
        %v6898 = vadd.f32 %v6121, %v6732
        %v6899 = vadd.f32 %v6126, %v6737
        %v6900 = vadd.f32 %v6133, %v6744
        %v6901 = vadd.f32 %v6136, %v6747
        %v6902 = vadd.f32 %v6143, %v6754
        %v6903 = vadd.f32 %v6148, %v6759
        %v6904 = vadd.f32 %v6155, %v6766
        %v6905 = vadd.f32 %v6158, %v6769
        %v6906 = vadd.f32 %v6165, %v6776
        %v6907 = vadd.f32 %v6170, %v6781
        %v6908 = vadd.f32 %v6177, %v6788
        %v6909 = vadd.f32 %v6180, %v6791
        %v6910 = vadd.f32 %v6187, %v6798
        %v6911 = vadd.f32 %v6192, %v6803
        %v6912 = vadd.f32 %v6199, %v6810
        %v6913 = vadd.f32 %v6202, %v6813
        %v6914 = vadd.f32 %v6209, %v6820
        %v6915 = vadd.f32 %v6214, %v6825
        %v6916 = vadd.f32 %v6221, %v6832
        %v6917 = vadd.f32 %v6224, %v6835
        %v6918 = vadd.f32 %v6231, %v6842
        %v6919 = vadd.f32 %v6236, %v6847
        %v6920 = vadd.f32 %v6243, %v6854
        %v6921 = vadd.f32 %v6246, %v6857
        %v6922 = vadd.f32 %v6253, %v6864
        %v6923 = vadd.f32 %v6258, %v6869
        %v6924 = vadd.f32 %v6265, %v6876
        %v6925 = vadd.f32 %v6268, %v6879
        %v6926 = vadd.f32 %v6275, %v6886
        %v6927 = vadd.f32 %v6280, %v6891
        %s6928 = sadd.s32 %s342, 2
        %s6929 = smul.u32 %s6928, 3
        %s6930 = smul.addr %s6929, 4
        %s6931 = scalar_lea.vmem %s301, %s6930 [#allocation3]
        %v6932 = vld [vmem:[%s6931] sm:$0xf]
        %v6933 = vld [vmem:[%s6931 + $0x4] sm:$0xf]
        %v6934 = vld [vmem:[%s6931 + $0xc] sm:$0xf]
        %v6935 = vld [vmem:[%s6931 + $0x10] sm:$0xf]
        %v6936 = vld [vmem:[%s6931 + $0x18] sm:$0xf]
        %v6937 = vld [vmem:[%s6931 + $0x1c] sm:$0xf]
        %v6938 = vld [vmem:[%s6931 + $0x24] sm:$0xf]
        %v6939 = vld [vmem:[%s6931 + $0x28] sm:$0xf]
        %v6940 = vld [vmem:[%s6931 + $0x30] sm:$0xf]
        %v6941 = vld [vmem:[%s6931 + $0x34] sm:$0xf]
        %v6942 = vld [vmem:[%s6931 + $0x3c] sm:$0xf]
        %v6943 = vld [vmem:[%s6931 + $0x40] sm:$0xf]
        %v6944 = vld [vmem:[%s6931 + $0x48] sm:$0xf]
        %v6945 = vld [vmem:[%s6931 + $0x4c] sm:$0xf]
        %v6946 = vld [vmem:[%s6931 + $0x54] sm:$0xf]
        %v6947 = vld [vmem:[%s6931 + $0x58] sm:$0xf]
        %v6948 = vld [vmem:[%s6931 + $0x60] sm:$0xf]
        %v6949 = vld [vmem:[%s6931 + $0x64] sm:$0xf]
        %v6950 = vld [vmem:[%s6931 + $0x6c] sm:$0xf]
        %v6951 = vld [vmem:[%s6931 + $0x70] sm:$0xf]
        %v6952 = vld [vmem:[%s6931 + $0x78] sm:$0xf]
        %v6953 = vld [vmem:[%s6931 + $0x7c] sm:$0xf]
        %v6954 = vld [vmem:[%s6931 + $0x84] sm:$0xf]
        %v6955 = vld [vmem:[%s6931 + $0x88] sm:$0xf]
        %v6956 = vld [vmem:[%s6931 + $0x90] sm:$0xf]
        %v6957 = vld [vmem:[%s6931 + $0x94] sm:$0xf]
        %v6958 = vld [vmem:[%s6931 + $0x9c] sm:$0xf]
        %v6959 = vld [vmem:[%s6931 + $0xa0] sm:$0xf]
        %v6960 = vld [vmem:[%s6931 + $0xa8] sm:$0xf]
        %v6961 = vld [vmem:[%s6931 + $0xac] sm:$0xf]
        %v6962 = vld [vmem:[%s6931 + $0xb4] sm:$0xf]
        %v6963 = vld [vmem:[%s6931 + $0xb8] sm:$0xf]
        %v6964 = vunpack.c.l.bf16 %v6932
        %v6965 = vunpack.c.l.bf16 %v6933
        %v6966 = vunpack.c.l.bf16 %v6934
        %v6967 = vunpack.c.l.bf16 %v6935
        %v6968 = vunpack.c.l.bf16 %v6936
        %v6969 = vunpack.c.l.bf16 %v6937
        %v6970 = vunpack.c.l.bf16 %v6938
        %v6971 = vunpack.c.l.bf16 %v6939
        %v6972 = vunpack.c.l.bf16 %v6940
        %v6973 = vunpack.c.l.bf16 %v6941
        %v6974 = vunpack.c.l.bf16 %v6942
        %v6975 = vunpack.c.l.bf16 %v6943
        %v6976 = vunpack.c.l.bf16 %v6944
        %v6977 = vunpack.c.l.bf16 %v6945
        %v6978 = vunpack.c.l.bf16 %v6946
        %v6979 = vunpack.c.l.bf16 %v6947
        %v6980 = vunpack.c.l.bf16 %v6948
        %v6981 = vunpack.c.l.bf16 %v6949
        %v6982 = vunpack.c.l.bf16 %v6950
        %v6983 = vunpack.c.l.bf16 %v6951
        %v6984 = vunpack.c.l.bf16 %v6952
        %v6985 = vunpack.c.l.bf16 %v6953
        %v6986 = vunpack.c.l.bf16 %v6954
        %v6987 = vunpack.c.l.bf16 %v6955
        %v6988 = vunpack.c.l.bf16 %v6956
        %v6989 = vunpack.c.l.bf16 %v6957
        %v6990 = vunpack.c.l.bf16 %v6958
        %v6991 = vunpack.c.l.bf16 %v6959
        %v6992 = vunpack.c.l.bf16 %v6960
        %v6993 = vunpack.c.l.bf16 %v6961
        %v6994 = vunpack.c.l.bf16 %v6962
        %v6995 = vunpack.c.l.bf16 %v6963
        %v6996 = vld [vmem:[%s5] sm:$0x1]
        %v6998 = vlaneseq
        %v6999 = vshrl.u32 %v6998, 7
        %v7000 = vsub.s32 0, %v6999
        %v7001 = vrot.slane %v6996, %v7000
        %v7003 = vmul.f32 %v6896, %v7001
        %v7004 = vmul.f32 %v6897, %v7001
        %v7005 = vmul.f32 %v6898, %v7001
        %v7006 = vmul.f32 %v6899, %v7001
        %v7007 = vmul.f32 %v6900, %v7001
        %v7008 = vmul.f32 %v6901, %v7001
        %v7009 = vmul.f32 %v6902, %v7001
        %v7010 = vmul.f32 %v6903, %v7001
        %v7011 = vmul.f32 %v6904, %v7001
        %v7012 = vmul.f32 %v6905, %v7001
        %v7013 = vmul.f32 %v6906, %v7001
        %v7014 = vmul.f32 %v6907, %v7001
        %v7015 = vmul.f32 %v6908, %v7001
        %v7016 = vmul.f32 %v6909, %v7001
        %v7017 = vmul.f32 %v6910, %v7001
        %v7018 = vmul.f32 %v6911, %v7001
        %v7019 = vmul.f32 %v6912, %v7001
        %v7020 = vmul.f32 %v6913, %v7001
        %v7021 = vmul.f32 %v6914, %v7001
        %v7022 = vmul.f32 %v6915, %v7001
        %v7023 = vmul.f32 %v6916, %v7001
        %v7024 = vmul.f32 %v6917, %v7001
        %v7025 = vmul.f32 %v6918, %v7001
        %v7026 = vmul.f32 %v6919, %v7001
        %v7027 = vmul.f32 %v6920, %v7001
        %v7028 = vmul.f32 %v6921, %v7001
        %v7029 = vmul.f32 %v6922, %v7001
        %v7030 = vmul.f32 %v6923, %v7001
        %v7031 = vmul.f32 %v6924, %v7001
        %v7032 = vmul.f32 %v6925, %v7001
        %v7033 = vmul.f32 %v6926, %v7001
        %v7034 = vmul.f32 %v6927, %v7001
        %v7035 = vld [vmem:[%s6] sm:$0x1]
        %v7037 = vlaneseq
        %v7038 = vshrl.u32 %v7037, 7
        %v7039 = vsub.s32 0, %v7038
        %v7040 = vrot.slane %v7035, %v7039
        %v7042 = vadd.f32 %v7003, %v7040
        %v7043 = vadd.f32 %v7004, %v7040
        %v7044 = vadd.f32 %v7005, %v7040
        %v7045 = vadd.f32 %v7006, %v7040
        %v7046 = vadd.f32 %v7007, %v7040
        %v7047 = vadd.f32 %v7008, %v7040
        %v7048 = vadd.f32 %v7009, %v7040
        %v7049 = vadd.f32 %v7010, %v7040
        %v7050 = vadd.f32 %v7011, %v7040
        %v7051 = vadd.f32 %v7012, %v7040
        %v7052 = vadd.f32 %v7013, %v7040
        %v7053 = vadd.f32 %v7014, %v7040
        %v7054 = vadd.f32 %v7015, %v7040
        %v7055 = vadd.f32 %v7016, %v7040
        %v7056 = vadd.f32 %v7017, %v7040
        %v7057 = vadd.f32 %v7018, %v7040
        %v7058 = vadd.f32 %v7019, %v7040
        %v7059 = vadd.f32 %v7020, %v7040
        %v7060 = vadd.f32 %v7021, %v7040
        %v7061 = vadd.f32 %v7022, %v7040
        %v7062 = vadd.f32 %v7023, %v7040
        %v7063 = vadd.f32 %v7024, %v7040
        %v7064 = vadd.f32 %v7025, %v7040
        %v7065 = vadd.f32 %v7026, %v7040
        %v7066 = vadd.f32 %v7027, %v7040
        %v7067 = vadd.f32 %v7028, %v7040
        %v7068 = vadd.f32 %v7029, %v7040
        %v7069 = vadd.f32 %v7030, %v7040
        %v7070 = vadd.f32 %v7031, %v7040
        %v7071 = vadd.f32 %v7032, %v7040
        %v7072 = vadd.f32 %v7033, %v7040
        %v7073 = vadd.f32 %v7034, %v7040
        %v7074 = vadd.f32 %v7042, %v6964
        %v7075 = vadd.f32 %v7043, %v6965
        %v7076 = vadd.f32 %v7044, %v6966
        %v7077 = vadd.f32 %v7045, %v6967
        %v7078 = vadd.f32 %v7046, %v6968
        %v7079 = vadd.f32 %v7047, %v6969
        %v7080 = vadd.f32 %v7048, %v6970
        %v7081 = vadd.f32 %v7049, %v6971
        %v7082 = vadd.f32 %v7050, %v6972
        %v7083 = vadd.f32 %v7051, %v6973
        %v7084 = vadd.f32 %v7052, %v6974
        %v7085 = vadd.f32 %v7053, %v6975
        %v7086 = vadd.f32 %v7054, %v6976
        %v7087 = vadd.f32 %v7055, %v6977
        %v7088 = vadd.f32 %v7056, %v6978
        %v7089 = vadd.f32 %v7057, %v6979
        %v7090 = vadd.f32 %v7058, %v6980
        %v7091 = vadd.f32 %v7059, %v6981
        %v7092 = vadd.f32 %v7060, %v6982
        %v7093 = vadd.f32 %v7061, %v6983
        %v7094 = vadd.f32 %v7062, %v6984
        %v7095 = vadd.f32 %v7063, %v6985
        %v7096 = vadd.f32 %v7064, %v6986
        %v7097 = vadd.f32 %v7065, %v6987
        %v7098 = vadd.f32 %v7066, %v6988
        %v7099 = vadd.f32 %v7067, %v6989
        %v7100 = vadd.f32 %v7068, %v6990
        %v7101 = vadd.f32 %v7069, %v6991
        %v7102 = vadd.f32 %v7070, %v6992
        %v7103 = vadd.f32 %v7071, %v6993
        %v7104 = vadd.f32 %v7072, %v6994
        %v7105 = vadd.f32 %v7073, %v6995
        %v7106 = vmax.f32 %v7074, 0.0
        %v7107 = vmax.f32 %v7075, 0.0
        %v7108 = vmax.f32 %v7076, 0.0
        %v7109 = vmax.f32 %v7077, 0.0
        %v7110 = vmax.f32 %v7078, 0.0
        %v7111 = vmax.f32 %v7079, 0.0
        %v7112 = vmax.f32 %v7080, 0.0
        %v7113 = vmax.f32 %v7081, 0.0
        %v7114 = vmax.f32 %v7082, 0.0
        %v7115 = vmax.f32 %v7083, 0.0
        %v7116 = vmax.f32 %v7084, 0.0
        %v7117 = vmax.f32 %v7085, 0.0
        %v7118 = vmax.f32 %v7086, 0.0
        %v7119 = vmax.f32 %v7087, 0.0
        %v7120 = vmax.f32 %v7088, 0.0
        %v7121 = vmax.f32 %v7089, 0.0
        %v7122 = vmax.f32 %v7090, 0.0
        %v7123 = vmax.f32 %v7091, 0.0
        %v7124 = vmax.f32 %v7092, 0.0
        %v7125 = vmax.f32 %v7093, 0.0
        %v7126 = vmax.f32 %v7094, 0.0
        %v7127 = vmax.f32 %v7095, 0.0
        %v7128 = vmax.f32 %v7096, 0.0
        %v7129 = vmax.f32 %v7097, 0.0
        %v7130 = vmax.f32 %v7098, 0.0
        %v7131 = vmax.f32 %v7099, 0.0
        %v7132 = vmax.f32 %v7100, 0.0
        %v7133 = vmax.f32 %v7101, 0.0
        %v7134 = vmax.f32 %v7102, 0.0
        %v7135 = vmax.f32 %v7103, 0.0
        %v7136 = vmax.f32 %v7104, 0.0
        %v7137 = vmax.f32 %v7105, 0.0
        %v7138 = vpack.c.bf16 %v7107, %v7106
        %v7139 = vpack.c.bf16 %v7109, %v7108
        %v7140 = vpack.c.bf16 %v7111, %v7110
        %v7141 = vpack.c.bf16 %v7113, %v7112
        %v7142 = vpack.c.bf16 %v7115, %v7114
        %v7143 = vpack.c.bf16 %v7117, %v7116
        %v7144 = vpack.c.bf16 %v7119, %v7118
        %v7145 = vpack.c.bf16 %v7121, %v7120
        %v7146 = vpack.c.bf16 %v7123, %v7122
        %v7147 = vpack.c.bf16 %v7125, %v7124
        %v7148 = vpack.c.bf16 %v7127, %v7126
        %v7149 = vpack.c.bf16 %v7129, %v7128
        %v7150 = vpack.c.bf16 %v7131, %v7130
        %v7151 = vpack.c.bf16 %v7133, %v7132
        %v7152 = vpack.c.bf16 %v7135, %v7134
        %v7153 = vpack.c.bf16 %v7137, %v7136
        %v7170 = vunpack.c.l.b16 %v7138
        %v7171 = vunpack.c.h.b16 %v7138
        %v7172 = vunpack.c.l.b16 %v7139
        %v7173 = vunpack.c.h.b16 %v7139
        %v7174 = vunpack.c.l.b16 %v7140
        %v7175 = vunpack.c.h.b16 %v7140
        %v7176 = vunpack.c.l.b16 %v7141
        %v7177 = vunpack.c.h.b16 %v7141
        %v7178 = vunpack.c.l.b16 %v7142
        %v7179 = vunpack.c.h.b16 %v7142
        %v7180 = vunpack.c.l.b16 %v7143
        %v7181 = vunpack.c.h.b16 %v7143
        %v7182 = vunpack.c.l.b16 %v7144
        %v7183 = vunpack.c.h.b16 %v7144
        %v7184 = vunpack.c.l.b16 %v7145
        %v7185 = vunpack.c.h.b16 %v7145
        %v7186 = vunpack.c.l.b16 %v7146
        %v7187 = vunpack.c.h.b16 %v7146
        %v7188 = vunpack.c.l.b16 %v7147
        %v7189 = vunpack.c.h.b16 %v7147
        %v7190 = vunpack.c.l.b16 %v7148
        %v7191 = vunpack.c.h.b16 %v7148
        %v7192 = vunpack.c.l.b16 %v7149
        %v7193 = vunpack.c.h.b16 %v7149
        %v7194 = vunpack.c.l.b16 %v7150
        %v7195 = vunpack.c.h.b16 %v7150
        %v7196 = vunpack.c.l.b16 %v7151
        %v7197 = vunpack.c.h.b16 %v7151
        %v7198 = vunpack.c.l.b16 %v7152
        %v7199 = vunpack.c.h.b16 %v7152
        %v7200 = vunpack.c.l.b16 %v7153
        %v7201 = vunpack.c.h.b16 %v7153
        %v7202 = vpack.c.b16 %v7170, %v7170
        %v7203 = vpack.c.b16 %v7171, %v7171
        %v7204 = vpack.c.b16 %v7172, %v7172
        %v7205 = vpack.c.b16 %v7173, %v7173
        %v7206 = vpack.c.b16 %v7174, %v7174
        %v7207 = vpack.c.b16 %v7175, %v7175
        %v7208 = vpack.c.b16 %v7176, %v7176
        %v7209 = vpack.c.b16 %v7177, %v7177
        %v7210 = vpack.c.b16 %v7178, %v7178
        %v7211 = vpack.c.b16 %v7179, %v7179
        %v7212 = vpack.c.b16 %v7180, %v7180
        %v7213 = vpack.c.b16 %v7181, %v7181
        %v7214 = vpack.c.b16 %v7182, %v7182
        %v7215 = vpack.c.b16 %v7183, %v7183
        %v7216 = vpack.c.b16 %v7184, %v7184
        %v7217 = vpack.c.b16 %v7185, %v7185
        %v7218 = vpack.c.b16 %v7186, %v7186
        %v7219 = vpack.c.b16 %v7187, %v7187
        %v7220 = vpack.c.b16 %v7188, %v7188
        %v7221 = vpack.c.b16 %v7189, %v7189
        %v7222 = vpack.c.b16 %v7190, %v7190
        %v7223 = vpack.c.b16 %v7191, %v7191
        %v7224 = vpack.c.b16 %v7192, %v7192
        %v7225 = vpack.c.b16 %v7193, %v7193
        %v7226 = vpack.c.b16 %v7194, %v7194
        %v7227 = vpack.c.b16 %v7195, %v7195
        %v7228 = vpack.c.b16 %v7196, %v7196
        %v7229 = vpack.c.b16 %v7197, %v7197
        %v7230 = vpack.c.b16 %v7198, %v7198
        %v7231 = vpack.c.b16 %v7199, %v7199
        %v7232 = vpack.c.b16 %v7200, %v7200
        %v7233 = vpack.c.b16 %v7201, %v7201
        %7266 = vst [vmem:[%s339] sm:$0xf] %v7202
        %7267 = vst [vmem:[%s339 + $0x4] sm:$0xf] %v7203
        %7268 = vst [vmem:[%s339 + $0x8] sm:$0xf] %v7204
        %7269 = vst [vmem:[%s339 + $0xc] sm:$0xf] %v7205
        %7270 = vst [vmem:[%s339 + $0x10] sm:$0xf] %v7206
        %7271 = vst [vmem:[%s339 + $0x14] sm:$0xf] %v7207
        %7272 = vst [vmem:[%s339 + $0x18] sm:$0xf] %v7208
        %7273 = vst [vmem:[%s339 + $0x1c] sm:$0xf] %v7209
        %7274 = vst [vmem:[%s339 + $0x20] sm:$0xf] %v7210
        %7275 = vst [vmem:[%s339 + $0x24] sm:$0xf] %v7211
        %7276 = vst [vmem:[%s339 + $0x28] sm:$0xf] %v7212
        %7277 = vst [vmem:[%s339 + $0x2c] sm:$0xf] %v7213
        %7278 = vst [vmem:[%s339 + $0x30] sm:$0xf] %v7214
        %7279 = vst [vmem:[%s339 + $0x34] sm:$0xf] %v7215
        %7280 = vst [vmem:[%s339 + $0x38] sm:$0xf] %v7216
        %7281 = vst [vmem:[%s339 + $0x3c] sm:$0xf] %v7217
        %7282 = vst [vmem:[%s339 + $0x40] sm:$0xf] %v7218
        %7283 = vst [vmem:[%s339 + $0x44] sm:$0xf] %v7219
        %7284 = vst [vmem:[%s339 + $0x48] sm:$0xf] %v7220
        %7285 = vst [vmem:[%s339 + $0x4c] sm:$0xf] %v7221
        %7286 = vst [vmem:[%s339 + $0x50] sm:$0xf] %v7222
        %7287 = vst [vmem:[%s339 + $0x54] sm:$0xf] %v7223
        %7288 = vst [vmem:[%s339 + $0x58] sm:$0xf] %v7224
        %7289 = vst [vmem:[%s339 + $0x5c] sm:$0xf] %v7225
        %7290 = vst [vmem:[%s339 + $0x60] sm:$0xf] %v7226
        %7291 = vst [vmem:[%s339 + $0x64] sm:$0xf] %v7227
        %7292 = vst [vmem:[%s339 + $0x68] sm:$0xf] %v7228
        %7293 = vst [vmem:[%s339 + $0x6c] sm:$0xf] %v7229
        %7294 = vst [vmem:[%s339 + $0x70] sm:$0xf] %v7230
        %7295 = vst [vmem:[%s339 + $0x74] sm:$0xf] %v7231
        %7296 = vst [vmem:[%s339 + $0x78] sm:$0xf] %v7232
        %7297 = vst [vmem:[%s339 + $0x7c] sm:$0xf] %v7233
        %s7298 = sand.u32 %s199, 1
        %s7299 = scalar_lea.sflag [#allocation5], %s7298
        %s7300 = sand.u32 %s199, 1
        %s7301 = smul.addr %s7300, 128
        %s7302 = scalar_lea.vmem [#allocation9], %s7301
        // Predicated region
        $region65: #{tpu_custom_call.1} parent=47 // pred_check
          %p7303 = pneg %p209
        $region66: #{tpu_custom_call.1} parent=47 // pred_check_branch
          %7305 = sbr.rel (%p7303) target = $region68
        $region67: #{tpu_custom_call.1} parent=47 // pred_region
          %s7306 = smul.u32 16, %s30
          %s7308 = ssub.s32 2048, 2048
          %7309 = vsyncadd %s7299, %s7308
          %s7310 = smul.addr %s7306, 2
          %s7311 = smul.addr %s29, 32
          %s7312 = sadd.s32 %s7310, %s7311
          %s7313 = smul.addr %s7312, 64
          %s7314 = scalar_lea.hbm %s7, %s7313
          %s7315 = sshll.u32 %s7302, 4
          %s7316 = int_to_ptr.vmem [resolvable:$true] %s7315
          %7321 = dma.vmem_to_hbm [thread:$0]  %s7316, 2048, %s7314, %s7299, 64, 64, 4
        $region68: #{tpu_custom_call.1} parent=47 // pred_fallthru
          _
      $region48: #{tpu_custom_call.1} parent=5 // pred_fallthru
        _
      %p7322 = scmp.le.s32.totalorder 2, %s20
      // Predicated region
      $region69: #{tpu_custom_call.1} parent=5 // pred_check
        %p7323 = pneg %p7322
      $region70: #{tpu_custom_call.1} parent=5 // pred_check_branch
        %7325 = sbr.rel (%p7323) target = $region72
      $region71: #{tpu_custom_call.1} parent=5 // pred_region
        %s7326 = ssub.s32 %s20, 2
        // Predicated region
        $region73: #{tpu_custom_call.1} parent=71 // pred_check
          %p7327 = pneg %p215
        $region74: #{tpu_custom_call.1} parent=71 // pred_check_branch
          %7329 = sbr.rel (%p7327) target = $region76
        $region75: #{tpu_custom_call.1} parent=71 // pred_region
          %s7330 = sand.u32 %s200, 1
          %s7331 = scalar_lea.sflag [#allocation5], %s7330
          %s7332 = sand.u32 %s200, 1
          %s7333 = smul.addr %s7332, 128
          %s7334 = scalar_lea.vmem [#allocation9], %s7333
          %7335 = dma.done %s7331, 2048
        $region76: #{tpu_custom_call.1} parent=71 // pred_fallthru
          _
      $region72: #{tpu_custom_call.1} parent=5 // pred_fallthru
        _
    $region6: #{tpu_custom_call.1} parent=1 // loop_footer
      %s24 = sadd.s32 1, %s20
    $region7: #{tpu_custom_call.1} parent=1 // loop_footer_branch
      %19 = sbr.rel target = $region3
    $region8: #{tpu_custom_call.1} parent=1 // loop_exit
      _
    %7336 = vsyncpa [#allocation4], 1
    %s7337 = scalar_lea.sflag [#allocation4], 1
    %7338 = vsyncpa %s7337, 1
    %7339 = vsyncpa [#allocation7], 1
    %7340 = vsyncpa [#allocation5], 1
    %s7341 = scalar_lea.sflag [#allocation5], 1
    %7342 = vsyncpa %s7341, 1

</llo_original>
